<compile_context>
chip_gen: v7x
topology: tpu7x:2x2x1
jax: 0.10.0
libtpu: 0.0.40
codegen_flags: <defaults>
</compile_context>

<pallas_src>
import functools

import jax
import jax.numpy as jnp
from jax.experimental import pallas as pl
from jax.experimental.pallas import tpu as pltpu


_NSTAT = 4  # per-(n,k) tile stats: [sum masks, sum logits, sum p_masks, sum dmu^2]


# ----------------------------------------------------------------------------
# Kernel 1: fused decoder + likelihood + gradient residuals + pooled sums
#   grid = (spatial_tiles, N); one step handles one sample n, one HW tile.
# ----------------------------------------------------------------------------
def _decode_grad_kernel(z_ref, w_ref, b_ref, x_ref,
                        mu_ref, masks_ref, gz_ref, musum_ref, dmusum_ref,
                        kstat_ref, llsum_ref,
                        *, inv_2var, grad_scale, dmask_scale):
    """
    z_ref      (K, z_dim)         f32   latents of the K slots of sample n
    w_ref      (C+1, z_dim, T)    bf16  decoder weights, channel-major tile
    b_ref      (C+1, 1, T)        f32   decoder bias, channel-major tile
    x_ref      (C, T)             f32   input image tile
    mu_ref     (C, K, T)                decoded means, channel-major
    masks_ref  (K, T)                   softmax_K(mask logits)
    gz_ref     (K, z_dim)               dL/dz for this (tile, n) (summed in JAX)
    musum_ref  (K, C)                   per-channel spatial sums of mu
    dmusum_ref (K, C)                   per-channel spatial sums of dL/dmu
    kstat_ref  (K, 4)                   [sum masks, sum logits, sum p_masks, sum dmu^2]
    llsum_ref  (1, 1)                   sum over this tile of per-pixel log-lik
    grad_scale = beta / (N * var_x),  dmask_scale = -beta / N
    """
    z = z_ref[...].astype(jnp.bfloat16)                        # (K, zd)
    C = x_ref.shape[0]

    # mask-logit channel (decoder output channel C) + softmax over K
    w_mask = w_ref[C]                                          # (zd, T) bf16
    logits = (jnp.dot(z, w_mask, preferred_element_type=jnp.float32)
              + b_ref[C])                                      # (K, T)
    lmax = jnp.max(logits, axis=0, keepdims=True)
    e = jnp.exp(logits - lmax)
    masks = e * pl.reciprocal(jnp.sum(e, axis=0, keepdims=True), approx=True)
    masks_ref[...] = masks

    ll_prod = None      # prod_c S_c                  (1, T)
    pm_prod = None      # prod_c exp(dev_c / 2var)    (K, T)
    dmask_acc = None    # sum_c wgt_c / S_c           (K, T)
    gz_acc = jnp.zeros(gz_ref.shape, jnp.float32)              # (K, zd)
    dmu_sq = jnp.zeros((z.shape[0], 1), jnp.float32)           # (K, 1)

    for ch in range(C):
        w_c = w_ref[ch]                                        # (zd, T) bf16
        mu_c = (jnp.dot(z, w_c, preferred_element_type=jnp.float32)
                + b_ref[ch])                                   # (K, T)
        mu_ref[ch, :, :] = mu_c                                # direct store
        musum_ref[:, ch:ch + 1] = jnp.sum(mu_c, axis=1, keepdims=True)

        diff = mu_c - x_ref[ch:ch + 1, :]                      # (K, T)
        wgt = jnp.exp(-(diff * diff) * inv_2var)               # (K, T)
        pm_prod = wgt if pm_prod is None else pm_prod * wgt

        s_c = jnp.maximum(jnp.sum(masks * wgt, axis=0, keepdims=True), 1e-30)
        ll_prod = s_c if ll_prod is None else ll_prod * s_c
        inv_s = pl.reciprocal(s_c, approx=True)                # (1, T)

        w_over_s = wgt * inv_s                                 # (K, T)
        dmask_acc = w_over_s if dmask_acc is None else dmask_acc + w_over_s

        # dL/dmu_x for this channel (masks is not downstream of mu_x)
        dmu_c = grad_scale * masks * w_over_s * diff           # (K, T)
        dmusum_ref[:, ch:ch + 1] = jnp.sum(dmu_c, axis=1, keepdims=True)
        dmu_sq = dmu_sq + jnp.sum(dmu_c * dmu_c, axis=1, keepdims=True)

        # decoder backward against the already-resident bf16 weight tile
        gz_acc = gz_acc + jnp.dot(dmu_c.astype(jnp.bfloat16), w_c.T,
                                  preferred_element_type=jnp.float32)

    # dL/dmasks and softmax-over-K backward -> dL/dlogits
    dmasks = dmask_scale * dmask_acc                           # (K, T)
    g_logits = masks * (dmasks - jnp.sum(masks * dmasks, axis=0, keepdims=True))
    gz_acc = gz_acc + jnp.dot(g_logits.astype(jnp.bfloat16), w_mask.T,
                              preferred_element_type=jnp.float32)
    gz_ref[...] = gz_acc

    # per-pixel mixture log-likelihood: one log of the channel product,
    # clamped so underflow can never produce -inf.
    ll = jnp.log(jnp.maximum(ll_prod, 1e-37))                  # (1, T)
    llsum_ref[...] = jnp.sum(ll, axis=1, keepdims=True)

    # p_masks = softmax_K( prod_C exp(dev / 2 var) ); the reference applies the
    # softmax to the already-exponentiated product, replicated here.
    pmax = jnp.max(pm_prod, axis=0, keepdims=True)
    pe = jnp.exp(pm_prod - pmax)
    pm = pe * pl.reciprocal(jnp.sum(pe, axis=0, keepdims=True), approx=True)

    # tiny per-(k) tile stats for the pooled refine features
    kstat_ref[:, 0:1] = jnp.sum(masks, axis=1, keepdims=True)
    kstat_ref[:, 1:2] = jnp.sum(logits, axis=1, keepdims=True)
    kstat_ref[:, 2:3] = jnp.sum(pm, axis=1, keepdims=True)
    kstat_ref[:, 3:4] = dmu_sq


def decode_grad_pallas(z3, w_t, b_t, x_f, *, var_x, beta, tile_hw=1024):
    """z3 (N,K,z_dim) f32, w_t (C+1,z_dim,HW) bf16, b_t (C+1,1,HW) f32,
    x_f (N,C,HW) f32."""
    N, K, z_dim = z3.shape
    Cp1, _, HW = w_t.shape
    C = Cp1 - 1
    tile_hw = min(tile_hw, HW)
    assert HW % tile_hw == 0 and tile_hw % 128 == 0
    n_tiles = HW // tile_hw

    kern = functools.partial(
        _decode_grad_kernel,
        inv_2var=1.0 / (2.0 * float(var_x)),
        grad_scale=float(beta) / (float(N) * float(var_x)),
        dmask_scale=-float(beta) / float(N),
    )
    out_shapes = (
        jax.ShapeDtypeStruct((N, C, K, HW), jnp.float32),          # mu (chan-major)
        jax.ShapeDtypeStruct((N, K, HW), jnp.float32),             # masks
        jax.ShapeDtypeStruct((n_tiles, N, K, z_dim), jnp.float32),  # g_z partials
        jax.ShapeDtypeStruct((n_tiles, N, K, C), jnp.float32),     # mu tile sums
        jax.ShapeDtypeStruct((n_tiles, N, K, C), jnp.float32),     # dmu tile sums
        jax.ShapeDtypeStruct((n_tiles, N, K, _NSTAT), jnp.float32),  # k stats
        jax.ShapeDtypeStruct((n_tiles, N, 1, 1), jnp.float32),     # ll tile sums
    )
    return pl.pallas_call(
        kern,
        out_shape=out_shapes,
        grid_spec=pltpu.PrefetchScalarGridSpec(
            num_scalar_prefetch=0,
            grid=(n_tiles, N),   # batch innermost -> weight tile stays resident
            in_specs=[
                pl.BlockSpec((None, K, z_dim), lambda t, n: (n, 0, 0)),
                pl.BlockSpec((Cp1, z_dim, tile_hw), lambda t, n: (0, 0, t)),
                pl.BlockSpec((Cp1, 1, tile_hw), lambda t, n: (0, 0, t)),
                pl.BlockSpec((None, C, tile_hw), lambda t, n: (n, 0, t)),
            ],
            out_specs=(
                pl.BlockSpec((None, C, K, tile_hw), lambda t, n: (n, 0, 0, t)),
                pl.BlockSpec((None, K, tile_hw), lambda t, n: (n, 0, t)),
                pl.BlockSpec((None, None, K, z_dim), lambda t, n: (t, n, 0, 0)),
                pl.BlockSpec((None, None, K, C), lambda t, n: (t, n, 0, 0)),
                pl.BlockSpec((None, None, K, C), lambda t, n: (t, n, 0, 0)),
                pl.BlockSpec((None, None, K, _NSTAT), lambda t, n: (t, n, 0, 0)),
                pl.BlockSpec((None, None, 1, 1), lambda t, n: (t, n, 0, 0)),
            ),
        ),
        compiler_params=pltpu.CompilerParams(
            dimension_semantics=("parallel", "parallel")),
    )(z3, w_t, b_t, x_f)


# ----------------------------------------------------------------------------
# Kernel 2: refinement network (MLP -> LSTM cell -> delta head), fused matmuls.
# Tiny (NK=6 rows) and latency-bound; kept simple per perf review.
# ----------------------------------------------------------------------------
def _refine_kernel(feat_ref, h_ref, c_ref,
                   w1_ref, b1_ref, wxh_ref, bg_ref, w2_ref, b2_ref,
                   delta_ref, h_out_ref, c_out_ref, *, hidden):
    feat = feat_ref[...]                                       # (M, 16 + 4*z_dim)
    e = (jnp.dot(feat, w1_ref[...], preferred_element_type=jnp.float32)
         + b1_ref[...])
    # ELU
    e = jnp.where(e > 0, e, jnp.exp(jnp.minimum(e, 0.0)) - 1.0)

    eh = jnp.concatenate([e, h_ref[...]], axis=1)              # (M, 2*hidden)
    gates = (jnp.dot(eh, wxh_ref[...], preferred_element_type=jnp.float32)
             + bg_ref[...])                                    # (M, 4*hidden)
    gi = gates[:, 0 * hidden:1 * hidden]
    gf = gates[:, 1 * hidden:2 * hidden]
    gg = gates[:, 2 * hidden:3 * hidden]
    go = gates[:, 3 * hidden:4 * hidden]

    def sig(t):
        return 1.0 / (1.0 + jnp.exp(-t))

    c_new = sig(gf) * c_ref[...] + sig(gi) * jnp.tanh(gg)
    h_new = sig(go) * jnp.tanh(c_new)

    delta_ref[...] = (jnp.dot(h_new, w2_ref[...],
                              preferred_element_type=jnp.float32) + b2_ref[...])
    h_out_ref[...] = h_new
    c_out_ref[...] = c_new


def refine_pallas(feat, h, c, params):
    NK = feat.shape[0]
    hidden = h.shape[1]
    two_z = params['W2'].shape[1]
    kern = functools.partial(_refine_kernel, hidden=hidden)
    return pl.pallas_call(
        kern,
        out_shape=(
            jax.ShapeDtypeStruct((NK, two_z), jnp.float32),
            jax.ShapeDtypeStruct((NK, hidden), jnp.float32),
            jax.ShapeDtypeStruct((NK, hidden), jnp.float32),
        ),
    )(feat, h, c,
      params['W1'], params['b1'], params['Wxh'], params['bg'],
      params['W2'], params['b2'])


# ----------------------------------------------------------------------------
# Plain-JAX glue
# ----------------------------------------------------------------------------
def _layernorm(v, axes, eps=1e-5):
    m = jnp.mean(v, axis=axes, keepdims=True)
    var = jnp.mean((v - m) ** 2, axis=axes, keepdims=True)
    return (v - m) / jnp.sqrt(var + eps)


# ----------------------------------------------------------------------------
# IODINE forward pass
# ----------------------------------------------------------------------------
def iodine_forward(x, params, *, T, K, z_dim, var_x=0.3, beta=1.0, seed=0):
    N, C, H, W = x.shape
    HW = H * W
    NK = N * K
    hidden = params['Wxh'].shape[1] // 4

    # decoder weights rearranged once: (z_dim, (C+1)*HW) -> channel-major bf16
    # (native MXU dtype, half the HBM weight traffic; also reused in-kernel for
    # the decoder backward so no f32 weight copy is needed anywhere).
    Wd_t = jnp.transpose(params['Wd'].reshape(z_dim, C + 1, HW),
                         (1, 0, 2)).astype(jnp.bfloat16)           # (C+1, zd, HW)
    bd_t = params['bd'].reshape(C + 1, 1, HW)
    x_f = x.reshape(N, C, HW)

    lmbda = jnp.broadcast_to(params['lmbda0'], (NK, 2 * z_dim))
    h = jnp.zeros((NK, hidden), jnp.float32)
    c = jnp.zeros_like(h)
    total_loss = jnp.zeros((N, 1), jnp.float32)
    key = jax.random.PRNGKey(seed)

    # coordinate channels (torch.meshgrid default 'ij', linspace(-1,1)); only
    # their spatial means feed the pooled refine features.
    xg_mean = jnp.mean(jnp.linspace(-1.0, 1.0, W))
    yg_mean = jnp.mean(jnp.linspace(-1.0, 1.0, H))
    x_pool = jnp.mean(x_f, axis=2)                                 # (N, C)

    nll = div = mu_cn = masks_f = None
    for it in range(T):
        mu_z, logvar_z = lmbda[:, :z_dim], lmbda[:, z_dim:]
        key, sub = jax.random.split(key)
        eps = jax.random.normal(sub, mu_z.shape, dtype=jnp.float32)
        z = mu_z + eps * jnp.exp(0.5 * logvar_z)

        # ---- fused decoder + likelihood + gradient residuals (Pallas) ----
        (mu_cn, masks_f, gz_t, musum_t, dmusum_t, kstat_t, llsum_t) = \
            decode_grad_pallas(z.reshape(N, K, z_dim), Wd_t, bd_t, x_f,
                               var_x=var_x, beta=beta)

        nll = -jnp.mean(jnp.sum(llsum_t, axis=(0, 2, 3)))          # mean over n
        kl = (-0.5 * (1.0 + logvar_z - jnp.exp(logvar_z)
                      - mu_z ** 2).sum(axis=1)).reshape(N, K)
        div = kl.sum(axis=1).mean()
        loss = beta * nll + div
        total_loss = total_loss + (float(it) + 1.0) / float(T) * loss

        if it == T - 1:
            continue

        # ---- dL/dlmbda via reparameterization + KL, reusing in-kernel dL/dz ----
        g_z = jnp.sum(gz_t, axis=0).reshape(NK, z_dim)
        g_mu_z = g_z + mu_z / N
        g_logvar = (g_z * eps * (0.5 * jnp.exp(0.5 * logvar_z))
                    + (0.5 / N) * (jnp.exp(logvar_z) - 1.0))
        dlmbda = jnp.concatenate([g_mu_z, g_logvar], axis=1)
        dlmbda_stable = _layernorm(dlmbda, axes=(1,))

        # ---- pooled refine-net image features from the kernel's tile sums
        #      (no full-resolution tensor is re-read from HBM) ----
        stats = jnp.sum(kstat_t, axis=0)                           # (N, K, 4)
        mu_pool = jnp.sum(musum_t, axis=0) / HW                    # (N, K, C)
        masks_pool = stats[..., 0] / HW                            # (N, K)
        logits_pool = stats[..., 1] / HW
        pm_pool = stats[..., 2] / HW
        dmu_sum = jnp.sum(dmusum_t, axis=0)                        # (N, K, C)
        dmu_m = jnp.sum(dmu_sum, axis=2) / (C * HW)                # (N, K)
        dmu_v = stats[..., 3] / (C * HW) - dmu_m ** 2
        dmu_pool = ((dmu_sum / HW - dmu_m[..., None])
                    / jnp.sqrt(dmu_v[..., None] + 1e-5))           # (N, K, C)
        # LayerNorm'd dmasks / ll are pooled over exactly their normalization
        # axes -> identically zero; no full-res tensors needed.
        zero_nk1 = jnp.zeros((N, K, 1), jnp.float32)

        pooled = jnp.concatenate([
            jnp.broadcast_to(x_pool[:, None, :], (N, K, C)),        # _x
            mu_pool,                                                # mu_x
            masks_pool[..., None],                                  # masks
            logits_pool[..., None],                                 # mask_logits
            dmu_pool,                                               # dmu_x (LN)
            zero_nk1,                                               # dmasks (LN)
            pm_pool[..., None],                                     # p_masks
            zero_nk1,                                               # ll (LN)
            jnp.broadcast_to(jnp.reshape(xg_mean, (1, 1, 1)), (N, K, 1)),
            jnp.broadcast_to(jnp.reshape(yg_mean, (1, 1, 1)), (N, K, 1)),
        ], axis=2).reshape(NK, 2 * C + 10)

        feat = jnp.concatenate([pooled, lmbda, dlmbda_stable], axis=1)

        # ---- refinement network (Pallas) ----
        delta, h, c = refine_pallas(feat, h, c, params)
        lmbda = lmbda + delta

    mu_x = jnp.transpose(mu_cn, (0, 2, 1, 3)).reshape(N, K, C, H, W)
    masks = masks_f.reshape(N, K, 1, H, W)
    # TODO(synk): the optional feature_extractor branch (pretrained conv stack)
    # of the reference module is not implemented (feature_extractor=None path).
    return total_loss, nll, div, mu_x, masks


# ----------------------------------------------------------------------------
# main
# ----------------------------------------------------------------------------
if __name__ == "__main__":
    # H=W=64 is hard-coded by the module (LayerNorm shapes + meshgrid).
    N, C, H, W = 2, 3, 64, 64
    K, T, z_dim = 3, 3, 16
    hidden = 128
    pooled_channels = 2 * C + 10     # 16 pooled image features for the refine net

    key = jax.random.PRNGKey(0)
    ks = jax.random.split(key, 10)
    x = jax.random.uniform(ks[0], (N, C, H, W), dtype=jnp.float32)

    params = dict(
        lmbda0=jax.random.uniform(ks[1], (1, 2 * z_dim)) - 0.5,
        Wd=jax.random.normal(ks[2], (z_dim, (C + 1) * H * W)) * 0.02,
        bd=jnp.zeros((1, (C + 1) * H * W), jnp.float32),
        W1=jax.random.normal(ks[3], (pooled_channels + 4 * z_dim, hidden)) * 0.05,
        b1=jnp.zeros((1, hidden), jnp.float32),
        Wxh=jax.random.normal(ks[4], (2 * hidden, 4 * hidden)) * 0.05,
        bg=jnp.zeros((1, 4 * hidden), jnp.float32),
        W2=jax.random.normal(ks[5], (hidden, 2 * z_dim)) * 0.01,
        b2=jnp.zeros((1, 2 * z_dim), jnp.float32),
    )
    params = {k_: v.astype(jnp.float32) for k_, v in params.items()}

    fwd = jax.jit(functools.partial(iodine_forward, T=T, K=K, z_dim=z_dim))
    out = fwd(x, params)
    total_loss, nll, div, mu_x, masks = jax.block_until_ready(out)

    assert total_loss.shape == (N, 1)
    assert mu_x.shape == (N, K, C, H, W)
    assert masks.shape == (N, K, 1, H, W)
    assert bool(jnp.all(jnp.isfinite(total_loss)))
    assert bool(jnp.isfinite(nll)) and bool(jnp.isfinite(div))
    assert bool(jnp.all(jnp.isfinite(mu_x))) and bool(jnp.all(jnp.isfinite(masks)))
    print("KERNEL_OK")
</pallas_src>

<mosaic_0001>
module attributes {stable_mosaic.version = 11 : i64} {
  func.func @_decode_grad_kernel(%arg0: i32, %arg1: i32, %arg2: memref<1x3x16xf32, #tpu.memory_space<vmem>>, %arg3: memref<4x16x1024xbf16, #tpu.memory_space<vmem>>, %arg4: memref<4x1x1024xf32, #tpu.memory_space<vmem>>, %arg5: memref<1x3x1024xf32, #tpu.memory_space<vmem>>, %arg6: memref<1x3x3x1024xf32, #tpu.memory_space<vmem>>, %arg7: memref<1x3x1024xf32, #tpu.memory_space<vmem>>, %arg8: memref<1x1x3x16xf32, #tpu.memory_space<vmem>>, %arg9: memref<1x1x3x3xf32, #tpu.memory_space<vmem>>, %arg10: memref<1x1x3x3xf32, #tpu.memory_space<vmem>>, %arg11: memref<1x1x3x4xf32, #tpu.memory_space<vmem>>, %arg12: memref<1x1x1x1xf32, #tpu.memory_space<vmem>>) attributes {dimension_semantics = [#tpu.dimension_semantics<parallel>, #tpu.dimension_semantics<parallel>], iteration_bounds = array<i64: 4, 2>, scalar_prefetch = 0 : i64, scratch_operands = 0 : i64, tpu.core_type = #tpu.core_type<tc>, window_params = [{transform_indices = @transform_0, window_bounds = array<i64: 1, 3, 16>}, {transform_indices = @transform_1, window_bounds = array<i64: 4, 16, 1024>}, {transform_indices = @transform_2, window_bounds = array<i64: 4, 1, 1024>}, {transform_indices = @transform_3, window_bounds = array<i64: 1, 3, 1024>}, {transform_indices = @transform_4, window_bounds = array<i64: 1, 3, 3, 1024>}, {transform_indices = @transform_5, window_bounds = array<i64: 1, 3, 1024>}, {transform_indices = @transform_6, window_bounds = array<i64: 1, 1, 3, 16>}, {transform_indices = @transform_7, window_bounds = array<i64: 1, 1, 3, 3>}, {transform_indices = @transform_8, window_bounds = array<i64: 1, 1, 3, 3>}, {transform_indices = @transform_9, window_bounds = array<i64: 1, 1, 3, 4>}, {transform_indices = @transform_10, window_bounds = array<i64: 1, 1, 1, 1>}]} {
    %c0 = arith.constant 0 : index
    %c0_0 = arith.constant 0 : index
    %c0_1 = arith.constant 0 : index
    %0 = vector.load %arg2[%c0, %c0_0, %c0_1] : memref<1x3x16xf32, #tpu.memory_space<vmem>>, vector<1x3x16xf32>
    %1 = vector.shape_cast %0 : vector<1x3x16xf32> to vector<3x16xf32>
    %2 = arith.truncf %1 : vector<3x16xf32> to vector<3x16xbf16>
    %c3 = arith.constant 3 : index
    %c0_2 = arith.constant 0 : index
    %c0_3 = arith.constant 0 : index
    %3 = vector.load %arg3[%c3, %c0_2, %c0_3] : memref<4x16x1024xbf16, #tpu.memory_space<vmem>>, vector<1x16x1024xbf16>
    %4 = vector.shape_cast %3 : vector<1x16x1024xbf16> to vector<16x1024xbf16>
    %cst = arith.constant dense<0.000000e+00> : vector<3x1024xf32>
    %5 = tpu.matmul %2, %4, %cst {dimension_numbers = #tpu.dot_dimension_numbers<[1], [0], [0], [1], [0, 0, 1, 1], [], []>} : vector<3x16xbf16>, vector<16x1024xbf16>, vector<3x1024xf32> -> vector<3x1024xf32>
    %c3_4 = arith.constant 3 : index
    %c0_5 = arith.constant 0 : index
    %c0_6 = arith.constant 0 : index
    %6 = vector.load %arg4[%c3_4, %c0_5, %c0_6] : memref<4x1x1024xf32, #tpu.memory_space<vmem>>, vector<1x1x1024xf32>
    %7 = vector.shape_cast %6 : vector<1x1x1024xf32> to vector<1x1024xf32>
    %8 = vector.broadcast %7 : vector<1x1024xf32> to vector<3x1024xf32>
    %9 = arith.addf %5, %8 : vector<3x1024xf32>
    %cst_7 = arith.constant dense<0xFF800000> : vector<1024xf32>
    %10 = vector.multi_reduction <maximumf>, %9, %cst_7 [0] : vector<3x1024xf32> to vector<1024xf32>
    %11 = vector.shape_cast %10 : vector<1024xf32> to vector<1x1024xf32>
    %12 = vector.broadcast %11 : vector<1x1024xf32> to vector<3x1024xf32>
    %13 = arith.subf %9, %12 : vector<3x1024xf32>
    %14 = math.exp %13 : vector<3x1024xf32>
    %cst_8 = arith.constant dense<0.000000e+00> : vector<1024xf32>
    %15 = vector.multi_reduction <add>, %14, %cst_8 [0] : vector<3x1024xf32> to vector<1024xf32>
    %16 = vector.shape_cast %15 : vector<1024xf32> to vector<1x1024xf32>
    %17 = tpu.reciprocal %16 {approx = true} : vector<1x1024xf32> -> vector<1x1024xf32>
    %18 = vector.broadcast %17 : vector<1x1024xf32> to vector<3x1024xf32>
    %19 = arith.mulf %14, %18 : vector<3x1024xf32>
    %c0_9 = arith.constant 0 : index
    %c0_10 = arith.constant 0 : index
    %c0_11 = arith.constant 0 : index
    %20 = vector.load %arg7[%c0_9, %c0_10, %c0_11] : memref<1x3x1024xf32, #tpu.memory_space<vmem>>, vector<1x3x1024xf32>
    %21 = vector.shape_cast %20 : vector<1x3x1024xf32> to vector<3x1024xf32>
    %22 = vector.shape_cast %19 : vector<3x1024xf32> to vector<1x3x1024xf32>
    tpu.vector_store %arg7[%c0_9, %c0_10, %c0_11], %22 {strides = array<i32>} : memref<1x3x1024xf32, #tpu.memory_space<vmem>>, vector<1x3x1024xf32>,
    %cst_12 = arith.constant 0.000000e+00 : f32
    %23 = vector.broadcast %cst_12 : f32 to vector<3x16xf32>
    %cst_13 = arith.constant 0.000000e+00 : f32
    %24 = vector.broadcast %cst_13 : f32 to vector<3x1xf32>
    %c0_14 = arith.constant 0 : index
    %c0_15 = arith.constant 0 : index
    %c0_16 = arith.constant 0 : index
    %25 = vector.load %arg3[%c0_14, %c0_15, %c0_16] : memref<4x16x1024xbf16, #tpu.memory_space<vmem>>, vector<1x16x1024xbf16>
    %26 = vector.shape_cast %25 : vector<1x16x1024xbf16> to vector<16x1024xbf16>
    %cst_17 = arith.constant dense<0.000000e+00> : vector<3x1024xf32>
    %27 = tpu.matmul %2, %26, %cst_17 {dimension_numbers = #tpu.dot_dimension_numbers<[1], [0], [0], [1], [0, 0, 1, 1], [], []>} : vector<3x16xbf16>, vector<16x1024xbf16>, vector<3x1024xf32> -> vector<3x1024xf32>
    %c0_18 = arith.constant 0 : index
    %c0_19 = arith.constant 0 : index
    %c0_20 = arith.constant 0 : index
    %28 = vector.load %arg4[%c0_18, %c0_19, %c0_20] : memref<4x1x1024xf32, #tpu.memory_space<vmem>>, vector<1x1x1024xf32>
    %29 = vector.shape_cast %28 : vector<1x1x1024xf32> to vector<1x1024xf32>
    %30 = vector.broadcast %29 : vector<1x1024xf32> to vector<3x1024xf32>
    %31 = arith.addf %27, %30 : vector<3x1024xf32>
    %c0_21 = arith.constant 0 : index
    %c0_22 = arith.constant 0 : index
    %c0_23 = arith.constant 0 : index
    %c0_24 = arith.constant 0 : index
    %32 = vector.load %arg6[%c0_21, %c0_22, %c0_23, %c0_24] : memref<1x3x3x1024xf32, #tpu.memory_space<vmem>>, vector<1x1x3x1024xf32>
    %33 = vector.shape_cast %32 : vector<1x1x3x1024xf32> to vector<3x1024xf32>
    %34 = vector.shape_cast %31 : vector<3x1024xf32> to vector<1x1x3x1024xf32>
    tpu.vector_store %arg6[%c0_21, %c0_22, %c0_23, %c0_24], %34 {strides = array<i32>} : memref<1x3x3x1024xf32, #tpu.memory_space<vmem>>, vector<1x1x3x1024xf32>,
    %cst_25 = arith.constant dense<0.000000e+00> : vector<3xf32>
    %35 = vector.multi_reduction <add>, %31, %cst_25 [1] : vector<3x1024xf32> to vector<3xf32>
    %36 = vector.shape_cast %35 : vector<3xf32> to vector<3x1xf32>
    %c0_26 = arith.constant 0 : index
    %c0_27 = arith.constant 0 : index
    %c0_28 = arith.constant 0 : index
    %c0_29 = arith.constant 0 : index
    %37 = vector.load %arg9[%c0_26, %c0_27, %c0_28, %c0_29] : memref<1x1x3x3xf32, #tpu.memory_space<vmem>>, vector<1x1x3x1xf32>
    %38 = vector.shape_cast %37 : vector<1x1x3x1xf32> to vector<3x1xf32>
    %39 = vector.shape_cast %36 : vector<3x1xf32> to vector<1x1x3x1xf32>
    tpu.vector_store %arg9[%c0_26, %c0_27, %c0_28, %c0_29], %39 {strides = array<i32>} : memref<1x1x3x3xf32, #tpu.memory_space<vmem>>, vector<1x1x3x1xf32>,
    %c0_30 = arith.constant 0 : index
    %c0_31 = arith.constant 0 : index
    %c0_32 = arith.constant 0 : index
    %40 = vector.load %arg5[%c0_30, %c0_31, %c0_32] : memref<1x3x1024xf32, #tpu.memory_space<vmem>>, vector<1x1x1024xf32>
    %41 = vector.shape_cast %40 : vector<1x1x1024xf32> to vector<1x1024xf32>
    %42 = vector.broadcast %41 : vector<1x1024xf32> to vector<3x1024xf32>
    %43 = arith.subf %31, %42 : vector<3x1024xf32>
    %44 = arith.mulf %43, %43 : vector<3x1024xf32>
    %cst_33 = arith.constant 0.000000e+00 : f32
    %45 = vector.broadcast %cst_33 : f32 to vector<3x1024xf32>
    %46 = arith.subf %45, %44 : vector<3x1024xf32>
    %cst_34 = arith.constant 1.66666663 : f32
    %47 = vector.broadcast %cst_34 : f32 to vector<3x1024xf32>
    %48 = arith.mulf %46, %47 : vector<3x1024xf32>
    %49 = math.exp %48 : vector<3x1024xf32>
    %50 = arith.mulf %19, %49 : vector<3x1024xf32>
    %cst_35 = arith.constant dense<0.000000e+00> : vector<1024xf32>
    %51 = vector.multi_reduction <add>, %50, %cst_35 [0] : vector<3x1024xf32> to vector<1024xf32>
    %52 = vector.shape_cast %51 : vector<1024xf32> to vector<1x1024xf32>
    %cst_36 = arith.constant 1.000000e-30 : f32
    %53 = vector.broadcast %cst_36 : f32 to vector<1x1024xf32>
    %54 = arith.maximumf %52, %53 : vector<1x1024xf32>
    %55 = tpu.reciprocal %54 {approx = true} : vector<1x1024xf32> -> vector<1x1024xf32>
    %56 = vector.broadcast %55 : vector<1x1024xf32> to vector<3x1024xf32>
    %57 = arith.mulf %49, %56 : vector<3x1024xf32>
    %cst_37 = arith.constant 1.66666663 : f32
    %58 = vector.broadcast %cst_37 : f32 to vector<3x1024xf32>
    %59 = arith.mulf %58, %19 : vector<3x1024xf32>
    %60 = arith.mulf %59, %57 : vector<3x1024xf32>
    %61 = arith.mulf %60, %43 : vector<3x1024xf32>
    %cst_38 = arith.constant dense<0.000000e+00> : vector<3xf32>
    %62 = vector.multi_reduction <add>, %61, %cst_38 [1] : vector<3x1024xf32> to vector<3xf32>
    %63 = vector.shape_cast %62 : vector<3xf32> to vector<3x1xf32>
    %c0_39 = arith.constant 0 : index
    %c0_40 = arith.constant 0 : index
    %c0_41 = arith.constant 0 : index
    %c0_42 = arith.constant 0 : index
    %64 = vector.load %arg10[%c0_39, %c0_40, %c0_41, %c0_42] : memref<1x1x3x3xf32, #tpu.memory_space<vmem>>, vector<1x1x3x1xf32>
    %65 = vector.shape_cast %64 : vector<1x1x3x1xf32> to vector<3x1xf32>
    %66 = vector.shape_cast %63 : vector<3x1xf32> to vector<1x1x3x1xf32>
    tpu.vector_store %arg10[%c0_39, %c0_40, %c0_41, %c0_42], %66 {strides = array<i32>} : memref<1x1x3x3xf32, #tpu.memory_space<vmem>>, vector<1x1x3x1xf32>,
    %67 = arith.mulf %61, %61 : vector<3x1024xf32>
    %cst_43 = arith.constant dense<0.000000e+00> : vector<3xf32>
    %68 = vector.multi_reduction <add>, %67, %cst_43 [1] : vector<3x1024xf32> to vector<3xf32>
    %69 = vector.shape_cast %68 : vector<3xf32> to vector<3x1xf32>
    %70 = arith.addf %24, %69 : vector<3x1xf32>
    %71 = arith.truncf %61 : vector<3x1024xf32> to vector<3x1024xbf16>
    %72 = tpu.transpose %26, [1, 0] : vector<16x1024xbf16> -> vector<1024x16xbf16>
    %cst_44 = arith.constant dense<0.000000e+00> : vector<3x16xf32>
    %73 = tpu.matmul %71, %72, %cst_44 {dimension_numbers = #tpu.dot_dimension_numbers<[1], [0], [0], [1], [0, 0, 1, 1], [], []>} : vector<3x1024xbf16>, vector<1024x16xbf16>, vector<3x16xf32> -> vector<3x16xf32>
    %74 = arith.addf %23, %73 : vector<3x16xf32>
    %c1 = arith.constant 1 : index
    %c0_45 = arith.constant 0 : index
    %c0_46 = arith.constant 0 : index
    %75 = vector.load %arg3[%c1, %c0_45, %c0_46] : memref<4x16x1024xbf16, #tpu.memory_space<vmem>>, vector<1x16x1024xbf16>
    %76 = vector.shape_cast %75 : vector<1x16x1024xbf16> to vector<16x1024xbf16>
    %cst_47 = arith.constant dense<0.000000e+00> : vector<3x1024xf32>
    %77 = tpu.matmul %2, %76, %cst_47 {dimension_numbers = #tpu.dot_dimension_numbers<[1], [0], [0], [1], [0, 0, 1, 1], [], []>} : vector<3x16xbf16>, vector<16x1024xbf16>, vector<3x1024xf32> -> vector<3x1024xf32>
    %c1_48 = arith.constant 1 : index
    %c0_49 = arith.constant 0 : index
    %c0_50 = arith.constant 0 : index
    %78 = vector.load %arg4[%c1_48, %c0_49, %c0_50] : memref<4x1x1024xf32, #tpu.memory_space<vmem>>, vector<1x1x1024xf32>
    %79 = vector.shape_cast %78 : vector<1x1x1024xf32> to vector<1x1024xf32>
    %80 = vector.broadcast %79 : vector<1x1024xf32> to vector<3x1024xf32>
    %81 = arith.addf %77, %80 : vector<3x1024xf32>
    %c0_51 = arith.constant 0 : index
    %c1_52 = arith.constant 1 : index
    %c0_53 = arith.constant 0 : index
    %c0_54 = arith.constant 0 : index
    %82 = vector.load %arg6[%c0_51, %c1_52, %c0_53, %c0_54] : memref<1x3x3x1024xf32, #tpu.memory_space<vmem>>, vector<1x1x3x1024xf32>
    %83 = vector.shape_cast %82 : vector<1x1x3x1024xf32> to vector<3x1024xf32>
    %84 = vector.shape_cast %81 : vector<3x1024xf32> to vector<1x1x3x1024xf32>
    tpu.vector_store %arg6[%c0_51, %c1_52, %c0_53, %c0_54], %84 {strides = array<i32>} : memref<1x3x3x1024xf32, #tpu.memory_space<vmem>>, vector<1x1x3x1024xf32>,
    %cst_55 = arith.constant dense<0.000000e+00> : vector<3xf32>
    %85 = vector.multi_reduction <add>, %81, %cst_55 [1] : vector<3x1024xf32> to vector<3xf32>
    %86 = vector.shape_cast %85 : vector<3xf32> to vector<3x1xf32>
    %c0_56 = arith.constant 0 : index
    %c0_57 = arith.constant 0 : index
    %c0_58 = arith.constant 0 : index
    %c1_59 = arith.constant 1 : index
    %87 = vector.load %arg9[%c0_56, %c0_57, %c0_58, %c1_59] : memref<1x1x3x3xf32, #tpu.memory_space<vmem>>, vector<1x1x3x1xf32>
    %88 = vector.shape_cast %87 : vector<1x1x3x1xf32> to vector<3x1xf32>
    %89 = vector.shape_cast %86 : vector<3x1xf32> to vector<1x1x3x1xf32>
    tpu.vector_store %arg9[%c0_56, %c0_57, %c0_58, %c1_59], %89 {strides = array<i32>} : memref<1x1x3x3xf32, #tpu.memory_space<vmem>>, vector<1x1x3x1xf32>,
    %c0_60 = arith.constant 0 : index
    %c1_61 = arith.constant 1 : index
    %c0_62 = arith.constant 0 : index
    %90 = vector.load %arg5[%c0_60, %c1_61, %c0_62] : memref<1x3x1024xf32, #tpu.memory_space<vmem>>, vector<1x1x1024xf32>
    %91 = vector.shape_cast %90 : vector<1x1x1024xf32> to vector<1x1024xf32>
    %92 = vector.broadcast %91 : vector<1x1024xf32> to vector<3x1024xf32>
    %93 = arith.subf %81, %92 : vector<3x1024xf32>
    %94 = arith.mulf %93, %93 : vector<3x1024xf32>
    %cst_63 = arith.constant 0.000000e+00 : f32
    %95 = vector.broadcast %cst_63 : f32 to vector<3x1024xf32>
    %96 = arith.subf %95, %94 : vector<3x1024xf32>
    %cst_64 = arith.constant 1.66666663 : f32
    %97 = vector.broadcast %cst_64 : f32 to vector<3x1024xf32>
    %98 = arith.mulf %96, %97 : vector<3x1024xf32>
    %99 = math.exp %98 : vector<3x1024xf32>
    %100 = arith.mulf %49, %99 : vector<3x1024xf32>
    %101 = arith.mulf %19, %99 : vector<3x1024xf32>
    %cst_65 = arith.constant dense<0.000000e+00> : vector<1024xf32>
    %102 = vector.multi_reduction <add>, %101, %cst_65 [0] : vector<3x1024xf32> to vector<1024xf32>
    %103 = vector.shape_cast %102 : vector<1024xf32> to vector<1x1024xf32>
    %cst_66 = arith.constant 1.000000e-30 : f32
    %104 = vector.broadcast %cst_66 : f32 to vector<1x1024xf32>
    %105 = arith.maximumf %103, %104 : vector<1x1024xf32>
    %106 = arith.mulf %54, %105 : vector<1x1024xf32>
    %107 = tpu.reciprocal %105 {approx = true} : vector<1x1024xf32> -> vector<1x1024xf32>
    %108 = vector.broadcast %107 : vector<1x1024xf32> to vector<3x1024xf32>
    %109 = arith.mulf %99, %108 : vector<3x1024xf32>
    %110 = arith.addf %57, %109 : vector<3x1024xf32>
    %cst_67 = arith.constant 1.66666663 : f32
    %111 = vector.broadcast %cst_67 : f32 to vector<3x1024xf32>
    %112 = arith.mulf %111, %19 : vector<3x1024xf32>
    %113 = arith.mulf %112, %109 : vector<3x1024xf32>
    %114 = arith.mulf %113, %93 : vector<3x1024xf32>
    %cst_68 = arith.constant dense<0.000000e+00> : vector<3xf32>
    %115 = vector.multi_reduction <add>, %114, %cst_68 [1] : vector<3x1024xf32> to vector<3xf32>
    %116 = vector.shape_cast %115 : vector<3xf32> to vector<3x1xf32>
    %c0_69 = arith.constant 0 : index
    %c0_70 = arith.constant 0 : index
    %c0_71 = arith.constant 0 : index
    %c1_72 = arith.constant 1 : index
    %117 = vector.load %arg10[%c0_69, %c0_70, %c0_71, %c1_72] : memref<1x1x3x3xf32, #tpu.memory_space<vmem>>, vector<1x1x3x1xf32>
    %118 = vector.shape_cast %117 : vector<1x1x3x1xf32> to vector<3x1xf32>
    %119 = vector.shape_cast %116 : vector<3x1xf32> to vector<1x1x3x1xf32>
    tpu.vector_store %arg10[%c0_69, %c0_70, %c0_71, %c1_72], %119 {strides = array<i32>} : memref<1x1x3x3xf32, #tpu.memory_space<vmem>>, vector<1x1x3x1xf32>,
    %120 = arith.mulf %114, %114 : vector<3x1024xf32>
    %cst_73 = arith.constant dense<0.000000e+00> : vector<3xf32>
    %121 = vector.multi_reduction <add>, %120, %cst_73 [1] : vector<3x1024xf32> to vector<3xf32>
    %122 = vector.shape_cast %121 : vector<3xf32> to vector<3x1xf32>
    %123 = arith.addf %70, %122 : vector<3x1xf32>
    %124 = arith.truncf %114 : vector<3x1024xf32> to vector<3x1024xbf16>
    %125 = tpu.transpose %76, [1, 0] : vector<16x1024xbf16> -> vector<1024x16xbf16>
    %cst_74 = arith.constant dense<0.000000e+00> : vector<3x16xf32>
    %126 = tpu.matmul %124, %125, %cst_74 {dimension_numbers = #tpu.dot_dimension_numbers<[1], [0], [0], [1], [0, 0, 1, 1], [], []>} : vector<3x1024xbf16>, vector<1024x16xbf16>, vector<3x16xf32> -> vector<3x16xf32>
    %127 = arith.addf %74, %126 : vector<3x16xf32>
    %c2 = arith.constant 2 : index
    %c0_75 = arith.constant 0 : index
    %c0_76 = arith.constant 0 : index
    %128 = vector.load %arg3[%c2, %c0_75, %c0_76] : memref<4x16x1024xbf16, #tpu.memory_space<vmem>>, vector<1x16x1024xbf16>
    %129 = vector.shape_cast %128 : vector<1x16x1024xbf16> to vector<16x1024xbf16>
    %cst_77 = arith.constant dense<0.000000e+00> : vector<3x1024xf32>
    %130 = tpu.matmul %2, %129, %cst_77 {dimension_numbers = #tpu.dot_dimension_numbers<[1], [0], [0], [1], [0, 0, 1, 1], [], []>} : vector<3x16xbf16>, vector<16x1024xbf16>, vector<3x1024xf32> -> vector<3x1024xf32>
    %c2_78 = arith.constant 2 : index
    %c0_79 = arith.constant 0 : index
    %c0_80 = arith.constant 0 : index
    %131 = vector.load %arg4[%c2_78, %c0_79, %c0_80] : memref<4x1x1024xf32, #tpu.memory_space<vmem>>, vector<1x1x1024xf32>
    %132 = vector.shape_cast %131 : vector<1x1x1024xf32> to vector<1x1024xf32>
    %133 = vector.broadcast %132 : vector<1x1024xf32> to vector<3x1024xf32>
    %134 = arith.addf %130, %133 : vector<3x1024xf32>
    %c0_81 = arith.constant 0 : index
    %c2_82 = arith.constant 2 : index
    %c0_83 = arith.constant 0 : index
    %c0_84 = arith.constant 0 : index
    %135 = vector.load %arg6[%c0_81, %c2_82, %c0_83, %c0_84] : memref<1x3x3x1024xf32, #tpu.memory_space<vmem>>, vector<1x1x3x1024xf32>
    %136 = vector.shape_cast %135 : vector<1x1x3x1024xf32> to vector<3x1024xf32>
    %137 = vector.shape_cast %134 : vector<3x1024xf32> to vector<1x1x3x1024xf32>
    tpu.vector_store %arg6[%c0_81, %c2_82, %c0_83, %c0_84], %137 {strides = array<i32>} : memref<1x3x3x1024xf32, #tpu.memory_space<vmem>>, vector<1x1x3x1024xf32>,
    %cst_85 = arith.constant dense<0.000000e+00> : vector<3xf32>
    %138 = vector.multi_reduction <add>, %134, %cst_85 [1] : vector<3x1024xf32> to vector<3xf32>
    %139 = vector.shape_cast %138 : vector<3xf32> to vector<3x1xf32>
    %c0_86 = arith.constant 0 : index
    %c0_87 = arith.constant 0 : index
    %c0_88 = arith.constant 0 : index
    %c2_89 = arith.constant 2 : index
    %140 = vector.load %arg9[%c0_86, %c0_87, %c0_88, %c2_89] : memref<1x1x3x3xf32, #tpu.memory_space<vmem>>, vector<1x1x3x1xf32>
    %141 = vector.shape_cast %140 : vector<1x1x3x1xf32> to vector<3x1xf32>
    %142 = vector.shape_cast %139 : vector<3x1xf32> to vector<1x1x3x1xf32>
    tpu.vector_store %arg9[%c0_86, %c0_87, %c0_88, %c2_89], %142 {strides = array<i32>} : memref<1x1x3x3xf32, #tpu.memory_space<vmem>>, vector<1x1x3x1xf32>,
    %c0_90 = arith.constant 0 : index
    %c2_91 = arith.constant 2 : index
    %c0_92 = arith.constant 0 : index
    %143 = vector.load %arg5[%c0_90, %c2_91, %c0_92] : memref<1x3x1024xf32, #tpu.memory_space<vmem>>, vector<1x1x1024xf32>
    %144 = vector.shape_cast %143 : vector<1x1x1024xf32> to vector<1x1024xf32>
    %145 = vector.broadcast %144 : vector<1x1024xf32> to vector<3x1024xf32>
    %146 = arith.subf %134, %145 : vector<3x1024xf32>
    %147 = arith.mulf %146, %146 : vector<3x1024xf32>
    %cst_93 = arith.constant 0.000000e+00 : f32
    %148 = vector.broadcast %cst_93 : f32 to vector<3x1024xf32>
    %149 = arith.subf %148, %147 : vector<3x1024xf32>
    %cst_94 = arith.constant 1.66666663 : f32
    %150 = vector.broadcast %cst_94 : f32 to vector<3x1024xf32>
    %151 = arith.mulf %149, %150 : vector<3x1024xf32>
    %152 = math.exp %151 : vector<3x1024xf32>
    %153 = arith.mulf %100, %152 : vector<3x1024xf32>
    %154 = arith.mulf %19, %152 : vector<3x1024xf32>
    %cst_95 = arith.constant dense<0.000000e+00> : vector<1024xf32>
    %155 = vector.multi_reduction <add>, %154, %cst_95 [0] : vector<3x1024xf32> to vector<1024xf32>
    %156 = vector.shape_cast %155 : vector<1024xf32> to vector<1x1024xf32>
    %cst_96 = arith.constant 1.000000e-30 : f32
    %157 = vector.broadcast %cst_96 : f32 to vector<1x1024xf32>
    %158 = arith.maximumf %156, %157 : vector<1x1024xf32>
    %159 = arith.mulf %106, %158 : vector<1x1024xf32>
    %160 = tpu.reciprocal %158 {approx = true} : vector<1x1024xf32> -> vector<1x1024xf32>
    %161 = vector.broadcast %160 : vector<1x1024xf32> to vector<3x1024xf32>
    %162 = arith.mulf %152, %161 : vector<3x1024xf32>
    %163 = arith.addf %110, %162 : vector<3x1024xf32>
    %cst_97 = arith.constant 1.66666663 : f32
    %164 = vector.broadcast %cst_97 : f32 to vector<3x1024xf32>
    %165 = arith.mulf %164, %19 : vector<3x1024xf32>
    %166 = arith.mulf %165, %162 : vector<3x1024xf32>
    %167 = arith.mulf %166, %146 : vector<3x1024xf32>
    %cst_98 = arith.constant dense<0.000000e+00> : vector<3xf32>
    %168 = vector.multi_reduction <add>, %167, %cst_98 [1] : vector<3x1024xf32> to vector<3xf32>
    %169 = vector.shape_cast %168 : vector<3xf32> to vector<3x1xf32>
    %c0_99 = arith.constant 0 : index
    %c0_100 = arith.constant 0 : index
    %c0_101 = arith.constant 0 : index
    %c2_102 = arith.constant 2 : index
    %170 = vector.load %arg10[%c0_99, %c0_100, %c0_101, %c2_102] : memref<1x1x3x3xf32, #tpu.memory_space<vmem>>, vector<1x1x3x1xf32>
    %171 = vector.shape_cast %170 : vector<1x1x3x1xf32> to vector<3x1xf32>
    %172 = vector.shape_cast %169 : vector<3x1xf32> to vector<1x1x3x1xf32>
    tpu.vector_store %arg10[%c0_99, %c0_100, %c0_101, %c2_102], %172 {strides = array<i32>} : memref<1x1x3x3xf32, #tpu.memory_space<vmem>>, vector<1x1x3x1xf32>,
    %173 = arith.mulf %167, %167 : vector<3x1024xf32>
    %cst_103 = arith.constant dense<0.000000e+00> : vector<3xf32>
    %174 = vector.multi_reduction <add>, %173, %cst_103 [1] : vector<3x1024xf32> to vector<3xf32>
    %175 = vector.shape_cast %174 : vector<3xf32> to vector<3x1xf32>
    %176 = arith.addf %123, %175 : vector<3x1xf32>
    %177 = arith.truncf %167 : vector<3x1024xf32> to vector<3x1024xbf16>
    %178 = tpu.transpose %129, [1, 0] : vector<16x1024xbf16> -> vector<1024x16xbf16>
    %cst_104 = arith.constant dense<0.000000e+00> : vector<3x16xf32>
    %179 = tpu.matmul %177, %178, %cst_104 {dimension_numbers = #tpu.dot_dimension_numbers<[1], [0], [0], [1], [0, 0, 1, 1], [], []>} : vector<3x1024xbf16>, vector<1024x16xbf16>, vector<3x16xf32> -> vector<3x16xf32>
    %180 = arith.addf %127, %179 : vector<3x16xf32>
    %cst_105 = arith.constant -5.000000e-01 : f32
    %181 = vector.broadcast %cst_105 : f32 to vector<3x1024xf32>
    %182 = arith.mulf %181, %163 : vector<3x1024xf32>
    %183 = arith.mulf %19, %182 : vector<3x1024xf32>
    %cst_106 = arith.constant dense<0.000000e+00> : vector<1024xf32>
    %184 = vector.multi_reduction <add>, %183, %cst_106 [0] : vector<3x1024xf32> to vector<1024xf32>
    %185 = vector.shape_cast %184 : vector<1024xf32> to vector<1x1024xf32>
    %186 = vector.broadcast %185 : vector<1x1024xf32> to vector<3x1024xf32>
    %187 = arith.subf %182, %186 : vector<3x1024xf32>
    %188 = arith.mulf %19, %187 : vector<3x1024xf32>
    %189 = arith.truncf %188 : vector<3x1024xf32> to vector<3x1024xbf16>
    %190 = tpu.transpose %4, [1, 0] : vector<16x1024xbf16> -> vector<1024x16xbf16>
    %cst_107 = arith.constant dense<0.000000e+00> : vector<3x16xf32>
    %191 = tpu.matmul %189, %190, %cst_107 {dimension_numbers = #tpu.dot_dimension_numbers<[1], [0], [0], [1], [0, 0, 1, 1], [], []>} : vector<3x1024xbf16>, vector<1024x16xbf16>, vector<3x16xf32> -> vector<3x16xf32>
    %192 = arith.addf %180, %191 : vector<3x16xf32>
    %c0_108 = arith.constant 0 : index
    %c0_109 = arith.constant 0 : index
    %c0_110 = arith.constant 0 : index
    %c0_111 = arith.constant 0 : index
    %193 = vector.load %arg8[%c0_108, %c0_109, %c0_110, %c0_111] : memref<1x1x3x16xf32, #tpu.memory_space<vmem>>, vector<1x1x3x16xf32>
    %194 = vector.shape_cast %193 : vector<1x1x3x16xf32> to vector<3x16xf32>
    %195 = vector.shape_cast %192 : vector<3x16xf32> to vector<1x1x3x16xf32>
    tpu.vector_store %arg8[%c0_108, %c0_109, %c0_110, %c0_111], %195 {strides = array<i32>} : memref<1x1x3x16xf32, #tpu.memory_space<vmem>>, vector<1x1x3x16xf32>,
    %cst_112 = arith.constant 9.99999991E-38 : f32
    %196 = vector.broadcast %cst_112 : f32 to vector<1x1024xf32>
    %197 = arith.maximumf %159, %196 : vector<1x1024xf32>
    %198 = math.log %197 : vector<1x1024xf32>
    %cst_113 = arith.constant dense<0.000000e+00> : vector<1xf32>
    %199 = vector.multi_reduction <add>, %198, %cst_113 [1] : vector<1x1024xf32> to vector<1xf32>
    %200 = vector.shape_cast %199 : vector<1xf32> to vector<1x1xf32>
    %c0_114 = arith.constant 0 : index
    %c0_115 = arith.constant 0 : index
    %c0_116 = arith.constant 0 : index
    %c0_117 = arith.constant 0 : index
    %201 = vector.load %arg12[%c0_114, %c0_115, %c0_116, %c0_117] : memref<1x1x1x1xf32, #tpu.memory_space<vmem>>, vector<1x1x1x1xf32>
    %202 = vector.shape_cast %201 : vector<1x1x1x1xf32> to vector<1x1xf32>
    %203 = vector.shape_cast %200 : vector<1x1xf32> to vector<1x1x1x1xf32>
    tpu.vector_store %arg12[%c0_114, %c0_115, %c0_116, %c0_117], %203 {strides = array<i32>} : memref<1x1x1x1xf32, #tpu.memory_space<vmem>>, vector<1x1x1x1xf32>,
    %cst_118 = arith.constant dense<0xFF800000> : vector<1024xf32>
    %204 = vector.multi_reduction <maximumf>, %153, %cst_118 [0] : vector<3x1024xf32> to vector<1024xf32>
    %205 = vector.shape_cast %204 : vector<1024xf32> to vector<1x1024xf32>
    %206 = vector.broadcast %205 : vector<1x1024xf32> to vector<3x1024xf32>
    %207 = arith.subf %153, %206 : vector<3x1024xf32>
    %208 = math.exp %207 : vector<3x1024xf32>
    %cst_119 = arith.constant dense<0.000000e+00> : vector<1024xf32>
    %209 = vector.multi_reduction <add>, %208, %cst_119 [0] : vector<3x1024xf32> to vector<1024xf32>
    %210 = vector.shape_cast %209 : vector<1024xf32> to vector<1x1024xf32>
    %211 = tpu.reciprocal %210 {approx = true} : vector<1x1024xf32> -> vector<1x1024xf32>
    %212 = vector.broadcast %211 : vector<1x1024xf32> to vector<3x1024xf32>
    %213 = arith.mulf %208, %212 : vector<3x1024xf32>
    %cst_120 = arith.constant dense<0.000000e+00> : vector<3xf32>
    %214 = vector.multi_reduction <add>, %19, %cst_120 [1] : vector<3x1024xf32> to vector<3xf32>
    %215 = vector.shape_cast %214 : vector<3xf32> to vector<3x1xf32>
    %c0_121 = arith.constant 0 : index
    %c0_122 = arith.constant 0 : index
    %c0_123 = arith.constant 0 : index
    %c0_124 = arith.constant 0 : index
    %216 = vector.load %arg11[%c0_121, %c0_122, %c0_123, %c0_124] : memref<1x1x3x4xf32, #tpu.memory_space<vmem>>, vector<1x1x3x1xf32>
    %217 = vector.shape_cast %216 : vector<1x1x3x1xf32> to vector<3x1xf32>
    %218 = vector.shape_cast %215 : vector<3x1xf32> to vector<1x1x3x1xf32>
    tpu.vector_store %arg11[%c0_121, %c0_122, %c0_123, %c0_124], %218 {strides = array<i32>} : memref<1x1x3x4xf32, #tpu.memory_space<vmem>>, vector<1x1x3x1xf32>,
    %cst_125 = arith.constant dense<0.000000e+00> : vector<3xf32>
    %219 = vector.multi_reduction <add>, %9, %cst_125 [1] : vector<3x1024xf32> to vector<3xf32>
    %220 = vector.shape_cast %219 : vector<3xf32> to vector<3x1xf32>
    %c0_126 = arith.constant 0 : index
    %c0_127 = arith.constant 0 : index
    %c0_128 = arith.constant 0 : index
    %c1_129 = arith.constant 1 : index
    %221 = vector.load %arg11[%c0_126, %c0_127, %c0_128, %c1_129] : memref<1x1x3x4xf32, #tpu.memory_space<vmem>>, vector<1x1x3x1xf32>
    %222 = vector.shape_cast %221 : vector<1x1x3x1xf32> to vector<3x1xf32>
    %223 = vector.shape_cast %220 : vector<3x1xf32> to vector<1x1x3x1xf32>
    tpu.vector_store %arg11[%c0_126, %c0_127, %c0_128, %c1_129], %223 {strides = array<i32>} : memref<1x1x3x4xf32, #tpu.memory_space<vmem>>, vector<1x1x3x1xf32>,
    %cst_130 = arith.constant dense<0.000000e+00> : vector<3xf32>
    %224 = vector.multi_reduction <add>, %213, %cst_130 [1] : vector<3x1024xf32> to vector<3xf32>
    %225 = vector.shape_cast %224 : vector<3xf32> to vector<3x1xf32>
    %c0_131 = arith.constant 0 : index
    %c0_132 = arith.constant 0 : index
    %c0_133 = arith.constant 0 : index
    %c2_134 = arith.constant 2 : index
    %226 = vector.load %arg11[%c0_131, %c0_132, %c0_133, %c2_134] : memref<1x1x3x4xf32, #tpu.memory_space<vmem>>, vector<1x1x3x1xf32>
    %227 = vector.shape_cast %226 : vector<1x1x3x1xf32> to vector<3x1xf32>
    %228 = vector.shape_cast %225 : vector<3x1xf32> to vector<1x1x3x1xf32>
    tpu.vector_store %arg11[%c0_131, %c0_132, %c0_133, %c2_134], %228 {strides = array<i32>} : memref<1x1x3x4xf32, #tpu.memory_space<vmem>>, vector<1x1x3x1xf32>,
    %c0_135 = arith.constant 0 : index
    %c0_136 = arith.constant 0 : index
    %c0_137 = arith.constant 0 : index
    %c3_138 = arith.constant 3 : index
    %229 = vector.load %arg11[%c0_135, %c0_136, %c0_137, %c3_138] : memref<1x1x3x4xf32, #tpu.memory_space<vmem>>, vector<1x1x3x1xf32>
    %230 = vector.shape_cast %229 : vector<1x1x3x1xf32> to vector<3x1xf32>
    %231 = vector.shape_cast %176 : vector<3x1xf32> to vector<1x1x3x1xf32>
    tpu.vector_store %arg11[%c0_135, %c0_136, %c0_137, %c3_138], %231 {strides = array<i32>} : memref<1x1x3x4xf32, #tpu.memory_space<vmem>>, vector<1x1x3x1xf32>,
    return
  }
  func.func @transform_0(%arg0: i32, %arg1: i32) -> (i32, i32, i32) {
    %c0_i32 = arith.constant 0 : i32
    %c0_i32_0 = arith.constant 0 : i32
    %c0_i32_1 = arith.constant 0 : i32
    return %arg1, %c0_i32, %c0_i32_0 : i32, i32, i32
  }
  func.func @transform_1(%arg0: i32, %arg1: i32) -> (i32, i32, i32) {
    %c0_i32 = arith.constant 0 : i32
    %c0_i32_0 = arith.constant 0 : i32
    %c0_i32_1 = arith.constant 0 : i32
    return %c0_i32, %c0_i32_0, %arg0 : i32, i32, i32
  }
  func.func @transform_2(%arg0: i32, %arg1: i32) -> (i32, i32, i32) {
    %c0_i32 = arith.constant 0 : i32
    %c0_i32_0 = arith.constant 0 : i32
    %c0_i32_1 = arith.constant 0 : i32
    return %c0_i32, %c0_i32_0, %arg0 : i32, i32, i32
  }
  func.func @transform_3(%arg0: i32, %arg1: i32) -> (i32, i32, i32) {
    %c0_i32 = arith.constant 0 : i32
    %c0_i32_0 = arith.constant 0 : i32
    return %arg1, %c0_i32, %arg0 : i32, i32, i32
  }
  func.func @transform_4(%arg0: i32, %arg1: i32) -> (i32, i32, i32, i32) {
    %c0_i32 = arith.constant 0 : i32
    %c0_i32_0 = arith.constant 0 : i32
    %c0_i32_1 = arith.constant 0 : i32
    return %arg1, %c0_i32, %c0_i32_0, %arg0 : i32, i32, i32, i32
  }
  func.func @transform_5(%arg0: i32, %arg1: i32) -> (i32, i32, i32) {
    %c0_i32 = arith.constant 0 : i32
    %c0_i32_0 = arith.constant 0 : i32
    return %arg1, %c0_i32, %arg0 : i32, i32, i32
  }
  func.func @transform_6(%arg0: i32, %arg1: i32) -> (i32, i32, i32, i32) {
    %c0_i32 = arith.constant 0 : i32
    %c0_i32_0 = arith.constant 0 : i32
    %c0_i32_1 = arith.constant 0 : i32
    return %arg0, %arg1, %c0_i32, %c0_i32_0 : i32, i32, i32, i32
  }
  func.func @transform_7(%arg0: i32, %arg1: i32) -> (i32, i32, i32, i32) {
    %c0_i32 = arith.constant 0 : i32
    %c0_i32_0 = arith.constant 0 : i32
    %c0_i32_1 = arith.constant 0 : i32
    return %arg0, %arg1, %c0_i32, %c0_i32_0 : i32, i32, i32, i32
  }
  func.func @transform_8(%arg0: i32, %arg1: i32) -> (i32, i32, i32, i32) {
    %c0_i32 = arith.constant 0 : i32
    %c0_i32_0 = arith.constant 0 : i32
    %c0_i32_1 = arith.constant 0 : i32
    return %arg0, %arg1, %c0_i32, %c0_i32_0 : i32, i32, i32, i32
  }
  func.func @transform_9(%arg0: i32, %arg1: i32) -> (i32, i32, i32, i32) {
    %c0_i32 = arith.constant 0 : i32
    %c0_i32_0 = arith.constant 0 : i32
    %c0_i32_1 = arith.constant 0 : i32
    return %arg0, %arg1, %c0_i32, %c0_i32_0 : i32, i32, i32, i32
  }
  func.func @transform_10(%arg0: i32, %arg1: i32) -> (i32, i32, i32, i32) {
    %c0_i32 = arith.constant 0 : i32
    %c0_i32_0 = arith.constant 0 : i32
    %c0_i32_1 = arith.constant 0 : i32
    return %arg0, %arg1, %c0_i32, %c0_i32_0 : i32, i32, i32, i32
  }
}

module attributes {stable_mosaic.version = 11 : i64} {
  func.func @_refine_kernel(%arg0: memref<6x80xf32, #tpu.memory_space<vmem>>, %arg1: memref<6x128xf32, #tpu.memory_space<vmem>>, %arg2: memref<6x128xf32, #tpu.memory_space<vmem>>, %arg3: memref<80x128xf32, #tpu.memory_space<vmem>>, %arg4: memref<1x128xf32, #tpu.memory_space<vmem>>, %arg5: memref<256x512xf32, #tpu.memory_space<vmem>>, %arg6: memref<1x512xf32, #tpu.memory_space<vmem>>, %arg7: memref<128x32xf32, #tpu.memory_space<vmem>>, %arg8: memref<1x32xf32, #tpu.memory_space<vmem>>, %arg9: memref<6x32xf32, #tpu.memory_space<vmem>>, %arg10: memref<6x128xf32, #tpu.memory_space<vmem>>, %arg11: memref<6x128xf32, #tpu.memory_space<vmem>>) attributes {dimension_semantics = [], scalar_prefetch = 0 : i64, scratch_operands = 0 : i64, tpu.core_type = #tpu.core_type<tc>} {
    %c0 = arith.constant 0 : index
    %c0_0 = arith.constant 0 : index
    %0 = vector.load %arg0[%c0, %c0_0] : memref<6x80xf32, #tpu.memory_space<vmem>>, vector<6x80xf32>
    %c0_1 = arith.constant 0 : index
    %c0_2 = arith.constant 0 : index
    %1 = vector.load %arg3[%c0_1, %c0_2] : memref<80x128xf32, #tpu.memory_space<vmem>>, vector<80x128xf32>
    %cst = arith.constant dense<0.000000e+00> : vector<6x128xf32>
    %2 = tpu.matmul %0, %1, %cst {dimension_numbers = #tpu.dot_dimension_numbers<[1], [0], [0], [1], [0, 0, 1, 1], [], []>} : vector<6x80xf32>, vector<80x128xf32>, vector<6x128xf32> -> vector<6x128xf32>
    %c0_3 = arith.constant 0 : index
    %c0_4 = arith.constant 0 : index
    %3 = vector.load %arg4[%c0_3, %c0_4] : memref<1x128xf32, #tpu.memory_space<vmem>>, vector<1x128xf32>
    %4 = vector.broadcast %3 : vector<1x128xf32> to vector<6x128xf32>
    %5 = arith.addf %2, %4 : vector<6x128xf32>
    %cst_5 = arith.constant 0.000000e+00 : f32
    %6 = vector.broadcast %cst_5 : f32 to vector<6x128xf32>
    %7 = arith.cmpf ogt, %5, %6 : vector<6x128xf32>
    %cst_6 = arith.constant 0.000000e+00 : f32
    %8 = vector.broadcast %cst_6 : f32 to vector<6x128xf32>
    %9 = arith.minimumf %5, %8 : vector<6x128xf32>
    %10 = math.exp %9 : vector<6x128xf32>
    %cst_7 = arith.constant 1.000000e+00 : f32
    %11 = vector.broadcast %cst_7 : f32 to vector<6x128xf32>
    %12 = arith.subf %10, %11 : vector<6x128xf32>
    %13 = arith.select %7, %5, %12 : vector<6x128xi1>, vector<6x128xf32>
    %c0_8 = arith.constant 0 : index
    %c0_9 = arith.constant 0 : index
    %14 = vector.load %arg1[%c0_8, %c0_9] : memref<6x128xf32, #tpu.memory_space<vmem>>, vector<6x128xf32>
    %15 = tpu.concatenate %13, %14 in 1 : vector<6x128xf32>, vector<6x128xf32> -> vector<6x256xf32>
    %c0_10 = arith.constant 0 : index
    %c0_11 = arith.constant 0 : index
    %16 = vector.load %arg5[%c0_10, %c0_11] : memref<256x512xf32, #tpu.memory_space<vmem>>, vector<256x512xf32>
    %cst_12 = arith.constant dense<0.000000e+00> : vector<6x512xf32>
    %17 = tpu.matmul %15, %16, %cst_12 {dimension_numbers = #tpu.dot_dimension_numbers<[1], [0], [0], [1], [0, 0, 1, 1], [], []>} : vector<6x256xf32>, vector<256x512xf32>, vector<6x512xf32> -> vector<6x512xf32>
    %c0_13 = arith.constant 0 : index
    %c0_14 = arith.constant 0 : index
    %18 = vector.load %arg6[%c0_13, %c0_14] : memref<1x512xf32, #tpu.memory_space<vmem>>, vector<1x512xf32>
    %19 = vector.broadcast %18 : vector<1x512xf32> to vector<6x512xf32>
    %20 = arith.addf %17, %19 : vector<6x512xf32>
    %21 = vector.extract_strided_slice %20 {offsets = [0, 0], sizes = [6, 128], strides = [1, 1]} : vector<6x512xf32> to vector<6x128xf32>
    %22 = vector.extract_strided_slice %20 {offsets = [0, 128], sizes = [6, 128], strides = [1, 1]} : vector<6x512xf32> to vector<6x128xf32>
    %23 = vector.extract_strided_slice %20 {offsets = [0, 256], sizes = [6, 128], strides = [1, 1]} : vector<6x512xf32> to vector<6x128xf32>
    %24 = vector.extract_strided_slice %20 {offsets = [0, 384], sizes = [6, 128], strides = [1, 1]} : vector<6x512xf32> to vector<6x128xf32>
    %cst_15 = arith.constant 0.000000e+00 : f32
    %25 = vector.broadcast %cst_15 : f32 to vector<6x128xf32>
    %26 = arith.subf %25, %22 : vector<6x128xf32>
    %27 = math.exp %26 : vector<6x128xf32>
    %cst_16 = arith.constant 1.000000e+00 : f32
    %28 = vector.broadcast %cst_16 : f32 to vector<6x128xf32>
    %29 = arith.addf %28, %27 : vector<6x128xf32>
    %cst_17 = arith.constant 1.000000e+00 : f32
    %30 = vector.broadcast %cst_17 : f32 to vector<6x128xf32>
    %31 = arith.divf %30, %29 : vector<6x128xf32>
    %c0_18 = arith.constant 0 : index
    %c0_19 = arith.constant 0 : index
    %32 = vector.load %arg2[%c0_18, %c0_19] : memref<6x128xf32, #tpu.memory_space<vmem>>, vector<6x128xf32>
    %33 = arith.mulf %31, %32 : vector<6x128xf32>
    %cst_20 = arith.constant 0.000000e+00 : f32
    %34 = vector.broadcast %cst_20 : f32 to vector<6x128xf32>
    %35 = arith.subf %34, %21 : vector<6x128xf32>
    %36 = math.exp %35 : vector<6x128xf32>
    %cst_21 = arith.constant 1.000000e+00 : f32
    %37 = vector.broadcast %cst_21 : f32 to vector<6x128xf32>
    %38 = arith.addf %37, %36 : vector<6x128xf32>
    %cst_22 = arith.constant 1.000000e+00 : f32
    %39 = vector.broadcast %cst_22 : f32 to vector<6x128xf32>
    %40 = arith.divf %39, %38 : vector<6x128xf32>
    %41 = math.tanh %23 : vector<6x128xf32>
    %42 = arith.mulf %40, %41 : vector<6x128xf32>
    %43 = arith.addf %33, %42 : vector<6x128xf32>
    %cst_23 = arith.constant 0.000000e+00 : f32
    %44 = vector.broadcast %cst_23 : f32 to vector<6x128xf32>
    %45 = arith.subf %44, %24 : vector<6x128xf32>
    %46 = math.exp %45 : vector<6x128xf32>
    %cst_24 = arith.constant 1.000000e+00 : f32
    %47 = vector.broadcast %cst_24 : f32 to vector<6x128xf32>
    %48 = arith.addf %47, %46 : vector<6x128xf32>
    %cst_25 = arith.constant 1.000000e+00 : f32
    %49 = vector.broadcast %cst_25 : f32 to vector<6x128xf32>
    %50 = arith.divf %49, %48 : vector<6x128xf32>
    %51 = math.tanh %43 : vector<6x128xf32>
    %52 = arith.mulf %50, %51 : vector<6x128xf32>
    %c0_26 = arith.constant 0 : index
    %c0_27 = arith.constant 0 : index
    %53 = vector.load %arg7[%c0_26, %c0_27] : memref<128x32xf32, #tpu.memory_space<vmem>>, vector<128x32xf32>
    %cst_28 = arith.constant dense<0.000000e+00> : vector<6x32xf32>
    %54 = tpu.matmul %52, %53, %cst_28 {dimension_numbers = #tpu.dot_dimension_numbers<[1], [0], [0], [1], [0, 0, 1, 1], [], []>} : vector<6x128xf32>, vector<128x32xf32>, vector<6x32xf32> -> vector<6x32xf32>
    %c0_29 = arith.constant 0 : index
    %c0_30 = arith.constant 0 : index
    %55 = vector.load %arg8[%c0_29, %c0_30] : memref<1x32xf32, #tpu.memory_space<vmem>>, vector<1x32xf32>
    %56 = vector.broadcast %55 : vector<1x32xf32> to vector<6x32xf32>
    %57 = arith.addf %54, %56 : vector<6x32xf32>
    %c0_31 = arith.constant 0 : index
    %c0_32 = arith.constant 0 : index
    %58 = vector.load %arg9[%c0_31, %c0_32] : memref<6x32xf32, #tpu.memory_space<vmem>>, vector<6x32xf32>
    tpu.vector_store %arg9[%c0_31, %c0_32], %57 {strides = array<i32>} : memref<6x32xf32, #tpu.memory_space<vmem>>, vector<6x32xf32>,
    %c0_33 = arith.constant 0 : index
    %c0_34 = arith.constant 0 : index
    %59 = vector.load %arg10[%c0_33, %c0_34] : memref<6x128xf32, #tpu.memory_space<vmem>>, vector<6x128xf32>
    tpu.vector_store %arg10[%c0_33, %c0_34], %52 {strides = array<i32>} : memref<6x128xf32, #tpu.memory_space<vmem>>, vector<6x128xf32>,
    %c0_35 = arith.constant 0 : index
    %c0_36 = arith.constant 0 : index
    %60 = vector.load %arg11[%c0_35, %c0_36] : memref<6x128xf32, #tpu.memory_space<vmem>>, vector<6x128xf32>
    tpu.vector_store %arg11[%c0_35, %c0_36], %43 {strides = array<i32>} : memref<6x128xf32, #tpu.memory_space<vmem>>, vector<6x128xf32>,
    return
  }
}

module attributes {stable_mosaic.version = 11 : i64} {
  func.func @_refine_kernel(%arg0: memref<6x80xf32, #tpu.memory_space<vmem>>, %arg1: memref<6x128xf32, #tpu.memory_space<vmem>>, %arg2: memref<6x128xf32, #tpu.memory_space<vmem>>, %arg3: memref<80x128xf32, #tpu.memory_space<vmem>>, %arg4: memref<1x128xf32, #tpu.memory_space<vmem>>, %arg5: memref<256x512xf32, #tpu.memory_space<vmem>>, %arg6: memref<1x512xf32, #tpu.memory_space<vmem>>, %arg7: memref<128x32xf32, #tpu.memory_space<vmem>>, %arg8: memref<1x32xf32, #tpu.memory_space<vmem>>, %arg9: memref<6x32xf32, #tpu.memory_space<vmem>>, %arg10: memref<6x128xf32, #tpu.memory_space<vmem>>, %arg11: memref<6x128xf32, #tpu.memory_space<vmem>>) attributes {dimension_semantics = [], scalar_prefetch = 0 : i64, scratch_operands = 0 : i64, tpu.core_type = #tpu.core_type<tc>} {
    %c0 = arith.constant 0 : index
    %c0_0 = arith.constant 0 : index
    %0 = vector.load %arg0[%c0, %c0_0] : memref<6x80xf32, #tpu.memory_space<vmem>>, vector<6x80xf32>
    %c0_1 = arith.constant 0 : index
    %c0_2 = arith.constant 0 : index
    %1 = vector.load %arg3[%c0_1, %c0_2] : memref<80x128xf32, #tpu.memory_space<vmem>>, vector<80x128xf32>
    %cst = arith.constant dense<0.000000e+00> : vector<6x128xf32>
    %2 = tpu.matmul %0, %1, %cst {dimension_numbers = #tpu.dot_dimension_numbers<[1], [0], [0], [1], [0, 0, 1, 1], [], []>} : vector<6x80xf32>, vector<80x128xf32>, vector<6x128xf32> -> vector<6x128xf32>
    %c0_3 = arith.constant 0 : index
    %c0_4 = arith.constant 0 : index
    %3 = vector.load %arg4[%c0_3, %c0_4] : memref<1x128xf32, #tpu.memory_space<vmem>>, vector<1x128xf32>
    %4 = vector.broadcast %3 : vector<1x128xf32> to vector<6x128xf32>
    %5 = arith.addf %2, %4 : vector<6x128xf32>
    %cst_5 = arith.constant 0.000000e+00 : f32
    %6 = vector.broadcast %cst_5 : f32 to vector<6x128xf32>
    %7 = arith.cmpf ogt, %5, %6 : vector<6x128xf32>
    %cst_6 = arith.constant 0.000000e+00 : f32
    %8 = vector.broadcast %cst_6 : f32 to vector<6x128xf32>
    %9 = arith.minimumf %5, %8 : vector<6x128xf32>
    %10 = math.exp %9 : vector<6x128xf32>
    %cst_7 = arith.constant 1.000000e+00 : f32
    %11 = vector.broadcast %cst_7 : f32 to vector<6x128xf32>
    %12 = arith.subf %10, %11 : vector<6x128xf32>
    %13 = arith.select %7, %5, %12 : vector<6x128xi1>, vector<6x128xf32>
    %c0_8 = arith.constant 0 : index
    %c0_9 = arith.constant 0 : index
    %14 = vector.load %arg1[%c0_8, %c0_9] : memref<6x128xf32, #tpu.memory_space<vmem>>, vector<6x128xf32>
    %15 = tpu.concatenate %13, %14 in 1 : vector<6x128xf32>, vector<6x128xf32> -> vector<6x256xf32>
    %c0_10 = arith.constant 0 : index
    %c0_11 = arith.constant 0 : index
    %16 = vector.load %arg5[%c0_10, %c0_11] : memref<256x512xf32, #tpu.memory_space<vmem>>, vector<256x512xf32>
    %cst_12 = arith.constant dense<0.000000e+00> : vector<6x512xf32>
    %17 = tpu.matmul %15, %16, %cst_12 {dimension_numbers = #tpu.dot_dimension_numbers<[1], [0], [0], [1], [0, 0, 1, 1], [], []>} : vector<6x256xf32>, vector<256x512xf32>, vector<6x512xf32> -> vector<6x512xf32>
    %c0_13 = arith.constant 0 : index
    %c0_14 = arith.constant 0 : index
    %18 = vector.load %arg6[%c0_13, %c0_14] : memref<1x512xf32, #tpu.memory_space<vmem>>, vector<1x512xf32>
    %19 = vector.broadcast %18 : vector<1x512xf32> to vector<6x512xf32>
    %20 = arith.addf %17, %19 : vector<6x512xf32>
    %21 = vector.extract_strided_slice %20 {offsets = [0, 0], sizes = [6, 128], strides = [1, 1]} : vector<6x512xf32> to vector<6x128xf32>
    %22 = vector.extract_strided_slice %20 {offsets = [0, 128], sizes = [6, 128], strides = [1, 1]} : vector<6x512xf32> to vector<6x128xf32>
    %23 = vector.extract_strided_slice %20 {offsets = [0, 256], sizes = [6, 128], strides = [1, 1]} : vector<6x512xf32> to vector<6x128xf32>
    %24 = vector.extract_strided_slice %20 {offsets = [0, 384], sizes = [6, 128], strides = [1, 1]} : vector<6x512xf32> to vector<6x128xf32>
    %cst_15 = arith.constant 0.000000e+00 : f32
    %25 = vector.broadcast %cst_15 : f32 to vector<6x128xf32>
    %26 = arith.subf %25, %22 : vector<6x128xf32>
    %27 = math.exp %26 : vector<6x128xf32>
    %cst_16 = arith.constant 1.000000e+00 : f32
    %28 = vector.broadcast %cst_16 : f32 to vector<6x128xf32>
    %29 = arith.addf %28, %27 : vector<6x128xf32>
    %cst_17 = arith.constant 1.000000e+00 : f32
    %30 = vector.broadcast %cst_17 : f32 to vector<6x128xf32>
    %31 = arith.divf %30, %29 : vector<6x128xf32>
    %c0_18 = arith.constant 0 : index
    %c0_19 = arith.constant 0 : index
    %32 = vector.load %arg2[%c0_18, %c0_19] : memref<6x128xf32, #tpu.memory_space<vmem>>, vector<6x128xf32>
    %33 = arith.mulf %31, %32 : vector<6x128xf32>
    %cst_20 = arith.constant 0.000000e+00 : f32
    %34 = vector.broadcast %cst_20 : f32 to vector<6x128xf32>
    %35 = arith.subf %34, %21 : vector<6x128xf32>
    %36 = math.exp %35 : vector<6x128xf32>
    %cst_21 = arith.constant 1.000000e+00 : f32
    %37 = vector.broadcast %cst_21 : f32 to vector<6x128xf32>
    %38 = arith.addf %37, %36 : vector<6x128xf32>
    %cst_22 = arith.constant 1.000000e+00 : f32
    %39 = vector.broadcast %cst_22 : f32 to vector<6x128xf32>
    %40 = arith.divf %39, %38 : vector<6x128xf32>
    %41 = math.tanh %23 : vector<6x128xf32>
    %42 = arith.mulf %40, %41 : vector<6x128xf32>
    %43 = arith.addf %33, %42 : vector<6x128xf32>
    %cst_23 = arith.constant 0.000000e+00 : f32
    %44 = vector.broadcast %cst_23 : f32 to vector<6x128xf32>
    %45 = arith.subf %44, %24 : vector<6x128xf32>
    %46 = math.exp %45 : vector<6x128xf32>
    %cst_24 = arith.constant 1.000000e+00 : f32
    %47 = vector.broadcast %cst_24 : f32 to vector<6x128xf32>
    %48 = arith.addf %47, %46 : vector<6x128xf32>
    %cst_25 = arith.constant 1.000000e+00 : f32
    %49 = vector.broadcast %cst_25 : f32 to vector<6x128xf32>
    %50 = arith.divf %49, %48 : vector<6x128xf32>
    %51 = math.tanh %43 : vector<6x128xf32>
    %52 = arith.mulf %50, %51 : vector<6x128xf32>
    %c0_26 = arith.constant 0 : index
    %c0_27 = arith.constant 0 : index
    %53 = vector.load %arg7[%c0_26, %c0_27] : memref<128x32xf32, #tpu.memory_space<vmem>>, vector<128x32xf32>
    %cst_28 = arith.constant dense<0.000000e+00> : vector<6x32xf32>
    %54 = tpu.matmul %52, %53, %cst_28 {dimension_numbers = #tpu.dot_dimension_numbers<[1], [0], [0], [1], [0, 0, 1, 1], [], []>} : vector<6x128xf32>, vector<128x32xf32>, vector<6x32xf32> -> vector<6x32xf32>
    %c0_29 = arith.constant 0 : index
    %c0_30 = arith.constant 0 : index
    %55 = vector.load %arg8[%c0_29, %c0_30] : memref<1x32xf32, #tpu.memory_space<vmem>>, vector<1x32xf32>
    %56 = vector.broadcast %55 : vector<1x32xf32> to vector<6x32xf32>
    %57 = arith.addf %54, %56 : vector<6x32xf32>
    %c0_31 = arith.constant 0 : index
    %c0_32 = arith.constant 0 : index
    %58 = vector.load %arg9[%c0_31, %c0_32] : memref<6x32xf32, #tpu.memory_space<vmem>>, vector<6x32xf32>
    tpu.vector_store %arg9[%c0_31, %c0_32], %57 {strides = array<i32>} : memref<6x32xf32, #tpu.memory_space<vmem>>, vector<6x32xf32>,
    %c0_33 = arith.constant 0 : index
    %c0_34 = arith.constant 0 : index
    %59 = vector.load %arg10[%c0_33, %c0_34] : memref<6x128xf32, #tpu.memory_space<vmem>>, vector<6x128xf32>
    tpu.vector_store %arg10[%c0_33, %c0_34], %52 {strides = array<i32>} : memref<6x128xf32, #tpu.memory_space<vmem>>, vector<6x128xf32>,
    %c0_35 = arith.constant 0 : index
    %c0_36 = arith.constant 0 : index
    %60 = vector.load %arg11[%c0_35, %c0_36] : memref<6x128xf32, #tpu.memory_space<vmem>>, vector<6x128xf32>
    tpu.vector_store %arg11[%c0_35, %c0_36], %43 {strides = array<i32>} : memref<6x128xf32, #tpu.memory_space<vmem>>, vector<6x128xf32>,
    return
  }
}

module attributes {stable_mosaic.version = 11 : i64} {
  func.func @_decode_grad_kernel(%arg0: i32, %arg1: i32, %arg2: memref<1x3x16xf32, #tpu.memory_space<vmem>>, %arg3: memref<4x16x1024xbf16, #tpu.memory_space<vmem>>, %arg4: memref<4x1x1024xf32, #tpu.memory_space<vmem>>, %arg5: memref<1x3x1024xf32, #tpu.memory_space<vmem>>, %arg6: memref<1x3x3x1024xf32, #tpu.memory_space<vmem>>, %arg7: memref<1x3x1024xf32, #tpu.memory_space<vmem>>, %arg8: memref<1x1x3x16xf32, #tpu.memory_space<vmem>>, %arg9: memref<1x1x3x3xf32, #tpu.memory_space<vmem>>, %arg10: memref<1x1x3x3xf32, #tpu.memory_space<vmem>>, %arg11: memref<1x1x3x4xf32, #tpu.memory_space<vmem>>, %arg12: memref<1x1x1x1xf32, #tpu.memory_space<vmem>>) attributes {dimension_semantics = [#tpu.dimension_semantics<parallel>, #tpu.dimension_semantics<parallel>], iteration_bounds = array<i64: 4, 2>, scalar_prefetch = 0 : i64, scratch_operands = 0 : i64, tpu.core_type = #tpu.core_type<tc>, window_params = [{transform_indices = @transform_0, window_bounds = array<i64: 1, 3, 16>}, {transform_indices = @transform_1, window_bounds = array<i64: 4, 16, 1024>}, {transform_indices = @transform_2, window_bounds = array<i64: 4, 1, 1024>}, {transform_indices = @transform_3, window_bounds = array<i64: 1, 3, 1024>}, {transform_indices = @transform_4, window_bounds = array<i64: 1, 3, 3, 1024>}, {transform_indices = @transform_5, window_bounds = array<i64: 1, 3, 1024>}, {transform_indices = @transform_6, window_bounds = array<i64: 1, 1, 3, 16>}, {transform_indices = @transform_7, window_bounds = array<i64: 1, 1, 3, 3>}, {transform_indices = @transform_8, window_bounds = array<i64: 1, 1, 3, 3>}, {transform_indices = @transform_9, window_bounds = array<i64: 1, 1, 3, 4>}, {transform_indices = @transform_10, window_bounds = array<i64: 1, 1, 1, 1>}]} {
    %c0 = arith.constant 0 : index
    %c0_0 = arith.constant 0 : index
    %c0_1 = arith.constant 0 : index
    %0 = vector.load %arg2[%c0, %c0_0, %c0_1] : memref<1x3x16xf32, #tpu.memory_space<vmem>>, vector<1x3x16xf32>
    %1 = vector.shape_cast %0 : vector<1x3x16xf32> to vector<3x16xf32>
    %2 = arith.truncf %1 : vector<3x16xf32> to vector<3x16xbf16>
    %c3 = arith.constant 3 : index
    %c0_2 = arith.constant 0 : index
    %c0_3 = arith.constant 0 : index
    %3 = vector.load %arg3[%c3, %c0_2, %c0_3] : memref<4x16x1024xbf16, #tpu.memory_space<vmem>>, vector<1x16x1024xbf16>
    %4 = vector.shape_cast %3 : vector<1x16x1024xbf16> to vector<16x1024xbf16>
    %cst = arith.constant dense<0.000000e+00> : vector<3x1024xf32>
    %5 = tpu.matmul %2, %4, %cst {dimension_numbers = #tpu.dot_dimension_numbers<[1], [0], [0], [1], [0, 0, 1, 1], [], []>} : vector<3x16xbf16>, vector<16x1024xbf16>, vector<3x1024xf32> -> vector<3x1024xf32>
    %c3_4 = arith.constant 3 : index
    %c0_5 = arith.constant 0 : index
    %c0_6 = arith.constant 0 : index
    %6 = vector.load %arg4[%c3_4, %c0_5, %c0_6] : memref<4x1x1024xf32, #tpu.memory_space<vmem>>, vector<1x1x1024xf32>
    %7 = vector.shape_cast %6 : vector<1x1x1024xf32> to vector<1x1024xf32>
    %8 = vector.broadcast %7 : vector<1x1024xf32> to vector<3x1024xf32>
    %9 = arith.addf %5, %8 : vector<3x1024xf32>
    %cst_7 = arith.constant dense<0xFF800000> : vector<1024xf32>
    %10 = vector.multi_reduction <maximumf>, %9, %cst_7 [0] : vector<3x1024xf32> to vector<1024xf32>
    %11 = vector.shape_cast %10 : vector<1024xf32> to vector<1x1024xf32>
    %12 = vector.broadcast %11 : vector<1x1024xf32> to vector<3x1024xf32>
    %13 = arith.subf %9, %12 : vector<3x1024xf32>
    %14 = math.exp %13 : vector<3x1024xf32>
    %cst_8 = arith.constant dense<0.000000e+00> : vector<1024xf32>
    %15 = vector.multi_reduction <add>, %14, %cst_8 [0] : vector<3x1024xf32> to vector<1024xf32>
    %16 = vector.shape_cast %15 : vector<1024xf32> to vector<1x1024xf32>
    %17 = tpu.reciprocal %16 {approx = true} : vector<1x1024xf32> -> vector<1x1024xf32>
    %18 = vector.broadcast %17 : vector<1x1024xf32> to vector<3x1024xf32>
    %19 = arith.mulf %14, %18 : vector<3x1024xf32>
    %c0_9 = arith.constant 0 : index
    %c0_10 = arith.constant 0 : index
    %c0_11 = arith.constant 0 : index
    %20 = vector.load %arg7[%c0_9, %c0_10, %c0_11] : memref<1x3x1024xf32, #tpu.memory_space<vmem>>, vector<1x3x1024xf32>
    %21 = vector.shape_cast %20 : vector<1x3x1024xf32> to vector<3x1024xf32>
    %22 = vector.shape_cast %19 : vector<3x1024xf32> to vector<1x3x1024xf32>
    tpu.vector_store %arg7[%c0_9, %c0_10, %c0_11], %22 {strides = array<i32>} : memref<1x3x1024xf32, #tpu.memory_space<vmem>>, vector<1x3x1024xf32>,
    %cst_12 = arith.constant 0.000000e+00 : f32
    %23 = vector.broadcast %cst_12 : f32 to vector<3x16xf32>
    %cst_13 = arith.constant 0.000000e+00 : f32
    %24 = vector.broadcast %cst_13 : f32 to vector<3x1xf32>
    %c0_14 = arith.constant 0 : index
    %c0_15 = arith.constant 0 : index
    %c0_16 = arith.constant 0 : index
    %25 = vector.load %arg3[%c0_14, %c0_15, %c0_16] : memref<4x16x1024xbf16, #tpu.memory_space<vmem>>, vector<1x16x1024xbf16>
    %26 = vector.shape_cast %25 : vector<1x16x1024xbf16> to vector<16x1024xbf16>
    %cst_17 = arith.constant dense<0.000000e+00> : vector<3x1024xf32>
    %27 = tpu.matmul %2, %26, %cst_17 {dimension_numbers = #tpu.dot_dimension_numbers<[1], [0], [0], [1], [0, 0, 1, 1], [], []>} : vector<3x16xbf16>, vector<16x1024xbf16>, vector<3x1024xf32> -> vector<3x1024xf32>
    %c0_18 = arith.constant 0 : index
    %c0_19 = arith.constant 0 : index
    %c0_20 = arith.constant 0 : index
    %28 = vector.load %arg4[%c0_18, %c0_19, %c0_20] : memref<4x1x1024xf32, #tpu.memory_space<vmem>>, vector<1x1x1024xf32>
    %29 = vector.shape_cast %28 : vector<1x1x1024xf32> to vector<1x1024xf32>
    %30 = vector.broadcast %29 : vector<1x1024xf32> to vector<3x1024xf32>
    %31 = arith.addf %27, %30 : vector<3x1024xf32>
    %c0_21 = arith.constant 0 : index
    %c0_22 = arith.constant 0 : index
    %c0_23 = arith.constant 0 : index
    %c0_24 = arith.constant 0 : index
    %32 = vector.load %arg6[%c0_21, %c0_22, %c0_23, %c0_24] : memref<1x3x3x1024xf32, #tpu.memory_space<vmem>>, vector<1x1x3x1024xf32>
    %33 = vector.shape_cast %32 : vector<1x1x3x1024xf32> to vector<3x1024xf32>
    %34 = vector.shape_cast %31 : vector<3x1024xf32> to vector<1x1x3x1024xf32>
    tpu.vector_store %arg6[%c0_21, %c0_22, %c0_23, %c0_24], %34 {strides = array<i32>} : memref<1x3x3x1024xf32, #tpu.memory_space<vmem>>, vector<1x1x3x1024xf32>,
    %cst_25 = arith.constant dense<0.000000e+00> : vector<3xf32>
    %35 = vector.multi_reduction <add>, %31, %cst_25 [1] : vector<3x1024xf32> to vector<3xf32>
    %36 = vector.shape_cast %35 : vector<3xf32> to vector<3x1xf32>
    %c0_26 = arith.constant 0 : index
    %c0_27 = arith.constant 0 : index
    %c0_28 = arith.constant 0 : index
    %c0_29 = arith.constant 0 : index
    %37 = vector.load %arg9[%c0_26, %c0_27, %c0_28, %c0_29] : memref<1x1x3x3xf32, #tpu.memory_space<vmem>>, vector<1x1x3x1xf32>
    %38 = vector.shape_cast %37 : vector<1x1x3x1xf32> to vector<3x1xf32>
    %39 = vector.shape_cast %36 : vector<3x1xf32> to vector<1x1x3x1xf32>
    tpu.vector_store %arg9[%c0_26, %c0_27, %c0_28, %c0_29], %39 {strides = array<i32>} : memref<1x1x3x3xf32, #tpu.memory_space<vmem>>, vector<1x1x3x1xf32>,
    %c0_30 = arith.constant 0 : index
    %c0_31 = arith.constant 0 : index
    %c0_32 = arith.constant 0 : index
    %40 = vector.load %arg5[%c0_30, %c0_31, %c0_32] : memref<1x3x1024xf32, #tpu.memory_space<vmem>>, vector<1x1x1024xf32>
    %41 = vector.shape_cast %40 : vector<1x1x1024xf32> to vector<1x1024xf32>
    %42 = vector.broadcast %41 : vector<1x1024xf32> to vector<3x1024xf32>
    %43 = arith.subf %31, %42 : vector<3x1024xf32>
    %44 = arith.mulf %43, %43 : vector<3x1024xf32>
    %cst_33 = arith.constant 0.000000e+00 : f32
    %45 = vector.broadcast %cst_33 : f32 to vector<3x1024xf32>
    %46 = arith.subf %45, %44 : vector<3x1024xf32>
    %cst_34 = arith.constant 1.66666663 : f32
    %47 = vector.broadcast %cst_34 : f32 to vector<3x1024xf32>
    %48 = arith.mulf %46, %47 : vector<3x1024xf32>
    %49 = math.exp %48 : vector<3x1024xf32>
    %50 = arith.mulf %19, %49 : vector<3x1024xf32>
    %cst_35 = arith.constant dense<0.000000e+00> : vector<1024xf32>
    %51 = vector.multi_reduction <add>, %50, %cst_35 [0] : vector<3x1024xf32> to vector<1024xf32>
    %52 = vector.shape_cast %51 : vector<1024xf32> to vector<1x1024xf32>
    %cst_36 = arith.constant 1.000000e-30 : f32
    %53 = vector.broadcast %cst_36 : f32 to vector<1x1024xf32>
    %54 = arith.maximumf %52, %53 : vector<1x1024xf32>
    %55 = tpu.reciprocal %54 {approx = true} : vector<1x1024xf32> -> vector<1x1024xf32>
    %56 = vector.broadcast %55 : vector<1x1024xf32> to vector<3x1024xf32>
    %57 = arith.mulf %49, %56 : vector<3x1024xf32>
    %cst_37 = arith.constant 1.66666663 : f32
    %58 = vector.broadcast %cst_37 : f32 to vector<3x1024xf32>
    %59 = arith.mulf %58, %19 : vector<3x1024xf32>
    %60 = arith.mulf %59, %57 : vector<3x1024xf32>
    %61 = arith.mulf %60, %43 : vector<3x1024xf32>
    %cst_38 = arith.constant dense<0.000000e+00> : vector<3xf32>
    %62 = vector.multi_reduction <add>, %61, %cst_38 [1] : vector<3x1024xf32> to vector<3xf32>
    %63 = vector.shape_cast %62 : vector<3xf32> to vector<3x1xf32>
    %c0_39 = arith.constant 0 : index
    %c0_40 = arith.constant 0 : index
    %c0_41 = arith.constant 0 : index
    %c0_42 = arith.constant 0 : index
    %64 = vector.load %arg10[%c0_39, %c0_40, %c0_41, %c0_42] : memref<1x1x3x3xf32, #tpu.memory_space<vmem>>, vector<1x1x3x1xf32>
    %65 = vector.shape_cast %64 : vector<1x1x3x1xf32> to vector<3x1xf32>
    %66 = vector.shape_cast %63 : vector<3x1xf32> to vector<1x1x3x1xf32>
    tpu.vector_store %arg10[%c0_39, %c0_40, %c0_41, %c0_42], %66 {strides = array<i32>} : memref<1x1x3x3xf32, #tpu.memory_space<vmem>>, vector<1x1x3x1xf32>,
    %67 = arith.mulf %61, %61 : vector<3x1024xf32>
    %cst_43 = arith.constant dense<0.000000e+00> : vector<3xf32>
    %68 = vector.multi_reduction <add>, %67, %cst_43 [1] : vector<3x1024xf32> to vector<3xf32>
    %69 = vector.shape_cast %68 : vector<3xf32> to vector<3x1xf32>
    %70 = arith.addf %24, %69 : vector<3x1xf32>
    %71 = arith.truncf %61 : vector<3x1024xf32> to vector<3x1024xbf16>
    %72 = tpu.transpose %26, [1, 0] : vector<16x1024xbf16> -> vector<1024x16xbf16>
    %cst_44 = arith.constant dense<0.000000e+00> : vector<3x16xf32>
    %73 = tpu.matmul %71, %72, %cst_44 {dimension_numbers = #tpu.dot_dimension_numbers<[1], [0], [0], [1], [0, 0, 1, 1], [], []>} : vector<3x1024xbf16>, vector<1024x16xbf16>, vector<3x16xf32> -> vector<3x16xf32>
    %74 = arith.addf %23, %73 : vector<3x16xf32>
    %c1 = arith.constant 1 : index
    %c0_45 = arith.constant 0 : index
    %c0_46 = arith.constant 0 : index
    %75 = vector.load %arg3[%c1, %c0_45, %c0_46] : memref<4x16x1024xbf16, #tpu.memory_space<vmem>>, vector<1x16x1024xbf16>
    %76 = vector.shape_cast %75 : vector<1x16x1024xbf16> to vector<16x1024xbf16>
    %cst_47 = arith.constant dense<0.000000e+00> : vector<3x1024xf32>
    %77 = tpu.matmul %2, %76, %cst_47 {dimension_numbers = #tpu.dot_dimension_numbers<[1], [0], [0], [1], [0, 0, 1, 1], [], []>} : vector<3x16xbf16>, vector<16x1024xbf16>, vector<3x1024xf32> -> vector<3x1024xf32>
    %c1_48 = arith.constant 1 : index
    %c0_49 = arith.constant 0 : index
    %c0_50 = arith.constant 0 : index
    %78 = vector.load %arg4[%c1_48, %c0_49, %c0_50] : memref<4x1x1024xf32, #tpu.memory_space<vmem>>, vector<1x1x1024xf32>
    %79 = vector.shape_cast %78 : vector<1x1x1024xf32> to vector<1x1024xf32>
    %80 = vector.broadcast %79 : vector<1x1024xf32> to vector<3x1024xf32>
    %81 = arith.addf %77, %80 : vector<3x1024xf32>
    %c0_51 = arith.constant 0 : index
    %c1_52 = arith.constant 1 : index
    %c0_53 = arith.constant 0 : index
    %c0_54 = arith.constant 0 : index
    %82 = vector.load %arg6[%c0_51, %c1_52, %c0_53, %c0_54] : memref<1x3x3x1024xf32, #tpu.memory_space<vmem>>, vector<1x1x3x1024xf32>
    %83 = vector.shape_cast %82 : vector<1x1x3x1024xf32> to vector<3x1024xf32>
    %84 = vector.shape_cast %81 : vector<3x1024xf32> to vector<1x1x3x1024xf32>
    tpu.vector_store %arg6[%c0_51, %c1_52, %c0_53, %c0_54], %84 {strides = array<i32>} : memref<1x3x3x1024xf32, #tpu.memory_space<vmem>>, vector<1x1x3x1024xf32>,
    %cst_55 = arith.constant dense<0.000000e+00> : vector<3xf32>
    %85 = vector.multi_reduction <add>, %81, %cst_55 [1] : vector<3x1024xf32> to vector<3xf32>
    %86 = vector.shape_cast %85 : vector<3xf32> to vector<3x1xf32>
    %c0_56 = arith.constant 0 : index
    %c0_57 = arith.constant 0 : index
    %c0_58 = arith.constant 0 : index
    %c1_59 = arith.constant 1 : index
    %87 = vector.load %arg9[%c0_56, %c0_57, %c0_58, %c1_59] : memref<1x1x3x3xf32, #tpu.memory_space<vmem>>, vector<1x1x3x1xf32>
    %88 = vector.shape_cast %87 : vector<1x1x3x1xf32> to vector<3x1xf32>
    %89 = vector.shape_cast %86 : vector<3x1xf32> to vector<1x1x3x1xf32>
    tpu.vector_store %arg9[%c0_56, %c0_57, %c0_58, %c1_59], %89 {strides = array<i32>} : memref<1x1x3x3xf32, #tpu.memory_space<vmem>>, vector<1x1x3x1xf32>,
    %c0_60 = arith.constant 0 : index
    %c1_61 = arith.constant 1 : index
    %c0_62 = arith.constant 0 : index
    %90 = vector.load %arg5[%c0_60, %c1_61, %c0_62] : memref<1x3x1024xf32, #tpu.memory_space<vmem>>, vector<1x1x1024xf32>
    %91 = vector.shape_cast %90 : vector<1x1x1024xf32> to vector<1x1024xf32>
    %92 = vector.broadcast %91 : vector<1x1024xf32> to vector<3x1024xf32>
    %93 = arith.subf %81, %92 : vector<3x1024xf32>
    %94 = arith.mulf %93, %93 : vector<3x1024xf32>
    %cst_63 = arith.constant 0.000000e+00 : f32
    %95 = vector.broadcast %cst_63 : f32 to vector<3x1024xf32>
    %96 = arith.subf %95, %94 : vector<3x1024xf32>
    %cst_64 = arith.constant 1.66666663 : f32
    %97 = vector.broadcast %cst_64 : f32 to vector<3x1024xf32>
    %98 = arith.mulf %96, %97 : vector<3x1024xf32>
    %99 = math.exp %98 : vector<3x1024xf32>
    %100 = arith.mulf %49, %99 : vector<3x1024xf32>
    %101 = arith.mulf %19, %99 : vector<3x1024xf32>
    %cst_65 = arith.constant dense<0.000000e+00> : vector<1024xf32>
    %102 = vector.multi_reduction <add>, %101, %cst_65 [0] : vector<3x1024xf32> to vector<1024xf32>
    %103 = vector.shape_cast %102 : vector<1024xf32> to vector<1x1024xf32>
    %cst_66 = arith.constant 1.000000e-30 : f32
    %104 = vector.broadcast %cst_66 : f32 to vector<1x1024xf32>
    %105 = arith.maximumf %103, %104 : vector<1x1024xf32>
    %106 = arith.mulf %54, %105 : vector<1x1024xf32>
    %107 = tpu.reciprocal %105 {approx = true} : vector<1x1024xf32> -> vector<1x1024xf32>
    %108 = vector.broadcast %107 : vector<1x1024xf32> to vector<3x1024xf32>
    %109 = arith.mulf %99, %108 : vector<3x1024xf32>
    %110 = arith.addf %57, %109 : vector<3x1024xf32>
    %cst_67 = arith.constant 1.66666663 : f32
    %111 = vector.broadcast %cst_67 : f32 to vector<3x1024xf32>
    %112 = arith.mulf %111, %19 : vector<3x1024xf32>
    %113 = arith.mulf %112, %109 : vector<3x1024xf32>
    %114 = arith.mulf %113, %93 : vector<3x1024xf32>
    %cst_68 = arith.constant dense<0.000000e+00> : vector<3xf32>
    %115 = vector.multi_reduction <add>, %114, %cst_68 [1] : vector<3x1024xf32> to vector<3xf32>
    %116 = vector.shape_cast %115 : vector<3xf32> to vector<3x1xf32>
    %c0_69 = arith.constant 0 : index
    %c0_70 = arith.constant 0 : index
    %c0_71 = arith.constant 0 : index
    %c1_72 = arith.constant 1 : index
    %117 = vector.load %arg10[%c0_69, %c0_70, %c0_71, %c1_72] : memref<1x1x3x3xf32, #tpu.memory_space<vmem>>, vector<1x1x3x1xf32>
    %118 = vector.shape_cast %117 : vector<1x1x3x1xf32> to vector<3x1xf32>
    %119 = vector.shape_cast %116 : vector<3x1xf32> to vector<1x1x3x1xf32>
    tpu.vector_store %arg10[%c0_69, %c0_70, %c0_71, %c1_72], %119 {strides = array<i32>} : memref<1x1x3x3xf32, #tpu.memory_space<vmem>>, vector<1x1x3x1xf32>,
    %120 = arith.mulf %114, %114 : vector<3x1024xf32>
    %cst_73 = arith.constant dense<0.000000e+00> : vector<3xf32>
    %121 = vector.multi_reduction <add>, %120, %cst_73 [1] : vector<3x1024xf32> to vector<3xf32>
    %122 = vector.shape_cast %121 : vector<3xf32> to vector<3x1xf32>
    %123 = arith.addf %70, %122 : vector<3x1xf32>
    %124 = arith.truncf %114 : vector<3x1024xf32> to vector<3x1024xbf16>
    %125 = tpu.transpose %76, [1, 0] : vector<16x1024xbf16> -> vector<1024x16xbf16>
    %cst_74 = arith.constant dense<0.000000e+00> : vector<3x16xf32>
    %126 = tpu.matmul %124, %125, %cst_74 {dimension_numbers = #tpu.dot_dimension_numbers<[1], [0], [0], [1], [0, 0, 1, 1], [], []>} : vector<3x1024xbf16>, vector<1024x16xbf16>, vector<3x16xf32> -> vector<3x16xf32>
    %127 = arith.addf %74, %126 : vector<3x16xf32>
    %c2 = arith.constant 2 : index
    %c0_75 = arith.constant 0 : index
    %c0_76 = arith.constant 0 : index
    %128 = vector.load %arg3[%c2, %c0_75, %c0_76] : memref<4x16x1024xbf16, #tpu.memory_space<vmem>>, vector<1x16x1024xbf16>
    %129 = vector.shape_cast %128 : vector<1x16x1024xbf16> to vector<16x1024xbf16>
    %cst_77 = arith.constant dense<0.000000e+00> : vector<3x1024xf32>
    %130 = tpu.matmul %2, %129, %cst_77 {dimension_numbers = #tpu.dot_dimension_numbers<[1], [0], [0], [1], [0, 0, 1, 1], [], []>} : vector<3x16xbf16>, vector<16x1024xbf16>, vector<3x1024xf32> -> vector<3x1024xf32>
    %c2_78 = arith.constant 2 : index
    %c0_79 = arith.constant 0 : index
    %c0_80 = arith.constant 0 : index
    %131 = vector.load %arg4[%c2_78, %c0_79, %c0_80] : memref<4x1x1024xf32, #tpu.memory_space<vmem>>, vector<1x1x1024xf32>
    %132 = vector.shape_cast %131 : vector<1x1x1024xf32> to vector<1x1024xf32>
    %133 = vector.broadcast %132 : vector<1x1024xf32> to vector<3x1024xf32>
    %134 = arith.addf %130, %133 : vector<3x1024xf32>
    %c0_81 = arith.constant 0 : index
    %c2_82 = arith.constant 2 : index
    %c0_83 = arith.constant 0 : index
    %c0_84 = arith.constant 0 : index
    %135 = vector.load %arg6[%c0_81, %c2_82, %c0_83, %c0_84] : memref<1x3x3x1024xf32, #tpu.memory_space<vmem>>, vector<1x1x3x1024xf32>
    %136 = vector.shape_cast %135 : vector<1x1x3x1024xf32> to vector<3x1024xf32>
    %137 = vector.shape_cast %134 : vector<3x1024xf32> to vector<1x1x3x1024xf32>
    tpu.vector_store %arg6[%c0_81, %c2_82, %c0_83, %c0_84], %137 {strides = array<i32>} : memref<1x3x3x1024xf32, #tpu.memory_space<vmem>>, vector<1x1x3x1024xf32>,
    %cst_85 = arith.constant dense<0.000000e+00> : vector<3xf32>
    %138 = vector.multi_reduction <add>, %134, %cst_85 [1] : vector<3x1024xf32> to vector<3xf32>
    %139 = vector.shape_cast %138 : vector<3xf32> to vector<3x1xf32>
    %c0_86 = arith.constant 0 : index
    %c0_87 = arith.constant 0 : index
    %c0_88 = arith.constant 0 : index
    %c2_89 = arith.constant 2 : index
    %140 = vector.load %arg9[%c0_86, %c0_87, %c0_88, %c2_89] : memref<1x1x3x3xf32, #tpu.memory_space<vmem>>, vector<1x1x3x1xf32>
    %141 = vector.shape_cast %140 : vector<1x1x3x1xf32> to vector<3x1xf32>
    %142 = vector.shape_cast %139 : vector<3x1xf32> to vector<1x1x3x1xf32>
    tpu.vector_store %arg9[%c0_86, %c0_87, %c0_88, %c2_89], %142 {strides = array<i32>} : memref<1x1x3x3xf32, #tpu.memory_space<vmem>>, vector<1x1x3x1xf32>,
    %c0_90 = arith.constant 0 : index
    %c2_91 = arith.constant 2 : index
    %c0_92 = arith.constant 0 : index
    %143 = vector.load %arg5[%c0_90, %c2_91, %c0_92] : memref<1x3x1024xf32, #tpu.memory_space<vmem>>, vector<1x1x1024xf32>
    %144 = vector.shape_cast %143 : vector<1x1x1024xf32> to vector<1x1024xf32>
    %145 = vector.broadcast %144 : vector<1x1024xf32> to vector<3x1024xf32>
    %146 = arith.subf %134, %145 : vector<3x1024xf32>
    %147 = arith.mulf %146, %146 : vector<3x1024xf32>
    %cst_93 = arith.constant 0.000000e+00 : f32
    %148 = vector.broadcast %cst_93 : f32 to vector<3x1024xf32>
    %149 = arith.subf %148, %147 : vector<3x1024xf32>
    %cst_94 = arith.constant 1.66666663 : f32
    %150 = vector.broadcast %cst_94 : f32 to vector<3x1024xf32>
    %151 = arith.mulf %149, %150 : vector<3x1024xf32>
    %152 = math.exp %151 : vector<3x1024xf32>
    %153 = arith.mulf %100, %152 : vector<3x1024xf32>
    %154 = arith.mulf %19, %152 : vector<3x1024xf32>
    %cst_95 = arith.constant dense<0.000000e+00> : vector<1024xf32>
    %155 = vector.multi_reduction <add>, %154, %cst_95 [0] : vector<3x1024xf32> to vector<1024xf32>
    %156 = vector.shape_cast %155 : vector<1024xf32> to vector<1x1024xf32>
    %cst_96 = arith.constant 1.000000e-30 : f32
    %157 = vector.broadcast %cst_96 : f32 to vector<1x1024xf32>
    %158 = arith.maximumf %156, %157 : vector<1x1024xf32>
    %159 = arith.mulf %106, %158 : vector<1x1024xf32>
    %160 = tpu.reciprocal %158 {approx = true} : vector<1x1024xf32> -> vector<1x1024xf32>
    %161 = vector.broadcast %160 : vector<1x1024xf32> to vector<3x1024xf32>
    %162 = arith.mulf %152, %161 : vector<3x1024xf32>
    %163 = arith.addf %110, %162 : vector<3x1024xf32>
    %cst_97 = arith.constant 1.66666663 : f32
    %164 = vector.broadcast %cst_97 : f32 to vector<3x1024xf32>
    %165 = arith.mulf %164, %19 : vector<3x1024xf32>
    %166 = arith.mulf %165, %162 : vector<3x1024xf32>
    %167 = arith.mulf %166, %146 : vector<3x1024xf32>
    %cst_98 = arith.constant dense<0.000000e+00> : vector<3xf32>
    %168 = vector.multi_reduction <add>, %167, %cst_98 [1] : vector<3x1024xf32> to vector<3xf32>
    %169 = vector.shape_cast %168 : vector<3xf32> to vector<3x1xf32>
    %c0_99 = arith.constant 0 : index
    %c0_100 = arith.constant 0 : index
    %c0_101 = arith.constant 0 : index
    %c2_102 = arith.constant 2 : index
    %170 = vector.load %arg10[%c0_99, %c0_100, %c0_101, %c2_102] : memref<1x1x3x3xf32, #tpu.memory_space<vmem>>, vector<1x1x3x1xf32>
    %171 = vector.shape_cast %170 : vector<1x1x3x1xf32> to vector<3x1xf32>
    %172 = vector.shape_cast %169 : vector<3x1xf32> to vector<1x1x3x1xf32>
    tpu.vector_store %arg10[%c0_99, %c0_100, %c0_101, %c2_102], %172 {strides = array<i32>} : memref<1x1x3x3xf32, #tpu.memory_space<vmem>>, vector<1x1x3x1xf32>,
    %173 = arith.mulf %167, %167 : vector<3x1024xf32>
    %cst_103 = arith.constant dense<0.000000e+00> : vector<3xf32>
    %174 = vector.multi_reduction <add>, %173, %cst_103 [1] : vector<3x1024xf32> to vector<3xf32>
    %175 = vector.shape_cast %174 : vector<3xf32> to vector<3x1xf32>
    %176 = arith.addf %123, %175 : vector<3x1xf32>
    %177 = arith.truncf %167 : vector<3x1024xf32> to vector<3x1024xbf16>
    %178 = tpu.transpose %129, [1, 0] : vector<16x1024xbf16> -> vector<1024x16xbf16>
    %cst_104 = arith.constant dense<0.000000e+00> : vector<3x16xf32>
    %179 = tpu.matmul %177, %178, %cst_104 {dimension_numbers = #tpu.dot_dimension_numbers<[1], [0], [0], [1], [0, 0, 1, 1], [], []>} : vector<3x1024xbf16>, vector<1024x16xbf16>, vector<3x16xf32> -> vector<3x16xf32>
    %180 = arith.addf %127, %179 : vector<3x16xf32>
    %cst_105 = arith.constant -5.000000e-01 : f32
    %181 = vector.broadcast %cst_105 : f32 to vector<3x1024xf32>
    %182 = arith.mulf %181, %163 : vector<3x1024xf32>
    %183 = arith.mulf %19, %182 : vector<3x1024xf32>
    %cst_106 = arith.constant dense<0.000000e+00> : vector<1024xf32>
    %184 = vector.multi_reduction <add>, %183, %cst_106 [0] : vector<3x1024xf32> to vector<1024xf32>
    %185 = vector.shape_cast %184 : vector<1024xf32> to vector<1x1024xf32>
    %186 = vector.broadcast %185 : vector<1x1024xf32> to vector<3x1024xf32>
    %187 = arith.subf %182, %186 : vector<3x1024xf32>
    %188 = arith.mulf %19, %187 : vector<3x1024xf32>
    %189 = arith.truncf %188 : vector<3x1024xf32> to vector<3x1024xbf16>
    %190 = tpu.transpose %4, [1, 0] : vector<16x1024xbf16> -> vector<1024x16xbf16>
    %cst_107 = arith.constant dense<0.000000e+00> : vector<3x16xf32>
    %191 = tpu.matmul %189, %190, %cst_107 {dimension_numbers = #tpu.dot_dimension_numbers<[1], [0], [0], [1], [0, 0, 1, 1], [], []>} : vector<3x1024xbf16>, vector<1024x16xbf16>, vector<3x16xf32> -> vector<3x16xf32>
    %192 = arith.addf %180, %191 : vector<3x16xf32>
    %c0_108 = arith.constant 0 : index
    %c0_109 = arith.constant 0 : index
    %c0_110 = arith.constant 0 : index
    %c0_111 = arith.constant 0 : index
    %193 = vector.load %arg8[%c0_108, %c0_109, %c0_110, %c0_111] : memref<1x1x3x16xf32, #tpu.memory_space<vmem>>, vector<1x1x3x16xf32>
    %194 = vector.shape_cast %193 : vector<1x1x3x16xf32> to vector<3x16xf32>
    %195 = vector.shape_cast %192 : vector<3x16xf32> to vector<1x1x3x16xf32>
    tpu.vector_store %arg8[%c0_108, %c0_109, %c0_110, %c0_111], %195 {strides = array<i32>} : memref<1x1x3x16xf32, #tpu.memory_space<vmem>>, vector<1x1x3x16xf32>,
    %cst_112 = arith.constant 9.99999991E-38 : f32
    %196 = vector.broadcast %cst_112 : f32 to vector<1x1024xf32>
    %197 = arith.maximumf %159, %196 : vector<1x1024xf32>
    %198 = math.log %197 : vector<1x1024xf32>
    %cst_113 = arith.constant dense<0.000000e+00> : vector<1xf32>
    %199 = vector.multi_reduction <add>, %198, %cst_113 [1] : vector<1x1024xf32> to vector<1xf32>
    %200 = vector.shape_cast %199 : vector<1xf32> to vector<1x1xf32>
    %c0_114 = arith.constant 0 : index
    %c0_115 = arith.constant 0 : index
    %c0_116 = arith.constant 0 : index
    %c0_117 = arith.constant 0 : index
    %201 = vector.load %arg12[%c0_114, %c0_115, %c0_116, %c0_117] : memref<1x1x1x1xf32, #tpu.memory_space<vmem>>, vector<1x1x1x1xf32>
    %202 = vector.shape_cast %201 : vector<1x1x1x1xf32> to vector<1x1xf32>
    %203 = vector.shape_cast %200 : vector<1x1xf32> to vector<1x1x1x1xf32>
    tpu.vector_store %arg12[%c0_114, %c0_115, %c0_116, %c0_117], %203 {strides = array<i32>} : memref<1x1x1x1xf32, #tpu.memory_space<vmem>>, vector<1x1x1x1xf32>,
    %cst_118 = arith.constant dense<0xFF800000> : vector<1024xf32>
    %204 = vector.multi_reduction <maximumf>, %153, %cst_118 [0] : vector<3x1024xf32> to vector<1024xf32>
    %205 = vector.shape_cast %204 : vector<1024xf32> to vector<1x1024xf32>
    %206 = vector.broadcast %205 : vector<1x1024xf32> to vector<3x1024xf32>
    %207 = arith.subf %153, %206 : vector<3x1024xf32>
    %208 = math.exp %207 : vector<3x1024xf32>
    %cst_119 = arith.constant dense<0.000000e+00> : vector<1024xf32>
    %209 = vector.multi_reduction <add>, %208, %cst_119 [0] : vector<3x1024xf32> to vector<1024xf32>
    %210 = vector.shape_cast %209 : vector<1024xf32> to vector<1x1024xf32>
    %211 = tpu.reciprocal %210 {approx = true} : vector<1x1024xf32> -> vector<1x1024xf32>
    %212 = vector.broadcast %211 : vector<1x1024xf32> to vector<3x1024xf32>
    %213 = arith.mulf %208, %212 : vector<3x1024xf32>
    %cst_120 = arith.constant dense<0.000000e+00> : vector<3xf32>
    %214 = vector.multi_reduction <add>, %19, %cst_120 [1] : vector<3x1024xf32> to vector<3xf32>
    %215 = vector.shape_cast %214 : vector<3xf32> to vector<3x1xf32>
    %c0_121 = arith.constant 0 : index
    %c0_122 = arith.constant 0 : index
    %c0_123 = arith.constant 0 : index
    %c0_124 = arith.constant 0 : index
    %216 = vector.load %arg11[%c0_121, %c0_122, %c0_123, %c0_124] : memref<1x1x3x4xf32, #tpu.memory_space<vmem>>, vector<1x1x3x1xf32>
    %217 = vector.shape_cast %216 : vector<1x1x3x1xf32> to vector<3x1xf32>
    %218 = vector.shape_cast %215 : vector<3x1xf32> to vector<1x1x3x1xf32>
    tpu.vector_store %arg11[%c0_121, %c0_122, %c0_123, %c0_124], %218 {strides = array<i32>} : memref<1x1x3x4xf32, #tpu.memory_space<vmem>>, vector<1x1x3x1xf32>,
    %cst_125 = arith.constant dense<0.000000e+00> : vector<3xf32>
    %219 = vector.multi_reduction <add>, %9, %cst_125 [1] : vector<3x1024xf32> to vector<3xf32>
    %220 = vector.shape_cast %219 : vector<3xf32> to vector<3x1xf32>
    %c0_126 = arith.constant 0 : index
    %c0_127 = arith.constant 0 : index
    %c0_128 = arith.constant 0 : index
    %c1_129 = arith.constant 1 : index
    %221 = vector.load %arg11[%c0_126, %c0_127, %c0_128, %c1_129] : memref<1x1x3x4xf32, #tpu.memory_space<vmem>>, vector<1x1x3x1xf32>
    %222 = vector.shape_cast %221 : vector<1x1x3x1xf32> to vector<3x1xf32>
    %223 = vector.shape_cast %220 : vector<3x1xf32> to vector<1x1x3x1xf32>
    tpu.vector_store %arg11[%c0_126, %c0_127, %c0_128, %c1_129], %223 {strides = array<i32>} : memref<1x1x3x4xf32, #tpu.memory_space<vmem>>, vector<1x1x3x1xf32>,
    %cst_130 = arith.constant dense<0.000000e+00> : vector<3xf32>
    %224 = vector.multi_reduction <add>, %213, %cst_130 [1] : vector<3x1024xf32> to vector<3xf32>
    %225 = vector.shape_cast %224 : vector<3xf32> to vector<3x1xf32>
    %c0_131 = arith.constant 0 : index
    %c0_132 = arith.constant 0 : index
    %c0_133 = arith.constant 0 : index
    %c2_134 = arith.constant 2 : index
    %226 = vector.load %arg11[%c0_131, %c0_132, %c0_133, %c2_134] : memref<1x1x3x4xf32, #tpu.memory_space<vmem>>, vector<1x1x3x1xf32>
    %227 = vector.shape_cast %226 : vector<1x1x3x1xf32> to vector<3x1xf32>
    %228 = vector.shape_cast %225 : vector<3x1xf32> to vector<1x1x3x1xf32>
    tpu.vector_store %arg11[%c0_131, %c0_132, %c0_133, %c2_134], %228 {strides = array<i32>} : memref<1x1x3x4xf32, #tpu.memory_space<vmem>>, vector<1x1x3x1xf32>,
    %c0_135 = arith.constant 0 : index
    %c0_136 = arith.constant 0 : index
    %c0_137 = arith.constant 0 : index
    %c3_138 = arith.constant 3 : index
    %229 = vector.load %arg11[%c0_135, %c0_136, %c0_137, %c3_138] : memref<1x1x3x4xf32, #tpu.memory_space<vmem>>, vector<1x1x3x1xf32>
    %230 = vector.shape_cast %229 : vector<1x1x3x1xf32> to vector<3x1xf32>
    %231 = vector.shape_cast %176 : vector<3x1xf32> to vector<1x1x3x1xf32>
    tpu.vector_store %arg11[%c0_135, %c0_136, %c0_137, %c3_138], %231 {strides = array<i32>} : memref<1x1x3x4xf32, #tpu.memory_space<vmem>>, vector<1x1x3x1xf32>,
    return
  }
  func.func @transform_0(%arg0: i32, %arg1: i32) -> (i32, i32, i32) {
    %c0_i32 = arith.constant 0 : i32
    %c0_i32_0 = arith.constant 0 : i32
    %c0_i32_1 = arith.constant 0 : i32
    return %arg1, %c0_i32, %c0_i32_0 : i32, i32, i32
  }
  func.func @transform_1(%arg0: i32, %arg1: i32) -> (i32, i32, i32) {
    %c0_i32 = arith.constant 0 : i32
    %c0_i32_0 = arith.constant 0 : i32
    %c0_i32_1 = arith.constant 0 : i32
    return %c0_i32, %c0_i32_0, %arg0 : i32, i32, i32
  }
  func.func @transform_2(%arg0: i32, %arg1: i32) -> (i32, i32, i32) {
    %c0_i32 = arith.constant 0 : i32
    %c0_i32_0 = arith.constant 0 : i32
    %c0_i32_1 = arith.constant 0 : i32
    return %c0_i32, %c0_i32_0, %arg0 : i32, i32, i32
  }
  func.func @transform_3(%arg0: i32, %arg1: i32) -> (i32, i32, i32) {
    %c0_i32 = arith.constant 0 : i32
    %c0_i32_0 = arith.constant 0 : i32
    return %arg1, %c0_i32, %arg0 : i32, i32, i32
  }
  func.func @transform_4(%arg0: i32, %arg1: i32) -> (i32, i32, i32, i32) {
    %c0_i32 = arith.constant 0 : i32
    %c0_i32_0 = arith.constant 0 : i32
    %c0_i32_1 = arith.constant 0 : i32
    return %arg1, %c0_i32, %c0_i32_0, %arg0 : i32, i32, i32, i32
  }
  func.func @transform_5(%arg0: i32, %arg1: i32) -> (i32, i32, i32) {
    %c0_i32 = arith.constant 0 : i32
    %c0_i32_0 = arith.constant 0 : i32
    return %arg1, %c0_i32, %arg0 : i32, i32, i32
  }
  func.func @transform_6(%arg0: i32, %arg1: i32) -> (i32, i32, i32, i32) {
    %c0_i32 = arith.constant 0 : i32
    %c0_i32_0 = arith.constant 0 : i32
    %c0_i32_1 = arith.constant 0 : i32
    return %arg0, %arg1, %c0_i32, %c0_i32_0 : i32, i32, i32, i32
  }
  func.func @transform_7(%arg0: i32, %arg1: i32) -> (i32, i32, i32, i32) {
    %c0_i32 = arith.constant 0 : i32
    %c0_i32_0 = arith.constant 0 : i32
    %c0_i32_1 = arith.constant 0 : i32
    return %arg0, %arg1, %c0_i32, %c0_i32_0 : i32, i32, i32, i32
  }
  func.func @transform_8(%arg0: i32, %arg1: i32) -> (i32, i32, i32, i32) {
    %c0_i32 = arith.constant 0 : i32
    %c0_i32_0 = arith.constant 0 : i32
    %c0_i32_1 = arith.constant 0 : i32
    return %arg0, %arg1, %c0_i32, %c0_i32_0 : i32, i32, i32, i32
  }
  func.func @transform_9(%arg0: i32, %arg1: i32) -> (i32, i32, i32, i32) {
    %c0_i32 = arith.constant 0 : i32
    %c0_i32_0 = arith.constant 0 : i32
    %c0_i32_1 = arith.constant 0 : i32
    return %arg0, %arg1, %c0_i32, %c0_i32_0 : i32, i32, i32, i32
  }
  func.func @transform_10(%arg0: i32, %arg1: i32) -> (i32, i32, i32, i32) {
    %c0_i32 = arith.constant 0 : i32
    %c0_i32_0 = arith.constant 0 : i32
    %c0_i32_1 = arith.constant 0 : i32
    return %arg0, %arg1, %c0_i32, %c0_i32_0 : i32, i32, i32, i32
  }
}

</mosaic_0001>

<llo_original>
// kernel: iodine_forward.5
$region0: #{iodine_forward.5}
  #allocation0 [shape = 'u32[]', space=smem, size = 0x4, offset = 0x4, fixed_abs, tag = 'smem constant byte address 0x4 - core index']
  #allocation1 [shape = 'u32[144,128]{1,0:T(1,128)}', space=vmem, size = 0x12000, scoped, tag = 'internal scratch']
  %s0 = inlined_call_operand.vmem [shape: f32[2,3,16], index: 0, kind: input, shape index: {}]
  %s1 = inlined_call_operand.vmem [shape: bf16[4,16,4096], index: 1, kind: input, shape index: {}]
  %s2 = inlined_call_operand.vmem [shape: f32[4,1,4096], index: 2, kind: input, shape index: {}]
  %s3 = inlined_call_operand.vmem [shape: f32[2,3,4096], index: 3, kind: input, shape index: {}]
  %s4 = inlined_call_operand.hbm [shape: f32[2,3,3,4096], index: 4, kind: output, shape index: {0}]
  %s5 = inlined_call_operand.hbm [shape: f32[2,3,4096], index: 5, kind: output, shape index: {1}]
  %s6 = inlined_call_operand.vmem [shape: f32[4,2,3,16], index: 6, kind: output, shape index: {2}]
  %s7 = inlined_call_operand.vmem [shape: f32[4,2,3,3], index: 7, kind: output, shape index: {3}]
  %s8 = inlined_call_operand.vmem [shape: f32[4,2,3,3], index: 8, kind: output, shape index: {4}]
  %s9 = inlined_call_operand.vmem [shape: f32[4,2,3,4], index: 9, kind: output, shape index: {5}]
  %s10 = inlined_call_operand.vmem [shape: f32[4,2,1,1], index: 10, kind: output, shape index: {6}]
  %11 = xla_tuple %s4, %s5, %s6, %s7, %s8, %s9, %s10
  %s12 = sld [smem:[#allocation0]]
  $region158: #{iodine_forward.5} parent=0
    _
  %s14 = ssub.s32 1, %s12
  %s15 = scalar_select 0, %s14, %s12
  $region1: #{iodine_forward.5} parent=0
    #allocation2 [shape = 'u8[262144]{0}', space=vmem, size = 0x40000, scoped, tag = 'input window, operand 1']
    #allocation3 [shape = 'u8[32768]{0}', space=vmem, size = 0x8000, scoped, tag = 'input window, operand 2']
    #allocation4 [shape = 'u8[98304]{0}', space=vmem, size = 0x18000, scoped, tag = 'output window, operand 0']
    #allocation5 [shape = 's32[2]{0}', space=sflag, size = 0x8, scoped, tag = 'scoped memory for iodine_forward.5']
    #allocation6 [shape = 'u8[32768]{0}', space=vmem, size = 0x8000, scoped, tag = 'output window, operand 1']
    #allocation7 [shape = 's32[2]{0}', space=sflag, size = 0x8, scoped, tag = 'scoped memory for iodine_forward.5']
    %16 = vsyncpa [#allocation5], 0
    %s17 = scalar_lea.sflag [#allocation5], 1
    %18 = vsyncpa %s17, 0
    %19 = vsyncpa [#allocation7], 0
    %s20 = scalar_lea.sflag [#allocation7], 1
    %21 = vsyncpa %s20, 0
    loop: start=0, step=1, limit=10
    $region2: #{iodine_forward.5} parent=1 // loop_pre_header
      _
    $region3: #{iodine_forward.5} parent=1 // loop_header
      %s23 = sphi 0, %s27
      %p24 = scmp.ge.s32.totalorder %s23, 10
      %s30 = sphi 0, %s42
      %s31 = sphi 0, %s38
      %s32 = sphi 0, %s30
      %s33 = sphi 0, %s31
      %s34 = sphi 0, %s32
      %s35 = sphi 0, %s33
      %s45 = sphi 0, %s47
      %s48 = sphi 0, %s45
      %s49 = sphi 0, %s48
      %s65 = sphi 0, %s49
      %s71 = sphi 0, %s73
      %s74 = sphi 0, %s71
      %s75 = sphi 0, %s74
      %s91 = sphi 0, %s75
      %s97 = sphi 0, %s99
      %s100 = sphi 0, %s97
      %s101 = sphi 0, %s100
      %s117 = sphi 0, %s101
      %s125 = sphi 0, %s127
      %s128 = sphi 0, %s125
      %s129 = sphi 0, %s128
      %s145 = sphi 0, %s129
      %s153 = sphi 0, %s155
      %s156 = sphi 0, %s153
      %s157 = sphi 0, %s156
      %s173 = sphi 0, %s157
      %s181 = sphi 0, %s183
      %s184 = sphi 0, %s181
      %s185 = sphi 0, %s184
      %s201 = sphi 0, %s185
      %s209 = sphi 0, %s211
      %s212 = sphi 0, %s209
      %s213 = sphi 0, %s212
      %s229 = sphi 0, %s213
      %s237 = sphi 0, %s239
      %s240 = sphi 0, %s237
      %s241 = sphi 0, %s240
      %s257 = sphi 0, %s241
      %s265 = sphi 0, %s267
      %s268 = sphi 0, %s265
      %s269 = sphi 0, %s268
      %s285 = sphi 0, %s269
      %s293 = sphi 0, %s295
      %s296 = sphi 0, %s293
      %s297 = sphi 0, %s296
      %s313 = sphi 0, %s297
      %s321 = sphi 0, %s323
      %s324 = sphi 0, %s321
      %s325 = sphi 0, %s324
      %s341 = sphi 0, %s325
    $region4: #{iodine_forward.5} parent=1 // loop_header_branch
      %26 = sbr.rel (%p24) target = $region8
    $region5: #{iodine_forward.5} parent=1 // loop_body
      %s28 = ssub.s32 %s23, 1
      %s29 = ssub.s32 %s23, 2
      %s36 = sadd.s32 1, %s31
      %p37 = scmp.ge.s32.totalorder %s36, 2
      %s38 = scalar_select %p37, 0, %s36
      %s39 = sadd.s32 1, %s30
      %s40 = scalar_select %p37, %s39, %s30
      %p41 = scmp.ge.s32.totalorder %s40, 4
      %s42 = scalar_select %p41, 0, %s40
      %s43 = ssub.s32 %s31, %s38
      %p44 = scmp.eq.s32.totalorder %s43, 0
      %s46 = sadd.s32 %s45, 1
      %s47 = scalar_select %p44, %s45, %s46
      %p50 = pneg %p44
      %p51 = scmp.eq.s32.totalorder %s23, 7
      %p52 = por %p50, %p51
      %p53 = scmp.ne.s32.totalorder %s45, %s48
      %p54 = scmp.eq.s32.totalorder %s23, 0
      %p55 = por %p53, %p54
      %p56 = scmp.ne.s32.totalorder %s45, %s48
      %p57 = scmp.eq.s32.totalorder %s28, 7
      %p58 = por %p56, %p57
      %p59 = scmp.ne.s32.totalorder %s48, %s49
      %p60 = scmp.eq.s32.totalorder %s28, 0
      %p61 = por %p59, %p60
      %p62 = scmp.ne.s32.totalorder %s48, %s49
      %p63 = scmp.eq.s32.totalorder %s29, 7
      %p64 = por %p62, %p63
      %p66 = scmp.ne.s32.totalorder %s49, %s65
      %p67 = scmp.eq.s32.totalorder %s29, 0
      %p68 = por %p66, %p67
      %s69 = ssub.s32 %s30, %s42
      %p70 = scmp.eq.s32.totalorder %s69, 0
      %s72 = sadd.s32 %s71, 1
      %s73 = scalar_select %p70, %s71, %s72
      %p76 = pneg %p70
      %p77 = scmp.eq.s32.totalorder %s23, 7
      %p78 = por %p76, %p77
      %p79 = scmp.ne.s32.totalorder %s71, %s74
      %p80 = scmp.eq.s32.totalorder %s23, 0
      %p81 = por %p79, %p80
      %p82 = scmp.ne.s32.totalorder %s71, %s74
      %p83 = scmp.eq.s32.totalorder %s28, 7
      %p84 = por %p82, %p83
      %p85 = scmp.ne.s32.totalorder %s74, %s75
      %p86 = scmp.eq.s32.totalorder %s28, 0
      %p87 = por %p85, %p86
      %p88 = scmp.ne.s32.totalorder %s74, %s75
      %p89 = scmp.eq.s32.totalorder %s29, 7
      %p90 = por %p88, %p89
      %p92 = scmp.ne.s32.totalorder %s75, %s91
      %p93 = scmp.eq.s32.totalorder %s29, 0
      %p94 = por %p92, %p93
      %s95 = ssub.s32 %s30, %s42
      %p96 = scmp.eq.s32.totalorder %s95, 0
      %s98 = sadd.s32 %s97, 1
      %s99 = scalar_select %p96, %s97, %s98
      %p102 = pneg %p96
      %p103 = scmp.eq.s32.totalorder %s23, 7
      %p104 = por %p102, %p103
      %p105 = scmp.ne.s32.totalorder %s97, %s100
      %p106 = scmp.eq.s32.totalorder %s23, 0
      %p107 = por %p105, %p106
      %p108 = scmp.ne.s32.totalorder %s97, %s100
      %p109 = scmp.eq.s32.totalorder %s28, 7
      %p110 = por %p108, %p109
      %p111 = scmp.ne.s32.totalorder %s100, %s101
      %p112 = scmp.eq.s32.totalorder %s28, 0
      %p113 = por %p111, %p112
      %p114 = scmp.ne.s32.totalorder %s100, %s101
      %p115 = scmp.eq.s32.totalorder %s29, 7
      %p116 = por %p114, %p115
      %p118 = scmp.ne.s32.totalorder %s101, %s117
      %p119 = scmp.eq.s32.totalorder %s29, 0
      %p120 = por %p118, %p119
      %s121 = ssub.s32 %s31, %s38
      %s122 = ssub.s32 %s30, %s42
      %s123 = sor.u32 %s121, %s122
      %p124 = scmp.eq.s32.totalorder %s123, 0
      %s126 = sadd.s32 %s125, 1
      %s127 = scalar_select %p124, %s125, %s126
      %p130 = pneg %p124
      %p131 = scmp.eq.s32.totalorder %s23, 7
      %p132 = por %p130, %p131
      %p133 = scmp.ne.s32.totalorder %s125, %s128
      %p134 = scmp.eq.s32.totalorder %s23, 0
      %p135 = por %p133, %p134
      %p136 = scmp.ne.s32.totalorder %s125, %s128
      %p137 = scmp.eq.s32.totalorder %s28, 7
      %p138 = por %p136, %p137
      %p139 = scmp.ne.s32.totalorder %s128, %s129
      %p140 = scmp.eq.s32.totalorder %s28, 0
      %p141 = por %p139, %p140
      %p142 = scmp.ne.s32.totalorder %s128, %s129
      %p143 = scmp.eq.s32.totalorder %s29, 7
      %p144 = por %p142, %p143
      %p146 = scmp.ne.s32.totalorder %s129, %s145
      %p147 = scmp.eq.s32.totalorder %s29, 0
      %p148 = por %p146, %p147
      %s149 = ssub.s32 %s31, %s38
      %s150 = ssub.s32 %s30, %s42
      %s151 = sor.u32 %s149, %s150
      %p152 = scmp.eq.s32.totalorder %s151, 0
      %s154 = sadd.s32 %s153, 1
      %s155 = scalar_select %p152, %s153, %s154
      %p158 = pneg %p152
      %p159 = scmp.eq.s32.totalorder %s23, 7
      %p160 = por %p158, %p159
      %p161 = scmp.ne.s32.totalorder %s153, %s156
      %p162 = scmp.eq.s32.totalorder %s23, 0
      %p163 = por %p161, %p162
      %p164 = scmp.ne.s32.totalorder %s153, %s156
      %p165 = scmp.eq.s32.totalorder %s28, 7
      %p166 = por %p164, %p165
      %p167 = scmp.ne.s32.totalorder %s156, %s157
      %p168 = scmp.eq.s32.totalorder %s28, 0
      %p169 = por %p167, %p168
      %p170 = scmp.ne.s32.totalorder %s156, %s157
      %p171 = scmp.eq.s32.totalorder %s29, 7
      %p172 = por %p170, %p171
      %p174 = scmp.ne.s32.totalorder %s157, %s173
      %p175 = scmp.eq.s32.totalorder %s29, 0
      %p176 = por %p174, %p175
      %s177 = ssub.s32 %s31, %s38
      %s178 = ssub.s32 %s30, %s42
      %s179 = sor.u32 %s177, %s178
      %p180 = scmp.eq.s32.totalorder %s179, 0
      %s182 = sadd.s32 %s181, 1
      %s183 = scalar_select %p180, %s181, %s182
      %p186 = pneg %p180
      %p187 = scmp.eq.s32.totalorder %s23, 7
      %p188 = por %p186, %p187
      %p189 = scmp.ne.s32.totalorder %s181, %s184
      %p190 = scmp.eq.s32.totalorder %s23, 0
      %p191 = por %p189, %p190
      %p192 = scmp.ne.s32.totalorder %s181, %s184
      %p193 = scmp.eq.s32.totalorder %s28, 7
      %p194 = por %p192, %p193
      %p195 = scmp.ne.s32.totalorder %s184, %s185
      %p196 = scmp.eq.s32.totalorder %s28, 0
      %p197 = por %p195, %p196
      %p198 = scmp.ne.s32.totalorder %s184, %s185
      %p199 = scmp.eq.s32.totalorder %s29, 7
      %p200 = por %p198, %p199
      %p202 = scmp.ne.s32.totalorder %s185, %s201
      %p203 = scmp.eq.s32.totalorder %s29, 0
      %p204 = por %p202, %p203
      %s205 = ssub.s32 %s30, %s42
      %s206 = ssub.s32 %s31, %s38
      %s207 = sor.u32 %s205, %s206
      %p208 = scmp.eq.s32.totalorder %s207, 0
      %s210 = sadd.s32 %s209, 1
      %s211 = scalar_select %p208, %s209, %s210
      %p214 = pneg %p208
      %p215 = scmp.eq.s32.totalorder %s23, 7
      %p216 = por %p214, %p215
      %p217 = scmp.ne.s32.totalorder %s209, %s212
      %p218 = scmp.eq.s32.totalorder %s23, 0
      %p219 = por %p217, %p218
      %p220 = scmp.ne.s32.totalorder %s209, %s212
      %p221 = scmp.eq.s32.totalorder %s28, 7
      %p222 = por %p220, %p221
      %p223 = scmp.ne.s32.totalorder %s212, %s213
      %p224 = scmp.eq.s32.totalorder %s28, 0
      %p225 = por %p223, %p224
      %p226 = scmp.ne.s32.totalorder %s212, %s213
      %p227 = scmp.eq.s32.totalorder %s29, 7
      %p228 = por %p226, %p227
      %p230 = scmp.ne.s32.totalorder %s213, %s229
      %p231 = scmp.eq.s32.totalorder %s29, 0
      %p232 = por %p230, %p231
      %s233 = ssub.s32 %s30, %s42
      %s234 = ssub.s32 %s31, %s38
      %s235 = sor.u32 %s233, %s234
      %p236 = scmp.eq.s32.totalorder %s235, 0
      %s238 = sadd.s32 %s237, 1
      %s239 = scalar_select %p236, %s237, %s238
      %p242 = pneg %p236
      %p243 = scmp.eq.s32.totalorder %s23, 7
      %p244 = por %p242, %p243
      %p245 = scmp.ne.s32.totalorder %s237, %s240
      %p246 = scmp.eq.s32.totalorder %s23, 0
      %p247 = por %p245, %p246
      %p248 = scmp.ne.s32.totalorder %s237, %s240
      %p249 = scmp.eq.s32.totalorder %s28, 7
      %p250 = por %p248, %p249
      %p251 = scmp.ne.s32.totalorder %s240, %s241
      %p252 = scmp.eq.s32.totalorder %s28, 0
      %p253 = por %p251, %p252
      %p254 = scmp.ne.s32.totalorder %s240, %s241
      %p255 = scmp.eq.s32.totalorder %s29, 7
      %p256 = por %p254, %p255
      %p258 = scmp.ne.s32.totalorder %s241, %s257
      %p259 = scmp.eq.s32.totalorder %s29, 0
      %p260 = por %p258, %p259
      %s261 = ssub.s32 %s30, %s42
      %s262 = ssub.s32 %s31, %s38
      %s263 = sor.u32 %s261, %s262
      %p264 = scmp.eq.s32.totalorder %s263, 0
      %s266 = sadd.s32 %s265, 1
      %s267 = scalar_select %p264, %s265, %s266
      %p270 = pneg %p264
      %p271 = scmp.eq.s32.totalorder %s23, 7
      %p272 = por %p270, %p271
      %p273 = scmp.ne.s32.totalorder %s265, %s268
      %p274 = scmp.eq.s32.totalorder %s23, 0
      %p275 = por %p273, %p274
      %p276 = scmp.ne.s32.totalorder %s265, %s268
      %p277 = scmp.eq.s32.totalorder %s28, 7
      %p278 = por %p276, %p277
      %p279 = scmp.ne.s32.totalorder %s268, %s269
      %p280 = scmp.eq.s32.totalorder %s28, 0
      %p281 = por %p279, %p280
      %p282 = scmp.ne.s32.totalorder %s268, %s269
      %p283 = scmp.eq.s32.totalorder %s29, 7
      %p284 = por %p282, %p283
      %p286 = scmp.ne.s32.totalorder %s269, %s285
      %p287 = scmp.eq.s32.totalorder %s29, 0
      %p288 = por %p286, %p287
      %s289 = ssub.s32 %s30, %s42
      %s290 = ssub.s32 %s31, %s38
      %s291 = sor.u32 %s289, %s290
      %p292 = scmp.eq.s32.totalorder %s291, 0
      %s294 = sadd.s32 %s293, 1
      %s295 = scalar_select %p292, %s293, %s294
      %p298 = pneg %p292
      %p299 = scmp.eq.s32.totalorder %s23, 7
      %p300 = por %p298, %p299
      %p301 = scmp.ne.s32.totalorder %s293, %s296
      %p302 = scmp.eq.s32.totalorder %s23, 0
      %p303 = por %p301, %p302
      %p304 = scmp.ne.s32.totalorder %s293, %s296
      %p305 = scmp.eq.s32.totalorder %s28, 7
      %p306 = por %p304, %p305
      %p307 = scmp.ne.s32.totalorder %s296, %s297
      %p308 = scmp.eq.s32.totalorder %s28, 0
      %p309 = por %p307, %p308
      %p310 = scmp.ne.s32.totalorder %s296, %s297
      %p311 = scmp.eq.s32.totalorder %s29, 7
      %p312 = por %p310, %p311
      %p314 = scmp.ne.s32.totalorder %s297, %s313
      %p315 = scmp.eq.s32.totalorder %s29, 0
      %p316 = por %p314, %p315
      %s317 = ssub.s32 %s30, %s42
      %s318 = ssub.s32 %s31, %s38
      %s319 = sor.u32 %s317, %s318
      %p320 = scmp.eq.s32.totalorder %s319, 0
      %s322 = sadd.s32 %s321, 1
      %s323 = scalar_select %p320, %s321, %s322
      %p326 = pneg %p320
      %p327 = scmp.eq.s32.totalorder %s23, 7
      %p328 = por %p326, %p327
      %p329 = scmp.ne.s32.totalorder %s321, %s324
      %p330 = scmp.eq.s32.totalorder %s23, 0
      %p331 = por %p329, %p330
      %p332 = scmp.ne.s32.totalorder %s321, %s324
      %p333 = scmp.eq.s32.totalorder %s28, 7
      %p334 = por %p332, %p333
      %p335 = scmp.ne.s32.totalorder %s324, %s325
      %p336 = scmp.eq.s32.totalorder %s28, 0
      %p337 = por %p335, %p336
      %p338 = scmp.ne.s32.totalorder %s324, %s325
      %p339 = scmp.eq.s32.totalorder %s29, 7
      %p340 = por %p338, %p339
      %p342 = scmp.ne.s32.totalorder %s325, %s341
      %p343 = scmp.eq.s32.totalorder %s29, 0
      %p344 = por %p342, %p343
      %p345 = scmp.le.s32.totalorder 1, %s23
      %p346 = scmp.lt.s32.totalorder %s23, 9
      %p347 = pnand %p345, %p346
      %p348 = pneg %p347
      // Predicated region
      $region9: #{iodine_forward.5} parent=5 // pred_check
        _
      $region10: #{iodine_forward.5} parent=5 // pred_check_branch
        %350 = sbr.rel (%p347) target = $region12
      $region11: #{iodine_forward.5} parent=5 // pred_region
        %s351 = ssub.s32 %s23, 1
      $region12: #{iodine_forward.5} parent=5 // pred_fallthru
        _
      %p352 = scmp.lt.s32.totalorder %s23, 8
      // Predicated region
      $region13: #{iodine_forward.5} parent=5 // pred_check
        %p353 = pneg %p352
      $region14: #{iodine_forward.5} parent=5 // pred_check_branch
        %355 = sbr.rel (%p353) target = $region16
      $region15: #{iodine_forward.5} parent=5 // pred_region
        // Predicated region
        $region17: #{iodine_forward.5} parent=15 // pred_check
          %p356 = pneg %p55
        $region18: #{iodine_forward.5} parent=15 // pred_check_branch
          %358 = sbr.rel (%p356) target = $region20
        $region19: #{iodine_forward.5} parent=15 // pred_region
          %p359 = scmp.lt.s32.totalorder %s31, 1
          %s360 = scalar_select %p359, %s31, 1
          %s361 = smul.addr %s360, 4
          %s362 = scalar_lea.vmem %s0, %s361
        $region20: #{iodine_forward.5} parent=15 // pred_fallthru
          _
        // Predicated region
        $region21: #{iodine_forward.5} parent=15 // pred_check
          %p363 = pneg %p81
        $region22: #{iodine_forward.5} parent=15 // pred_check_branch
          %365 = sbr.rel (%p363) target = $region24
        $region23: #{iodine_forward.5} parent=15 // pred_region
          %s366 = sand.u32 %s71, 1
          %s367 = sand.u32 %s71, 1
          %s368 = smul.addr %s367, 256
          %s369 = scalar_lea.vmem [#allocation2], %s368
          %s370 = smul.u32 8, %s30
          %s371 = smul.addr %s370, 4
          %s372 = scalar_lea.vmem %s1, %s371
          // Predicated region
          $region25: #{iodine_forward.5} parent=23 // pred_check
            _
          $region26: #{iodine_forward.5} parent=23 // pred_check_branch
            %374 = sbr.rel (0) target = $region28
          $region27: #{iodine_forward.5} parent=23 // pred_region
            // Predicated region
            $region29: #{iodine_forward.5} parent=27 // pred_check
              _
            $region30: #{iodine_forward.5} parent=27 // pred_check_branch
              %376 = sbr.rel (0) target = $region32
            $region31: #{iodine_forward.5} parent=27 // pred_region
              loop: start=0, step=1, limit=1
              $region33: #{iodine_forward.5} parent=31 // loop_pre_header
                _
              $region34: #{iodine_forward.5} parent=31 // loop_header
                %s378 = sphi 0, %s382
                %p379 = scmp.ge.s32.totalorder %s378, 1
                %s383 = sphi %s372, %s372
                %s384 = sphi %s369, %s369
              $region35: #{iodine_forward.5} parent=31 // loop_header_branch
                %381 = sbr.rel (%p379) target = $region39
              $region36: #{iodine_forward.5} parent=31 // loop_body
                %v385 = vld [vmem:[%s383] sm:$0xff]
                %386 = vst [vmem:[%s384] sm:$0xff] %v385
                %v387 = vld [vmem:[%s383 + $0x8] sm:$0xff]
                %388 = vst [vmem:[%s384 + $0x8] sm:$0xff] %v387
                %v389 = vld [vmem:[%s383 + $0x10] sm:$0xff]
                %390 = vst [vmem:[%s384 + $0x10] sm:$0xff] %v389
                %v391 = vld [vmem:[%s383 + $0x18] sm:$0xff]
                %392 = vst [vmem:[%s384 + $0x18] sm:$0xff] %v391
                %v393 = vld [vmem:[%s383 + $0x80] sm:$0xff]
                %394 = vst [vmem:[%s384 + $0x20] sm:$0xff] %v393
                %v395 = vld [vmem:[%s383 + $0x88] sm:$0xff]
                %396 = vst [vmem:[%s384 + $0x28] sm:$0xff] %v395
                %v397 = vld [vmem:[%s383 + $0x90] sm:$0xff]
                %398 = vst [vmem:[%s384 + $0x30] sm:$0xff] %v397
                %v399 = vld [vmem:[%s383 + $0x98] sm:$0xff]
                %400 = vst [vmem:[%s384 + $0x38] sm:$0xff] %v399
                %v401 = vld [vmem:[%s383 + $0x100] sm:$0xff]
                %402 = vst [vmem:[%s384 + $0x40] sm:$0xff] %v401
                %v403 = vld [vmem:[%s383 + $0x108] sm:$0xff]
                %404 = vst [vmem:[%s384 + $0x48] sm:$0xff] %v403
                %v405 = vld [vmem:[%s383 + $0x110] sm:$0xff]
                %406 = vst [vmem:[%s384 + $0x50] sm:$0xff] %v405
                %v407 = vld [vmem:[%s383 + $0x118] sm:$0xff]
                %408 = vst [vmem:[%s384 + $0x58] sm:$0xff] %v407
                %v409 = vld [vmem:[%s383 + $0x180] sm:$0xff]
                %410 = vst [vmem:[%s384 + $0x60] sm:$0xff] %v409
                %v411 = vld [vmem:[%s383 + $0x188] sm:$0xff]
                %412 = vst [vmem:[%s384 + $0x68] sm:$0xff] %v411
                %v413 = vld [vmem:[%s383 + $0x190] sm:$0xff]
                %414 = vst [vmem:[%s384 + $0x70] sm:$0xff] %v413
                %v415 = vld [vmem:[%s383 + $0x198] sm:$0xff]
                %416 = vst [vmem:[%s384 + $0x78] sm:$0xff] %v415
                %v417 = vld [vmem:[%s383 + $0x200] sm:$0xff]
                %418 = vst [vmem:[%s384 + $0x80] sm:$0xff] %v417
                %v419 = vld [vmem:[%s383 + $0x208] sm:$0xff]
                %420 = vst [vmem:[%s384 + $0x88] sm:$0xff] %v419
                %v421 = vld [vmem:[%s383 + $0x210] sm:$0xff]
                %422 = vst [vmem:[%s384 + $0x90] sm:$0xff] %v421
                %v423 = vld [vmem:[%s383 + $0x218] sm:$0xff]
                %424 = vst [vmem:[%s384 + $0x98] sm:$0xff] %v423
                %v425 = vld [vmem:[%s383 + $0x280] sm:$0xff]
                %426 = vst [vmem:[%s384 + $0xa0] sm:$0xff] %v425
                %v427 = vld [vmem:[%s383 + $0x288] sm:$0xff]
                %428 = vst [vmem:[%s384 + $0xa8] sm:$0xff] %v427
                %v429 = vld [vmem:[%s383 + $0x290] sm:$0xff]
                %430 = vst [vmem:[%s384 + $0xb0] sm:$0xff] %v429
                %v431 = vld [vmem:[%s383 + $0x298] sm:$0xff]
                %432 = vst [vmem:[%s384 + $0xb8] sm:$0xff] %v431
                %v433 = vld [vmem:[%s383 + $0x300] sm:$0xff]
                %434 = vst [vmem:[%s384 + $0xc0] sm:$0xff] %v433
                %v435 = vld [vmem:[%s383 + $0x308] sm:$0xff]
                %436 = vst [vmem:[%s384 + $0xc8] sm:$0xff] %v435
                %v437 = vld [vmem:[%s383 + $0x310] sm:$0xff]
                %438 = vst [vmem:[%s384 + $0xd0] sm:$0xff] %v437
                %v439 = vld [vmem:[%s383 + $0x318] sm:$0xff]
                %440 = vst [vmem:[%s384 + $0xd8] sm:$0xff] %v439
                %v441 = vld [vmem:[%s383 + $0x380] sm:$0xff]
                %442 = vst [vmem:[%s384 + $0xe0] sm:$0xff] %v441
                %v443 = vld [vmem:[%s383 + $0x388] sm:$0xff]
                %444 = vst [vmem:[%s384 + $0xe8] sm:$0xff] %v443
                %v445 = vld [vmem:[%s383 + $0x390] sm:$0xff]
                %446 = vst [vmem:[%s384 + $0xf0] sm:$0xff] %v445
                %v447 = vld [vmem:[%s383 + $0x398] sm:$0xff]
                %448 = vst [vmem:[%s384 + $0xf8] sm:$0xff] %v447
              $region37: #{iodine_forward.5} parent=31 // loop_footer
                %s382 = sadd.s32 1, %s378
              $region38: #{iodine_forward.5} parent=31 // loop_footer_branch
                %377 = sbr.rel target = $region34
              $region39: #{iodine_forward.5} parent=31 // loop_exit
                _
            $region32: #{iodine_forward.5} parent=27 // pred_fallthru
              _
            // Predicated region
            $region40: #{iodine_forward.5} parent=27 // pred_check
              _
            $region41: #{iodine_forward.5} parent=27 // pred_check_branch
              %450 = sbr.rel target = $region43
            $region42: #{iodine_forward.5} parent=27 // pred_region
              _
            $region43: #{iodine_forward.5} parent=27 // pred_fallthru
              _
          $region28: #{iodine_forward.5} parent=23 // pred_fallthru
            _
          %451 = vnop
        $region24: #{iodine_forward.5} parent=15 // pred_fallthru
          _
        // Predicated region
        $region44: #{iodine_forward.5} parent=15 // pred_check
          %p452 = pneg %p107
        $region45: #{iodine_forward.5} parent=15 // pred_check_branch
          %454 = sbr.rel (%p452) target = $region47
        $region46: #{iodine_forward.5} parent=15 // pred_region
          %s455 = sand.u32 %s97, 1
          %s456 = sand.u32 %s97, 1
          %s457 = smul.addr %s456, 32
          %s458 = scalar_lea.vmem [#allocation3], %s457
          %s459 = smul.u32 8, %s30
          %s460 = scalar_lea.vmem %s2, %s459
          // Predicated region
          $region48: #{iodine_forward.5} parent=46 // pred_check
            _
          $region49: #{iodine_forward.5} parent=46 // pred_check_branch
            %462 = sbr.rel (0) target = $region51
          $region50: #{iodine_forward.5} parent=46 // pred_region
            // Predicated region
            $region52: #{iodine_forward.5} parent=50 // pred_check
              _
            $region53: #{iodine_forward.5} parent=50 // pred_check_branch
              %464 = sbr.rel (0) target = $region55
            $region54: #{iodine_forward.5} parent=50 // pred_region
              // Predicated region
              $region67: #{iodine_forward.5} parent=54 // pred_check
                _
              $region68: #{iodine_forward.5} parent=54 // pred_check_branch
                %485 = sbr.rel (0) target = $region70
              $region69: #{iodine_forward.5} parent=54 // pred_region
                loop: start=0, step=1, limit=1
                $region71: #{iodine_forward.5} parent=69 // loop_pre_header
                  _
                $region72: #{iodine_forward.5} parent=69 // loop_header
                  %s487 = sphi 0, %s491
                  %p488 = scmp.ge.s32.totalorder %s487, 1
                  %s492 = sphi %s460, %s460
                  %s493 = sphi %s458, %s458
                $region73: #{iodine_forward.5} parent=69 // loop_header_branch
                  %490 = sbr.rel (%p488) target = $region77
                $region74: #{iodine_forward.5} parent=69 // loop_body
                  %v494 = vld [vmem:[%s492] sm:$0xff]
                  %495 = vst [vmem:[%s493] sm:$0xff] %v494
                  %v496 = vld [vmem:[%s492 + $0x20] sm:$0xff]
                  %497 = vst [vmem:[%s493 + $0x8] sm:$0xff] %v496
                  %v498 = vld [vmem:[%s492 + $0x40] sm:$0xff]
                  %499 = vst [vmem:[%s493 + $0x10] sm:$0xff] %v498
                  %v500 = vld [vmem:[%s492 + $0x60] sm:$0xff]
                  %501 = vst [vmem:[%s493 + $0x18] sm:$0xff] %v500
                $region75: #{iodine_forward.5} parent=69 // loop_footer
                  %s491 = sadd.s32 1, %s487
                $region76: #{iodine_forward.5} parent=69 // loop_footer_branch
                  %486 = sbr.rel target = $region72
                $region77: #{iodine_forward.5} parent=69 // loop_exit
                  _
              $region70: #{iodine_forward.5} parent=54 // pred_fallthru
                _
              // Predicated region
              $region78: #{iodine_forward.5} parent=54 // pred_check
                _
              $region79: #{iodine_forward.5} parent=54 // pred_check_branch
                %503 = sbr.rel target = $region81
              $region80: #{iodine_forward.5} parent=54 // pred_region
                _
              $region81: #{iodine_forward.5} parent=54 // pred_fallthru
                _
            $region55: #{iodine_forward.5} parent=50 // pred_fallthru
              _
            // Predicated region
            $region56: #{iodine_forward.5} parent=50 // pred_check
              _
            $region57: #{iodine_forward.5} parent=50 // pred_check_branch
              %466 = sbr.rel target = $region59
            $region58: #{iodine_forward.5} parent=50 // pred_region
              loop: start=0, step=1, limit=1
              $region60: #{iodine_forward.5} parent=58 // loop_pre_header
                _
              $region61: #{iodine_forward.5} parent=58 // loop_header
                %s469 = sphi 0, %s473
                %p470 = scmp.ge.s32.totalorder %s469, 1
                %s474 = sphi %s460, %s460
                %s475 = sphi %s458, %s458
              $region62: #{iodine_forward.5} parent=58 // loop_header_branch
                %472 = sbr.rel (%p470) target = $region66
              $region63: #{iodine_forward.5} parent=58 // loop_body
                %v476 = vld [vmem:[%s474] sm:$0xff]
                %477 = vst [vmem:[%s475] sm:$0xff] %v476
                %v478 = vld [vmem:[%s474 + $0x20] sm:$0xff]
                %479 = vst [vmem:[%s475 + $0x8] sm:$0xff] %v478
                %v480 = vld [vmem:[%s474 + $0x40] sm:$0xff]
                %481 = vst [vmem:[%s475 + $0x10] sm:$0xff] %v480
                %v482 = vld [vmem:[%s474 + $0x60] sm:$0xff]
                %483 = vst [vmem:[%s475 + $0x18] sm:$0xff] %v482
              $region64: #{iodine_forward.5} parent=58 // loop_footer
                %s473 = sadd.s32 1, %s469
              $region65: #{iodine_forward.5} parent=58 // loop_footer_branch
                %468 = sbr.rel target = $region61
              $region66: #{iodine_forward.5} parent=58 // loop_exit
                _
            $region59: #{iodine_forward.5} parent=50 // pred_fallthru
              _
          $region51: #{iodine_forward.5} parent=46 // pred_fallthru
            _
          %504 = vnop
        $region47: #{iodine_forward.5} parent=15 // pred_fallthru
          _
        // Predicated region
        $region82: #{iodine_forward.5} parent=15 // pred_check
          %p505 = pneg %p135
        $region83: #{iodine_forward.5} parent=15 // pred_check_branch
          %507 = sbr.rel (%p505) target = $region85
        $region84: #{iodine_forward.5} parent=15 // pred_region
          %s508 = smul.u32 8, %s30
          %p509 = scmp.lt.s32.totalorder %s31, 1
          %s510 = scalar_select %p509, %s31, 1
          %p511 = scmp.lt.s32.totalorder %s508, 31
          %s512 = scalar_select %p511, %s508, 31
          %s513 = smul.addr %s510, 32
          %s514 = sadd.s32 %s512, %s513
          %s515 = smul.addr %s514, 4
          %s516 = scalar_lea.vmem %s3, %s515
          %s517 = smul.u32 8, %s30
        $region85: #{iodine_forward.5} parent=15 // pred_fallthru
          _
      $region16: #{iodine_forward.5} parent=5 // pred_fallthru
        _
      %p518 = scmp.le.s32.totalorder 1, %s23
      %p519 = scmp.lt.s32.totalorder %s23, 9
      %p520 = pnand %p518, %p519
      %p521 = pneg %p520
      // Predicated region
      $region86: #{iodine_forward.5} parent=5 // pred_check
        _
      $region87: #{iodine_forward.5} parent=5 // pred_check_branch
        %523 = sbr.rel (%p520) target = $region89
      $region88: #{iodine_forward.5} parent=5 // pred_region
        %s524 = ssub.s32 %s23, 1
        %s525 = sand.u32 %s74, 1
        %s526 = sand.u32 %s74, 1
        %s527 = smul.addr %s526, 256
        %s528 = scalar_lea.vmem [#allocation2], %s527
        // Predicated region
        $region90: #{iodine_forward.5} parent=88 // pred_check
          %p529 = pneg %p87
        $region91: #{iodine_forward.5} parent=88 // pred_check_branch
          %531 = sbr.rel (%p529) target = $region93
        $region92: #{iodine_forward.5} parent=88 // pred_region
          _
        $region93: #{iodine_forward.5} parent=88 // pred_fallthru
          _
        %s532 = sand.u32 %s100, 1
        %s533 = sand.u32 %s100, 1
        %s534 = smul.addr %s533, 32
        %s535 = scalar_lea.vmem [#allocation3], %s534
        // Predicated region
        $region94: #{iodine_forward.5} parent=88 // pred_check
          %p536 = pneg %p113
        $region95: #{iodine_forward.5} parent=88 // pred_check_branch
          %538 = sbr.rel (%p536) target = $region97
        $region96: #{iodine_forward.5} parent=88 // pred_region
          _
        $region97: #{iodine_forward.5} parent=88 // pred_fallthru
          _
        %p539 = scmp.lt.s32.totalorder %s33, 1
        %s540 = scalar_select %p539, %s33, 1
        %s541 = smul.addr %s540, 4
        %s542 = scalar_lea.vmem %s0, %s541
        %p543 = pneg %p61
        %p544 = pneg %p58
        %s545 = sand.u32 %s74, 1
        %s546 = sand.u32 %s74, 1
        %s547 = smul.addr %s546, 256
        %s548 = scalar_lea.vmem [#allocation2], %s547
        %p549 = pneg %p87
        %p550 = pneg %p84
        %s551 = sand.u32 %s100, 1
        %s552 = sand.u32 %s100, 1
        %s553 = smul.addr %s552, 32
        %s554 = scalar_lea.vmem [#allocation3], %s553
        %p555 = pneg %p113
        %p556 = pneg %p110
        %s557 = smul.u32 8, %s32
        %p558 = scmp.lt.s32.totalorder %s33, 1
        %s559 = scalar_select %p558, %s33, 1
        %p560 = scmp.lt.s32.totalorder %s557, 31
        %s561 = scalar_select %p560, %s557, 31
        %s562 = smul.addr %s559, 32
        %s563 = sadd.s32 %s561, %s562
        %s564 = smul.addr %s563, 4
        %s565 = scalar_lea.vmem %s3, %s564
        %p566 = pneg %p141
        %p567 = pneg %p138
        %p568 = pneg %p169
        %p569 = pneg %p166
        %s570 = sand.u32 %s156, 1
        %s571 = scalar_lea.sflag [#allocation5], %s570
        %s572 = sand.u32 %s156, 1
        %s573 = smul.addr %s572, 96
        %s574 = scalar_lea.vmem [#allocation4], %s573
        %p575 = pneg %p197
        %p576 = pneg %p194
        %s577 = sand.u32 %s184, 1
        %s578 = scalar_lea.sflag [#allocation7], %s577
        %s579 = sand.u32 %s184, 1
        %s580 = smul.addr %s579, 32
        %s581 = scalar_lea.vmem [#allocation6], %s580
        %p582 = pneg %p225
        %p583 = pneg %p222
        %p584 = scmp.lt.s32.totalorder %s32, 3
        %s585 = scalar_select %p584, %s32, 3
        %p586 = scmp.lt.s32.totalorder %s33, 1
        %s587 = scalar_select %p586, %s33, 1
        %s588 = smul.addr %s585, 2
        %s589 = sadd.s32 %s587, %s588
        %s590 = smul.addr %s589, 4
        %s591 = scalar_lea.vmem %s6, %s590
        %p592 = pneg %p253
        %p593 = pneg %p250
        %p594 = scmp.lt.s32.totalorder %s32, 3
        %s595 = scalar_select %p594, %s32, 3
        %p596 = scmp.lt.s32.totalorder %s33, 1
        %s597 = scalar_select %p596, %s33, 1
        %s598 = smul.addr %s595, 2
        %s599 = sadd.s32 %s597, %s598
        %s600 = smul.addr %s599, 4
        %s601 = scalar_lea.vmem %s7, %s600
        %p602 = pneg %p281
        %p603 = pneg %p278
        %p604 = scmp.lt.s32.totalorder %s32, 3
        %s605 = scalar_select %p604, %s32, 3
        %p606 = scmp.lt.s32.totalorder %s33, 1
        %s607 = scalar_select %p606, %s33, 1
        %s608 = smul.addr %s605, 2
        %s609 = sadd.s32 %s607, %s608
        %s610 = smul.addr %s609, 4
        %s611 = scalar_lea.vmem %s8, %s610
        %p612 = pneg %p309
        %p613 = pneg %p306
        %p614 = scmp.lt.s32.totalorder %s32, 3
        %s615 = scalar_select %p614, %s32, 3
        %p616 = scmp.lt.s32.totalorder %s33, 1
        %s617 = scalar_select %p616, %s33, 1
        %s618 = smul.addr %s615, 2
        %s619 = sadd.s32 %s617, %s618
        %s620 = smul.addr %s619, 4
        %s621 = scalar_lea.vmem %s9, %s620
        %p622 = pneg %p337
        %p623 = pneg %p334
        %p624 = scmp.lt.s32.totalorder %s32, 3
        %s625 = scalar_select %p624, %s32, 3
        %p626 = scmp.lt.s32.totalorder %s33, 1
        %s627 = scalar_select %p626, %s33, 1
        %s628 = smul.addr %s625, 2
        %s629 = sadd.s32 %s627, %s628
        %s630 = scalar_lea.vmem %s10, %s629
        %p631 = scmp.lt.s32.totalorder %s33, 1
        %s632 = scalar_select %p631, %s33, 1
        %s633 = smul.addr %s632, 4
        %s634 = scalar_lea.vmem %s0, %s633
        %s635 = smul.u32 8, %s32
        %s636 = smul.u32 8, %s32
        %s637 = smul.u32 8, %s32
        %p638 = scmp.lt.s32.totalorder %s33, 1
        %s639 = scalar_select %p638, %s33, 1
        %p640 = scmp.lt.s32.totalorder %s637, 31
        %s641 = scalar_select %p640, %s637, 31
        %s642 = smul.addr %s639, 32
        %s643 = sadd.s32 %s641, %s642
        %s644 = smul.addr %s643, 4
        %s645 = scalar_lea.vmem %s3, %s644
        %s646 = smul.u32 8, %s32
        %s647 = smul.u32 8, %s32
        %s648 = smul.u32 8, %s32
        %p649 = scmp.lt.s32.totalorder %s32, 3
        %s650 = scalar_select %p649, %s32, 3
        %p651 = scmp.lt.s32.totalorder %s33, 1
        %s652 = scalar_select %p651, %s33, 1
        %s653 = smul.addr %s650, 2
        %s654 = sadd.s32 %s652, %s653
        %s655 = smul.addr %s654, 4
        %s656 = scalar_lea.vmem %s6, %s655
        %p657 = scmp.lt.s32.totalorder %s32, 3
        %s658 = scalar_select %p657, %s32, 3
        %p659 = scmp.lt.s32.totalorder %s33, 1
        %s660 = scalar_select %p659, %s33, 1
        %s661 = smul.addr %s658, 2
        %s662 = sadd.s32 %s660, %s661
        %s663 = smul.addr %s662, 4
        %s664 = scalar_lea.vmem %s7, %s663
        %p665 = scmp.lt.s32.totalorder %s32, 3
        %s666 = scalar_select %p665, %s32, 3
        %p667 = scmp.lt.s32.totalorder %s33, 1
        %s668 = scalar_select %p667, %s33, 1
        %s669 = smul.addr %s666, 2
        %s670 = sadd.s32 %s668, %s669
        %s671 = smul.addr %s670, 4
        %s672 = scalar_lea.vmem %s8, %s671
        %p673 = scmp.lt.s32.totalorder %s32, 3
        %s674 = scalar_select %p673, %s32, 3
        %p675 = scmp.lt.s32.totalorder %s33, 1
        %s676 = scalar_select %p675, %s33, 1
        %s677 = smul.addr %s674, 2
        %s678 = sadd.s32 %s676, %s677
        %s679 = smul.addr %s678, 4
        %s680 = scalar_lea.vmem %s9, %s679
        %p681 = scmp.lt.s32.totalorder %s32, 3
        %s682 = scalar_select %p681, %s32, 3
        %p683 = scmp.lt.s32.totalorder %s33, 1
        %s684 = scalar_select %p683, %s33, 1
        %s685 = smul.addr %s682, 2
        %s686 = sadd.s32 %s684, %s685
        %s687 = scalar_lea.vmem %s10, %s686
        %v689 = vld [vmem:[%s634] sm:$0x7]
        %v690 = vpack.c.bf16 %v689, %v689
        %s691 = scalar_lea.vmem %s528, 192 [#allocation2]
        %v692 = vld [vmem:[%s691] sm:$0xff]
        %v693 = vld [vmem:[%s691 + $0x8] sm:$0xff]
        %v694 = vld [vmem:[%s691 + $0x10] sm:$0xff]
        %v695 = vld [vmem:[%s691 + $0x18] sm:$0xff]
        %v696 = vld [vmem:[%s691 + $0x20] sm:$0xff]
        %v697 = vld [vmem:[%s691 + $0x28] sm:$0xff]
        %v698 = vld [vmem:[%s691 + $0x30] sm:$0xff]
        %v699 = vld [vmem:[%s691 + $0x38] sm:$0xff]
        %s700 = scalar_lea.vmem %s535, 24 [#allocation3]
        %v701 = vld [vmem:[%s700] sm:$0xff]
        %v703 = vlaneseq
        %v704 = vshrl.u32 %v703, 7
        %v705 = vsub.s32 0, %v704
        %v706 = vrot.slane %v701, %v705
        %v707 = vlaneseq
        %v708 = vshrl.u32 %v707, 7
        %v709 = vsub.s32 1, %v708
        %v710 = vrot.slane %v701, %v709
        %v711 = vlaneseq
        %v712 = vshrl.u32 %v711, 7
        %v713 = vsub.s32 2, %v712
        %v714 = vrot.slane %v701, %v713
        %v715 = vlaneseq
        %v716 = vshrl.u32 %v715, 7
        %v717 = vsub.s32 3, %v716
        %v718 = vrot.slane %v701, %v717
        %v719 = vlaneseq
        %v720 = vshrl.u32 %v719, 7
        %v721 = vsub.s32 4, %v720
        %v722 = vrot.slane %v701, %v721
        %v723 = vlaneseq
        %v724 = vshrl.u32 %v723, 7
        %v725 = vsub.s32 5, %v724
        %v726 = vrot.slane %v701, %v725
        %v727 = vlaneseq
        %v728 = vshrl.u32 %v727, 7
        %v729 = vsub.s32 6, %v728
        %v730 = vrot.slane %v701, %v729
        %v731 = vlaneseq
        %v732 = vshrl.u32 %v731, 7
        %v733 = vsub.s32 7, %v732
        %v734 = vrot.slane %v701, %v733
        %v751 = vunpack.c.l.b16 %v692
        %v752 = vunpack.c.h.b16 %v692
        %v753 = vunpack.c.l.b16 %v693
        %v754 = vunpack.c.h.b16 %v693
        %v755 = vunpack.c.l.b16 %v694
        %v756 = vunpack.c.h.b16 %v694
        %v757 = vunpack.c.l.b16 %v695
        %v758 = vunpack.c.h.b16 %v695
        %v759 = vunpack.c.l.b16 %v696
        %v760 = vunpack.c.h.b16 %v696
        %v761 = vunpack.c.l.b16 %v697
        %v762 = vunpack.c.h.b16 %v697
        %v763 = vunpack.c.l.b16 %v698
        %v764 = vunpack.c.h.b16 %v698
        %v765 = vunpack.c.l.b16 %v699
        %v766 = vunpack.c.h.b16 %v699
        %v767 = vpack.c.b16 %v759, %v751
        %v768 = vpack.c.b16 %v760, %v752
        %v769 = vpack.c.b16 %v761, %v753
        %v770 = vpack.c.b16 %v762, %v754
        %v771 = vpack.c.b16 %v763, %v755
        %v772 = vpack.c.b16 %v764, %v756
        %v773 = vpack.c.b16 %v765, %v757
        %v774 = vpack.c.b16 %v766, %v758
        %vm783 = vcmask 130048
        %v785 = vsel %vm783, %v690, 0
        %787 = vmatprep.subr.bf16.mxu0 %v768
        %788 = vmatpush1.bf16.msra.mxu0 %v767
        %789 = vmatprep.subr.bf16.mxu0 0
        %790 = vmatpush1.bf16.msra.mxu0 0
        %791 = vmatprep.subr.bf16.mxu0 0
        %792 = vmatpush1.bf16.msra.mxu0 0
        %793 = vmatprep.subr.bf16.mxu0 0
        %794 = vmatpush1.bf16.msra.mxu0 0
        %795 = vmatprep.subr.bf16.mxu0 0
        %796 = vmatpush1.bf16.msra.mxu0 0
        %797 = vmatprep.subr.bf16.mxu0 0
        %798 = vmatpush1.bf16.msra.mxu0 0
        %799 = vmatprep.subr.bf16.mxu0 0
        %800 = vmatpush1.bf16.msra.mxu0 0
        %801 = vmatprep.subr.bf16.mxu0 0
        %802 = vmatpush1.bf16.msra.mxu0 0
        %803 = vmatprep.subr.bf16.mxu0 0
        %804 = vmatpush1.bf16.msra.mxu0 0
        %805 = vmatprep.subr.bf16.mxu0 0
        %806 = vmatpush1.bf16.msra.mxu0 0
        %807 = vmatprep.subr.bf16.mxu0 0
        %808 = vmatpush1.bf16.msra.mxu0 0
        %809 = vmatprep.subr.bf16.mxu0 0
        %810 = vmatpush1.bf16.msra.mxu0 0
        %811 = vmatprep.subr.bf16.mxu0 0
        %812 = vmatpush1.bf16.msra.mxu0 0
        %813 = vmatprep.subr.bf16.mxu0 0
        %814 = vmatpush1.bf16.msra.mxu0 0
        %815 = vmatprep.subr.bf16.mxu0 0
        %816 = vmatpush1.bf16.msra.mxu0 0
        %817 = vmatprep.subr.bf16.mxu0 0
        %818 = vmatpush1.bf16.msra.mxu0 0
        %819 = vmatprep.mubr.bf16.mxu0 0
        %820 = vmatmul.mubr.bf16.gmra.mrb[0].mxu0 %v785
        %v821 = vpop.f32.mrb[0].mxu0
        %v822 = vadd.f32 %v706, %v821
        %v823 = vpop.f32.mrb[0].mxu0
        %v824 = vadd.f32 %v710, %v823
        %v825 = vpop.f32.mrb[0].mxu0
        %v826 = vpop.f32.mrb[0].mxu0
        %827 = vdwg.mxu0
        %828 = vmatprep.subr.bf16.mxu0 %v770
        %829 = vmatpush1.bf16.msra.mxu0 %v769
        %830 = vmatprep.subr.bf16.mxu0 0
        %831 = vmatpush1.bf16.msra.mxu0 0
        %832 = vmatprep.subr.bf16.mxu0 0
        %833 = vmatpush1.bf16.msra.mxu0 0
        %834 = vmatprep.subr.bf16.mxu0 0
        %835 = vmatpush1.bf16.msra.mxu0 0
        %836 = vmatprep.subr.bf16.mxu0 0
        %837 = vmatpush1.bf16.msra.mxu0 0
        %838 = vmatprep.subr.bf16.mxu0 0
        %839 = vmatpush1.bf16.msra.mxu0 0
        %840 = vmatprep.subr.bf16.mxu0 0
        %841 = vmatpush1.bf16.msra.mxu0 0
        %842 = vmatprep.subr.bf16.mxu0 0
        %843 = vmatpush1.bf16.msra.mxu0 0
        %844 = vmatprep.subr.bf16.mxu0 0
        %845 = vmatpush1.bf16.msra.mxu0 0
        %846 = vmatprep.subr.bf16.mxu0 0
        %847 = vmatpush1.bf16.msra.mxu0 0
        %848 = vmatprep.subr.bf16.mxu0 0
        %849 = vmatpush1.bf16.msra.mxu0 0
        %850 = vmatprep.subr.bf16.mxu0 0
        %851 = vmatpush1.bf16.msra.mxu0 0
        %852 = vmatprep.subr.bf16.mxu0 0
        %853 = vmatpush1.bf16.msra.mxu0 0
        %854 = vmatprep.subr.bf16.mxu0 0
        %855 = vmatpush1.bf16.msra.mxu0 0
        %856 = vmatprep.subr.bf16.mxu0 0
        %857 = vmatpush1.bf16.msra.mxu0 0
        %858 = vmatprep.subr.bf16.mxu0 0
        %859 = vmatpush1.bf16.msra.mxu0 0
        %860 = vmatprep.mubr.bf16.mxu0 0
        %861 = vmatmul.mubr.bf16.gmra.mrb[0].mxu0 %v785
        %v862 = vpop.f32.mrb[0].mxu0
        %v863 = vadd.f32 %v714, %v862
        %v864 = vpop.f32.mrb[0].mxu0
        %v865 = vadd.f32 %v718, %v864
        %v866 = vpop.f32.mrb[0].mxu0
        %v867 = vpop.f32.mrb[0].mxu0
        %868 = vdwg.mxu0
        %869 = vmatprep.subr.bf16.mxu0 %v772
        %870 = vmatpush1.bf16.msra.mxu0 %v771
        %871 = vmatprep.subr.bf16.mxu0 0
        %872 = vmatpush1.bf16.msra.mxu0 0
        %873 = vmatprep.subr.bf16.mxu0 0
        %874 = vmatpush1.bf16.msra.mxu0 0
        %875 = vmatprep.subr.bf16.mxu0 0
        %876 = vmatpush1.bf16.msra.mxu0 0
        %877 = vmatprep.subr.bf16.mxu0 0
        %878 = vmatpush1.bf16.msra.mxu0 0
        %879 = vmatprep.subr.bf16.mxu0 0
        %880 = vmatpush1.bf16.msra.mxu0 0
        %881 = vmatprep.subr.bf16.mxu0 0
        %882 = vmatpush1.bf16.msra.mxu0 0
        %883 = vmatprep.subr.bf16.mxu0 0
        %884 = vmatpush1.bf16.msra.mxu0 0
        %885 = vmatprep.subr.bf16.mxu0 0
        %886 = vmatpush1.bf16.msra.mxu0 0
        %887 = vmatprep.subr.bf16.mxu0 0
        %888 = vmatpush1.bf16.msra.mxu0 0
        %889 = vmatprep.subr.bf16.mxu0 0
        %890 = vmatpush1.bf16.msra.mxu0 0
        %891 = vmatprep.subr.bf16.mxu0 0
        %892 = vmatpush1.bf16.msra.mxu0 0
        %893 = vmatprep.subr.bf16.mxu0 0
        %894 = vmatpush1.bf16.msra.mxu0 0
        %895 = vmatprep.subr.bf16.mxu0 0
        %896 = vmatpush1.bf16.msra.mxu0 0
        %897 = vmatprep.subr.bf16.mxu0 0
        %898 = vmatpush1.bf16.msra.mxu0 0
        %899 = vmatprep.subr.bf16.mxu0 0
        %900 = vmatpush1.bf16.msra.mxu0 0
        %901 = vmatprep.mubr.bf16.mxu0 0
        %902 = vmatmul.mubr.bf16.gmra.mrb[0].mxu0 %v785
        %v903 = vpop.f32.mrb[0].mxu0
        %v904 = vadd.f32 %v722, %v903
        %v905 = vpop.f32.mrb[0].mxu0
        %v906 = vadd.f32 %v726, %v905
        %v907 = vpop.f32.mrb[0].mxu0
        %v908 = vpop.f32.mrb[0].mxu0
        %909 = vdwg.mxu0
        %910 = vmatprep.subr.bf16.mxu0 %v774
        %911 = vmatpush1.bf16.msra.mxu0 %v773
        %912 = vmatprep.subr.bf16.mxu0 0
        %913 = vmatpush1.bf16.msra.mxu0 0
        %914 = vmatprep.subr.bf16.mxu0 0
        %915 = vmatpush1.bf16.msra.mxu0 0
        %916 = vmatprep.subr.bf16.mxu0 0
        %917 = vmatpush1.bf16.msra.mxu0 0
        %918 = vmatprep.subr.bf16.mxu0 0
        %919 = vmatpush1.bf16.msra.mxu0 0
        %920 = vmatprep.subr.bf16.mxu0 0
        %921 = vmatpush1.bf16.msra.mxu0 0
        %922 = vmatprep.subr.bf16.mxu0 0
        %923 = vmatpush1.bf16.msra.mxu0 0
        %924 = vmatprep.subr.bf16.mxu0 0
        %925 = vmatpush1.bf16.msra.mxu0 0
        %926 = vmatprep.subr.bf16.mxu0 0
        %927 = vmatpush1.bf16.msra.mxu0 0
        %928 = vmatprep.subr.bf16.mxu0 0
        %929 = vmatpush1.bf16.msra.mxu0 0
        %930 = vmatprep.subr.bf16.mxu0 0
        %931 = vmatpush1.bf16.msra.mxu0 0
        %932 = vmatprep.subr.bf16.mxu0 0
        %933 = vmatpush1.bf16.msra.mxu0 0
        %934 = vmatprep.subr.bf16.mxu0 0
        %935 = vmatpush1.bf16.msra.mxu0 0
        %936 = vmatprep.subr.bf16.mxu0 0
        %937 = vmatpush1.bf16.msra.mxu0 0
        %938 = vmatprep.subr.bf16.mxu0 0
        %939 = vmatpush1.bf16.msra.mxu0 0
        %940 = vmatprep.subr.bf16.mxu0 0
        %941 = vmatpush1.bf16.msra.mxu0 0
        %942 = vmatprep.mubr.bf16.mxu0 0
        %943 = vmatmul.mubr.bf16.gmra.mrb[0].mxu0 %v785
        %v944 = vpop.f32.mrb[0].mxu0
        %v945 = vadd.f32 %v730, %v944
        %v946 = vpop.f32.mrb[0].mxu0
        %v947 = vadd.f32 %v734, %v946
        %v948 = vpop.f32.mrb[0].mxu0
        %v949 = vpop.f32.mrb[0].mxu0
        %950 = vdwg.mxu0
        %vm951 = vcmask 1042432
        %v952 = vsel %vm951, %v822, -inf
        %v953 = vrot.slane %v952, 4
        %v954 = vmax.f32 %v952, %v953
        %v955 = vrot.slane %v954, 2
        %v956 = vmax.f32 %v954, %v955
        %v957 = vrot.slane %v956, 1
        %v958 = vmax.f32 %v956, %v957
        %v959 = vsel %vm951, %v824, -inf
        %v960 = vrot.slane %v959, 4
        %v961 = vmax.f32 %v959, %v960
        %v962 = vrot.slane %v961, 2
        %v963 = vmax.f32 %v961, %v962
        %v964 = vrot.slane %v963, 1
        %v965 = vmax.f32 %v963, %v964
        %v966 = vsel %vm951, %v863, -inf
        %v967 = vrot.slane %v966, 4
        %v968 = vmax.f32 %v966, %v967
        %v969 = vrot.slane %v968, 2
        %v970 = vmax.f32 %v968, %v969
        %v971 = vrot.slane %v970, 1
        %v972 = vmax.f32 %v970, %v971
        %v973 = vsel %vm951, %v865, -inf
        %v974 = vrot.slane %v973, 4
        %v975 = vmax.f32 %v973, %v974
        %v976 = vrot.slane %v975, 2
        %v977 = vmax.f32 %v975, %v976
        %v978 = vrot.slane %v977, 1
        %v979 = vmax.f32 %v977, %v978
        %v980 = vsel %vm951, %v904, -inf
        %v981 = vrot.slane %v980, 4
        %v982 = vmax.f32 %v980, %v981
        %v983 = vrot.slane %v982, 2
        %v984 = vmax.f32 %v982, %v983
        %v985 = vrot.slane %v984, 1
        %v986 = vmax.f32 %v984, %v985
        %v987 = vsel %vm951, %v906, -inf
        %v988 = vrot.slane %v987, 4
        %v989 = vmax.f32 %v987, %v988
        %v990 = vrot.slane %v989, 2
        %v991 = vmax.f32 %v989, %v990
        %v992 = vrot.slane %v991, 1
        %v993 = vmax.f32 %v991, %v992
        %v994 = vsel %vm951, %v945, -inf
        %v995 = vrot.slane %v994, 4
        %v996 = vmax.f32 %v994, %v995
        %v997 = vrot.slane %v996, 2
        %v998 = vmax.f32 %v996, %v997
        %v999 = vrot.slane %v998, 1
        %v1000 = vmax.f32 %v998, %v999
        %v1001 = vsel %vm951, %v947, -inf
        %v1002 = vrot.slane %v1001, 4
        %v1003 = vmax.f32 %v1001, %v1002
        %v1004 = vrot.slane %v1003, 2
        %v1005 = vmax.f32 %v1003, %v1004
        %v1006 = vrot.slane %v1005, 1
        %v1007 = vmax.f32 %v1005, %v1006
        %v1008 = vsub.f32 %v822, %v958
        %v1009 = vsub.f32 %v824, %v965
        %v1010 = vsub.f32 %v863, %v972
        %v1011 = vsub.f32 %v865, %v979
        %v1012 = vsub.f32 %v904, %v986
        %v1013 = vsub.f32 %v906, %v993
        %v1014 = vsub.f32 %v945, %v1000
        %v1015 = vsub.f32 %v947, %v1007
        %v1016 = vmul.f32 %v1008, 1.442695
        %v1017 = vpow.pop %v1016
        %v1018 = vmul.f32 %v1009, 1.442695
        %v1019 = vpow.pop %v1018
        %v1020 = vmul.f32 %v1010, 1.442695
        %v1021 = vpow.pop %v1020
        %v1022 = vmul.f32 %v1011, 1.442695
        %v1023 = vpow.pop %v1022
        %v1024 = vmul.f32 %v1012, 1.442695
        %v1025 = vpow.pop %v1024
        %v1026 = vmul.f32 %v1013, 1.442695
        %v1027 = vpow.pop %v1026
        %v1028 = vmul.f32 %v1014, 1.442695
        %v1029 = vpow.pop %v1028
        %v1030 = vmul.f32 %v1015, 1.442695
        %v1031 = vpow.pop %v1030
        %v1032 = vsel %vm951, %v1017, 0.0
        %v1033 = vrot.slane %v1032, 4
        %v1034 = vadd.f32 %v1032, %v1033
        %v1035 = vrot.slane %v1034, 2
        %v1036 = vadd.f32 %v1034, %v1035
        %v1037 = vrot.slane %v1036, 1
        %v1038 = vadd.f32 %v1036, %v1037
        %v1039 = vsel %vm951, %v1019, 0.0
        %v1040 = vrot.slane %v1039, 4
        %v1041 = vadd.f32 %v1039, %v1040
        %v1042 = vrot.slane %v1041, 2
        %v1043 = vadd.f32 %v1041, %v1042
        %v1044 = vrot.slane %v1043, 1
        %v1045 = vadd.f32 %v1043, %v1044
        %v1046 = vsel %vm951, %v1021, 0.0
        %v1047 = vrot.slane %v1046, 4
        %v1048 = vadd.f32 %v1046, %v1047
        %v1049 = vrot.slane %v1048, 2
        %v1050 = vadd.f32 %v1048, %v1049
        %v1051 = vrot.slane %v1050, 1
        %v1052 = vadd.f32 %v1050, %v1051
        %v1053 = vsel %vm951, %v1023, 0.0
        %v1054 = vrot.slane %v1053, 4
        %v1055 = vadd.f32 %v1053, %v1054
        %v1056 = vrot.slane %v1055, 2
        %v1057 = vadd.f32 %v1055, %v1056
        %v1058 = vrot.slane %v1057, 1
        %v1059 = vadd.f32 %v1057, %v1058
        %v1060 = vsel %vm951, %v1025, 0.0
        %v1061 = vrot.slane %v1060, 4
        %v1062 = vadd.f32 %v1060, %v1061
        %v1063 = vrot.slane %v1062, 2
        %v1064 = vadd.f32 %v1062, %v1063
        %v1065 = vrot.slane %v1064, 1
        %v1066 = vadd.f32 %v1064, %v1065
        %v1067 = vsel %vm951, %v1027, 0.0
        %v1068 = vrot.slane %v1067, 4
        %v1069 = vadd.f32 %v1067, %v1068
        %v1070 = vrot.slane %v1069, 2
        %v1071 = vadd.f32 %v1069, %v1070
        %v1072 = vrot.slane %v1071, 1
        %v1073 = vadd.f32 %v1071, %v1072
        %v1074 = vsel %vm951, %v1029, 0.0
        %v1075 = vrot.slane %v1074, 4
        %v1076 = vadd.f32 %v1074, %v1075
        %v1077 = vrot.slane %v1076, 2
        %v1078 = vadd.f32 %v1076, %v1077
        %v1079 = vrot.slane %v1078, 1
        %v1080 = vadd.f32 %v1078, %v1079
        %v1081 = vsel %vm951, %v1031, 0.0
        %v1082 = vrot.slane %v1081, 4
        %v1083 = vadd.f32 %v1081, %v1082
        %v1084 = vrot.slane %v1083, 2
        %v1085 = vadd.f32 %v1083, %v1084
        %v1086 = vrot.slane %v1085, 1
        %v1087 = vadd.f32 %v1085, %v1086
        %v1088 = vrcp.pop %v1038
        %v1089 = vrcp.pop %v1045
        %v1090 = vrcp.pop %v1052
        %v1091 = vrcp.pop %v1059
        %v1092 = vrcp.pop %v1066
        %v1093 = vrcp.pop %v1073
        %v1094 = vrcp.pop %v1080
        %v1095 = vrcp.pop %v1087
        %v1096 = vmul.f32 %v1017, %v1088
        %v1097 = vmul.f32 %v1019, %v1089
        %v1098 = vmul.f32 %v1021, %v1090
        %v1099 = vmul.f32 %v1023, %v1091
        %v1100 = vmul.f32 %v1025, %v1092
        %v1101 = vmul.f32 %v1027, %v1093
        %v1102 = vmul.f32 %v1029, %v1094
        %v1103 = vmul.f32 %v1031, %v1095
        %v1112 = vcombine.low %v1096, %v1097
        %v1113 = vcombine.low %v1098, %v1099
        %v1114 = vcombine.low %v1100, %v1101
        %v1115 = vcombine.low %v1102, %v1103
        %1120 = vst [vmem:[%s581] sm:$0x77] %v1112
        %1121 = vst [vmem:[%s581 + $0x8] sm:$0x77] %v1113
        %1122 = vst [vmem:[%s581 + $0x10] sm:$0x77] %v1114
        %1123 = vst [vmem:[%s581 + $0x18] sm:$0x77] %v1115
        %v1124 = vld [vmem:[%s528] sm:$0xff]
        %v1125 = vld [vmem:[%s528 + $0x8] sm:$0xff]
        %v1126 = vld [vmem:[%s528 + $0x10] sm:$0xff]
        %v1127 = vld [vmem:[%s528 + $0x18] sm:$0xff]
        %v1128 = vld [vmem:[%s528 + $0x20] sm:$0xff]
        %v1129 = vld [vmem:[%s528 + $0x28] sm:$0xff]
        %v1130 = vld [vmem:[%s528 + $0x30] sm:$0xff]
        %v1131 = vld [vmem:[%s528 + $0x38] sm:$0xff]
        %v1132 = vld [vmem:[%s535] sm:$0xff]
        %v1134 = vlaneseq
        %v1135 = vshrl.u32 %v1134, 7
        %v1136 = vsub.s32 0, %v1135
        %v1137 = vrot.slane %v1132, %v1136
        %v1138 = vlaneseq
        %v1139 = vshrl.u32 %v1138, 7
        %v1140 = vsub.s32 1, %v1139
        %v1141 = vrot.slane %v1132, %v1140
        %v1142 = vlaneseq
        %v1143 = vshrl.u32 %v1142, 7
        %v1144 = vsub.s32 2, %v1143
        %v1145 = vrot.slane %v1132, %v1144
        %v1146 = vlaneseq
        %v1147 = vshrl.u32 %v1146, 7
        %v1148 = vsub.s32 3, %v1147
        %v1149 = vrot.slane %v1132, %v1148
        %v1150 = vlaneseq
        %v1151 = vshrl.u32 %v1150, 7
        %v1152 = vsub.s32 4, %v1151
        %v1153 = vrot.slane %v1132, %v1152
        %v1154 = vlaneseq
        %v1155 = vshrl.u32 %v1154, 7
        %v1156 = vsub.s32 5, %v1155
        %v1157 = vrot.slane %v1132, %v1156
        %v1158 = vlaneseq
        %v1159 = vshrl.u32 %v1158, 7
        %v1160 = vsub.s32 6, %v1159
        %v1161 = vrot.slane %v1132, %v1160
        %v1162 = vlaneseq
        %v1163 = vshrl.u32 %v1162, 7
        %v1164 = vsub.s32 7, %v1163
        %v1165 = vrot.slane %v1132, %v1164
        %v1182 = vunpack.c.l.b16 %v1124
        %v1183 = vunpack.c.h.b16 %v1124
        %v1184 = vunpack.c.l.b16 %v1125
        %v1185 = vunpack.c.h.b16 %v1125
        %v1186 = vunpack.c.l.b16 %v1126
        %v1187 = vunpack.c.h.b16 %v1126
        %v1188 = vunpack.c.l.b16 %v1127
        %v1189 = vunpack.c.h.b16 %v1127
        %v1190 = vunpack.c.l.b16 %v1128
        %v1191 = vunpack.c.h.b16 %v1128
        %v1192 = vunpack.c.l.b16 %v1129
        %v1193 = vunpack.c.h.b16 %v1129
        %v1194 = vunpack.c.l.b16 %v1130
        %v1195 = vunpack.c.h.b16 %v1130
        %v1196 = vunpack.c.l.b16 %v1131
        %v1197 = vunpack.c.h.b16 %v1131
        %v1198 = vpack.c.b16 %v1190, %v1182
        %v1199 = vpack.c.b16 %v1191, %v1183
        %v1200 = vpack.c.b16 %v1192, %v1184
        %v1201 = vpack.c.b16 %v1193, %v1185
        %v1202 = vpack.c.b16 %v1194, %v1186
        %v1203 = vpack.c.b16 %v1195, %v1187
        %v1204 = vpack.c.b16 %v1196, %v1188
        %v1205 = vpack.c.b16 %v1197, %v1189
        %1214 = vmatprep.subr.bf16.mxu0 %v1199
        %1215 = vmatpush1.bf16.msra.mxu0 %v1198
        %1216 = vmatprep.subr.bf16.mxu0 0
        %1217 = vmatpush1.bf16.msra.mxu0 0
        %1218 = vmatprep.subr.bf16.mxu0 0
        %1219 = vmatpush1.bf16.msra.mxu0 0
        %1220 = vmatprep.subr.bf16.mxu0 0
        %1221 = vmatpush1.bf16.msra.mxu0 0
        %1222 = vmatprep.subr.bf16.mxu0 0
        %1223 = vmatpush1.bf16.msra.mxu0 0
        %1224 = vmatprep.subr.bf16.mxu0 0
        %1225 = vmatpush1.bf16.msra.mxu0 0
        %1226 = vmatprep.subr.bf16.mxu0 0
        %1227 = vmatpush1.bf16.msra.mxu0 0
        %1228 = vmatprep.subr.bf16.mxu0 0
        %1229 = vmatpush1.bf16.msra.mxu0 0
        %1230 = vmatprep.subr.bf16.mxu0 0
        %1231 = vmatpush1.bf16.msra.mxu0 0
        %1232 = vmatprep.subr.bf16.mxu0 0
        %1233 = vmatpush1.bf16.msra.mxu0 0
        %1234 = vmatprep.subr.bf16.mxu0 0
        %1235 = vmatpush1.bf16.msra.mxu0 0
        %1236 = vmatprep.subr.bf16.mxu0 0
        %1237 = vmatpush1.bf16.msra.mxu0 0
        %1238 = vmatprep.subr.bf16.mxu0 0
        %1239 = vmatpush1.bf16.msra.mxu0 0
        %1240 = vmatprep.subr.bf16.mxu0 0
        %1241 = vmatpush1.bf16.msra.mxu0 0
        %1242 = vmatprep.subr.bf16.mxu0 0
        %1243 = vmatpush1.bf16.msra.mxu0 0
        %1244 = vmatprep.subr.bf16.mxu0 0
        %1245 = vmatpush1.bf16.msra.mxu0 0
        %1246 = vmatprep.mubr.bf16.mxu0 0
        %1247 = vmatmul.mubr.bf16.gmra.mrb[0].mxu0 %v785
        %v1248 = vpop.f32.mrb[0].mxu0
        %v1249 = vadd.f32 %v1137, %v1248
        %v1250 = vpop.f32.mrb[0].mxu0
        %v1251 = vadd.f32 %v1141, %v1250
        %v1252 = vpop.f32.mrb[0].mxu0
        %v1253 = vpop.f32.mrb[0].mxu0
        %1254 = vdwg.mxu0
        %1255 = vmatprep.subr.bf16.mxu0 %v1201
        %1256 = vmatpush1.bf16.msra.mxu0 %v1200
        %1257 = vmatprep.subr.bf16.mxu0 0
        %1258 = vmatpush1.bf16.msra.mxu0 0
        %1259 = vmatprep.subr.bf16.mxu0 0
        %1260 = vmatpush1.bf16.msra.mxu0 0
        %1261 = vmatprep.subr.bf16.mxu0 0
        %1262 = vmatpush1.bf16.msra.mxu0 0
        %1263 = vmatprep.subr.bf16.mxu0 0
        %1264 = vmatpush1.bf16.msra.mxu0 0
        %1265 = vmatprep.subr.bf16.mxu0 0
        %1266 = vmatpush1.bf16.msra.mxu0 0
        %1267 = vmatprep.subr.bf16.mxu0 0
        %1268 = vmatpush1.bf16.msra.mxu0 0
        %1269 = vmatprep.subr.bf16.mxu0 0
        %1270 = vmatpush1.bf16.msra.mxu0 0
        %1271 = vmatprep.subr.bf16.mxu0 0
        %1272 = vmatpush1.bf16.msra.mxu0 0
        %1273 = vmatprep.subr.bf16.mxu0 0
        %1274 = vmatpush1.bf16.msra.mxu0 0
        %1275 = vmatprep.subr.bf16.mxu0 0
        %1276 = vmatpush1.bf16.msra.mxu0 0
        %1277 = vmatprep.subr.bf16.mxu0 0
        %1278 = vmatpush1.bf16.msra.mxu0 0
        %1279 = vmatprep.subr.bf16.mxu0 0
        %1280 = vmatpush1.bf16.msra.mxu0 0
        %1281 = vmatprep.subr.bf16.mxu0 0
        %1282 = vmatpush1.bf16.msra.mxu0 0
        %1283 = vmatprep.subr.bf16.mxu0 0
        %1284 = vmatpush1.bf16.msra.mxu0 0
        %1285 = vmatprep.subr.bf16.mxu0 0
        %1286 = vmatpush1.bf16.msra.mxu0 0
        %1287 = vmatprep.mubr.bf16.mxu0 0
        %1288 = vmatmul.mubr.bf16.gmra.mrb[0].mxu0 %v785
        %v1289 = vpop.f32.mrb[0].mxu0
        %v1290 = vadd.f32 %v1145, %v1289
        %v1291 = vpop.f32.mrb[0].mxu0
        %v1292 = vadd.f32 %v1149, %v1291
        %v1293 = vpop.f32.mrb[0].mxu0
        %v1294 = vpop.f32.mrb[0].mxu0
        %1295 = vdwg.mxu0
        %1296 = vmatprep.subr.bf16.mxu0 %v1203
        %1297 = vmatpush1.bf16.msra.mxu0 %v1202
        %1298 = vmatprep.subr.bf16.mxu0 0
        %1299 = vmatpush1.bf16.msra.mxu0 0
        %1300 = vmatprep.subr.bf16.mxu0 0
        %1301 = vmatpush1.bf16.msra.mxu0 0
        %1302 = vmatprep.subr.bf16.mxu0 0
        %1303 = vmatpush1.bf16.msra.mxu0 0
        %1304 = vmatprep.subr.bf16.mxu0 0
        %1305 = vmatpush1.bf16.msra.mxu0 0
        %1306 = vmatprep.subr.bf16.mxu0 0
        %1307 = vmatpush1.bf16.msra.mxu0 0
        %1308 = vmatprep.subr.bf16.mxu0 0
        %1309 = vmatpush1.bf16.msra.mxu0 0
        %1310 = vmatprep.subr.bf16.mxu0 0
        %1311 = vmatpush1.bf16.msra.mxu0 0
        %1312 = vmatprep.subr.bf16.mxu0 0
        %1313 = vmatpush1.bf16.msra.mxu0 0
        %1314 = vmatprep.subr.bf16.mxu0 0
        %1315 = vmatpush1.bf16.msra.mxu0 0
        %1316 = vmatprep.subr.bf16.mxu0 0
        %1317 = vmatpush1.bf16.msra.mxu0 0
        %1318 = vmatprep.subr.bf16.mxu0 0
        %1319 = vmatpush1.bf16.msra.mxu0 0
        %1320 = vmatprep.subr.bf16.mxu0 0
        %1321 = vmatpush1.bf16.msra.mxu0 0
        %1322 = vmatprep.subr.bf16.mxu0 0
        %1323 = vmatpush1.bf16.msra.mxu0 0
        %1324 = vmatprep.subr.bf16.mxu0 0
        %1325 = vmatpush1.bf16.msra.mxu0 0
        %1326 = vmatprep.subr.bf16.mxu0 0
        %1327 = vmatpush1.bf16.msra.mxu0 0
        %1328 = vmatprep.mubr.bf16.mxu0 0
        %1329 = vmatmul.mubr.bf16.gmra.mrb[0].mxu0 %v785
        %v1330 = vpop.f32.mrb[0].mxu0
        %v1331 = vadd.f32 %v1153, %v1330
        %v1332 = vpop.f32.mrb[0].mxu0
        %v1333 = vadd.f32 %v1157, %v1332
        %v1334 = vpop.f32.mrb[0].mxu0
        %v1335 = vpop.f32.mrb[0].mxu0
        %1336 = vdwg.mxu0
        %1337 = vmatprep.subr.bf16.mxu0 %v1205
        %1338 = vmatpush1.bf16.msra.mxu0 %v1204
        %1339 = vmatprep.subr.bf16.mxu0 0
        %1340 = vmatpush1.bf16.msra.mxu0 0
        %1341 = vmatprep.subr.bf16.mxu0 0
        %1342 = vmatpush1.bf16.msra.mxu0 0
        %1343 = vmatprep.subr.bf16.mxu0 0
        %1344 = vmatpush1.bf16.msra.mxu0 0
        %1345 = vmatprep.subr.bf16.mxu0 0
        %1346 = vmatpush1.bf16.msra.mxu0 0
        %1347 = vmatprep.subr.bf16.mxu0 0
        %1348 = vmatpush1.bf16.msra.mxu0 0
        %1349 = vmatprep.subr.bf16.mxu0 0
        %1350 = vmatpush1.bf16.msra.mxu0 0
        %1351 = vmatprep.subr.bf16.mxu0 0
        %1352 = vmatpush1.bf16.msra.mxu0 0
        %1353 = vmatprep.subr.bf16.mxu0 0
        %1354 = vmatpush1.bf16.msra.mxu0 0
        %1355 = vmatprep.subr.bf16.mxu0 0
        %1356 = vmatpush1.bf16.msra.mxu0 0
        %1357 = vmatprep.subr.bf16.mxu0 0
        %1358 = vmatpush1.bf16.msra.mxu0 0
        %1359 = vmatprep.subr.bf16.mxu0 0
        %1360 = vmatpush1.bf16.msra.mxu0 0
        %1361 = vmatprep.subr.bf16.mxu0 0
        %1362 = vmatpush1.bf16.msra.mxu0 0
        %1363 = vmatprep.subr.bf16.mxu0 0
        %1364 = vmatpush1.bf16.msra.mxu0 0
        %1365 = vmatprep.subr.bf16.mxu0 0
        %1366 = vmatpush1.bf16.msra.mxu0 0
        %1367 = vmatprep.subr.bf16.mxu0 0
        %1368 = vmatpush1.bf16.msra.mxu0 0
        %1369 = vmatprep.mubr.bf16.mxu0 0
        %1370 = vmatmul.mubr.bf16.gmra.mrb[0].mxu0 %v785
        %v1371 = vpop.f32.mrb[0].mxu0
        %v1372 = vadd.f32 %v1161, %v1371
        %v1373 = vpop.f32.mrb[0].mxu0
        %v1374 = vadd.f32 %v1165, %v1373
        %v1375 = vpop.f32.mrb[0].mxu0
        %v1376 = vpop.f32.mrb[0].mxu0
        %1377 = vdwg.mxu0
        %v1386 = vcombine.low %v1249, %v1251
        %v1387 = vcombine.low %v1290, %v1292
        %v1388 = vcombine.low %v1331, %v1333
        %v1389 = vcombine.low %v1372, %v1374
        %1394 = vst [vmem:[%s574] sm:$0x77] %v1386
        %1395 = vst [vmem:[%s574 + $0x8] sm:$0x77] %v1387
        %1396 = vst [vmem:[%s574 + $0x10] sm:$0x77] %v1388
        %1397 = vst [vmem:[%s574 + $0x18] sm:$0x77] %v1389
        %v1398 = vsel %vm951, %v1249, 0.0
        %v1399 = vsel %vm951, %v1251, 0.0
        %v1400 = vadd.f32 %v1398, %v1399
        %v1401 = vsel %vm951, %v1290, 0.0
        %v1402 = vadd.f32 %v1400, %v1401
        %v1403 = vsel %vm951, %v1292, 0.0
        %v1404 = vadd.f32 %v1402, %v1403
        %v1405 = vsel %vm951, %v1331, 0.0
        %v1406 = vadd.f32 %v1404, %v1405
        %v1407 = vsel %vm951, %v1333, 0.0
        %v1408 = vadd.f32 %v1406, %v1407
        %v1409 = vsel %vm951, %v1372, 0.0
        %v1410 = vadd.f32 %v1408, %v1409
        %v1411 = vsel %vm951, %v1374, 0.0
        %v1412 = vadd.f32 %v1410, %v1411
        %1413 = vadd.xlane.f32.xlu0 %v1412
        %v1414 = vpop.xlane.xlu0 %1413
        %vm1415 = vcmask 2048
        %1416 = vst.msk [vmem:[%s664] sm:$0x7] %vm1415, %v1414
        %v1417 = vld [vmem:[%s645] ss:$4 sm:$0xff]
        %v1419 = vlaneseq
        %v1420 = vshrl.u32 %v1419, 7
        %v1421 = vsub.s32 0, %v1420
        %v1422 = vrot.slane %v1417, %v1421
        %v1423 = vlaneseq
        %v1424 = vshrl.u32 %v1423, 7
        %v1425 = vsub.s32 1, %v1424
        %v1426 = vrot.slane %v1417, %v1425
        %v1427 = vlaneseq
        %v1428 = vshrl.u32 %v1427, 7
        %v1429 = vsub.s32 2, %v1428
        %v1430 = vrot.slane %v1417, %v1429
        %v1431 = vlaneseq
        %v1432 = vshrl.u32 %v1431, 7
        %v1433 = vsub.s32 3, %v1432
        %v1434 = vrot.slane %v1417, %v1433
        %v1435 = vlaneseq
        %v1436 = vshrl.u32 %v1435, 7
        %v1437 = vsub.s32 4, %v1436
        %v1438 = vrot.slane %v1417, %v1437
        %v1439 = vlaneseq
        %v1440 = vshrl.u32 %v1439, 7
        %v1441 = vsub.s32 5, %v1440
        %v1442 = vrot.slane %v1417, %v1441
        %v1443 = vlaneseq
        %v1444 = vshrl.u32 %v1443, 7
        %v1445 = vsub.s32 6, %v1444
        %v1446 = vrot.slane %v1417, %v1445
        %v1447 = vlaneseq
        %v1448 = vshrl.u32 %v1447, 7
        %v1449 = vsub.s32 7, %v1448
        %v1450 = vrot.slane %v1417, %v1449
        %v1459 = vsub.f32 %v1249, %v1422
        %v1460 = vsub.f32 %v1251, %v1426
        %v1461 = vsub.f32 %v1290, %v1430
        %v1462 = vsub.f32 %v1292, %v1434
        %v1463 = vsub.f32 %v1331, %v1438
        %v1464 = vsub.f32 %v1333, %v1442
        %v1465 = vsub.f32 %v1372, %v1446
        %v1466 = vsub.f32 %v1374, %v1450
        %v1467 = vmul.f32 %v1459, %v1459
        %v1468 = vmul.f32 %v1460, %v1460
        %v1469 = vmul.f32 %v1461, %v1461
        %v1470 = vmul.f32 %v1462, %v1462
        %v1471 = vmul.f32 %v1463, %v1463
        %v1472 = vmul.f32 %v1464, %v1464
        %v1473 = vmul.f32 %v1465, %v1465
        %v1474 = vmul.f32 %v1466, %v1466
        %v1475 = vsub.f32 0.0, %v1467
        %v1476 = vsub.f32 0.0, %v1468
        %v1477 = vsub.f32 0.0, %v1469
        %v1478 = vsub.f32 0.0, %v1470
        %v1479 = vsub.f32 0.0, %v1471
        %v1480 = vsub.f32 0.0, %v1472
        %v1481 = vsub.f32 0.0, %v1473
        %v1482 = vsub.f32 0.0, %v1474
        %v1483 = vmul.f32 %v1475, 1.6666666
        %v1484 = vmul.f32 %v1476, 1.6666666
        %v1485 = vmul.f32 %v1477, 1.6666666
        %v1486 = vmul.f32 %v1478, 1.6666666
        %v1487 = vmul.f32 %v1479, 1.6666666
        %v1488 = vmul.f32 %v1480, 1.6666666
        %v1489 = vmul.f32 %v1481, 1.6666666
        %v1490 = vmul.f32 %v1482, 1.6666666
        %v1491 = vmul.f32 %v1483, 1.442695
        %v1492 = vpow.pop %v1491
        %v1493 = vmul.f32 %v1484, 1.442695
        %v1494 = vpow.pop %v1493
        %v1495 = vmul.f32 %v1485, 1.442695
        %v1496 = vpow.pop %v1495
        %v1497 = vmul.f32 %v1486, 1.442695
        %v1498 = vpow.pop %v1497
        %v1499 = vmul.f32 %v1487, 1.442695
        %v1500 = vpow.pop %v1499
        %v1501 = vmul.f32 %v1488, 1.442695
        %v1502 = vpow.pop %v1501
        %v1503 = vmul.f32 %v1489, 1.442695
        %v1504 = vpow.pop %v1503
        %v1505 = vmul.f32 %v1490, 1.442695
        %v1506 = vpow.pop %v1505
        %v1507 = vmul.f32 %v1096, %v1492
        %v1508 = vmul.f32 %v1097, %v1494
        %v1509 = vmul.f32 %v1098, %v1496
        %v1510 = vmul.f32 %v1099, %v1498
        %v1511 = vmul.f32 %v1100, %v1500
        %v1512 = vmul.f32 %v1101, %v1502
        %v1513 = vmul.f32 %v1102, %v1504
        %v1514 = vmul.f32 %v1103, %v1506
        %v1515 = vsel %vm951, %v1507, 0.0
        %v1516 = vrot.slane %v1515, 4
        %v1517 = vadd.f32 %v1515, %v1516
        %v1518 = vrot.slane %v1517, 2
        %v1519 = vadd.f32 %v1517, %v1518
        %v1520 = vrot.slane %v1519, 1
        %v1521 = vadd.f32 %v1519, %v1520
        %v1522 = vsel %vm951, %v1508, 0.0
        %v1523 = vrot.slane %v1522, 4
        %v1524 = vadd.f32 %v1522, %v1523
        %v1525 = vrot.slane %v1524, 2
        %v1526 = vadd.f32 %v1524, %v1525
        %v1527 = vrot.slane %v1526, 1
        %v1528 = vadd.f32 %v1526, %v1527
        %v1529 = vsel %vm951, %v1509, 0.0
        %v1530 = vrot.slane %v1529, 4
        %v1531 = vadd.f32 %v1529, %v1530
        %v1532 = vrot.slane %v1531, 2
        %v1533 = vadd.f32 %v1531, %v1532
        %v1534 = vrot.slane %v1533, 1
        %v1535 = vadd.f32 %v1533, %v1534
        %v1536 = vsel %vm951, %v1510, 0.0
        %v1537 = vrot.slane %v1536, 4
        %v1538 = vadd.f32 %v1536, %v1537
        %v1539 = vrot.slane %v1538, 2
        %v1540 = vadd.f32 %v1538, %v1539
        %v1541 = vrot.slane %v1540, 1
        %v1542 = vadd.f32 %v1540, %v1541
        %v1543 = vsel %vm951, %v1511, 0.0
        %v1544 = vrot.slane %v1543, 4
        %v1545 = vadd.f32 %v1543, %v1544
        %v1546 = vrot.slane %v1545, 2
        %v1547 = vadd.f32 %v1545, %v1546
        %v1548 = vrot.slane %v1547, 1
        %v1549 = vadd.f32 %v1547, %v1548
        %v1550 = vsel %vm951, %v1512, 0.0
        %v1551 = vrot.slane %v1550, 4
        %v1552 = vadd.f32 %v1550, %v1551
        %v1553 = vrot.slane %v1552, 2
        %v1554 = vadd.f32 %v1552, %v1553
        %v1555 = vrot.slane %v1554, 1
        %v1556 = vadd.f32 %v1554, %v1555
        %v1557 = vsel %vm951, %v1513, 0.0
        %v1558 = vrot.slane %v1557, 4
        %v1559 = vadd.f32 %v1557, %v1558
        %v1560 = vrot.slane %v1559, 2
        %v1561 = vadd.f32 %v1559, %v1560
        %v1562 = vrot.slane %v1561, 1
        %v1563 = vadd.f32 %v1561, %v1562
        %v1564 = vsel %vm951, %v1514, 0.0
        %v1565 = vrot.slane %v1564, 4
        %v1566 = vadd.f32 %v1564, %v1565
        %v1567 = vrot.slane %v1566, 2
        %v1568 = vadd.f32 %v1566, %v1567
        %v1569 = vrot.slane %v1568, 1
        %v1570 = vadd.f32 %v1568, %v1569
        %v1571 = vmax.f32 %v1521, 1e-30
        %v1572 = vmax.f32 %v1528, 1e-30
        %v1573 = vmax.f32 %v1535, 1e-30
        %v1574 = vmax.f32 %v1542, 1e-30
        %v1575 = vmax.f32 %v1549, 1e-30
        %v1576 = vmax.f32 %v1556, 1e-30
        %v1577 = vmax.f32 %v1563, 1e-30
        %v1578 = vmax.f32 %v1570, 1e-30
        %v1579 = vrcp.pop %v1571
        %v1580 = vrcp.pop %v1572
        %v1581 = vrcp.pop %v1573
        %v1582 = vrcp.pop %v1574
        %v1583 = vrcp.pop %v1575
        %v1584 = vrcp.pop %v1576
        %v1585 = vrcp.pop %v1577
        %v1586 = vrcp.pop %v1578
        %v1587 = vmul.f32 %v1492, %v1579
        %v1588 = vmul.f32 %v1494, %v1580
        %v1589 = vmul.f32 %v1496, %v1581
        %v1590 = vmul.f32 %v1498, %v1582
        %v1591 = vmul.f32 %v1500, %v1583
        %v1592 = vmul.f32 %v1502, %v1584
        %v1593 = vmul.f32 %v1504, %v1585
        %v1594 = vmul.f32 %v1506, %v1586
        %v1595 = vmul.f32 %v1096, 1.6666666
        %v1596 = vmul.f32 %v1097, 1.6666666
        %v1597 = vmul.f32 %v1098, 1.6666666
        %v1598 = vmul.f32 %v1099, 1.6666666
        %v1599 = vmul.f32 %v1100, 1.6666666
        %v1600 = vmul.f32 %v1101, 1.6666666
        %v1601 = vmul.f32 %v1102, 1.6666666
        %v1602 = vmul.f32 %v1103, 1.6666666
        %v1603 = vmul.f32 %v1595, %v1587
        %v1604 = vmul.f32 %v1596, %v1588
        %v1605 = vmul.f32 %v1597, %v1589
        %v1606 = vmul.f32 %v1598, %v1590
        %v1607 = vmul.f32 %v1599, %v1591
        %v1608 = vmul.f32 %v1600, %v1592
        %v1609 = vmul.f32 %v1601, %v1593
        %v1610 = vmul.f32 %v1602, %v1594
        %v1611 = vmul.f32 %v1603, %v1459
        %v1612 = vmul.f32 %v1604, %v1460
        %v1613 = vmul.f32 %v1605, %v1461
        %v1614 = vmul.f32 %v1606, %v1462
        %v1615 = vmul.f32 %v1607, %v1463
        %v1616 = vmul.f32 %v1608, %v1464
        %v1617 = vmul.f32 %v1609, %v1465
        %v1618 = vmul.f32 %v1610, %v1466
        %v1619 = vsel %vm951, %v1611, 0.0
        %v1620 = vsel %vm951, %v1612, 0.0
        %v1621 = vadd.f32 %v1619, %v1620
        %v1622 = vsel %vm951, %v1613, 0.0
        %v1623 = vadd.f32 %v1621, %v1622
        %v1624 = vsel %vm951, %v1614, 0.0
        %v1625 = vadd.f32 %v1623, %v1624
        %v1626 = vsel %vm951, %v1615, 0.0
        %v1627 = vadd.f32 %v1625, %v1626
        %v1628 = vsel %vm951, %v1616, 0.0
        %v1629 = vadd.f32 %v1627, %v1628
        %v1630 = vsel %vm951, %v1617, 0.0
        %v1631 = vadd.f32 %v1629, %v1630
        %v1632 = vsel %vm951, %v1618, 0.0
        %v1633 = vadd.f32 %v1631, %v1632
        %1634 = vadd.xlane.f32.xlu0 %v1633
        %v1635 = vpop.xlane.xlu0 %1634
        %1636 = vst.msk [vmem:[%s672] sm:$0x7] %vm1415, %v1635
        %v1637 = vmul.f32 %v1611, %v1611
        %v1638 = vmul.f32 %v1612, %v1612
        %v1639 = vmul.f32 %v1613, %v1613
        %v1640 = vmul.f32 %v1614, %v1614
        %v1641 = vmul.f32 %v1615, %v1615
        %v1642 = vmul.f32 %v1616, %v1616
        %v1643 = vmul.f32 %v1617, %v1617
        %v1644 = vmul.f32 %v1618, %v1618
        %v1645 = vsel %vm951, %v1637, 0.0
        %v1646 = vsel %vm951, %v1638, 0.0
        %v1647 = vadd.f32 %v1645, %v1646
        %v1648 = vsel %vm951, %v1639, 0.0
        %v1649 = vadd.f32 %v1647, %v1648
        %v1650 = vsel %vm951, %v1640, 0.0
        %v1651 = vadd.f32 %v1649, %v1650
        %v1652 = vsel %vm951, %v1641, 0.0
        %v1653 = vadd.f32 %v1651, %v1652
        %v1654 = vsel %vm951, %v1642, 0.0
        %v1655 = vadd.f32 %v1653, %v1654
        %v1656 = vsel %vm951, %v1643, 0.0
        %v1657 = vadd.f32 %v1655, %v1656
        %v1658 = vsel %vm951, %v1644, 0.0
        %v1659 = vadd.f32 %v1657, %v1658
        %1660 = vadd.xlane.f32.xlu0 %v1659
        %v1661 = vpop.xlane.xlu0 %1660
        %v1662 = vadd.f32 %v1661, 0.0
        %v1663 = vpack.c.bf16 %v1611, %v1611
        %v1664 = vpack.c.bf16 %v1612, %v1612
        %v1665 = vpack.c.bf16 %v1613, %v1613
        %v1666 = vpack.c.bf16 %v1614, %v1614
        %v1667 = vpack.c.bf16 %v1615, %v1615
        %v1668 = vpack.c.bf16 %v1616, %v1616
        %v1669 = vpack.c.bf16 %v1617, %v1617
        %v1670 = vpack.c.bf16 %v1618, %v1618
        %s1671 = scalar_lea.vmem %s528, 64 [#allocation2]
        %v1672 = vld [vmem:[%s1671] sm:$0xff]
        %v1673 = vld [vmem:[%s1671 + $0x8] sm:$0xff]
        %v1674 = vld [vmem:[%s1671 + $0x10] sm:$0xff]
        %v1675 = vld [vmem:[%s1671 + $0x18] sm:$0xff]
        %v1676 = vld [vmem:[%s1671 + $0x20] sm:$0xff]
        %v1677 = vld [vmem:[%s1671 + $0x28] sm:$0xff]
        %v1678 = vld [vmem:[%s1671 + $0x30] sm:$0xff]
        %v1679 = vld [vmem:[%s1671 + $0x38] sm:$0xff]
        %s1680 = scalar_lea.vmem %s535, 8 [#allocation3]
        %v1681 = vld [vmem:[%s1680] sm:$0xff]
        %v1683 = vlaneseq
        %v1684 = vshrl.u32 %v1683, 7
        %v1685 = vsub.s32 0, %v1684
        %v1686 = vrot.slane %v1681, %v1685
        %v1687 = vlaneseq
        %v1688 = vshrl.u32 %v1687, 7
        %v1689 = vsub.s32 1, %v1688
        %v1690 = vrot.slane %v1681, %v1689
        %v1691 = vlaneseq
        %v1692 = vshrl.u32 %v1691, 7
        %v1693 = vsub.s32 2, %v1692
        %v1694 = vrot.slane %v1681, %v1693
        %v1695 = vlaneseq
        %v1696 = vshrl.u32 %v1695, 7
        %v1697 = vsub.s32 3, %v1696
        %v1698 = vrot.slane %v1681, %v1697
        %v1699 = vlaneseq
        %v1700 = vshrl.u32 %v1699, 7
        %v1701 = vsub.s32 4, %v1700
        %v1702 = vrot.slane %v1681, %v1701
        %v1703 = vlaneseq
        %v1704 = vshrl.u32 %v1703, 7
        %v1705 = vsub.s32 5, %v1704
        %v1706 = vrot.slane %v1681, %v1705
        %v1707 = vlaneseq
        %v1708 = vshrl.u32 %v1707, 7
        %v1709 = vsub.s32 6, %v1708
        %v1710 = vrot.slane %v1681, %v1709
        %v1711 = vlaneseq
        %v1712 = vshrl.u32 %v1711, 7
        %v1713 = vsub.s32 7, %v1712
        %v1714 = vrot.slane %v1681, %v1713
        %v1731 = vunpack.c.l.b16 %v1672
        %v1732 = vunpack.c.h.b16 %v1672
        %v1733 = vunpack.c.l.b16 %v1673
        %v1734 = vunpack.c.h.b16 %v1673
        %v1735 = vunpack.c.l.b16 %v1674
        %v1736 = vunpack.c.h.b16 %v1674
        %v1737 = vunpack.c.l.b16 %v1675
        %v1738 = vunpack.c.h.b16 %v1675
        %v1739 = vunpack.c.l.b16 %v1676
        %v1740 = vunpack.c.h.b16 %v1676
        %v1741 = vunpack.c.l.b16 %v1677
        %v1742 = vunpack.c.h.b16 %v1677
        %v1743 = vunpack.c.l.b16 %v1678
        %v1744 = vunpack.c.h.b16 %v1678
        %v1745 = vunpack.c.l.b16 %v1679
        %v1746 = vunpack.c.h.b16 %v1679
        %v1747 = vpack.c.b16 %v1739, %v1731
        %v1748 = vpack.c.b16 %v1740, %v1732
        %v1749 = vpack.c.b16 %v1741, %v1733
        %v1750 = vpack.c.b16 %v1742, %v1734
        %v1751 = vpack.c.b16 %v1743, %v1735
        %v1752 = vpack.c.b16 %v1744, %v1736
        %v1753 = vpack.c.b16 %v1745, %v1737
        %v1754 = vpack.c.b16 %v1746, %v1738
        %1763 = vmatprep.subr.bf16.mxu0 %v1748
        %1764 = vmatpush1.bf16.msra.mxu0 %v1747
        %1765 = vmatprep.subr.bf16.mxu0 0
        %1766 = vmatpush1.bf16.msra.mxu0 0
        %1767 = vmatprep.subr.bf16.mxu0 0
        %1768 = vmatpush1.bf16.msra.mxu0 0
        %1769 = vmatprep.subr.bf16.mxu0 0
        %1770 = vmatpush1.bf16.msra.mxu0 0
        %1771 = vmatprep.subr.bf16.mxu0 0
        %1772 = vmatpush1.bf16.msra.mxu0 0
        %1773 = vmatprep.subr.bf16.mxu0 0
        %1774 = vmatpush1.bf16.msra.mxu0 0
        %1775 = vmatprep.subr.bf16.mxu0 0
        %1776 = vmatpush1.bf16.msra.mxu0 0
        %1777 = vmatprep.subr.bf16.mxu0 0
        %1778 = vmatpush1.bf16.msra.mxu0 0
        %1779 = vmatprep.subr.bf16.mxu0 0
        %1780 = vmatpush1.bf16.msra.mxu0 0
        %1781 = vmatprep.subr.bf16.mxu0 0
        %1782 = vmatpush1.bf16.msra.mxu0 0
        %1783 = vmatprep.subr.bf16.mxu0 0
        %1784 = vmatpush1.bf16.msra.mxu0 0
        %1785 = vmatprep.subr.bf16.mxu0 0
        %1786 = vmatpush1.bf16.msra.mxu0 0
        %1787 = vmatprep.subr.bf16.mxu0 0
        %1788 = vmatpush1.bf16.msra.mxu0 0
        %1789 = vmatprep.subr.bf16.mxu0 0
        %1790 = vmatpush1.bf16.msra.mxu0 0
        %1791 = vmatprep.subr.bf16.mxu0 0
        %1792 = vmatpush1.bf16.msra.mxu0 0
        %1793 = vmatprep.subr.bf16.mxu0 0
        %1794 = vmatpush1.bf16.msra.mxu0 0
        %1795 = vmatprep.mubr.bf16.mxu0 0
        %1796 = vmatmul.mubr.bf16.gmra.mrb[0].mxu0 %v785
        %v1797 = vpop.f32.mrb[0].mxu0
        %v1798 = vadd.f32 %v1686, %v1797
        %v1799 = vpop.f32.mrb[0].mxu0
        %v1800 = vadd.f32 %v1690, %v1799
        %v1801 = vpop.f32.mrb[0].mxu0
        %v1802 = vpop.f32.mrb[0].mxu0
        %1803 = vdwg.mxu0
        %1804 = vmatprep.subr.bf16.mxu0 %v1750
        %1805 = vmatpush1.bf16.msra.mxu0 %v1749
        %1806 = vmatprep.subr.bf16.mxu0 0
        %1807 = vmatpush1.bf16.msra.mxu0 0
        %1808 = vmatprep.subr.bf16.mxu0 0
        %1809 = vmatpush1.bf16.msra.mxu0 0
        %1810 = vmatprep.subr.bf16.mxu0 0
        %1811 = vmatpush1.bf16.msra.mxu0 0
        %1812 = vmatprep.subr.bf16.mxu0 0
        %1813 = vmatpush1.bf16.msra.mxu0 0
        %1814 = vmatprep.subr.bf16.mxu0 0
        %1815 = vmatpush1.bf16.msra.mxu0 0
        %1816 = vmatprep.subr.bf16.mxu0 0
        %1817 = vmatpush1.bf16.msra.mxu0 0
        %1818 = vmatprep.subr.bf16.mxu0 0
        %1819 = vmatpush1.bf16.msra.mxu0 0
        %1820 = vmatprep.subr.bf16.mxu0 0
        %1821 = vmatpush1.bf16.msra.mxu0 0
        %1822 = vmatprep.subr.bf16.mxu0 0
        %1823 = vmatpush1.bf16.msra.mxu0 0
        %1824 = vmatprep.subr.bf16.mxu0 0
        %1825 = vmatpush1.bf16.msra.mxu0 0
        %1826 = vmatprep.subr.bf16.mxu0 0
        %1827 = vmatpush1.bf16.msra.mxu0 0
        %1828 = vmatprep.subr.bf16.mxu0 0
        %1829 = vmatpush1.bf16.msra.mxu0 0
        %1830 = vmatprep.subr.bf16.mxu0 0
        %1831 = vmatpush1.bf16.msra.mxu0 0
        %1832 = vmatprep.subr.bf16.mxu0 0
        %1833 = vmatpush1.bf16.msra.mxu0 0
        %1834 = vmatprep.subr.bf16.mxu0 0
        %1835 = vmatpush1.bf16.msra.mxu0 0
        %1836 = vmatprep.mubr.bf16.mxu0 0
        %1837 = vmatmul.mubr.bf16.gmra.mrb[0].mxu0 %v785
        %v1838 = vpop.f32.mrb[0].mxu0
        %v1839 = vadd.f32 %v1694, %v1838
        %v1840 = vpop.f32.mrb[0].mxu0
        %v1841 = vadd.f32 %v1698, %v1840
        %v1842 = vpop.f32.mrb[0].mxu0
        %v1843 = vpop.f32.mrb[0].mxu0
        %1844 = vdwg.mxu0
        %1845 = vmatprep.subr.bf16.mxu0 %v1752
        %1846 = vmatpush1.bf16.msra.mxu0 %v1751
        %1847 = vmatprep.subr.bf16.mxu0 0
        %1848 = vmatpush1.bf16.msra.mxu0 0
        %1849 = vmatprep.subr.bf16.mxu0 0
        %1850 = vmatpush1.bf16.msra.mxu0 0
        %1851 = vmatprep.subr.bf16.mxu0 0
        %1852 = vmatpush1.bf16.msra.mxu0 0
        %1853 = vmatprep.subr.bf16.mxu0 0
        %1854 = vmatpush1.bf16.msra.mxu0 0
        %1855 = vmatprep.subr.bf16.mxu0 0
        %1856 = vmatpush1.bf16.msra.mxu0 0
        %1857 = vmatprep.subr.bf16.mxu0 0
        %1858 = vmatpush1.bf16.msra.mxu0 0
        %1859 = vmatprep.subr.bf16.mxu0 0
        %1860 = vmatpush1.bf16.msra.mxu0 0
        %1861 = vmatprep.subr.bf16.mxu0 0
        %1862 = vmatpush1.bf16.msra.mxu0 0
        %1863 = vmatprep.subr.bf16.mxu0 0
        %1864 = vmatpush1.bf16.msra.mxu0 0
        %1865 = vmatprep.subr.bf16.mxu0 0
        %1866 = vmatpush1.bf16.msra.mxu0 0
        %1867 = vmatprep.subr.bf16.mxu0 0
        %1868 = vmatpush1.bf16.msra.mxu0 0
        %1869 = vmatprep.subr.bf16.mxu0 0
        %1870 = vmatpush1.bf16.msra.mxu0 0
        %1871 = vmatprep.subr.bf16.mxu0 0
        %1872 = vmatpush1.bf16.msra.mxu0 0
        %1873 = vmatprep.subr.bf16.mxu0 0
        %1874 = vmatpush1.bf16.msra.mxu0 0
        %1875 = vmatprep.subr.bf16.mxu0 0
        %1876 = vmatpush1.bf16.msra.mxu0 0
        %1877 = vmatprep.mubr.bf16.mxu0 0
        %1878 = vmatmul.mubr.bf16.gmra.mrb[0].mxu0 %v785
        %v1879 = vpop.f32.mrb[0].mxu0
        %v1880 = vadd.f32 %v1702, %v1879
        %v1881 = vpop.f32.mrb[0].mxu0
        %v1882 = vadd.f32 %v1706, %v1881
        %v1883 = vpop.f32.mrb[0].mxu0
        %v1884 = vpop.f32.mrb[0].mxu0
        %1885 = vdwg.mxu0
        %1886 = vmatprep.subr.bf16.mxu0 %v1754
        %1887 = vmatpush1.bf16.msra.mxu0 %v1753
        %1888 = vmatprep.subr.bf16.mxu0 0
        %1889 = vmatpush1.bf16.msra.mxu0 0
        %1890 = vmatprep.subr.bf16.mxu0 0
        %1891 = vmatpush1.bf16.msra.mxu0 0
        %1892 = vmatprep.subr.bf16.mxu0 0
        %1893 = vmatpush1.bf16.msra.mxu0 0
        %1894 = vmatprep.subr.bf16.mxu0 0
        %1895 = vmatpush1.bf16.msra.mxu0 0
        %1896 = vmatprep.subr.bf16.mxu0 0
        %1897 = vmatpush1.bf16.msra.mxu0 0
        %1898 = vmatprep.subr.bf16.mxu0 0
        %1899 = vmatpush1.bf16.msra.mxu0 0
        %1900 = vmatprep.subr.bf16.mxu0 0
        %1901 = vmatpush1.bf16.msra.mxu0 0
        %1902 = vmatprep.subr.bf16.mxu0 0
        %1903 = vmatpush1.bf16.msra.mxu0 0
        %1904 = vmatprep.subr.bf16.mxu0 0
        %1905 = vmatpush1.bf16.msra.mxu0 0
        %1906 = vmatprep.subr.bf16.mxu0 0
        %1907 = vmatpush1.bf16.msra.mxu0 0
        %1908 = vmatprep.subr.bf16.mxu0 0
        %1909 = vmatpush1.bf16.msra.mxu0 0
        %1910 = vmatprep.subr.bf16.mxu0 0
        %1911 = vmatpush1.bf16.msra.mxu0 0
        %1912 = vmatprep.subr.bf16.mxu0 0
        %1913 = vmatpush1.bf16.msra.mxu0 0
        %1914 = vmatprep.subr.bf16.mxu0 0
        %1915 = vmatpush1.bf16.msra.mxu0 0
        %1916 = vmatprep.subr.bf16.mxu0 0
        %1917 = vmatpush1.bf16.msra.mxu0 0
        %1918 = vmatprep.mubr.bf16.mxu0 0
        %1919 = vmatmul.mubr.bf16.gmra.mrb[0].mxu0 %v785
        %v1920 = vpop.f32.mrb[0].mxu0
        %v1921 = vadd.f32 %v1710, %v1920
        %v1922 = vpop.f32.mrb[0].mxu0
        %v1923 = vadd.f32 %v1714, %v1922
        %v1924 = vpop.f32.mrb[0].mxu0
        %v1925 = vpop.f32.mrb[0].mxu0
        %1926 = vdwg.mxu0
        %v1935 = vcombine.low %v1798, %v1800
        %v1936 = vcombine.low %v1839, %v1841
        %v1937 = vcombine.low %v1880, %v1882
        %v1938 = vcombine.low %v1921, %v1923
        %s1943 = scalar_lea.vmem %s574, 32 [#allocation4]
        %1944 = vst [vmem:[%s1943] sm:$0x77] %v1935
        %1945 = vst [vmem:[%s1943 + $0x8] sm:$0x77] %v1936
        %1946 = vst [vmem:[%s1943 + $0x10] sm:$0x77] %v1937
        %1947 = vst [vmem:[%s1943 + $0x18] sm:$0x77] %v1938
        %v1948 = vsel %vm951, %v1798, 0.0
        %v1949 = vsel %vm951, %v1800, 0.0
        %v1950 = vadd.f32 %v1948, %v1949
        %v1951 = vsel %vm951, %v1839, 0.0
        %v1952 = vadd.f32 %v1950, %v1951
        %v1953 = vsel %vm951, %v1841, 0.0
        %v1954 = vadd.f32 %v1952, %v1953
        %v1955 = vsel %vm951, %v1880, 0.0
        %v1956 = vadd.f32 %v1954, %v1955
        %v1957 = vsel %vm951, %v1882, 0.0
        %v1958 = vadd.f32 %v1956, %v1957
        %v1959 = vsel %vm951, %v1921, 0.0
        %v1960 = vadd.f32 %v1958, %v1959
        %v1961 = vsel %vm951, %v1923, 0.0
        %v1962 = vadd.f32 %v1960, %v1961
        %1963 = vadd.xlane.f32.xlu0 %v1962
        %v1964 = vpop.xlane.xlu0 %1963
        %vm1965 = vcmask 10248
        %1966 = vst.msk [vmem:[%s664] sm:$0x7] %vm1965, %v1964
        %s1967 = scalar_lea.vmem %s645, 1
        %v1968 = vld [vmem:[%s1967] ss:$4 sm:$0xff]
        %v1970 = vlaneseq
        %v1971 = vshrl.u32 %v1970, 7
        %v1972 = vsub.s32 0, %v1971
        %v1973 = vrot.slane %v1968, %v1972
        %v1974 = vlaneseq
        %v1975 = vshrl.u32 %v1974, 7
        %v1976 = vsub.s32 1, %v1975
        %v1977 = vrot.slane %v1968, %v1976
        %v1978 = vlaneseq
        %v1979 = vshrl.u32 %v1978, 7
        %v1980 = vsub.s32 2, %v1979
        %v1981 = vrot.slane %v1968, %v1980
        %v1982 = vlaneseq
        %v1983 = vshrl.u32 %v1982, 7
        %v1984 = vsub.s32 3, %v1983
        %v1985 = vrot.slane %v1968, %v1984
        %v1986 = vlaneseq
        %v1987 = vshrl.u32 %v1986, 7
        %v1988 = vsub.s32 4, %v1987
        %v1989 = vrot.slane %v1968, %v1988
        %v1990 = vlaneseq
        %v1991 = vshrl.u32 %v1990, 7
        %v1992 = vsub.s32 5, %v1991
        %v1993 = vrot.slane %v1968, %v1992
        %v1994 = vlaneseq
        %v1995 = vshrl.u32 %v1994, 7
        %v1996 = vsub.s32 6, %v1995
        %v1997 = vrot.slane %v1968, %v1996
        %v1998 = vlaneseq
        %v1999 = vshrl.u32 %v1998, 7
        %v2000 = vsub.s32 7, %v1999
        %v2001 = vrot.slane %v1968, %v2000
        %v2010 = vsub.f32 %v1798, %v1973
        %v2011 = vsub.f32 %v1800, %v1977
        %v2012 = vsub.f32 %v1839, %v1981
        %v2013 = vsub.f32 %v1841, %v1985
        %v2014 = vsub.f32 %v1880, %v1989
        %v2015 = vsub.f32 %v1882, %v1993
        %v2016 = vsub.f32 %v1921, %v1997
        %v2017 = vsub.f32 %v1923, %v2001
        %v2018 = vmul.f32 %v2010, %v2010
        %v2019 = vmul.f32 %v2011, %v2011
        %v2020 = vmul.f32 %v2012, %v2012
        %v2021 = vmul.f32 %v2013, %v2013
        %v2022 = vmul.f32 %v2014, %v2014
        %v2023 = vmul.f32 %v2015, %v2015
        %v2024 = vmul.f32 %v2016, %v2016
        %v2025 = vmul.f32 %v2017, %v2017
        %v2026 = vsub.f32 0.0, %v2018
        %v2027 = vsub.f32 0.0, %v2019
        %v2028 = vsub.f32 0.0, %v2020
        %v2029 = vsub.f32 0.0, %v2021
        %v2030 = vsub.f32 0.0, %v2022
        %v2031 = vsub.f32 0.0, %v2023
        %v2032 = vsub.f32 0.0, %v2024
        %v2033 = vsub.f32 0.0, %v2025
        %v2034 = vmul.f32 %v2026, 1.6666666
        %v2035 = vmul.f32 %v2027, 1.6666666
        %v2036 = vmul.f32 %v2028, 1.6666666
        %v2037 = vmul.f32 %v2029, 1.6666666
        %v2038 = vmul.f32 %v2030, 1.6666666
        %v2039 = vmul.f32 %v2031, 1.6666666
        %v2040 = vmul.f32 %v2032, 1.6666666
        %v2041 = vmul.f32 %v2033, 1.6666666
        %v2042 = vmul.f32 %v2034, 1.442695
        %v2043 = vpow.pop %v2042
        %v2044 = vmul.f32 %v2035, 1.442695
        %v2045 = vpow.pop %v2044
        %v2046 = vmul.f32 %v2036, 1.442695
        %v2047 = vpow.pop %v2046
        %v2048 = vmul.f32 %v2037, 1.442695
        %v2049 = vpow.pop %v2048
        %v2050 = vmul.f32 %v2038, 1.442695
        %v2051 = vpow.pop %v2050
        %v2052 = vmul.f32 %v2039, 1.442695
        %v2053 = vpow.pop %v2052
        %v2054 = vmul.f32 %v2040, 1.442695
        %v2055 = vpow.pop %v2054
        %v2056 = vmul.f32 %v2041, 1.442695
        %v2057 = vpow.pop %v2056
        %v2058 = vmul.f32 %v1492, %v2043
        %v2059 = vmul.f32 %v1494, %v2045
        %v2060 = vmul.f32 %v1496, %v2047
        %v2061 = vmul.f32 %v1498, %v2049
        %v2062 = vmul.f32 %v1500, %v2051
        %v2063 = vmul.f32 %v1502, %v2053
        %v2064 = vmul.f32 %v1504, %v2055
        %v2065 = vmul.f32 %v1506, %v2057
        %v2066 = vmul.f32 %v1096, %v2043
        %v2067 = vmul.f32 %v1097, %v2045
        %v2068 = vmul.f32 %v1098, %v2047
        %v2069 = vmul.f32 %v1099, %v2049
        %v2070 = vmul.f32 %v1100, %v2051
        %v2071 = vmul.f32 %v1101, %v2053
        %v2072 = vmul.f32 %v1102, %v2055
        %v2073 = vmul.f32 %v1103, %v2057
        %v2074 = vsel %vm951, %v2066, 0.0
        %v2075 = vrot.slane %v2074, 4
        %v2076 = vadd.f32 %v2074, %v2075
        %v2077 = vrot.slane %v2076, 2
        %v2078 = vadd.f32 %v2076, %v2077
        %v2079 = vrot.slane %v2078, 1
        %v2080 = vadd.f32 %v2078, %v2079
        %v2081 = vsel %vm951, %v2067, 0.0
        %v2082 = vrot.slane %v2081, 4
        %v2083 = vadd.f32 %v2081, %v2082
        %v2084 = vrot.slane %v2083, 2
        %v2085 = vadd.f32 %v2083, %v2084
        %v2086 = vrot.slane %v2085, 1
        %v2087 = vadd.f32 %v2085, %v2086
        %v2088 = vsel %vm951, %v2068, 0.0
        %v2089 = vrot.slane %v2088, 4
        %v2090 = vadd.f32 %v2088, %v2089
        %v2091 = vrot.slane %v2090, 2
        %v2092 = vadd.f32 %v2090, %v2091
        %v2093 = vrot.slane %v2092, 1
        %v2094 = vadd.f32 %v2092, %v2093
        %v2095 = vsel %vm951, %v2069, 0.0
        %v2096 = vrot.slane %v2095, 4
        %v2097 = vadd.f32 %v2095, %v2096
        %v2098 = vrot.slane %v2097, 2
        %v2099 = vadd.f32 %v2097, %v2098
        %v2100 = vrot.slane %v2099, 1
        %v2101 = vadd.f32 %v2099, %v2100
        %v2102 = vsel %vm951, %v2070, 0.0
        %v2103 = vrot.slane %v2102, 4
        %v2104 = vadd.f32 %v2102, %v2103
        %v2105 = vrot.slane %v2104, 2
        %v2106 = vadd.f32 %v2104, %v2105
        %v2107 = vrot.slane %v2106, 1
        %v2108 = vadd.f32 %v2106, %v2107
        %v2109 = vsel %vm951, %v2071, 0.0
        %v2110 = vrot.slane %v2109, 4
        %v2111 = vadd.f32 %v2109, %v2110
        %v2112 = vrot.slane %v2111, 2
        %v2113 = vadd.f32 %v2111, %v2112
        %v2114 = vrot.slane %v2113, 1
        %v2115 = vadd.f32 %v2113, %v2114
        %v2116 = vsel %vm951, %v2072, 0.0
        %v2117 = vrot.slane %v2116, 4
        %v2118 = vadd.f32 %v2116, %v2117
        %v2119 = vrot.slane %v2118, 2
        %v2120 = vadd.f32 %v2118, %v2119
        %v2121 = vrot.slane %v2120, 1
        %v2122 = vadd.f32 %v2120, %v2121
        %v2123 = vsel %vm951, %v2073, 0.0
        %v2124 = vrot.slane %v2123, 4
        %v2125 = vadd.f32 %v2123, %v2124
        %v2126 = vrot.slane %v2125, 2
        %v2127 = vadd.f32 %v2125, %v2126
        %v2128 = vrot.slane %v2127, 1
        %v2129 = vadd.f32 %v2127, %v2128
        %v2130 = vmax.f32 %v2080, 1e-30
        %v2131 = vmax.f32 %v2087, 1e-30
        %v2132 = vmax.f32 %v2094, 1e-30
        %v2133 = vmax.f32 %v2101, 1e-30
        %v2134 = vmax.f32 %v2108, 1e-30
        %v2135 = vmax.f32 %v2115, 1e-30
        %v2136 = vmax.f32 %v2122, 1e-30
        %v2137 = vmax.f32 %v2129, 1e-30
        %v2138 = vmul.f32 %v1571, %v2130
        %v2139 = vmul.f32 %v1572, %v2131
        %v2140 = vmul.f32 %v1573, %v2132
        %v2141 = vmul.f32 %v1574, %v2133
        %v2142 = vmul.f32 %v1575, %v2134
        %v2143 = vmul.f32 %v1576, %v2135
        %v2144 = vmul.f32 %v1577, %v2136
        %v2145 = vmul.f32 %v1578, %v2137
        %v2146 = vrcp.pop %v2130
        %v2147 = vrcp.pop %v2131
        %v2148 = vrcp.pop %v2132
        %v2149 = vrcp.pop %v2133
        %v2150 = vrcp.pop %v2134
        %v2151 = vrcp.pop %v2135
        %v2152 = vrcp.pop %v2136
        %v2153 = vrcp.pop %v2137
        %v2154 = vmul.f32 %v2043, %v2146
        %v2155 = vmul.f32 %v2045, %v2147
        %v2156 = vmul.f32 %v2047, %v2148
        %v2157 = vmul.f32 %v2049, %v2149
        %v2158 = vmul.f32 %v2051, %v2150
        %v2159 = vmul.f32 %v2053, %v2151
        %v2160 = vmul.f32 %v2055, %v2152
        %v2161 = vmul.f32 %v2057, %v2153
        %v2162 = vadd.f32 %v1587, %v2154
        %v2163 = vadd.f32 %v1588, %v2155
        %v2164 = vadd.f32 %v1589, %v2156
        %v2165 = vadd.f32 %v1590, %v2157
        %v2166 = vadd.f32 %v1591, %v2158
        %v2167 = vadd.f32 %v1592, %v2159
        %v2168 = vadd.f32 %v1593, %v2160
        %v2169 = vadd.f32 %v1594, %v2161
        %v2170 = vmul.f32 %v1595, %v2154
        %v2171 = vmul.f32 %v1596, %v2155
        %v2172 = vmul.f32 %v1597, %v2156
        %v2173 = vmul.f32 %v1598, %v2157
        %v2174 = vmul.f32 %v1599, %v2158
        %v2175 = vmul.f32 %v1600, %v2159
        %v2176 = vmul.f32 %v1601, %v2160
        %v2177 = vmul.f32 %v1602, %v2161
        %v2178 = vmul.f32 %v2170, %v2010
        %v2179 = vmul.f32 %v2171, %v2011
        %v2180 = vmul.f32 %v2172, %v2012
        %v2181 = vmul.f32 %v2173, %v2013
        %v2182 = vmul.f32 %v2174, %v2014
        %v2183 = vmul.f32 %v2175, %v2015
        %v2184 = vmul.f32 %v2176, %v2016
        %v2185 = vmul.f32 %v2177, %v2017
        %v2186 = vsel %vm951, %v2178, 0.0
        %v2187 = vsel %vm951, %v2179, 0.0
        %v2188 = vadd.f32 %v2186, %v2187
        %v2189 = vsel %vm951, %v2180, 0.0
        %v2190 = vadd.f32 %v2188, %v2189
        %v2191 = vsel %vm951, %v2181, 0.0
        %v2192 = vadd.f32 %v2190, %v2191
        %v2193 = vsel %vm951, %v2182, 0.0
        %v2194 = vadd.f32 %v2192, %v2193
        %v2195 = vsel %vm951, %v2183, 0.0
        %v2196 = vadd.f32 %v2194, %v2195
        %v2197 = vsel %vm951, %v2184, 0.0
        %v2198 = vadd.f32 %v2196, %v2197
        %v2199 = vsel %vm951, %v2185, 0.0
        %v2200 = vadd.f32 %v2198, %v2199
        %2201 = vadd.xlane.f32.xlu0 %v2200
        %v2202 = vpop.xlane.xlu0 %2201
        %2203 = vst.msk [vmem:[%s672] sm:$0x7] %vm1965, %v2202
        %v2204 = vmul.f32 %v2178, %v2178
        %v2205 = vmul.f32 %v2179, %v2179
        %v2206 = vmul.f32 %v2180, %v2180
        %v2207 = vmul.f32 %v2181, %v2181
        %v2208 = vmul.f32 %v2182, %v2182
        %v2209 = vmul.f32 %v2183, %v2183
        %v2210 = vmul.f32 %v2184, %v2184
        %v2211 = vmul.f32 %v2185, %v2185
        %v2212 = vsel %vm951, %v2204, 0.0
        %v2213 = vsel %vm951, %v2205, 0.0
        %v2214 = vadd.f32 %v2212, %v2213
        %v2215 = vsel %vm951, %v2206, 0.0
        %v2216 = vadd.f32 %v2214, %v2215
        %v2217 = vsel %vm951, %v2207, 0.0
        %v2218 = vadd.f32 %v2216, %v2217
        %v2219 = vsel %vm951, %v2208, 0.0
        %v2220 = vadd.f32 %v2218, %v2219
        %v2221 = vsel %vm951, %v2209, 0.0
        %v2222 = vadd.f32 %v2220, %v2221
        %v2223 = vsel %vm951, %v2210, 0.0
        %v2224 = vadd.f32 %v2222, %v2223
        %v2225 = vsel %vm951, %v2211, 0.0
        %v2226 = vadd.f32 %v2224, %v2225
        %2227 = vadd.xlane.f32.xlu0 %v2226
        %v2228 = vpop.xlane.xlu0 %2227
        %v2229 = vadd.f32 %v1662, %v2228
        %v2230 = vpack.c.bf16 %v2178, %v2178
        %v2231 = vpack.c.bf16 %v2179, %v2179
        %v2232 = vpack.c.bf16 %v2180, %v2180
        %v2233 = vpack.c.bf16 %v2181, %v2181
        %v2234 = vpack.c.bf16 %v2182, %v2182
        %v2235 = vpack.c.bf16 %v2183, %v2183
        %v2236 = vpack.c.bf16 %v2184, %v2184
        %v2237 = vpack.c.bf16 %v2185, %v2185
        %2238 = vmatprep.subr.bf16.mxu0 %v1748
        %2239 = vmatpush1.bf16.xpose.msra.mxu0 %v1747
        %2240 = vmatprep.subr.bf16.mxu0 0
        %2241 = vmatpush1.bf16.xpose.msra.mxu0 0
        %2242 = vmatprep.subr.bf16.mxu0 0
        %2243 = vmatpush1.bf16.xpose.msra.mxu0 0
        %2244 = vmatprep.subr.bf16.mxu0 0
        %2245 = vmatpush1.bf16.xpose.msra.mxu0 0
        %2246 = vmatprep.subr.bf16.mxu0 0
        %2247 = vmatpush1.bf16.xpose.msra.mxu0 0
        %2248 = vmatprep.subr.bf16.mxu0 0
        %2249 = vmatpush1.bf16.xpose.msra.mxu0 0
        %2250 = vmatprep.subr.bf16.mxu0 0
        %2251 = vmatpush1.bf16.xpose.msra.mxu0 0
        %2252 = vmatprep.subr.bf16.mxu0 0
        %2253 = vmatpush1.bf16.xpose.msra.mxu0 0
        %2254 = vmatprep.subr.bf16.mxu0 0
        %2255 = vmatpush1.bf16.xpose.msra.mxu0 0
        %2256 = vmatprep.subr.bf16.mxu0 0
        %2257 = vmatpush1.bf16.xpose.msra.mxu0 0
        %2258 = vmatprep.subr.bf16.mxu0 0
        %2259 = vmatpush1.bf16.xpose.msra.mxu0 0
        %2260 = vmatprep.subr.bf16.mxu0 0
        %2261 = vmatpush1.bf16.xpose.msra.mxu0 0
        %2262 = vmatprep.subr.bf16.mxu0 0
        %2263 = vmatpush1.bf16.xpose.msra.mxu0 0
        %2264 = vmatprep.subr.bf16.mxu0 0
        %2265 = vmatpush1.bf16.xpose.msra.mxu0 0
        %2266 = vmatprep.subr.bf16.mxu0 0
        %2267 = vmatpush1.bf16.xpose.msra.mxu0 0
        %2268 = vmatprep.subr.bf16.mxu0 0
        %2269 = vmatpush1.bf16.xpose.msra.mxu0 0
        %2270 = vmatprep.mubr.bf16.mxu0 %v2231
        %2271 = vmatmul.mubr.bf16.gmra.mrb[0].mxu0 %v2230
        %v2272 = vpop.f32.mrb[0].mxu0
        %v2273 = vadd.f32 0.0, %v2272
        %v2274 = vpop.f32.mrb[0].mxu0
        %v2275 = vpop.f32.mrb[0].mxu0
        %v2276 = vpop.f32.mrb[0].mxu0
        %2277 = vdwg.mxu0
        %2278 = vmatprep.subr.bf16.mxu0 %v1750
        %2279 = vmatpush1.bf16.xpose.msra.mxu0 %v1749
        %2280 = vmatprep.subr.bf16.mxu0 0
        %2281 = vmatpush1.bf16.xpose.msra.mxu0 0
        %2282 = vmatprep.subr.bf16.mxu0 0
        %2283 = vmatpush1.bf16.xpose.msra.mxu0 0
        %2284 = vmatprep.subr.bf16.mxu0 0
        %2285 = vmatpush1.bf16.xpose.msra.mxu0 0
        %2286 = vmatprep.subr.bf16.mxu0 0
        %2287 = vmatpush1.bf16.xpose.msra.mxu0 0
        %2288 = vmatprep.subr.bf16.mxu0 0
        %2289 = vmatpush1.bf16.xpose.msra.mxu0 0
        %2290 = vmatprep.subr.bf16.mxu0 0
        %2291 = vmatpush1.bf16.xpose.msra.mxu0 0
        %2292 = vmatprep.subr.bf16.mxu0 0
        %2293 = vmatpush1.bf16.xpose.msra.mxu0 0
        %2294 = vmatprep.subr.bf16.mxu0 0
        %2295 = vmatpush1.bf16.xpose.msra.mxu0 0
        %2296 = vmatprep.subr.bf16.mxu0 0
        %2297 = vmatpush1.bf16.xpose.msra.mxu0 0
        %2298 = vmatprep.subr.bf16.mxu0 0
        %2299 = vmatpush1.bf16.xpose.msra.mxu0 0
        %2300 = vmatprep.subr.bf16.mxu0 0
        %2301 = vmatpush1.bf16.xpose.msra.mxu0 0
        %2302 = vmatprep.subr.bf16.mxu0 0
        %2303 = vmatpush1.bf16.xpose.msra.mxu0 0
        %2304 = vmatprep.subr.bf16.mxu0 0
        %2305 = vmatpush1.bf16.xpose.msra.mxu0 0
        %2306 = vmatprep.subr.bf16.mxu0 0
        %2307 = vmatpush1.bf16.xpose.msra.mxu0 0
        %2308 = vmatprep.subr.bf16.mxu0 0
        %2309 = vmatpush1.bf16.xpose.msra.mxu0 0
        %2310 = vmatprep.mubr.bf16.mxu0 %v2233
        %2311 = vmatmul.mubr.bf16.gmra.mrb[0].mxu0 %v2232
        %v2312 = vpop.f32.mrb[0].mxu0
        %v2313 = vadd.f32 %v2273, %v2312
        %v2314 = vpop.f32.mrb[0].mxu0
        %v2315 = vpop.f32.mrb[0].mxu0
        %v2316 = vpop.f32.mrb[0].mxu0
        %2317 = vdwg.mxu0
        %2318 = vmatprep.subr.bf16.mxu0 %v1752
        %2319 = vmatpush1.bf16.xpose.msra.mxu0 %v1751
        %2320 = vmatprep.subr.bf16.mxu0 0
        %2321 = vmatpush1.bf16.xpose.msra.mxu0 0
        %2322 = vmatprep.subr.bf16.mxu0 0
        %2323 = vmatpush1.bf16.xpose.msra.mxu0 0
        %2324 = vmatprep.subr.bf16.mxu0 0
        %2325 = vmatpush1.bf16.xpose.msra.mxu0 0
        %2326 = vmatprep.subr.bf16.mxu0 0
        %2327 = vmatpush1.bf16.xpose.msra.mxu0 0
        %2328 = vmatprep.subr.bf16.mxu0 0
        %2329 = vmatpush1.bf16.xpose.msra.mxu0 0
        %2330 = vmatprep.subr.bf16.mxu0 0
        %2331 = vmatpush1.bf16.xpose.msra.mxu0 0
        %2332 = vmatprep.subr.bf16.mxu0 0
        %2333 = vmatpush1.bf16.xpose.msra.mxu0 0
        %2334 = vmatprep.subr.bf16.mxu0 0
        %2335 = vmatpush1.bf16.xpose.msra.mxu0 0
        %2336 = vmatprep.subr.bf16.mxu0 0
        %2337 = vmatpush1.bf16.xpose.msra.mxu0 0
        %2338 = vmatprep.subr.bf16.mxu0 0
        %2339 = vmatpush1.bf16.xpose.msra.mxu0 0
        %2340 = vmatprep.subr.bf16.mxu0 0
        %2341 = vmatpush1.bf16.xpose.msra.mxu0 0
        %2342 = vmatprep.subr.bf16.mxu0 0
        %2343 = vmatpush1.bf16.xpose.msra.mxu0 0
        %2344 = vmatprep.subr.bf16.mxu0 0
        %2345 = vmatpush1.bf16.xpose.msra.mxu0 0
        %2346 = vmatprep.subr.bf16.mxu0 0
        %2347 = vmatpush1.bf16.xpose.msra.mxu0 0
        %2348 = vmatprep.subr.bf16.mxu0 0
        %2349 = vmatpush1.bf16.xpose.msra.mxu0 0
        %2350 = vmatprep.mubr.bf16.mxu0 %v2235
        %2351 = vmatmul.mubr.bf16.gmra.mrb[0].mxu0 %v2234
        %v2352 = vpop.f32.mrb[0].mxu0
        %v2353 = vadd.f32 %v2313, %v2352
        %v2354 = vpop.f32.mrb[0].mxu0
        %v2355 = vpop.f32.mrb[0].mxu0
        %v2356 = vpop.f32.mrb[0].mxu0
        %2357 = vdwg.mxu0
        %2358 = vmatprep.subr.bf16.mxu0 %v1754
        %2359 = vmatpush1.bf16.xpose.msra.mxu0 %v1753
        %2360 = vmatprep.subr.bf16.mxu0 0
        %2361 = vmatpush1.bf16.xpose.msra.mxu0 0
        %2362 = vmatprep.subr.bf16.mxu0 0
        %2363 = vmatpush1.bf16.xpose.msra.mxu0 0
        %2364 = vmatprep.subr.bf16.mxu0 0
        %2365 = vmatpush1.bf16.xpose.msra.mxu0 0
        %2366 = vmatprep.subr.bf16.mxu0 0
        %2367 = vmatpush1.bf16.xpose.msra.mxu0 0
        %2368 = vmatprep.subr.bf16.mxu0 0
        %2369 = vmatpush1.bf16.xpose.msra.mxu0 0
        %2370 = vmatprep.subr.bf16.mxu0 0
        %2371 = vmatpush1.bf16.xpose.msra.mxu0 0
        %2372 = vmatprep.subr.bf16.mxu0 0
        %2373 = vmatpush1.bf16.xpose.msra.mxu0 0
        %2374 = vmatprep.subr.bf16.mxu0 0
        %2375 = vmatpush1.bf16.xpose.msra.mxu0 0
        %2376 = vmatprep.subr.bf16.mxu0 0
        %2377 = vmatpush1.bf16.xpose.msra.mxu0 0
        %2378 = vmatprep.subr.bf16.mxu0 0
        %2379 = vmatpush1.bf16.xpose.msra.mxu0 0
        %2380 = vmatprep.subr.bf16.mxu0 0
        %2381 = vmatpush1.bf16.xpose.msra.mxu0 0
        %2382 = vmatprep.subr.bf16.mxu0 0
        %2383 = vmatpush1.bf16.xpose.msra.mxu0 0
        %2384 = vmatprep.subr.bf16.mxu0 0
        %2385 = vmatpush1.bf16.xpose.msra.mxu0 0
        %2386 = vmatprep.subr.bf16.mxu0 0
        %2387 = vmatpush1.bf16.xpose.msra.mxu0 0
        %2388 = vmatprep.subr.bf16.mxu0 0
        %2389 = vmatpush1.bf16.xpose.msra.mxu0 0
        %2390 = vmatprep.mubr.bf16.mxu0 %v2237
        %2391 = vmatmul.mubr.bf16.gmra.mrb[0].mxu0 %v2236
        %v2392 = vpop.f32.mrb[0].mxu0
        %v2393 = vadd.f32 %v2353, %v2392
        %v2394 = vpop.f32.mrb[0].mxu0
        %v2395 = vpop.f32.mrb[0].mxu0
        %v2396 = vpop.f32.mrb[0].mxu0
        %2397 = vdwg.mxu0
        %2398 = vmatprep.subr.bf16.mxu0 %v1199
        %2399 = vmatpush1.bf16.xpose.msra.mxu0 %v1198
        %2400 = vmatprep.subr.bf16.mxu0 0
        %2401 = vmatpush1.bf16.xpose.msra.mxu0 0
        %2402 = vmatprep.subr.bf16.mxu0 0
        %2403 = vmatpush1.bf16.xpose.msra.mxu0 0
        %2404 = vmatprep.subr.bf16.mxu0 0
        %2405 = vmatpush1.bf16.xpose.msra.mxu0 0
        %2406 = vmatprep.subr.bf16.mxu0 0
        %2407 = vmatpush1.bf16.xpose.msra.mxu0 0
        %2408 = vmatprep.subr.bf16.mxu0 0
        %2409 = vmatpush1.bf16.xpose.msra.mxu0 0
        %2410 = vmatprep.subr.bf16.mxu0 0
        %2411 = vmatpush1.bf16.xpose.msra.mxu0 0
        %2412 = vmatprep.subr.bf16.mxu0 0
        %2413 = vmatpush1.bf16.xpose.msra.mxu0 0
        %2414 = vmatprep.subr.bf16.mxu0 0
        %2415 = vmatpush1.bf16.xpose.msra.mxu0 0
        %2416 = vmatprep.subr.bf16.mxu0 0
        %2417 = vmatpush1.bf16.xpose.msra.mxu0 0
        %2418 = vmatprep.subr.bf16.mxu0 0
        %2419 = vmatpush1.bf16.xpose.msra.mxu0 0
        %2420 = vmatprep.subr.bf16.mxu0 0
        %2421 = vmatpush1.bf16.xpose.msra.mxu0 0
        %2422 = vmatprep.subr.bf16.mxu0 0
        %2423 = vmatpush1.bf16.xpose.msra.mxu0 0
        %2424 = vmatprep.subr.bf16.mxu0 0
        %2425 = vmatpush1.bf16.xpose.msra.mxu0 0
        %2426 = vmatprep.subr.bf16.mxu0 0
        %2427 = vmatpush1.bf16.xpose.msra.mxu0 0
        %2428 = vmatprep.subr.bf16.mxu0 0
        %2429 = vmatpush1.bf16.xpose.msra.mxu0 0
        %2430 = vmatprep.mubr.bf16.mxu0 %v1664
        %2431 = vmatmul.mubr.bf16.gmra.mrb[0].mxu0 %v1663
        %v2432 = vpop.f32.mrb[0].mxu0
        %v2433 = vadd.f32 %v2393, %v2432
        %v2434 = vpop.f32.mrb[0].mxu0
        %v2435 = vpop.f32.mrb[0].mxu0
        %v2436 = vpop.f32.mrb[0].mxu0
        %2437 = vdwg.mxu0
        %2438 = vmatprep.subr.bf16.mxu0 %v1201
        %2439 = vmatpush1.bf16.xpose.msra.mxu0 %v1200
        %2440 = vmatprep.subr.bf16.mxu0 0
        %2441 = vmatpush1.bf16.xpose.msra.mxu0 0
        %2442 = vmatprep.subr.bf16.mxu0 0
        %2443 = vmatpush1.bf16.xpose.msra.mxu0 0
        %2444 = vmatprep.subr.bf16.mxu0 0
        %2445 = vmatpush1.bf16.xpose.msra.mxu0 0
        %2446 = vmatprep.subr.bf16.mxu0 0
        %2447 = vmatpush1.bf16.xpose.msra.mxu0 0
        %2448 = vmatprep.subr.bf16.mxu0 0
        %2449 = vmatpush1.bf16.xpose.msra.mxu0 0
        %2450 = vmatprep.subr.bf16.mxu0 0
        %2451 = vmatpush1.bf16.xpose.msra.mxu0 0
        %2452 = vmatprep.subr.bf16.mxu0 0
        %2453 = vmatpush1.bf16.xpose.msra.mxu0 0
        %2454 = vmatprep.subr.bf16.mxu0 0
        %2455 = vmatpush1.bf16.xpose.msra.mxu0 0
        %2456 = vmatprep.subr.bf16.mxu0 0
        %2457 = vmatpush1.bf16.xpose.msra.mxu0 0
        %2458 = vmatprep.subr.bf16.mxu0 0
        %2459 = vmatpush1.bf16.xpose.msra.mxu0 0
        %2460 = vmatprep.subr.bf16.mxu0 0
        %2461 = vmatpush1.bf16.xpose.msra.mxu0 0
        %2462 = vmatprep.subr.bf16.mxu0 0
        %2463 = vmatpush1.bf16.xpose.msra.mxu0 0
        %2464 = vmatprep.subr.bf16.mxu0 0
        %2465 = vmatpush1.bf16.xpose.msra.mxu0 0
        %2466 = vmatprep.subr.bf16.mxu0 0
        %2467 = vmatpush1.bf16.xpose.msra.mxu0 0
        %2468 = vmatprep.subr.bf16.mxu0 0
        %2469 = vmatpush1.bf16.xpose.msra.mxu0 0
        %2470 = vmatprep.mubr.bf16.mxu0 %v1666
        %2471 = vmatmul.mubr.bf16.gmra.mrb[0].mxu0 %v1665
        %v2472 = vpop.f32.mrb[0].mxu0
        %v2473 = vadd.f32 %v2433, %v2472
        %v2474 = vpop.f32.mrb[0].mxu0
        %v2475 = vpop.f32.mrb[0].mxu0
        %v2476 = vpop.f32.mrb[0].mxu0
        %2477 = vdwg.mxu0
        %2478 = vmatprep.subr.bf16.mxu0 %v1203
        %2479 = vmatpush1.bf16.xpose.msra.mxu0 %v1202
        %2480 = vmatprep.subr.bf16.mxu0 0
        %2481 = vmatpush1.bf16.xpose.msra.mxu0 0
        %2482 = vmatprep.subr.bf16.mxu0 0
        %2483 = vmatpush1.bf16.xpose.msra.mxu0 0
        %2484 = vmatprep.subr.bf16.mxu0 0
        %2485 = vmatpush1.bf16.xpose.msra.mxu0 0
        %2486 = vmatprep.subr.bf16.mxu0 0
        %2487 = vmatpush1.bf16.xpose.msra.mxu0 0
        %2488 = vmatprep.subr.bf16.mxu0 0
        %2489 = vmatpush1.bf16.xpose.msra.mxu0 0
        %2490 = vmatprep.subr.bf16.mxu0 0
        %2491 = vmatpush1.bf16.xpose.msra.mxu0 0
        %2492 = vmatprep.subr.bf16.mxu0 0
        %2493 = vmatpush1.bf16.xpose.msra.mxu0 0
        %2494 = vmatprep.subr.bf16.mxu0 0
        %2495 = vmatpush1.bf16.xpose.msra.mxu0 0
        %2496 = vmatprep.subr.bf16.mxu0 0
        %2497 = vmatpush1.bf16.xpose.msra.mxu0 0
        %2498 = vmatprep.subr.bf16.mxu0 0
        %2499 = vmatpush1.bf16.xpose.msra.mxu0 0
        %2500 = vmatprep.subr.bf16.mxu0 0
        %2501 = vmatpush1.bf16.xpose.msra.mxu0 0
        %2502 = vmatprep.subr.bf16.mxu0 0
        %2503 = vmatpush1.bf16.xpose.msra.mxu0 0
        %2504 = vmatprep.subr.bf16.mxu0 0
        %2505 = vmatpush1.bf16.xpose.msra.mxu0 0
        %2506 = vmatprep.subr.bf16.mxu0 0
        %2507 = vmatpush1.bf16.xpose.msra.mxu0 0
        %2508 = vmatprep.subr.bf16.mxu0 0
        %2509 = vmatpush1.bf16.xpose.msra.mxu0 0
        %2510 = vmatprep.mubr.bf16.mxu0 %v1668
        %2511 = vmatmul.mubr.bf16.gmra.mrb[0].mxu0 %v1667
        %v2512 = vpop.f32.mrb[0].mxu0
        %v2513 = vadd.f32 %v2473, %v2512
        %v2514 = vpop.f32.mrb[0].mxu0
        %v2515 = vpop.f32.mrb[0].mxu0
        %v2516 = vpop.f32.mrb[0].mxu0
        %2517 = vdwg.mxu0
        %2518 = vmatprep.subr.bf16.mxu0 %v1205
        %2519 = vmatpush1.bf16.xpose.msra.mxu0 %v1204
        %2520 = vmatprep.subr.bf16.mxu0 0
        %2521 = vmatpush1.bf16.xpose.msra.mxu0 0
        %2522 = vmatprep.subr.bf16.mxu0 0
        %2523 = vmatpush1.bf16.xpose.msra.mxu0 0
        %2524 = vmatprep.subr.bf16.mxu0 0
        %2525 = vmatpush1.bf16.xpose.msra.mxu0 0
        %2526 = vmatprep.subr.bf16.mxu0 0
        %2527 = vmatpush1.bf16.xpose.msra.mxu0 0
        %2528 = vmatprep.subr.bf16.mxu0 0
        %2529 = vmatpush1.bf16.xpose.msra.mxu0 0
        %2530 = vmatprep.subr.bf16.mxu0 0
        %2531 = vmatpush1.bf16.xpose.msra.mxu0 0
        %2532 = vmatprep.subr.bf16.mxu0 0
        %2533 = vmatpush1.bf16.xpose.msra.mxu0 0
        %2534 = vmatprep.subr.bf16.mxu0 0
        %2535 = vmatpush1.bf16.xpose.msra.mxu0 0
        %2536 = vmatprep.subr.bf16.mxu0 0
        %2537 = vmatpush1.bf16.xpose.msra.mxu0 0
        %2538 = vmatprep.subr.bf16.mxu0 0
        %2539 = vmatpush1.bf16.xpose.msra.mxu0 0
        %2540 = vmatprep.subr.bf16.mxu0 0
        %2541 = vmatpush1.bf16.xpose.msra.mxu0 0
        %2542 = vmatprep.subr.bf16.mxu0 0
        %2543 = vmatpush1.bf16.xpose.msra.mxu0 0
        %2544 = vmatprep.subr.bf16.mxu0 0
        %2545 = vmatpush1.bf16.xpose.msra.mxu0 0
        %2546 = vmatprep.subr.bf16.mxu0 0
        %2547 = vmatpush1.bf16.xpose.msra.mxu0 0
        %2548 = vmatprep.subr.bf16.mxu0 0
        %2549 = vmatpush1.bf16.xpose.msra.mxu0 0
        %2550 = vmatprep.mubr.bf16.mxu0 %v1670
        %2551 = vmatmul.mubr.bf16.gmra.mrb[0].mxu0 %v1669
        %v2552 = vpop.f32.mrb[0].mxu0
        %v2553 = vadd.f32 %v2513, %v2552
        %v2554 = vpop.f32.mrb[0].mxu0
        %v2555 = vpop.f32.mrb[0].mxu0
        %v2556 = vpop.f32.mrb[0].mxu0
        %2557 = vdwg.mxu0
        %s2558 = scalar_lea.vmem %s528, 128 [#allocation2]
        %v2559 = vld [vmem:[%s2558] sm:$0xff]
        %v2560 = vld [vmem:[%s2558 + $0x8] sm:$0xff]
        %v2561 = vld [vmem:[%s2558 + $0x10] sm:$0xff]
        %v2562 = vld [vmem:[%s2558 + $0x18] sm:$0xff]
        %v2563 = vld [vmem:[%s2558 + $0x20] sm:$0xff]
        %v2564 = vld [vmem:[%s2558 + $0x28] sm:$0xff]
        %v2565 = vld [vmem:[%s2558 + $0x30] sm:$0xff]
        %v2566 = vld [vmem:[%s2558 + $0x38] sm:$0xff]
        %s2567 = scalar_lea.vmem %s535, 16 [#allocation3]
        %v2568 = vld [vmem:[%s2567] sm:$0xff]
        %v2570 = vlaneseq
        %v2571 = vshrl.u32 %v2570, 7
        %v2572 = vsub.s32 0, %v2571
        %v2573 = vrot.slane %v2568, %v2572
        %v2574 = vlaneseq
        %v2575 = vshrl.u32 %v2574, 7
        %v2576 = vsub.s32 1, %v2575
        %v2577 = vrot.slane %v2568, %v2576
        %v2578 = vlaneseq
        %v2579 = vshrl.u32 %v2578, 7
        %v2580 = vsub.s32 2, %v2579
        %v2581 = vrot.slane %v2568, %v2580
        %v2582 = vlaneseq
        %v2583 = vshrl.u32 %v2582, 7
        %v2584 = vsub.s32 3, %v2583
        %v2585 = vrot.slane %v2568, %v2584
        %v2586 = vlaneseq
        %v2587 = vshrl.u32 %v2586, 7
        %v2588 = vsub.s32 4, %v2587
        %v2589 = vrot.slane %v2568, %v2588
        %v2590 = vlaneseq
        %v2591 = vshrl.u32 %v2590, 7
        %v2592 = vsub.s32 5, %v2591
        %v2593 = vrot.slane %v2568, %v2592
        %v2594 = vlaneseq
        %v2595 = vshrl.u32 %v2594, 7
        %v2596 = vsub.s32 6, %v2595
        %v2597 = vrot.slane %v2568, %v2596
        %v2598 = vlaneseq
        %v2599 = vshrl.u32 %v2598, 7
        %v2600 = vsub.s32 7, %v2599
        %v2601 = vrot.slane %v2568, %v2600
        %v2618 = vunpack.c.l.b16 %v2559
        %v2619 = vunpack.c.h.b16 %v2559
        %v2620 = vunpack.c.l.b16 %v2560
        %v2621 = vunpack.c.h.b16 %v2560
        %v2622 = vunpack.c.l.b16 %v2561
        %v2623 = vunpack.c.h.b16 %v2561
        %v2624 = vunpack.c.l.b16 %v2562
        %v2625 = vunpack.c.h.b16 %v2562
        %v2626 = vunpack.c.l.b16 %v2563
        %v2627 = vunpack.c.h.b16 %v2563
        %v2628 = vunpack.c.l.b16 %v2564
        %v2629 = vunpack.c.h.b16 %v2564
        %v2630 = vunpack.c.l.b16 %v2565
        %v2631 = vunpack.c.h.b16 %v2565
        %v2632 = vunpack.c.l.b16 %v2566
        %v2633 = vunpack.c.h.b16 %v2566
        %v2634 = vpack.c.b16 %v2626, %v2618
        %v2635 = vpack.c.b16 %v2627, %v2619
        %v2636 = vpack.c.b16 %v2628, %v2620
        %v2637 = vpack.c.b16 %v2629, %v2621
        %v2638 = vpack.c.b16 %v2630, %v2622
        %v2639 = vpack.c.b16 %v2631, %v2623
        %v2640 = vpack.c.b16 %v2632, %v2624
        %v2641 = vpack.c.b16 %v2633, %v2625
        %2650 = vmatprep.subr.bf16.mxu0 %v2635
        %2651 = vmatpush1.bf16.msra.mxu0 %v2634
        %2652 = vmatprep.subr.bf16.mxu0 0
        %2653 = vmatpush1.bf16.msra.mxu0 0
        %2654 = vmatprep.subr.bf16.mxu0 0
        %2655 = vmatpush1.bf16.msra.mxu0 0
        %2656 = vmatprep.subr.bf16.mxu0 0
        %2657 = vmatpush1.bf16.msra.mxu0 0
        %2658 = vmatprep.subr.bf16.mxu0 0
        %2659 = vmatpush1.bf16.msra.mxu0 0
        %2660 = vmatprep.subr.bf16.mxu0 0
        %2661 = vmatpush1.bf16.msra.mxu0 0
        %2662 = vmatprep.subr.bf16.mxu0 0
        %2663 = vmatpush1.bf16.msra.mxu0 0
        %2664 = vmatprep.subr.bf16.mxu0 0
        %2665 = vmatpush1.bf16.msra.mxu0 0
        %2666 = vmatprep.subr.bf16.mxu0 0
        %2667 = vmatpush1.bf16.msra.mxu0 0
        %2668 = vmatprep.subr.bf16.mxu0 0
        %2669 = vmatpush1.bf16.msra.mxu0 0
        %2670 = vmatprep.subr.bf16.mxu0 0
        %2671 = vmatpush1.bf16.msra.mxu0 0
        %2672 = vmatprep.subr.bf16.mxu0 0
        %2673 = vmatpush1.bf16.msra.mxu0 0
        %2674 = vmatprep.subr.bf16.mxu0 0
        %2675 = vmatpush1.bf16.msra.mxu0 0
        %2676 = vmatprep.subr.bf16.mxu0 0
        %2677 = vmatpush1.bf16.msra.mxu0 0
        %2678 = vmatprep.subr.bf16.mxu0 0
        %2679 = vmatpush1.bf16.msra.mxu0 0
        %2680 = vmatprep.subr.bf16.mxu0 0
        %2681 = vmatpush1.bf16.msra.mxu0 0
        %2682 = vmatprep.mubr.bf16.mxu0 0
        %2683 = vmatmul.mubr.bf16.gmra.mrb[0].mxu0 %v785
        %v2684 = vpop.f32.mrb[0].mxu0
        %v2685 = vadd.f32 %v2573, %v2684
        %v2686 = vpop.f32.mrb[0].mxu0
        %v2687 = vadd.f32 %v2577, %v2686
        %v2688 = vpop.f32.mrb[0].mxu0
        %v2689 = vpop.f32.mrb[0].mxu0
        %2690 = vdwg.mxu0
        %2691 = vmatprep.subr.bf16.mxu0 %v2637
        %2692 = vmatpush1.bf16.msra.mxu0 %v2636
        %2693 = vmatprep.subr.bf16.mxu0 0
        %2694 = vmatpush1.bf16.msra.mxu0 0
        %2695 = vmatprep.subr.bf16.mxu0 0
        %2696 = vmatpush1.bf16.msra.mxu0 0
        %2697 = vmatprep.subr.bf16.mxu0 0
        %2698 = vmatpush1.bf16.msra.mxu0 0
        %2699 = vmatprep.subr.bf16.mxu0 0
        %2700 = vmatpush1.bf16.msra.mxu0 0
        %2701 = vmatprep.subr.bf16.mxu0 0
        %2702 = vmatpush1.bf16.msra.mxu0 0
        %2703 = vmatprep.subr.bf16.mxu0 0
        %2704 = vmatpush1.bf16.msra.mxu0 0
        %2705 = vmatprep.subr.bf16.mxu0 0
        %2706 = vmatpush1.bf16.msra.mxu0 0
        %2707 = vmatprep.subr.bf16.mxu0 0
        %2708 = vmatpush1.bf16.msra.mxu0 0
        %2709 = vmatprep.subr.bf16.mxu0 0
        %2710 = vmatpush1.bf16.msra.mxu0 0
        %2711 = vmatprep.subr.bf16.mxu0 0
        %2712 = vmatpush1.bf16.msra.mxu0 0
        %2713 = vmatprep.subr.bf16.mxu0 0
        %2714 = vmatpush1.bf16.msra.mxu0 0
        %2715 = vmatprep.subr.bf16.mxu0 0
        %2716 = vmatpush1.bf16.msra.mxu0 0
        %2717 = vmatprep.subr.bf16.mxu0 0
        %2718 = vmatpush1.bf16.msra.mxu0 0
        %2719 = vmatprep.subr.bf16.mxu0 0
        %2720 = vmatpush1.bf16.msra.mxu0 0
        %2721 = vmatprep.subr.bf16.mxu0 0
        %2722 = vmatpush1.bf16.msra.mxu0 0
        %2723 = vmatprep.mubr.bf16.mxu0 0
        %2724 = vmatmul.mubr.bf16.gmra.mrb[0].mxu0 %v785
        %v2725 = vpop.f32.mrb[0].mxu0
        %v2726 = vadd.f32 %v2581, %v2725
        %v2727 = vpop.f32.mrb[0].mxu0
        %v2728 = vadd.f32 %v2585, %v2727
        %v2729 = vpop.f32.mrb[0].mxu0
        %v2730 = vpop.f32.mrb[0].mxu0
        %2731 = vdwg.mxu0
        %2732 = vmatprep.subr.bf16.mxu0 %v2639
        %2733 = vmatpush1.bf16.msra.mxu0 %v2638
        %2734 = vmatprep.subr.bf16.mxu0 0
        %2735 = vmatpush1.bf16.msra.mxu0 0
        %2736 = vmatprep.subr.bf16.mxu0 0
        %2737 = vmatpush1.bf16.msra.mxu0 0
        %2738 = vmatprep.subr.bf16.mxu0 0
        %2739 = vmatpush1.bf16.msra.mxu0 0
        %2740 = vmatprep.subr.bf16.mxu0 0
        %2741 = vmatpush1.bf16.msra.mxu0 0
        %2742 = vmatprep.subr.bf16.mxu0 0
        %2743 = vmatpush1.bf16.msra.mxu0 0
        %2744 = vmatprep.subr.bf16.mxu0 0
        %2745 = vmatpush1.bf16.msra.mxu0 0
        %2746 = vmatprep.subr.bf16.mxu0 0
        %2747 = vmatpush1.bf16.msra.mxu0 0
        %2748 = vmatprep.subr.bf16.mxu0 0
        %2749 = vmatpush1.bf16.msra.mxu0 0
        %2750 = vmatprep.subr.bf16.mxu0 0
        %2751 = vmatpush1.bf16.msra.mxu0 0
        %2752 = vmatprep.subr.bf16.mxu0 0
        %2753 = vmatpush1.bf16.msra.mxu0 0
        %2754 = vmatprep.subr.bf16.mxu0 0
        %2755 = vmatpush1.bf16.msra.mxu0 0
        %2756 = vmatprep.subr.bf16.mxu0 0
        %2757 = vmatpush1.bf16.msra.mxu0 0
        %2758 = vmatprep.subr.bf16.mxu0 0
        %2759 = vmatpush1.bf16.msra.mxu0 0
        %2760 = vmatprep.subr.bf16.mxu0 0
        %2761 = vmatpush1.bf16.msra.mxu0 0
        %2762 = vmatprep.subr.bf16.mxu0 0
        %2763 = vmatpush1.bf16.msra.mxu0 0
        %2764 = vmatprep.mubr.bf16.mxu0 0
        %2765 = vmatmul.mubr.bf16.gmra.mrb[0].mxu0 %v785
        %v2766 = vpop.f32.mrb[0].mxu0
        %v2767 = vadd.f32 %v2589, %v2766
        %v2768 = vpop.f32.mrb[0].mxu0
        %v2769 = vadd.f32 %v2593, %v2768
        %v2770 = vpop.f32.mrb[0].mxu0
        %v2771 = vpop.f32.mrb[0].mxu0
        %2772 = vdwg.mxu0
        %2773 = vmatprep.subr.bf16.mxu0 %v2641
        %2774 = vmatpush1.bf16.msra.mxu0 %v2640
        %2775 = vmatprep.subr.bf16.mxu0 0
        %2776 = vmatpush1.bf16.msra.mxu0 0
        %2777 = vmatprep.subr.bf16.mxu0 0
        %2778 = vmatpush1.bf16.msra.mxu0 0
        %2779 = vmatprep.subr.bf16.mxu0 0
        %2780 = vmatpush1.bf16.msra.mxu0 0
        %2781 = vmatprep.subr.bf16.mxu0 0
        %2782 = vmatpush1.bf16.msra.mxu0 0
        %2783 = vmatprep.subr.bf16.mxu0 0
        %2784 = vmatpush1.bf16.msra.mxu0 0
        %2785 = vmatprep.subr.bf16.mxu0 0
        %2786 = vmatpush1.bf16.msra.mxu0 0
        %2787 = vmatprep.subr.bf16.mxu0 0
        %2788 = vmatpush1.bf16.msra.mxu0 0
        %2789 = vmatprep.subr.bf16.mxu0 0
        %2790 = vmatpush1.bf16.msra.mxu0 0
        %2791 = vmatprep.subr.bf16.mxu0 0
        %2792 = vmatpush1.bf16.msra.mxu0 0
        %2793 = vmatprep.subr.bf16.mxu0 0
        %2794 = vmatpush1.bf16.msra.mxu0 0
        %2795 = vmatprep.subr.bf16.mxu0 0
        %2796 = vmatpush1.bf16.msra.mxu0 0
        %2797 = vmatprep.subr.bf16.mxu0 0
        %2798 = vmatpush1.bf16.msra.mxu0 0
        %2799 = vmatprep.subr.bf16.mxu0 0
        %2800 = vmatpush1.bf16.msra.mxu0 0
        %2801 = vmatprep.subr.bf16.mxu0 0
        %2802 = vmatpush1.bf16.msra.mxu0 0
        %2803 = vmatprep.subr.bf16.mxu0 0
        %2804 = vmatpush1.bf16.msra.mxu0 0
        %2805 = vmatprep.mubr.bf16.mxu0 0
        %2806 = vmatmul.mubr.bf16.gmra.mrb[0].mxu0 %v785
        %v2807 = vpop.f32.mrb[0].mxu0
        %v2808 = vadd.f32 %v2597, %v2807
        %v2809 = vpop.f32.mrb[0].mxu0
        %v2810 = vadd.f32 %v2601, %v2809
        %v2811 = vpop.f32.mrb[0].mxu0
        %v2812 = vpop.f32.mrb[0].mxu0
        %2813 = vdwg.mxu0
        %v2822 = vcombine.low %v2685, %v2687
        %v2823 = vcombine.low %v2726, %v2728
        %v2824 = vcombine.low %v2767, %v2769
        %v2825 = vcombine.low %v2808, %v2810
        %s2830 = scalar_lea.vmem %s574, 64 [#allocation4]
        %2831 = vst [vmem:[%s2830] sm:$0x77] %v2822
        %2832 = vst [vmem:[%s2830 + $0x8] sm:$0x77] %v2823
        %2833 = vst [vmem:[%s2830 + $0x10] sm:$0x77] %v2824
        %2834 = vst [vmem:[%s2830 + $0x18] sm:$0x77] %v2825
        %v2835 = vsel %vm951, %v2685, 0.0
        %v2836 = vsel %vm951, %v2687, 0.0
        %v2837 = vadd.f32 %v2835, %v2836
        %v2838 = vsel %vm951, %v2726, 0.0
        %v2839 = vadd.f32 %v2837, %v2838
        %v2840 = vsel %vm951, %v2728, 0.0
        %v2841 = vadd.f32 %v2839, %v2840
        %v2842 = vsel %vm951, %v2767, 0.0
        %v2843 = vadd.f32 %v2841, %v2842
        %v2844 = vsel %vm951, %v2769, 0.0
        %v2845 = vadd.f32 %v2843, %v2844
        %v2846 = vsel %vm951, %v2808, 0.0
        %v2847 = vadd.f32 %v2845, %v2846
        %v2848 = vsel %vm951, %v2810, 0.0
        %v2849 = vadd.f32 %v2847, %v2848
        %2850 = vadd.xlane.f32.xlu0 %v2849
        %v2851 = vpop.xlane.xlu0 %2850
        %vm2852 = vcmask 18448
        %2853 = vst.msk [vmem:[%s664] sm:$0x7] %vm2852, %v2851
        %s2854 = scalar_lea.vmem %s645, 2
        %v2855 = vld [vmem:[%s2854] ss:$4 sm:$0xff]
        %v2857 = vlaneseq
        %v2858 = vshrl.u32 %v2857, 7
        %v2859 = vsub.s32 0, %v2858
        %v2860 = vrot.slane %v2855, %v2859
        %v2861 = vlaneseq
        %v2862 = vshrl.u32 %v2861, 7
        %v2863 = vsub.s32 1, %v2862
        %v2864 = vrot.slane %v2855, %v2863
        %v2865 = vlaneseq
        %v2866 = vshrl.u32 %v2865, 7
        %v2867 = vsub.s32 2, %v2866
        %v2868 = vrot.slane %v2855, %v2867
        %v2869 = vlaneseq
        %v2870 = vshrl.u32 %v2869, 7
        %v2871 = vsub.s32 3, %v2870
        %v2872 = vrot.slane %v2855, %v2871
        %v2873 = vlaneseq
        %v2874 = vshrl.u32 %v2873, 7
        %v2875 = vsub.s32 4, %v2874
        %v2876 = vrot.slane %v2855, %v2875
        %v2877 = vlaneseq
        %v2878 = vshrl.u32 %v2877, 7
        %v2879 = vsub.s32 5, %v2878
        %v2880 = vrot.slane %v2855, %v2879
        %v2881 = vlaneseq
        %v2882 = vshrl.u32 %v2881, 7
        %v2883 = vsub.s32 6, %v2882
        %v2884 = vrot.slane %v2855, %v2883
        %v2885 = vlaneseq
        %v2886 = vshrl.u32 %v2885, 7
        %v2887 = vsub.s32 7, %v2886
        %v2888 = vrot.slane %v2855, %v2887
        %v2897 = vsub.f32 %v2685, %v2860
        %v2898 = vsub.f32 %v2687, %v2864
        %v2899 = vsub.f32 %v2726, %v2868
        %v2900 = vsub.f32 %v2728, %v2872
        %v2901 = vsub.f32 %v2767, %v2876
        %v2902 = vsub.f32 %v2769, %v2880
        %v2903 = vsub.f32 %v2808, %v2884
        %v2904 = vsub.f32 %v2810, %v2888
        %v2905 = vmul.f32 %v2897, %v2897
        %v2906 = vmul.f32 %v2898, %v2898
        %v2907 = vmul.f32 %v2899, %v2899
        %v2908 = vmul.f32 %v2900, %v2900
        %v2909 = vmul.f32 %v2901, %v2901
        %v2910 = vmul.f32 %v2902, %v2902
        %v2911 = vmul.f32 %v2903, %v2903
        %v2912 = vmul.f32 %v2904, %v2904
        %v2913 = vsub.f32 0.0, %v2905
        %v2914 = vsub.f32 0.0, %v2906
        %v2915 = vsub.f32 0.0, %v2907
        %v2916 = vsub.f32 0.0, %v2908
        %v2917 = vsub.f32 0.0, %v2909
        %v2918 = vsub.f32 0.0, %v2910
        %v2919 = vsub.f32 0.0, %v2911
        %v2920 = vsub.f32 0.0, %v2912
        %v2921 = vmul.f32 %v2913, 1.6666666
        %v2922 = vmul.f32 %v2914, 1.6666666
        %v2923 = vmul.f32 %v2915, 1.6666666
        %v2924 = vmul.f32 %v2916, 1.6666666
        %v2925 = vmul.f32 %v2917, 1.6666666
        %v2926 = vmul.f32 %v2918, 1.6666666
        %v2927 = vmul.f32 %v2919, 1.6666666
        %v2928 = vmul.f32 %v2920, 1.6666666
        %v2929 = vmul.f32 %v2921, 1.442695
        %v2930 = vpow.pop %v2929
        %v2931 = vmul.f32 %v2922, 1.442695
        %v2932 = vpow.pop %v2931
        %v2933 = vmul.f32 %v2923, 1.442695
        %v2934 = vpow.pop %v2933
        %v2935 = vmul.f32 %v2924, 1.442695
        %v2936 = vpow.pop %v2935
        %v2937 = vmul.f32 %v2925, 1.442695
        %v2938 = vpow.pop %v2937
        %v2939 = vmul.f32 %v2926, 1.442695
        %v2940 = vpow.pop %v2939
        %v2941 = vmul.f32 %v2927, 1.442695
        %v2942 = vpow.pop %v2941
        %v2943 = vmul.f32 %v2928, 1.442695
        %v2944 = vpow.pop %v2943
        %v2945 = vmul.f32 %v2058, %v2930
        %v2946 = vmul.f32 %v2059, %v2932
        %v2947 = vmul.f32 %v2060, %v2934
        %v2948 = vmul.f32 %v2061, %v2936
        %v2949 = vmul.f32 %v2062, %v2938
        %v2950 = vmul.f32 %v2063, %v2940
        %v2951 = vmul.f32 %v2064, %v2942
        %v2952 = vmul.f32 %v2065, %v2944
        %v2953 = vmul.f32 %v1096, %v2930
        %v2954 = vmul.f32 %v1097, %v2932
        %v2955 = vmul.f32 %v1098, %v2934
        %v2956 = vmul.f32 %v1099, %v2936
        %v2957 = vmul.f32 %v1100, %v2938
        %v2958 = vmul.f32 %v1101, %v2940
        %v2959 = vmul.f32 %v1102, %v2942
        %v2960 = vmul.f32 %v1103, %v2944
        %v2961 = vsel %vm951, %v2953, 0.0
        %v2962 = vrot.slane %v2961, 4
        %v2963 = vadd.f32 %v2961, %v2962
        %v2964 = vrot.slane %v2963, 2
        %v2965 = vadd.f32 %v2963, %v2964
        %v2966 = vrot.slane %v2965, 1
        %v2967 = vadd.f32 %v2965, %v2966
        %v2968 = vsel %vm951, %v2954, 0.0
        %v2969 = vrot.slane %v2968, 4
        %v2970 = vadd.f32 %v2968, %v2969
        %v2971 = vrot.slane %v2970, 2
        %v2972 = vadd.f32 %v2970, %v2971
        %v2973 = vrot.slane %v2972, 1
        %v2974 = vadd.f32 %v2972, %v2973
        %v2975 = vsel %vm951, %v2955, 0.0
        %v2976 = vrot.slane %v2975, 4
        %v2977 = vadd.f32 %v2975, %v2976
        %v2978 = vrot.slane %v2977, 2
        %v2979 = vadd.f32 %v2977, %v2978
        %v2980 = vrot.slane %v2979, 1
        %v2981 = vadd.f32 %v2979, %v2980
        %v2982 = vsel %vm951, %v2956, 0.0
        %v2983 = vrot.slane %v2982, 4
        %v2984 = vadd.f32 %v2982, %v2983
        %v2985 = vrot.slane %v2984, 2
        %v2986 = vadd.f32 %v2984, %v2985
        %v2987 = vrot.slane %v2986, 1
        %v2988 = vadd.f32 %v2986, %v2987
        %v2989 = vsel %vm951, %v2957, 0.0
        %v2990 = vrot.slane %v2989, 4
        %v2991 = vadd.f32 %v2989, %v2990
        %v2992 = vrot.slane %v2991, 2
        %v2993 = vadd.f32 %v2991, %v2992
        %v2994 = vrot.slane %v2993, 1
        %v2995 = vadd.f32 %v2993, %v2994
        %v2996 = vsel %vm951, %v2958, 0.0
        %v2997 = vrot.slane %v2996, 4
        %v2998 = vadd.f32 %v2996, %v2997
        %v2999 = vrot.slane %v2998, 2
        %v3000 = vadd.f32 %v2998, %v2999
        %v3001 = vrot.slane %v3000, 1
        %v3002 = vadd.f32 %v3000, %v3001
        %v3003 = vsel %vm951, %v2959, 0.0
        %v3004 = vrot.slane %v3003, 4
        %v3005 = vadd.f32 %v3003, %v3004
        %v3006 = vrot.slane %v3005, 2
        %v3007 = vadd.f32 %v3005, %v3006
        %v3008 = vrot.slane %v3007, 1
        %v3009 = vadd.f32 %v3007, %v3008
        %v3010 = vsel %vm951, %v2960, 0.0
        %v3011 = vrot.slane %v3010, 4
        %v3012 = vadd.f32 %v3010, %v3011
        %v3013 = vrot.slane %v3012, 2
        %v3014 = vadd.f32 %v3012, %v3013
        %v3015 = vrot.slane %v3014, 1
        %v3016 = vadd.f32 %v3014, %v3015
        %v3017 = vmax.f32 %v2967, 1e-30
        %v3018 = vmax.f32 %v2974, 1e-30
        %v3019 = vmax.f32 %v2981, 1e-30
        %v3020 = vmax.f32 %v2988, 1e-30
        %v3021 = vmax.f32 %v2995, 1e-30
        %v3022 = vmax.f32 %v3002, 1e-30
        %v3023 = vmax.f32 %v3009, 1e-30
        %v3024 = vmax.f32 %v3016, 1e-30
        %v3025 = vmul.f32 %v2138, %v3017
        %v3026 = vmul.f32 %v2139, %v3018
        %v3027 = vmul.f32 %v2140, %v3019
        %v3028 = vmul.f32 %v2141, %v3020
        %v3029 = vmul.f32 %v2142, %v3021
        %v3030 = vmul.f32 %v2143, %v3022
        %v3031 = vmul.f32 %v2144, %v3023
        %v3032 = vmul.f32 %v2145, %v3024
        %v3033 = vrcp.pop %v3017
        %v3034 = vrcp.pop %v3018
        %v3035 = vrcp.pop %v3019
        %v3036 = vrcp.pop %v3020
        %v3037 = vrcp.pop %v3021
        %v3038 = vrcp.pop %v3022
        %v3039 = vrcp.pop %v3023
        %v3040 = vrcp.pop %v3024
        %v3041 = vmul.f32 %v2930, %v3033
        %v3042 = vmul.f32 %v2932, %v3034
        %v3043 = vmul.f32 %v2934, %v3035
        %v3044 = vmul.f32 %v2936, %v3036
        %v3045 = vmul.f32 %v2938, %v3037
        %v3046 = vmul.f32 %v2940, %v3038
        %v3047 = vmul.f32 %v2942, %v3039
        %v3048 = vmul.f32 %v2944, %v3040
        %v3049 = vadd.f32 %v2162, %v3041
        %v3050 = vadd.f32 %v2163, %v3042
        %v3051 = vadd.f32 %v2164, %v3043
        %v3052 = vadd.f32 %v2165, %v3044
        %v3053 = vadd.f32 %v2166, %v3045
        %v3054 = vadd.f32 %v2167, %v3046
        %v3055 = vadd.f32 %v2168, %v3047
        %v3056 = vadd.f32 %v2169, %v3048
        %v3057 = vmul.f32 %v1595, %v3041
        %v3058 = vmul.f32 %v1596, %v3042
        %v3059 = vmul.f32 %v1597, %v3043
        %v3060 = vmul.f32 %v1598, %v3044
        %v3061 = vmul.f32 %v1599, %v3045
        %v3062 = vmul.f32 %v1600, %v3046
        %v3063 = vmul.f32 %v1601, %v3047
        %v3064 = vmul.f32 %v1602, %v3048
        %v3065 = vmul.f32 %v3057, %v2897
        %v3066 = vmul.f32 %v3058, %v2898
        %v3067 = vmul.f32 %v3059, %v2899
        %v3068 = vmul.f32 %v3060, %v2900
        %v3069 = vmul.f32 %v3061, %v2901
        %v3070 = vmul.f32 %v3062, %v2902
        %v3071 = vmul.f32 %v3063, %v2903
        %v3072 = vmul.f32 %v3064, %v2904
        %v3073 = vsel %vm951, %v3065, 0.0
        %v3074 = vsel %vm951, %v3066, 0.0
        %v3075 = vadd.f32 %v3073, %v3074
        %v3076 = vsel %vm951, %v3067, 0.0
        %v3077 = vadd.f32 %v3075, %v3076
        %v3078 = vsel %vm951, %v3068, 0.0
        %v3079 = vadd.f32 %v3077, %v3078
        %v3080 = vsel %vm951, %v3069, 0.0
        %v3081 = vadd.f32 %v3079, %v3080
        %v3082 = vsel %vm951, %v3070, 0.0
        %v3083 = vadd.f32 %v3081, %v3082
        %v3084 = vsel %vm951, %v3071, 0.0
        %v3085 = vadd.f32 %v3083, %v3084
        %v3086 = vsel %vm951, %v3072, 0.0
        %v3087 = vadd.f32 %v3085, %v3086
        %3088 = vadd.xlane.f32.xlu0 %v3087
        %v3089 = vpop.xlane.xlu0 %3088
        %3090 = vst.msk [vmem:[%s672] sm:$0x7] %vm2852, %v3089
        %v3091 = vmul.f32 %v3065, %v3065
        %v3092 = vmul.f32 %v3066, %v3066
        %v3093 = vmul.f32 %v3067, %v3067
        %v3094 = vmul.f32 %v3068, %v3068
        %v3095 = vmul.f32 %v3069, %v3069
        %v3096 = vmul.f32 %v3070, %v3070
        %v3097 = vmul.f32 %v3071, %v3071
        %v3098 = vmul.f32 %v3072, %v3072
        %v3099 = vsel %vm951, %v3091, 0.0
        %v3100 = vsel %vm951, %v3092, 0.0
        %v3101 = vadd.f32 %v3099, %v3100
        %v3102 = vsel %vm951, %v3093, 0.0
        %v3103 = vadd.f32 %v3101, %v3102
        %v3104 = vsel %vm951, %v3094, 0.0
        %v3105 = vadd.f32 %v3103, %v3104
        %v3106 = vsel %vm951, %v3095, 0.0
        %v3107 = vadd.f32 %v3105, %v3106
        %v3108 = vsel %vm951, %v3096, 0.0
        %v3109 = vadd.f32 %v3107, %v3108
        %v3110 = vsel %vm951, %v3097, 0.0
        %v3111 = vadd.f32 %v3109, %v3110
        %v3112 = vsel %vm951, %v3098, 0.0
        %v3113 = vadd.f32 %v3111, %v3112
        %3114 = vadd.xlane.f32.xlu0 %v3113
        %v3115 = vpop.xlane.xlu0 %3114
        %v3116 = vadd.f32 %v2229, %v3115
        %v3117 = vpack.c.bf16 %v3065, %v3065
        %v3118 = vpack.c.bf16 %v3066, %v3066
        %v3119 = vpack.c.bf16 %v3067, %v3067
        %v3120 = vpack.c.bf16 %v3068, %v3068
        %v3121 = vpack.c.bf16 %v3069, %v3069
        %v3122 = vpack.c.bf16 %v3070, %v3070
        %v3123 = vpack.c.bf16 %v3071, %v3071
        %v3124 = vpack.c.bf16 %v3072, %v3072
        %3125 = vmatprep.subr.bf16.mxu0 %v2635
        %3126 = vmatpush1.bf16.xpose.msra.mxu0 %v2634
        %3127 = vmatprep.subr.bf16.mxu0 0
        %3128 = vmatpush1.bf16.xpose.msra.mxu0 0
        %3129 = vmatprep.subr.bf16.mxu0 0
        %3130 = vmatpush1.bf16.xpose.msra.mxu0 0
        %3131 = vmatprep.subr.bf16.mxu0 0
        %3132 = vmatpush1.bf16.xpose.msra.mxu0 0
        %3133 = vmatprep.subr.bf16.mxu0 0
        %3134 = vmatpush1.bf16.xpose.msra.mxu0 0
        %3135 = vmatprep.subr.bf16.mxu0 0
        %3136 = vmatpush1.bf16.xpose.msra.mxu0 0
        %3137 = vmatprep.subr.bf16.mxu0 0
        %3138 = vmatpush1.bf16.xpose.msra.mxu0 0
        %3139 = vmatprep.subr.bf16.mxu0 0
        %3140 = vmatpush1.bf16.xpose.msra.mxu0 0
        %3141 = vmatprep.subr.bf16.mxu0 0
        %3142 = vmatpush1.bf16.xpose.msra.mxu0 0
        %3143 = vmatprep.subr.bf16.mxu0 0
        %3144 = vmatpush1.bf16.xpose.msra.mxu0 0
        %3145 = vmatprep.subr.bf16.mxu0 0
        %3146 = vmatpush1.bf16.xpose.msra.mxu0 0
        %3147 = vmatprep.subr.bf16.mxu0 0
        %3148 = vmatpush1.bf16.xpose.msra.mxu0 0
        %3149 = vmatprep.subr.bf16.mxu0 0
        %3150 = vmatpush1.bf16.xpose.msra.mxu0 0
        %3151 = vmatprep.subr.bf16.mxu0 0
        %3152 = vmatpush1.bf16.xpose.msra.mxu0 0
        %3153 = vmatprep.subr.bf16.mxu0 0
        %3154 = vmatpush1.bf16.xpose.msra.mxu0 0
        %3155 = vmatprep.subr.bf16.mxu0 0
        %3156 = vmatpush1.bf16.xpose.msra.mxu0 0
        %3157 = vmatprep.mubr.bf16.mxu0 %v3118
        %3158 = vmatmul.mubr.bf16.gmra.mrb[0].mxu0 %v3117
        %v3159 = vpop.f32.mrb[0].mxu0
        %v3160 = vadd.f32 0.0, %v3159
        %v3161 = vpop.f32.mrb[0].mxu0
        %v3162 = vpop.f32.mrb[0].mxu0
        %v3163 = vpop.f32.mrb[0].mxu0
        %3164 = vdwg.mxu0
        %3165 = vmatprep.subr.bf16.mxu0 %v2637
        %3166 = vmatpush1.bf16.xpose.msra.mxu0 %v2636
        %3167 = vmatprep.subr.bf16.mxu0 0
        %3168 = vmatpush1.bf16.xpose.msra.mxu0 0
        %3169 = vmatprep.subr.bf16.mxu0 0
        %3170 = vmatpush1.bf16.xpose.msra.mxu0 0
        %3171 = vmatprep.subr.bf16.mxu0 0
        %3172 = vmatpush1.bf16.xpose.msra.mxu0 0
        %3173 = vmatprep.subr.bf16.mxu0 0
        %3174 = vmatpush1.bf16.xpose.msra.mxu0 0
        %3175 = vmatprep.subr.bf16.mxu0 0
        %3176 = vmatpush1.bf16.xpose.msra.mxu0 0
        %3177 = vmatprep.subr.bf16.mxu0 0
        %3178 = vmatpush1.bf16.xpose.msra.mxu0 0
        %3179 = vmatprep.subr.bf16.mxu0 0
        %3180 = vmatpush1.bf16.xpose.msra.mxu0 0
        %3181 = vmatprep.subr.bf16.mxu0 0
        %3182 = vmatpush1.bf16.xpose.msra.mxu0 0
        %3183 = vmatprep.subr.bf16.mxu0 0
        %3184 = vmatpush1.bf16.xpose.msra.mxu0 0
        %3185 = vmatprep.subr.bf16.mxu0 0
        %3186 = vmatpush1.bf16.xpose.msra.mxu0 0
        %3187 = vmatprep.subr.bf16.mxu0 0
        %3188 = vmatpush1.bf16.xpose.msra.mxu0 0
        %3189 = vmatprep.subr.bf16.mxu0 0
        %3190 = vmatpush1.bf16.xpose.msra.mxu0 0
        %3191 = vmatprep.subr.bf16.mxu0 0
        %3192 = vmatpush1.bf16.xpose.msra.mxu0 0
        %3193 = vmatprep.subr.bf16.mxu0 0
        %3194 = vmatpush1.bf16.xpose.msra.mxu0 0
        %3195 = vmatprep.subr.bf16.mxu0 0
        %3196 = vmatpush1.bf16.xpose.msra.mxu0 0
        %3197 = vmatprep.mubr.bf16.mxu0 %v3120
        %3198 = vmatmul.mubr.bf16.gmra.mrb[0].mxu0 %v3119
        %v3199 = vpop.f32.mrb[0].mxu0
        %v3200 = vadd.f32 %v3160, %v3199
        %v3201 = vpop.f32.mrb[0].mxu0
        %v3202 = vpop.f32.mrb[0].mxu0
        %v3203 = vpop.f32.mrb[0].mxu0
        %3204 = vdwg.mxu0
        %3205 = vmatprep.subr.bf16.mxu0 %v2639
        %3206 = vmatpush1.bf16.xpose.msra.mxu0 %v2638
        %3207 = vmatprep.subr.bf16.mxu0 0
        %3208 = vmatpush1.bf16.xpose.msra.mxu0 0
        %3209 = vmatprep.subr.bf16.mxu0 0
        %3210 = vmatpush1.bf16.xpose.msra.mxu0 0
        %3211 = vmatprep.subr.bf16.mxu0 0
        %3212 = vmatpush1.bf16.xpose.msra.mxu0 0
        %3213 = vmatprep.subr.bf16.mxu0 0
        %3214 = vmatpush1.bf16.xpose.msra.mxu0 0
        %3215 = vmatprep.subr.bf16.mxu0 0
        %3216 = vmatpush1.bf16.xpose.msra.mxu0 0
        %3217 = vmatprep.subr.bf16.mxu0 0
        %3218 = vmatpush1.bf16.xpose.msra.mxu0 0
        %3219 = vmatprep.subr.bf16.mxu0 0
        %3220 = vmatpush1.bf16.xpose.msra.mxu0 0
        %3221 = vmatprep.subr.bf16.mxu0 0
        %3222 = vmatpush1.bf16.xpose.msra.mxu0 0
        %3223 = vmatprep.subr.bf16.mxu0 0
        %3224 = vmatpush1.bf16.xpose.msra.mxu0 0
        %3225 = vmatprep.subr.bf16.mxu0 0
        %3226 = vmatpush1.bf16.xpose.msra.mxu0 0
        %3227 = vmatprep.subr.bf16.mxu0 0
        %3228 = vmatpush1.bf16.xpose.msra.mxu0 0
        %3229 = vmatprep.subr.bf16.mxu0 0
        %3230 = vmatpush1.bf16.xpose.msra.mxu0 0
        %3231 = vmatprep.subr.bf16.mxu0 0
        %3232 = vmatpush1.bf16.xpose.msra.mxu0 0
        %3233 = vmatprep.subr.bf16.mxu0 0
        %3234 = vmatpush1.bf16.xpose.msra.mxu0 0
        %3235 = vmatprep.subr.bf16.mxu0 0
        %3236 = vmatpush1.bf16.xpose.msra.mxu0 0
        %3237 = vmatprep.mubr.bf16.mxu0 %v3122
        %3238 = vmatmul.mubr.bf16.gmra.mrb[0].mxu0 %v3121
        %v3239 = vpop.f32.mrb[0].mxu0
        %v3240 = vadd.f32 %v3200, %v3239
        %v3241 = vpop.f32.mrb[0].mxu0
        %v3242 = vpop.f32.mrb[0].mxu0
        %v3243 = vpop.f32.mrb[0].mxu0
        %3244 = vdwg.mxu0
        %3245 = vmatprep.subr.bf16.mxu0 %v2641
        %3246 = vmatpush1.bf16.xpose.msra.mxu0 %v2640
        %3247 = vmatprep.subr.bf16.mxu0 0
        %3248 = vmatpush1.bf16.xpose.msra.mxu0 0
        %3249 = vmatprep.subr.bf16.mxu0 0
        %3250 = vmatpush1.bf16.xpose.msra.mxu0 0
        %3251 = vmatprep.subr.bf16.mxu0 0
        %3252 = vmatpush1.bf16.xpose.msra.mxu0 0
        %3253 = vmatprep.subr.bf16.mxu0 0
        %3254 = vmatpush1.bf16.xpose.msra.mxu0 0
        %3255 = vmatprep.subr.bf16.mxu0 0
        %3256 = vmatpush1.bf16.xpose.msra.mxu0 0
        %3257 = vmatprep.subr.bf16.mxu0 0
        %3258 = vmatpush1.bf16.xpose.msra.mxu0 0
        %3259 = vmatprep.subr.bf16.mxu0 0
        %3260 = vmatpush1.bf16.xpose.msra.mxu0 0
        %3261 = vmatprep.subr.bf16.mxu0 0
        %3262 = vmatpush1.bf16.xpose.msra.mxu0 0
        %3263 = vmatprep.subr.bf16.mxu0 0
        %3264 = vmatpush1.bf16.xpose.msra.mxu0 0
        %3265 = vmatprep.subr.bf16.mxu0 0
        %3266 = vmatpush1.bf16.xpose.msra.mxu0 0
        %3267 = vmatprep.subr.bf16.mxu0 0
        %3268 = vmatpush1.bf16.xpose.msra.mxu0 0
        %3269 = vmatprep.subr.bf16.mxu0 0
        %3270 = vmatpush1.bf16.xpose.msra.mxu0 0
        %3271 = vmatprep.subr.bf16.mxu0 0
        %3272 = vmatpush1.bf16.xpose.msra.mxu0 0
        %3273 = vmatprep.subr.bf16.mxu0 0
        %3274 = vmatpush1.bf16.xpose.msra.mxu0 0
        %3275 = vmatprep.subr.bf16.mxu0 0
        %3276 = vmatpush1.bf16.xpose.msra.mxu0 0
        %3277 = vmatprep.mubr.bf16.mxu0 %v3124
        %3278 = vmatmul.mubr.bf16.gmra.mrb[0].mxu0 %v3123
        %v3279 = vpop.f32.mrb[0].mxu0
        %v3280 = vadd.f32 %v3240, %v3279
        %v3281 = vpop.f32.mrb[0].mxu0
        %v3282 = vpop.f32.mrb[0].mxu0
        %v3283 = vpop.f32.mrb[0].mxu0
        %3284 = vdwg.mxu0
        %v3285 = vadd.f32 %v2553, %v3280
        %v3286 = vmul.f32 %v3049, -0.5
        %v3287 = vmul.f32 %v3050, -0.5
        %v3288 = vmul.f32 %v3051, -0.5
        %v3289 = vmul.f32 %v3052, -0.5
        %v3290 = vmul.f32 %v3053, -0.5
        %v3291 = vmul.f32 %v3054, -0.5
        %v3292 = vmul.f32 %v3055, -0.5
        %v3293 = vmul.f32 %v3056, -0.5
        %v3294 = vmul.f32 %v1096, %v3286
        %v3295 = vmul.f32 %v1097, %v3287
        %v3296 = vmul.f32 %v1098, %v3288
        %v3297 = vmul.f32 %v1099, %v3289
        %v3298 = vmul.f32 %v1100, %v3290
        %v3299 = vmul.f32 %v1101, %v3291
        %v3300 = vmul.f32 %v1102, %v3292
        %v3301 = vmul.f32 %v1103, %v3293
        %v3302 = vsel %vm951, %v3294, 0.0
        %v3303 = vrot.slane %v3302, 4
        %v3304 = vadd.f32 %v3302, %v3303
        %v3305 = vrot.slane %v3304, 2
        %v3306 = vadd.f32 %v3304, %v3305
        %v3307 = vrot.slane %v3306, 1
        %v3308 = vadd.f32 %v3306, %v3307
        %v3309 = vsel %vm951, %v3295, 0.0
        %v3310 = vrot.slane %v3309, 4
        %v3311 = vadd.f32 %v3309, %v3310
        %v3312 = vrot.slane %v3311, 2
        %v3313 = vadd.f32 %v3311, %v3312
        %v3314 = vrot.slane %v3313, 1
        %v3315 = vadd.f32 %v3313, %v3314
        %v3316 = vsel %vm951, %v3296, 0.0
        %v3317 = vrot.slane %v3316, 4
        %v3318 = vadd.f32 %v3316, %v3317
        %v3319 = vrot.slane %v3318, 2
        %v3320 = vadd.f32 %v3318, %v3319
        %v3321 = vrot.slane %v3320, 1
        %v3322 = vadd.f32 %v3320, %v3321
        %v3323 = vsel %vm951, %v3297, 0.0
        %v3324 = vrot.slane %v3323, 4
        %v3325 = vadd.f32 %v3323, %v3324
        %v3326 = vrot.slane %v3325, 2
        %v3327 = vadd.f32 %v3325, %v3326
        %v3328 = vrot.slane %v3327, 1
        %v3329 = vadd.f32 %v3327, %v3328
        %v3330 = vsel %vm951, %v3298, 0.0
        %v3331 = vrot.slane %v3330, 4
        %v3332 = vadd.f32 %v3330, %v3331
        %v3333 = vrot.slane %v3332, 2
        %v3334 = vadd.f32 %v3332, %v3333
        %v3335 = vrot.slane %v3334, 1
        %v3336 = vadd.f32 %v3334, %v3335
        %v3337 = vsel %vm951, %v3299, 0.0
        %v3338 = vrot.slane %v3337, 4
        %v3339 = vadd.f32 %v3337, %v3338
        %v3340 = vrot.slane %v3339, 2
        %v3341 = vadd.f32 %v3339, %v3340
        %v3342 = vrot.slane %v3341, 1
        %v3343 = vadd.f32 %v3341, %v3342
        %v3344 = vsel %vm951, %v3300, 0.0
        %v3345 = vrot.slane %v3344, 4
        %v3346 = vadd.f32 %v3344, %v3345
        %v3347 = vrot.slane %v3346, 2
        %v3348 = vadd.f32 %v3346, %v3347
        %v3349 = vrot.slane %v3348, 1
        %v3350 = vadd.f32 %v3348, %v3349
        %v3351 = vsel %vm951, %v3301, 0.0
        %v3352 = vrot.slane %v3351, 4
        %v3353 = vadd.f32 %v3351, %v3352
        %v3354 = vrot.slane %v3353, 2
        %v3355 = vadd.f32 %v3353, %v3354
        %v3356 = vrot.slane %v3355, 1
        %v3357 = vadd.f32 %v3355, %v3356
        %v3358 = vsub.f32 %v3286, %v3308
        %v3359 = vsub.f32 %v3287, %v3315
        %v3360 = vsub.f32 %v3288, %v3322
        %v3361 = vsub.f32 %v3289, %v3329
        %v3362 = vsub.f32 %v3290, %v3336
        %v3363 = vsub.f32 %v3291, %v3343
        %v3364 = vsub.f32 %v3292, %v3350
        %v3365 = vsub.f32 %v3293, %v3357
        %v3366 = vmul.f32 %v1096, %v3358
        %v3367 = vmul.f32 %v1097, %v3359
        %v3368 = vmul.f32 %v1098, %v3360
        %v3369 = vmul.f32 %v1099, %v3361
        %v3370 = vmul.f32 %v1100, %v3362
        %v3371 = vmul.f32 %v1101, %v3363
        %v3372 = vmul.f32 %v1102, %v3364
        %v3373 = vmul.f32 %v1103, %v3365
        %v3374 = vpack.c.bf16 %v3366, %v3366
        %v3375 = vpack.c.bf16 %v3367, %v3367
        %v3376 = vpack.c.bf16 %v3368, %v3368
        %v3377 = vpack.c.bf16 %v3369, %v3369
        %v3378 = vpack.c.bf16 %v3370, %v3370
        %v3379 = vpack.c.bf16 %v3371, %v3371
        %v3380 = vpack.c.bf16 %v3372, %v3372
        %v3381 = vpack.c.bf16 %v3373, %v3373
        %3382 = vmatprep.subr.bf16.mxu0 %v768
        %3383 = vmatpush1.bf16.xpose.msra.mxu0 %v767
        %3384 = vmatprep.subr.bf16.mxu0 0
        %3385 = vmatpush1.bf16.xpose.msra.mxu0 0
        %3386 = vmatprep.subr.bf16.mxu0 0
        %3387 = vmatpush1.bf16.xpose.msra.mxu0 0
        %3388 = vmatprep.subr.bf16.mxu0 0
        %3389 = vmatpush1.bf16.xpose.msra.mxu0 0
        %3390 = vmatprep.subr.bf16.mxu0 0
        %3391 = vmatpush1.bf16.xpose.msra.mxu0 0
        %3392 = vmatprep.subr.bf16.mxu0 0
        %3393 = vmatpush1.bf16.xpose.msra.mxu0 0
        %3394 = vmatprep.subr.bf16.mxu0 0
        %3395 = vmatpush1.bf16.xpose.msra.mxu0 0
        %3396 = vmatprep.subr.bf16.mxu0 0
        %3397 = vmatpush1.bf16.xpose.msra.mxu0 0
        %3398 = vmatprep.subr.bf16.mxu0 0
        %3399 = vmatpush1.bf16.xpose.msra.mxu0 0
        %3400 = vmatprep.subr.bf16.mxu0 0
        %3401 = vmatpush1.bf16.xpose.msra.mxu0 0
        %3402 = vmatprep.subr.bf16.mxu0 0
        %3403 = vmatpush1.bf16.xpose.msra.mxu0 0
        %3404 = vmatprep.subr.bf16.mxu0 0
        %3405 = vmatpush1.bf16.xpose.msra.mxu0 0
        %3406 = vmatprep.subr.bf16.mxu0 0
        %3407 = vmatpush1.bf16.xpose.msra.mxu0 0
        %3408 = vmatprep.subr.bf16.mxu0 0
        %3409 = vmatpush1.bf16.xpose.msra.mxu0 0
        %3410 = vmatprep.subr.bf16.mxu0 0
        %3411 = vmatpush1.bf16.xpose.msra.mxu0 0
        %3412 = vmatprep.subr.bf16.mxu0 0
        %3413 = vmatpush1.bf16.xpose.msra.mxu0 0
        %3414 = vmatprep.mubr.bf16.mxu0 %v3375
        %3415 = vmatmul.mubr.bf16.gmra.mrb[0].mxu0 %v3374
        %v3416 = vpop.f32.mrb[0].mxu0
        %v3417 = vadd.f32 0.0, %v3416
        %v3418 = vpop.f32.mrb[0].mxu0
        %v3419 = vpop.f32.mrb[0].mxu0
        %v3420 = vpop.f32.mrb[0].mxu0
        %3421 = vdwg.mxu0
        %3422 = vmatprep.subr.bf16.mxu0 %v770
        %3423 = vmatpush1.bf16.xpose.msra.mxu0 %v769
        %3424 = vmatprep.subr.bf16.mxu0 0
        %3425 = vmatpush1.bf16.xpose.msra.mxu0 0
        %3426 = vmatprep.subr.bf16.mxu0 0
        %3427 = vmatpush1.bf16.xpose.msra.mxu0 0
        %3428 = vmatprep.subr.bf16.mxu0 0
        %3429 = vmatpush1.bf16.xpose.msra.mxu0 0
        %3430 = vmatprep.subr.bf16.mxu0 0
        %3431 = vmatpush1.bf16.xpose.msra.mxu0 0
        %3432 = vmatprep.subr.bf16.mxu0 0
        %3433 = vmatpush1.bf16.xpose.msra.mxu0 0
        %3434 = vmatprep.subr.bf16.mxu0 0
        %3435 = vmatpush1.bf16.xpose.msra.mxu0 0
        %3436 = vmatprep.subr.bf16.mxu0 0
        %3437 = vmatpush1.bf16.xpose.msra.mxu0 0
        %3438 = vmatprep.subr.bf16.mxu0 0
        %3439 = vmatpush1.bf16.xpose.msra.mxu0 0
        %3440 = vmatprep.subr.bf16.mxu0 0
        %3441 = vmatpush1.bf16.xpose.msra.mxu0 0
        %3442 = vmatprep.subr.bf16.mxu0 0
        %3443 = vmatpush1.bf16.xpose.msra.mxu0 0
        %3444 = vmatprep.subr.bf16.mxu0 0
        %3445 = vmatpush1.bf16.xpose.msra.mxu0 0
        %3446 = vmatprep.subr.bf16.mxu0 0
        %3447 = vmatpush1.bf16.xpose.msra.mxu0 0
        %3448 = vmatprep.subr.bf16.mxu0 0
        %3449 = vmatpush1.bf16.xpose.msra.mxu0 0
        %3450 = vmatprep.subr.bf16.mxu0 0
        %3451 = vmatpush1.bf16.xpose.msra.mxu0 0
        %3452 = vmatprep.subr.bf16.mxu0 0
        %3453 = vmatpush1.bf16.xpose.msra.mxu0 0
        %3454 = vmatprep.mubr.bf16.mxu0 %v3377
        %3455 = vmatmul.mubr.bf16.gmra.mrb[0].mxu0 %v3376
        %v3456 = vpop.f32.mrb[0].mxu0
        %v3457 = vadd.f32 %v3417, %v3456
        %v3458 = vpop.f32.mrb[0].mxu0
        %v3459 = vpop.f32.mrb[0].mxu0
        %v3460 = vpop.f32.mrb[0].mxu0
        %3461 = vdwg.mxu0
        %3462 = vmatprep.subr.bf16.mxu0 %v772
        %3463 = vmatpush1.bf16.xpose.msra.mxu0 %v771
        %3464 = vmatprep.subr.bf16.mxu0 0
        %3465 = vmatpush1.bf16.xpose.msra.mxu0 0
        %3466 = vmatprep.subr.bf16.mxu0 0
        %3467 = vmatpush1.bf16.xpose.msra.mxu0 0
        %3468 = vmatprep.subr.bf16.mxu0 0
        %3469 = vmatpush1.bf16.xpose.msra.mxu0 0
        %3470 = vmatprep.subr.bf16.mxu0 0
        %3471 = vmatpush1.bf16.xpose.msra.mxu0 0
        %3472 = vmatprep.subr.bf16.mxu0 0
        %3473 = vmatpush1.bf16.xpose.msra.mxu0 0
        %3474 = vmatprep.subr.bf16.mxu0 0
        %3475 = vmatpush1.bf16.xpose.msra.mxu0 0
        %3476 = vmatprep.subr.bf16.mxu0 0
        %3477 = vmatpush1.bf16.xpose.msra.mxu0 0
        %3478 = vmatprep.subr.bf16.mxu0 0
        %3479 = vmatpush1.bf16.xpose.msra.mxu0 0
        %3480 = vmatprep.subr.bf16.mxu0 0
        %3481 = vmatpush1.bf16.xpose.msra.mxu0 0
        %3482 = vmatprep.subr.bf16.mxu0 0
        %3483 = vmatpush1.bf16.xpose.msra.mxu0 0
        %3484 = vmatprep.subr.bf16.mxu0 0
        %3485 = vmatpush1.bf16.xpose.msra.mxu0 0
        %3486 = vmatprep.subr.bf16.mxu0 0
        %3487 = vmatpush1.bf16.xpose.msra.mxu0 0
        %3488 = vmatprep.subr.bf16.mxu0 0
        %3489 = vmatpush1.bf16.xpose.msra.mxu0 0
        %3490 = vmatprep.subr.bf16.mxu0 0
        %3491 = vmatpush1.bf16.xpose.msra.mxu0 0
        %3492 = vmatprep.subr.bf16.mxu0 0
        %3493 = vmatpush1.bf16.xpose.msra.mxu0 0
        %3494 = vmatprep.mubr.bf16.mxu0 %v3379
        %3495 = vmatmul.mubr.bf16.gmra.mrb[0].mxu0 %v3378
        %v3496 = vpop.f32.mrb[0].mxu0
        %v3497 = vadd.f32 %v3457, %v3496
        %v3498 = vpop.f32.mrb[0].mxu0
        %v3499 = vpop.f32.mrb[0].mxu0
        %v3500 = vpop.f32.mrb[0].mxu0
        %3501 = vdwg.mxu0
        %3502 = vmatprep.subr.bf16.mxu0 %v774
        %3503 = vmatpush1.bf16.xpose.msra.mxu0 %v773
        %3504 = vmatprep.subr.bf16.mxu0 0
        %3505 = vmatpush1.bf16.xpose.msra.mxu0 0
        %3506 = vmatprep.subr.bf16.mxu0 0
        %3507 = vmatpush1.bf16.xpose.msra.mxu0 0
        %3508 = vmatprep.subr.bf16.mxu0 0
        %3509 = vmatpush1.bf16.xpose.msra.mxu0 0
        %3510 = vmatprep.subr.bf16.mxu0 0
        %3511 = vmatpush1.bf16.xpose.msra.mxu0 0
        %3512 = vmatprep.subr.bf16.mxu0 0
        %3513 = vmatpush1.bf16.xpose.msra.mxu0 0
        %3514 = vmatprep.subr.bf16.mxu0 0
        %3515 = vmatpush1.bf16.xpose.msra.mxu0 0
        %3516 = vmatprep.subr.bf16.mxu0 0
        %3517 = vmatpush1.bf16.xpose.msra.mxu0 0
        %3518 = vmatprep.subr.bf16.mxu0 0
        %3519 = vmatpush1.bf16.xpose.msra.mxu0 0
        %3520 = vmatprep.subr.bf16.mxu0 0
        %3521 = vmatpush1.bf16.xpose.msra.mxu0 0
        %3522 = vmatprep.subr.bf16.mxu0 0
        %3523 = vmatpush1.bf16.xpose.msra.mxu0 0
        %3524 = vmatprep.subr.bf16.mxu0 0
        %3525 = vmatpush1.bf16.xpose.msra.mxu0 0
        %3526 = vmatprep.subr.bf16.mxu0 0
        %3527 = vmatpush1.bf16.xpose.msra.mxu0 0
        %3528 = vmatprep.subr.bf16.mxu0 0
        %3529 = vmatpush1.bf16.xpose.msra.mxu0 0
        %3530 = vmatprep.subr.bf16.mxu0 0
        %3531 = vmatpush1.bf16.xpose.msra.mxu0 0
        %3532 = vmatprep.subr.bf16.mxu0 0
        %3533 = vmatpush1.bf16.xpose.msra.mxu0 0
        %3534 = vmatprep.mubr.bf16.mxu0 %v3381
        %3535 = vmatmul.mubr.bf16.gmra.mrb[0].mxu0 %v3380
        %v3536 = vpop.f32.mrb[0].mxu0
        %v3537 = vadd.f32 %v3497, %v3536
        %v3538 = vpop.f32.mrb[0].mxu0
        %v3539 = vpop.f32.mrb[0].mxu0
        %v3540 = vpop.f32.mrb[0].mxu0
        %3541 = vdwg.mxu0
        %v3542 = vadd.f32 %v3285, %v3537
        %vm3543 = vcmask 124928
        %3544 = vst.msk [vmem:[%s656] sm:$0x7] %vm3543, %v3542
        %v3545 = vmax.f32 %v3025, 1e-37
        %v3546 = vmax.f32 %v3026, 1e-37
        %v3547 = vmax.f32 %v3027, 1e-37
        %v3548 = vmax.f32 %v3028, 1e-37
        %v3549 = vmax.f32 %v3029, 1e-37
        %v3550 = vmax.f32 %v3030, 1e-37
        %v3551 = vmax.f32 %v3031, 1e-37
        %v3552 = vmax.f32 %v3032, 1e-37
        %v3553 = vlog2.pop %v3545
        %v3554 = vmul.f32 %v3553, 0.6931472
        %v3555 = vlog2.pop %v3546
        %v3556 = vmul.f32 %v3555, 0.6931472
        %v3557 = vlog2.pop %v3547
        %v3558 = vmul.f32 %v3557, 0.6931472
        %v3559 = vlog2.pop %v3548
        %v3560 = vmul.f32 %v3559, 0.6931472
        %v3561 = vlog2.pop %v3549
        %v3562 = vmul.f32 %v3561, 0.6931472
        %v3563 = vlog2.pop %v3550
        %v3564 = vmul.f32 %v3563, 0.6931472
        %v3565 = vlog2.pop %v3551
        %v3566 = vmul.f32 %v3565, 0.6931472
        %v3567 = vlog2.pop %v3552
        %v3568 = vmul.f32 %v3567, 0.6931472
        %v3569 = vadd.f32 %v3554, %v3556
        %v3570 = vadd.f32 %v3569, %v3558
        %v3571 = vadd.f32 %v3570, %v3560
        %v3572 = vadd.f32 %v3571, %v3562
        %v3573 = vadd.f32 %v3572, %v3564
        %v3574 = vadd.f32 %v3573, %v3566
        %v3575 = vadd.f32 %v3574, %v3568
        %3576 = vadd.xlane.f32.xlu0 %v3575
        %v3577 = vpop.xlane.xlu0 %3576
        %vm3578 = vcmask 0
        %3579 = vst.msk [vmem:[%s687] sm:$0x1] %vm3578, %v3577
        %v3580 = vsel %vm951, %v2945, -inf
        %v3581 = vrot.slane %v3580, 4
        %v3582 = vmax.f32 %v3580, %v3581
        %v3583 = vrot.slane %v3582, 2
        %v3584 = vmax.f32 %v3582, %v3583
        %v3585 = vrot.slane %v3584, 1
        %v3586 = vmax.f32 %v3584, %v3585
        %v3587 = vsel %vm951, %v2946, -inf
        %v3588 = vrot.slane %v3587, 4
        %v3589 = vmax.f32 %v3587, %v3588
        %v3590 = vrot.slane %v3589, 2
        %v3591 = vmax.f32 %v3589, %v3590
        %v3592 = vrot.slane %v3591, 1
        %v3593 = vmax.f32 %v3591, %v3592
        %v3594 = vsel %vm951, %v2947, -inf
        %v3595 = vrot.slane %v3594, 4
        %v3596 = vmax.f32 %v3594, %v3595
        %v3597 = vrot.slane %v3596, 2
        %v3598 = vmax.f32 %v3596, %v3597
        %v3599 = vrot.slane %v3598, 1
        %v3600 = vmax.f32 %v3598, %v3599
        %v3601 = vsel %vm951, %v2948, -inf
        %v3602 = vrot.slane %v3601, 4
        %v3603 = vmax.f32 %v3601, %v3602
        %v3604 = vrot.slane %v3603, 2
        %v3605 = vmax.f32 %v3603, %v3604
        %v3606 = vrot.slane %v3605, 1
        %v3607 = vmax.f32 %v3605, %v3606
        %v3608 = vsel %vm951, %v2949, -inf
        %v3609 = vrot.slane %v3608, 4
        %v3610 = vmax.f32 %v3608, %v3609
        %v3611 = vrot.slane %v3610, 2
        %v3612 = vmax.f32 %v3610, %v3611
        %v3613 = vrot.slane %v3612, 1
        %v3614 = vmax.f32 %v3612, %v3613
        %v3615 = vsel %vm951, %v2950, -inf
        %v3616 = vrot.slane %v3615, 4
        %v3617 = vmax.f32 %v3615, %v3616
        %v3618 = vrot.slane %v3617, 2
        %v3619 = vmax.f32 %v3617, %v3618
        %v3620 = vrot.slane %v3619, 1
        %v3621 = vmax.f32 %v3619, %v3620
        %v3622 = vsel %vm951, %v2951, -inf
        %v3623 = vrot.slane %v3622, 4
        %v3624 = vmax.f32 %v3622, %v3623
        %v3625 = vrot.slane %v3624, 2
        %v3626 = vmax.f32 %v3624, %v3625
        %v3627 = vrot.slane %v3626, 1
        %v3628 = vmax.f32 %v3626, %v3627
        %v3629 = vsel %vm951, %v2952, -inf
        %v3630 = vrot.slane %v3629, 4
        %v3631 = vmax.f32 %v3629, %v3630
        %v3632 = vrot.slane %v3631, 2
        %v3633 = vmax.f32 %v3631, %v3632
        %v3634 = vrot.slane %v3633, 1
        %v3635 = vmax.f32 %v3633, %v3634
        %v3636 = vsub.f32 %v2945, %v3586
        %v3637 = vsub.f32 %v2946, %v3593
        %v3638 = vsub.f32 %v2947, %v3600
        %v3639 = vsub.f32 %v2948, %v3607
        %v3640 = vsub.f32 %v2949, %v3614
        %v3641 = vsub.f32 %v2950, %v3621
        %v3642 = vsub.f32 %v2951, %v3628
        %v3643 = vsub.f32 %v2952, %v3635
        %v3644 = vmul.f32 %v3636, 1.442695
        %v3645 = vpow.pop %v3644
        %v3646 = vmul.f32 %v3637, 1.442695
        %v3647 = vpow.pop %v3646
        %v3648 = vmul.f32 %v3638, 1.442695
        %v3649 = vpow.pop %v3648
        %v3650 = vmul.f32 %v3639, 1.442695
        %v3651 = vpow.pop %v3650
        %v3652 = vmul.f32 %v3640, 1.442695
        %v3653 = vpow.pop %v3652
        %v3654 = vmul.f32 %v3641, 1.442695
        %v3655 = vpow.pop %v3654
        %v3656 = vmul.f32 %v3642, 1.442695
        %v3657 = vpow.pop %v3656
        %v3658 = vmul.f32 %v3643, 1.442695
        %v3659 = vpow.pop %v3658
        %v3660 = vsel %vm951, %v3645, 0.0
        %v3661 = vrot.slane %v3660, 4
        %v3662 = vadd.f32 %v3660, %v3661
        %v3663 = vrot.slane %v3662, 2
        %v3664 = vadd.f32 %v3662, %v3663
        %v3665 = vrot.slane %v3664, 1
        %v3666 = vadd.f32 %v3664, %v3665
        %v3667 = vsel %vm951, %v3647, 0.0
        %v3668 = vrot.slane %v3667, 4
        %v3669 = vadd.f32 %v3667, %v3668
        %v3670 = vrot.slane %v3669, 2
        %v3671 = vadd.f32 %v3669, %v3670
        %v3672 = vrot.slane %v3671, 1
        %v3673 = vadd.f32 %v3671, %v3672
        %v3674 = vsel %vm951, %v3649, 0.0
        %v3675 = vrot.slane %v3674, 4
        %v3676 = vadd.f32 %v3674, %v3675
        %v3677 = vrot.slane %v3676, 2
        %v3678 = vadd.f32 %v3676, %v3677
        %v3679 = vrot.slane %v3678, 1
        %v3680 = vadd.f32 %v3678, %v3679
        %v3681 = vsel %vm951, %v3651, 0.0
        %v3682 = vrot.slane %v3681, 4
        %v3683 = vadd.f32 %v3681, %v3682
        %v3684 = vrot.slane %v3683, 2
        %v3685 = vadd.f32 %v3683, %v3684
        %v3686 = vrot.slane %v3685, 1
        %v3687 = vadd.f32 %v3685, %v3686
        %v3688 = vsel %vm951, %v3653, 0.0
        %v3689 = vrot.slane %v3688, 4
        %v3690 = vadd.f32 %v3688, %v3689
        %v3691 = vrot.slane %v3690, 2
        %v3692 = vadd.f32 %v3690, %v3691
        %v3693 = vrot.slane %v3692, 1
        %v3694 = vadd.f32 %v3692, %v3693
        %v3695 = vsel %vm951, %v3655, 0.0
        %v3696 = vrot.slane %v3695, 4
        %v3697 = vadd.f32 %v3695, %v3696
        %v3698 = vrot.slane %v3697, 2
        %v3699 = vadd.f32 %v3697, %v3698
        %v3700 = vrot.slane %v3699, 1
        %v3701 = vadd.f32 %v3699, %v3700
        %v3702 = vsel %vm951, %v3657, 0.0
        %v3703 = vrot.slane %v3702, 4
        %v3704 = vadd.f32 %v3702, %v3703
        %v3705 = vrot.slane %v3704, 2
        %v3706 = vadd.f32 %v3704, %v3705
        %v3707 = vrot.slane %v3706, 1
        %v3708 = vadd.f32 %v3706, %v3707
        %v3709 = vsel %vm951, %v3659, 0.0
        %v3710 = vrot.slane %v3709, 4
        %v3711 = vadd.f32 %v3709, %v3710
        %v3712 = vrot.slane %v3711, 2
        %v3713 = vadd.f32 %v3711, %v3712
        %v3714 = vrot.slane %v3713, 1
        %v3715 = vadd.f32 %v3713, %v3714
        %v3716 = vrcp.pop %v3666
        %v3717 = vrcp.pop %v3673
        %v3718 = vrcp.pop %v3680
        %v3719 = vrcp.pop %v3687
        %v3720 = vrcp.pop %v3694
        %v3721 = vrcp.pop %v3701
        %v3722 = vrcp.pop %v3708
        %v3723 = vrcp.pop %v3715
        %v3724 = vmul.f32 %v3645, %v3716
        %v3725 = vmul.f32 %v3647, %v3717
        %v3726 = vmul.f32 %v3649, %v3718
        %v3727 = vmul.f32 %v3651, %v3719
        %v3728 = vmul.f32 %v3653, %v3720
        %v3729 = vmul.f32 %v3655, %v3721
        %v3730 = vmul.f32 %v3657, %v3722
        %v3731 = vmul.f32 %v3659, %v3723
        %v3732 = vsel %vm951, %v1096, 0.0
        %v3733 = vsel %vm951, %v1097, 0.0
        %v3734 = vadd.f32 %v3732, %v3733
        %v3735 = vsel %vm951, %v1098, 0.0
        %v3736 = vadd.f32 %v3734, %v3735
        %v3737 = vsel %vm951, %v1099, 0.0
        %v3738 = vadd.f32 %v3736, %v3737
        %v3739 = vsel %vm951, %v1100, 0.0
        %v3740 = vadd.f32 %v3738, %v3739
        %v3741 = vsel %vm951, %v1101, 0.0
        %v3742 = vadd.f32 %v3740, %v3741
        %v3743 = vsel %vm951, %v1102, 0.0
        %v3744 = vadd.f32 %v3742, %v3743
        %v3745 = vsel %vm951, %v1103, 0.0
        %v3746 = vadd.f32 %v3744, %v3745
        %3747 = vadd.xlane.f32.xlu0 %v3746
        %v3748 = vpop.xlane.xlu0 %3747
        %3749 = vst.msk [vmem:[%s680] sm:$0x7] %vm1415, %v3748
        %v3750 = vsel %vm951, %v822, 0.0
        %v3751 = vsel %vm951, %v824, 0.0
        %v3752 = vadd.f32 %v3750, %v3751
        %v3753 = vsel %vm951, %v863, 0.0
        %v3754 = vadd.f32 %v3752, %v3753
        %v3755 = vsel %vm951, %v865, 0.0
        %v3756 = vadd.f32 %v3754, %v3755
        %v3757 = vsel %vm951, %v904, 0.0
        %v3758 = vadd.f32 %v3756, %v3757
        %v3759 = vsel %vm951, %v906, 0.0
        %v3760 = vadd.f32 %v3758, %v3759
        %v3761 = vsel %vm951, %v945, 0.0
        %v3762 = vadd.f32 %v3760, %v3761
        %v3763 = vsel %vm951, %v947, 0.0
        %v3764 = vadd.f32 %v3762, %v3763
        %3765 = vadd.xlane.f32.xlu0 %v3764
        %v3766 = vpop.xlane.xlu0 %3765
        %3767 = vst.msk [vmem:[%s680] sm:$0x7] %vm1965, %v3766
        %v3768 = vsel %vm951, %v3724, 0.0
        %v3769 = vsel %vm951, %v3725, 0.0
        %v3770 = vadd.f32 %v3768, %v3769
        %v3771 = vsel %vm951, %v3726, 0.0
        %v3772 = vadd.f32 %v3770, %v3771
        %v3773 = vsel %vm951, %v3727, 0.0
        %v3774 = vadd.f32 %v3772, %v3773
        %v3775 = vsel %vm951, %v3728, 0.0
        %v3776 = vadd.f32 %v3774, %v3775
        %v3777 = vsel %vm951, %v3729, 0.0
        %v3778 = vadd.f32 %v3776, %v3777
        %v3779 = vsel %vm951, %v3730, 0.0
        %v3780 = vadd.f32 %v3778, %v3779
        %v3781 = vsel %vm951, %v3731, 0.0
        %v3782 = vadd.f32 %v3780, %v3781
        %3783 = vadd.xlane.f32.xlu0 %v3782
        %v3784 = vpop.xlane.xlu0 %3783
        %3785 = vst.msk [vmem:[%s680] sm:$0x7] %vm2852, %v3784
        %vm3786 = vcmask 26648
        %3787 = vst.msk [vmem:[%s680] sm:$0x7] %vm3786, %v3116
        %s3788 = sand.u32 %s156, 1
        %s3789 = scalar_lea.sflag [#allocation5], %s3788
        %s3790 = sand.u32 %s156, 1
        %s3791 = smul.addr %s3790, 96
        %s3792 = scalar_lea.vmem [#allocation4], %s3791
        %s3793 = sand.u32 %s184, 1
        %s3794 = scalar_lea.sflag [#allocation7], %s3793
        %s3795 = sand.u32 %s184, 1
        %s3796 = smul.addr %s3795, 32
        %s3797 = scalar_lea.vmem [#allocation6], %s3796
        %p3798 = scmp.lt.s32.totalorder %s32, 3
        %s3799 = scalar_select %p3798, %s32, 3
        %p3800 = scmp.lt.s32.totalorder %s33, 1
        %s3801 = scalar_select %p3800, %s33, 1
        %s3802 = smul.addr %s3799, 2
        %s3803 = sadd.s32 %s3801, %s3802
        %s3804 = smul.addr %s3803, 4
        %s3805 = scalar_lea.vmem %s6, %s3804
        %p3806 = scmp.lt.s32.totalorder %s32, 3
        %s3807 = scalar_select %p3806, %s32, 3
        %p3808 = scmp.lt.s32.totalorder %s33, 1
        %s3809 = scalar_select %p3808, %s33, 1
        %s3810 = smul.addr %s3807, 2
        %s3811 = sadd.s32 %s3809, %s3810
        %s3812 = smul.addr %s3811, 4
        %s3813 = scalar_lea.vmem %s7, %s3812
        %p3814 = scmp.lt.s32.totalorder %s32, 3
        %s3815 = scalar_select %p3814, %s32, 3
        %p3816 = scmp.lt.s32.totalorder %s33, 1
        %s3817 = scalar_select %p3816, %s33, 1
        %s3818 = smul.addr %s3815, 2
        %s3819 = sadd.s32 %s3817, %s3818
        %s3820 = smul.addr %s3819, 4
        %s3821 = scalar_lea.vmem %s8, %s3820
        %p3822 = scmp.lt.s32.totalorder %s32, 3
        %s3823 = scalar_select %p3822, %s32, 3
        %p3824 = scmp.lt.s32.totalorder %s33, 1
        %s3825 = scalar_select %p3824, %s33, 1
        %s3826 = smul.addr %s3823, 2
        %s3827 = sadd.s32 %s3825, %s3826
        %s3828 = smul.addr %s3827, 4
        %s3829 = scalar_lea.vmem %s9, %s3828
        %p3830 = scmp.lt.s32.totalorder %s32, 3
        %s3831 = scalar_select %p3830, %s32, 3
        %p3832 = scmp.lt.s32.totalorder %s33, 1
        %s3833 = scalar_select %p3832, %s33, 1
        %s3834 = smul.addr %s3831, 2
        %s3835 = sadd.s32 %s3833, %s3834
        %s3836 = scalar_lea.vmem %s10, %s3835
        // Predicated region
        $region98: #{iodine_forward.5} parent=88 // pred_check
          %p3837 = pneg %p166
        $region99: #{iodine_forward.5} parent=88 // pred_check_branch
          %3839 = sbr.rel (%p3837) target = $region101
        $region100: #{iodine_forward.5} parent=88 // pred_region
          %s3840 = smul.u32 8, %s32
          %s3842 = ssub.s32 1536, 1536
          %3843 = vsyncadd %s3789, %s3842
          %s3844 = smul.addr %s33, 96
          %s3845 = sadd.s32 %s3840, %s3844
          %s3846 = smul.addr %s3845, 64
          %s3847 = scalar_lea.hbm %s4, %s3846
          %s3848 = sshll.u32 %s3792, 4
          %s3849 = int_to_ptr.vmem [resolvable:$true] %s3848
          %3854 = dma.vmem_to_hbm [thread:$0]  %s3849, 1536, %s3847, %s3789, 512, 2048, 32
        $region101: #{iodine_forward.5} parent=88 // pred_fallthru
          _
        // Predicated region
        $region102: #{iodine_forward.5} parent=88 // pred_check
          %p3855 = pneg %p194
        $region103: #{iodine_forward.5} parent=88 // pred_check_branch
          %3857 = sbr.rel (%p3855) target = $region105
        $region104: #{iodine_forward.5} parent=88 // pred_region
          %s3858 = smul.u32 8, %s32
          %s3860 = ssub.s32 512, 512
          %3861 = vsyncadd %s3794, %s3860
          %s3862 = smul.addr %s33, 32
          %s3863 = sadd.s32 %s3858, %s3862
          %s3864 = smul.addr %s3863, 64
          %s3865 = scalar_lea.hbm %s5, %s3864
          %s3867 = sshll.u32 %s3797, 4
          %s3868 = int_to_ptr.vmem [resolvable:$true] %s3867
          %3870 = dma.vmem_to_hbm [thread:$0]  %s3868, 512, %s3865, %s3794
        $region105: #{iodine_forward.5} parent=88 // pred_fallthru
          _
        // Predicated region
        $region106: #{iodine_forward.5} parent=88 // pred_check
          %p3871 = pneg %p222
        $region107: #{iodine_forward.5} parent=88 // pred_check_branch
          %3873 = sbr.rel (%p3871) target = $region109
        $region108: #{iodine_forward.5} parent=88 // pred_region
          _
        $region109: #{iodine_forward.5} parent=88 // pred_fallthru
          _
        // Predicated region
        $region110: #{iodine_forward.5} parent=88 // pred_check
          %p3874 = pneg %p250
        $region111: #{iodine_forward.5} parent=88 // pred_check_branch
          %3876 = sbr.rel (%p3874) target = $region113
        $region112: #{iodine_forward.5} parent=88 // pred_region
          _
        $region113: #{iodine_forward.5} parent=88 // pred_fallthru
          _
        // Predicated region
        $region114: #{iodine_forward.5} parent=88 // pred_check
          %p3877 = pneg %p278
        $region115: #{iodine_forward.5} parent=88 // pred_check_branch
          %3879 = sbr.rel (%p3877) target = $region117
        $region116: #{iodine_forward.5} parent=88 // pred_region
          _
        $region117: #{iodine_forward.5} parent=88 // pred_fallthru
          _
        // Predicated region
        $region118: #{iodine_forward.5} parent=88 // pred_check
          %p3880 = pneg %p306
        $region119: #{iodine_forward.5} parent=88 // pred_check_branch
          %3882 = sbr.rel (%p3880) target = $region121
        $region120: #{iodine_forward.5} parent=88 // pred_region
          _
        $region121: #{iodine_forward.5} parent=88 // pred_fallthru
          _
        // Predicated region
        $region122: #{iodine_forward.5} parent=88 // pred_check
          %p3883 = pneg %p334
        $region123: #{iodine_forward.5} parent=88 // pred_check_branch
          %3885 = sbr.rel (%p3883) target = $region125
        $region124: #{iodine_forward.5} parent=88 // pred_region
          _
        $region125: #{iodine_forward.5} parent=88 // pred_fallthru
          _
      $region89: #{iodine_forward.5} parent=5 // pred_fallthru
        _
      %p3886 = scmp.le.s32.totalorder 2, %s23
      // Predicated region
      $region126: #{iodine_forward.5} parent=5 // pred_check
        %p3887 = pneg %p3886
      $region127: #{iodine_forward.5} parent=5 // pred_check_branch
        %3889 = sbr.rel (%p3887) target = $region129
      $region128: #{iodine_forward.5} parent=5 // pred_region
        %s3890 = ssub.s32 %s23, 2
        // Predicated region
        $region130: #{iodine_forward.5} parent=128 // pred_check
          %p3891 = pneg %p172
        $region131: #{iodine_forward.5} parent=128 // pred_check_branch
          %3893 = sbr.rel (%p3891) target = $region133
        $region132: #{iodine_forward.5} parent=128 // pred_region
          %s3894 = sand.u32 %s157, 1
          %s3895 = scalar_lea.sflag [#allocation5], %s3894
          %s3896 = sand.u32 %s157, 1
          %s3897 = smul.addr %s3896, 96
          %s3898 = scalar_lea.vmem [#allocation4], %s3897
          %3899 = dma.done %s3895, 1536
        $region133: #{iodine_forward.5} parent=128 // pred_fallthru
          _
        // Predicated region
        $region134: #{iodine_forward.5} parent=128 // pred_check
          %p3900 = pneg %p200
        $region135: #{iodine_forward.5} parent=128 // pred_check_branch
          %3902 = sbr.rel (%p3900) target = $region137
        $region136: #{iodine_forward.5} parent=128 // pred_region
          %s3903 = sand.u32 %s185, 1
          %s3904 = scalar_lea.sflag [#allocation7], %s3903
          %s3905 = sand.u32 %s185, 1
          %s3906 = smul.addr %s3905, 32
          %s3907 = scalar_lea.vmem [#allocation6], %s3906
          %3908 = dma.done %s3904, 512
        $region137: #{iodine_forward.5} parent=128 // pred_fallthru
          _
        // Predicated region
        $region138: #{iodine_forward.5} parent=128 // pred_check
          %p3909 = pneg %p228
        $region139: #{iodine_forward.5} parent=128 // pred_check_branch
          %3911 = sbr.rel (%p3909) target = $region141
        $region140: #{iodine_forward.5} parent=128 // pred_region
          %p3912 = scmp.lt.s32.totalorder %s34, 3
          %s3913 = scalar_select %p3912, %s34, 3
          %p3914 = scmp.lt.s32.totalorder %s35, 1
          %s3915 = scalar_select %p3914, %s35, 1
          %s3916 = smul.addr %s3913, 2
          %s3917 = sadd.s32 %s3915, %s3916
          %s3918 = smul.addr %s3917, 4
          %s3919 = scalar_lea.vmem %s6, %s3918
        $region141: #{iodine_forward.5} parent=128 // pred_fallthru
          _
        // Predicated region
        $region142: #{iodine_forward.5} parent=128 // pred_check
          %p3920 = pneg %p256
        $region143: #{iodine_forward.5} parent=128 // pred_check_branch
          %3922 = sbr.rel (%p3920) target = $region145
        $region144: #{iodine_forward.5} parent=128 // pred_region
          %p3923 = scmp.lt.s32.totalorder %s34, 3
          %s3924 = scalar_select %p3923, %s34, 3
          %p3925 = scmp.lt.s32.totalorder %s35, 1
          %s3926 = scalar_select %p3925, %s35, 1
          %s3927 = smul.addr %s3924, 2
          %s3928 = sadd.s32 %s3926, %s3927
          %s3929 = smul.addr %s3928, 4
          %s3930 = scalar_lea.vmem %s7, %s3929
        $region145: #{iodine_forward.5} parent=128 // pred_fallthru
          _
        // Predicated region
        $region146: #{iodine_forward.5} parent=128 // pred_check
          %p3931 = pneg %p284
        $region147: #{iodine_forward.5} parent=128 // pred_check_branch
          %3933 = sbr.rel (%p3931) target = $region149
        $region148: #{iodine_forward.5} parent=128 // pred_region
          %p3934 = scmp.lt.s32.totalorder %s34, 3
          %s3935 = scalar_select %p3934, %s34, 3
          %p3936 = scmp.lt.s32.totalorder %s35, 1
          %s3937 = scalar_select %p3936, %s35, 1
          %s3938 = smul.addr %s3935, 2
          %s3939 = sadd.s32 %s3937, %s3938
          %s3940 = smul.addr %s3939, 4
          %s3941 = scalar_lea.vmem %s8, %s3940
        $region149: #{iodine_forward.5} parent=128 // pred_fallthru
          _
        // Predicated region
        $region150: #{iodine_forward.5} parent=128 // pred_check
          %p3942 = pneg %p312
        $region151: #{iodine_forward.5} parent=128 // pred_check_branch
          %3944 = sbr.rel (%p3942) target = $region153
        $region152: #{iodine_forward.5} parent=128 // pred_region
          %p3945 = scmp.lt.s32.totalorder %s34, 3
          %s3946 = scalar_select %p3945, %s34, 3
          %p3947 = scmp.lt.s32.totalorder %s35, 1
          %s3948 = scalar_select %p3947, %s35, 1
          %s3949 = smul.addr %s3946, 2
          %s3950 = sadd.s32 %s3948, %s3949
          %s3951 = smul.addr %s3950, 4
          %s3952 = scalar_lea.vmem %s9, %s3951
        $region153: #{iodine_forward.5} parent=128 // pred_fallthru
          _
        // Predicated region
        $region154: #{iodine_forward.5} parent=128 // pred_check
          %p3953 = pneg %p340
        $region155: #{iodine_forward.5} parent=128 // pred_check_branch
          %3955 = sbr.rel (%p3953) target = $region157
        $region156: #{iodine_forward.5} parent=128 // pred_region
          %p3956 = scmp.lt.s32.totalorder %s34, 3
          %s3957 = scalar_select %p3956, %s34, 3
          %p3958 = scmp.lt.s32.totalorder %s35, 1
          %s3959 = scalar_select %p3958, %s35, 1
          %s3960 = smul.addr %s3957, 2
          %s3961 = sadd.s32 %s3959, %s3960
          %s3962 = scalar_lea.vmem %s10, %s3961
        $region157: #{iodine_forward.5} parent=128 // pred_fallthru
          _
      $region129: #{iodine_forward.5} parent=5 // pred_fallthru
        _
    $region6: #{iodine_forward.5} parent=1 // loop_footer
      %s27 = sadd.s32 1, %s23
    $region7: #{iodine_forward.5} parent=1 // loop_footer_branch
      %22 = sbr.rel target = $region3
    $region8: #{iodine_forward.5} parent=1 // loop_exit
      _
    %3963 = vsyncpa [#allocation5], 1
    %s3964 = scalar_lea.sflag [#allocation5], 1
    %3965 = vsyncpa %s3964, 1
    %3966 = vsyncpa [#allocation7], 1
    %s3967 = scalar_lea.sflag [#allocation7], 1
    %3968 = vsyncpa %s3967, 1

// kernel: iodine_forward.8
$region0: #{iodine_forward.8}
  #allocation0 [shape = 'u32[]', space=smem, size = 0x4, offset = 0x4, fixed_abs, tag = 'smem constant byte address 0x4 - core index']
  #allocation1 [shape = 'u32[144,128]{1,0:T(1,128)}', space=vmem, size = 0x12000, scoped, tag = 'internal scratch']
  %s0 = inlined_call_operand.vmem [shape: f32[6,80], index: 0, kind: input, shape index: {}]
  %s1 = inlined_call_operand.vmem [shape: f32[6,128], index: 1, kind: input, shape index: {}]
  %s2 = inlined_call_operand.vmem [shape: f32[6,128], index: 2, kind: input, shape index: {}]
  %s3 = inlined_call_operand.vmem [shape: f32[80,128], index: 3, kind: input, shape index: {}]
  %s4 = inlined_call_operand.vmem [shape: f32[1,128], index: 4, kind: input, shape index: {}]
  %s5 = inlined_call_operand.vmem [shape: f32[256,512], index: 5, kind: input, shape index: {}]
  %s6 = inlined_call_operand.vmem [shape: f32[1,512], index: 6, kind: input, shape index: {}]
  %s7 = inlined_call_operand.vmem [shape: f32[128,32], index: 7, kind: input, shape index: {}]
  %s8 = inlined_call_operand.vmem [shape: f32[1,32], index: 8, kind: input, shape index: {}]
  %s9 = inlined_call_operand.vmem [shape: f32[6,32], index: 9, kind: output, shape index: {0}]
  %s10 = inlined_call_operand.hbm [shape: f32[6,128], index: 10, kind: output, shape index: {1}]
  %s11 = inlined_call_operand.hbm [shape: f32[6,128], index: 11, kind: output, shape index: {2}]
  %12 = xla_tuple %s9, %s10, %s11
  %s13 = sld [smem:[#allocation0]]
  $region62: #{iodine_forward.8} parent=0
    _
  %s15 = ssub.s32 1, %s13
  %s16 = scalar_select 0, %s15, %s13
  $region1: #{iodine_forward.8} parent=0
    #allocation2 [shape = 'u8[4096]{0}', space=vmem, size = 0x1000, scoped, tag = 'output window, operand 1, single buffered']
    #allocation3 [shape = 's32[1]{0}', space=sflag, size = 0x4, scoped, tag = 'scoped memory for iodine_forward.8']
    #allocation4 [shape = 'u8[4096]{0}', space=vmem, size = 0x1000, scoped, tag = 'output window, operand 2, single buffered']
    #allocation5 [shape = 's32[1]{0}', space=sflag, size = 0x4, scoped, tag = 'scoped memory for iodine_forward.8']
    %17 = vsyncpa [#allocation3], 0
    %18 = vsyncpa [#allocation5], 0
    // Predicated region
    $region2: #{iodine_forward.8} parent=1 // pred_check
      _
    $region3: #{iodine_forward.8} parent=1 // pred_check_branch
      %20 = sbr.rel (0) target = $region5
    $region4: #{iodine_forward.8} parent=1 // pred_region
      _
    $region5: #{iodine_forward.8} parent=1 // pred_fallthru
      _
    // Predicated region
    $region6: #{iodine_forward.8} parent=1 // pred_check
      _
    $region7: #{iodine_forward.8} parent=1 // pred_check_branch
      %22 = sbr.rel (0) target = $region9
    $region8: #{iodine_forward.8} parent=1 // pred_region
      _
    $region9: #{iodine_forward.8} parent=1 // pred_fallthru
      _
    // Predicated region
    $region10: #{iodine_forward.8} parent=1 // pred_check
      _
    $region11: #{iodine_forward.8} parent=1 // pred_check_branch
      %24 = sbr.rel (0) target = $region13
    $region12: #{iodine_forward.8} parent=1 // pred_region
      _
    $region13: #{iodine_forward.8} parent=1 // pred_fallthru
      _
    // Predicated region
    $region14: #{iodine_forward.8} parent=1 // pred_check
      _
    $region15: #{iodine_forward.8} parent=1 // pred_check_branch
      %26 = sbr.rel (0) target = $region17
    $region16: #{iodine_forward.8} parent=1 // pred_region
      _
    $region17: #{iodine_forward.8} parent=1 // pred_fallthru
      _
    // Predicated region
    $region18: #{iodine_forward.8} parent=1 // pred_check
      _
    $region19: #{iodine_forward.8} parent=1 // pred_check_branch
      %28 = sbr.rel (0) target = $region21
    $region20: #{iodine_forward.8} parent=1 // pred_region
      _
    $region21: #{iodine_forward.8} parent=1 // pred_fallthru
      _
    // Predicated region
    $region22: #{iodine_forward.8} parent=1 // pred_check
      _
    $region23: #{iodine_forward.8} parent=1 // pred_check_branch
      %30 = sbr.rel (0) target = $region25
    $region24: #{iodine_forward.8} parent=1 // pred_region
      _
    $region25: #{iodine_forward.8} parent=1 // pred_fallthru
      _
    // Predicated region
    $region26: #{iodine_forward.8} parent=1 // pred_check
      _
    $region27: #{iodine_forward.8} parent=1 // pred_check_branch
      %32 = sbr.rel (0) target = $region29
    $region28: #{iodine_forward.8} parent=1 // pred_region
      _
    $region29: #{iodine_forward.8} parent=1 // pred_fallthru
      _
    // Predicated region
    $region30: #{iodine_forward.8} parent=1 // pred_check
      _
    $region31: #{iodine_forward.8} parent=1 // pred_check_branch
      %34 = sbr.rel (0) target = $region33
    $region32: #{iodine_forward.8} parent=1 // pred_region
      _
    $region33: #{iodine_forward.8} parent=1 // pred_fallthru
      _
    // Predicated region
    $region34: #{iodine_forward.8} parent=1 // pred_check
      _
    $region35: #{iodine_forward.8} parent=1 // pred_check_branch
      %36 = sbr.rel (0) target = $region37
    $region36: #{iodine_forward.8} parent=1 // pred_region
      _
    $region37: #{iodine_forward.8} parent=1 // pred_fallthru
      _
    %v37 = vld [vmem:[%s0] sm:$0x3f]
    %v38 = vld [vmem:[%s3] sm:$0xff]
    %v39 = vld [vmem:[%s3 + $0x8] sm:$0xff]
    %v40 = vld [vmem:[%s3 + $0x10] sm:$0xff]
    %v41 = vld [vmem:[%s3 + $0x18] sm:$0xff]
    %v42 = vld [vmem:[%s3 + $0x20] sm:$0xff]
    %v43 = vld [vmem:[%s3 + $0x28] sm:$0xff]
    %v44 = vld [vmem:[%s3 + $0x30] sm:$0xff]
    %v45 = vld [vmem:[%s3 + $0x38] sm:$0xff]
    %v46 = vld [vmem:[%s3 + $0x40] sm:$0xff]
    %v47 = vld [vmem:[%s3 + $0x48] sm:$0xff]
    %v48 = vld [vmem:[%s4] sm:$0x1]
    %v50 = vlaneseq
    %v51 = vshrl.u32 %v50, 7
    %v52 = vsub.s32 0, %v51
    %v53 = vrot.slane %v48, %v52
    %vm55 = vcmask 654336
    %v57 = vsel %vm55, %v37, 0
    %59 = vmatprep.subr.mxu0 0.0
    %60 = vmatpush1.msra.mxu0 %v38
    %61 = vmatprep.subr.mxu0 0.0
    %62 = vmatpush1.msra.mxu0 %v39
    %63 = vmatprep.subr.mxu0 0.0
    %64 = vmatpush1.msra.mxu0 %v40
    %65 = vmatprep.subr.mxu0 0.0
    %66 = vmatpush1.msra.mxu0 %v41
    %67 = vmatprep.subr.mxu0 0.0
    %68 = vmatpush1.msra.mxu0 %v42
    %69 = vmatprep.subr.mxu0 0.0
    %70 = vmatpush1.msra.mxu0 %v43
    %71 = vmatprep.subr.mxu0 0.0
    %72 = vmatpush1.msra.mxu0 %v44
    %73 = vmatprep.subr.mxu0 0.0
    %74 = vmatpush1.msra.mxu0 %v45
    %75 = vmatprep.subr.mxu0 0.0
    %76 = vmatpush1.msra.mxu0 %v46
    %77 = vmatprep.subr.mxu0 0.0
    %78 = vmatpush1.msra.mxu0 %v47
    %79 = vmatprep.subr.mxu0 0.0
    %80 = vmatpush1.msra.mxu0 0.0
    %81 = vmatprep.subr.mxu0 0.0
    %82 = vmatpush1.msra.mxu0 0.0
    %83 = vmatprep.subr.mxu0 0.0
    %84 = vmatpush1.msra.mxu0 0.0
    %85 = vmatprep.subr.mxu0 0.0
    %86 = vmatpush1.msra.mxu0 0.0
    %87 = vmatprep.subr.mxu0 0.0
    %88 = vmatpush1.msra.mxu0 0.0
    %89 = vmatprep.subr.mxu0 0.0
    %90 = vmatpush1.msra.mxu0 0.0
    %91 = vmatprep.subr.mxu0 0.0
    %92 = vmatpush1.msra.mxu0 0.0
    %93 = vmatprep.subr.mxu0 0.0
    %94 = vmatpush1.msra.mxu0 0.0
    %95 = vmatprep.subr.mxu0 0.0
    %96 = vmatpush1.msra.mxu0 0.0
    %97 = vmatprep.subr.mxu0 0.0
    %98 = vmatpush1.msra.mxu0 0.0
    %99 = vmatprep.subr.mxu0 0.0
    %100 = vmatpush1.msra.mxu0 0.0
    %101 = vmatprep.subr.mxu0 0.0
    %102 = vmatpush1.msra.mxu0 0.0
    %103 = vmatprep.subr.mxu0 0.0
    %104 = vmatpush1.msra.mxu0 0.0
    %105 = vmatprep.subr.mxu0 0.0
    %106 = vmatpush1.msra.mxu0 0.0
    %107 = vmatprep.subr.mxu0 0.0
    %108 = vmatpush1.msra.mxu0 0.0
    %109 = vmatprep.subr.mxu0 0.0
    %110 = vmatpush1.msra.mxu0 0.0
    %111 = vmatprep.subr.mxu0 0.0
    %112 = vmatpush1.msra.mxu0 0.0
    %113 = vmatprep.subr.mxu0 0.0
    %114 = vmatpush1.msra.mxu0 0.0
    %115 = vmatprep.subr.mxu0 0.0
    %116 = vmatpush1.msra.mxu0 0.0
    %117 = vmatprep.subr.mxu0 0.0
    %118 = vmatpush1.msra.mxu0 0.0
    %119 = vmatprep.subr.mxu0 0.0
    %120 = vmatpush1.msra.mxu0 0.0
    %121 = vmatprep.subr.mxu0 0.0
    %122 = vmatpush1.msra.mxu0 0.0
    %123 = vmatprep.mubr.f32.mxu0 0.0
    %124 = vmatmul.mubr.f32.gmra.mrb[0].mxu0 %v57
    %v125 = vpop.f32.mrb[0].mxu0
    %v126 = vadd.f32 %v53, %v125
    %v127 = vpop.f32.mrb[0].mxu0
    %128 = vdwg.mxu0
    %vm129 = vcmp.gt.f32.partialorder %v126, 0.0
    %v130 = vmin.f32 %v126, 0.0
    %v131 = vmul.f32 %v130, 1.442695
    %v132 = vpow.pop %v131
    %v133 = vsub.f32 %v132, 1.0
    %v134 = vsel %vm129, %v126, %v133
    %v135 = vld [vmem:[%s1] sm:$0x3f]
    %v136 = vld [vmem:[%s5] sm:$0xff]
    %v137 = vld [vmem:[%s5 + $0x8] sm:$0xff]
    %v138 = vld [vmem:[%s5 + $0x10] sm:$0xff]
    %v139 = vld [vmem:[%s5 + $0x18] sm:$0xff]
    %v140 = vld [vmem:[%s5 + $0x20] sm:$0xff]
    %v141 = vld [vmem:[%s5 + $0x28] sm:$0xff]
    %v142 = vld [vmem:[%s5 + $0x30] sm:$0xff]
    %v143 = vld [vmem:[%s5 + $0x38] sm:$0xff]
    %v144 = vld [vmem:[%s5 + $0x40] sm:$0xff]
    %v145 = vld [vmem:[%s5 + $0x48] sm:$0xff]
    %v146 = vld [vmem:[%s5 + $0x50] sm:$0xff]
    %v147 = vld [vmem:[%s5 + $0x58] sm:$0xff]
    %v148 = vld [vmem:[%s5 + $0x60] sm:$0xff]
    %v149 = vld [vmem:[%s5 + $0x68] sm:$0xff]
    %v150 = vld [vmem:[%s5 + $0x70] sm:$0xff]
    %v151 = vld [vmem:[%s5 + $0x78] sm:$0xff]
    %v152 = vld [vmem:[%s5 + $0x80] sm:$0xff]
    %v153 = vld [vmem:[%s5 + $0x88] sm:$0xff]
    %v154 = vld [vmem:[%s5 + $0x90] sm:$0xff]
    %v155 = vld [vmem:[%s5 + $0x98] sm:$0xff]
    %v156 = vld [vmem:[%s5 + $0xa0] sm:$0xff]
    %v157 = vld [vmem:[%s5 + $0xa8] sm:$0xff]
    %v158 = vld [vmem:[%s5 + $0xb0] sm:$0xff]
    %v159 = vld [vmem:[%s5 + $0xb8] sm:$0xff]
    %v160 = vld [vmem:[%s5 + $0xc0] sm:$0xff]
    %v161 = vld [vmem:[%s5 + $0xc8] sm:$0xff]
    %v162 = vld [vmem:[%s5 + $0xd0] sm:$0xff]
    %v163 = vld [vmem:[%s5 + $0xd8] sm:$0xff]
    %v164 = vld [vmem:[%s5 + $0xe0] sm:$0xff]
    %v165 = vld [vmem:[%s5 + $0xe8] sm:$0xff]
    %v166 = vld [vmem:[%s5 + $0xf0] sm:$0xff]
    %v167 = vld [vmem:[%s5 + $0xf8] sm:$0xff]
    %v168 = vld [vmem:[%s5 + $0x100] sm:$0xff]
    %v169 = vld [vmem:[%s5 + $0x108] sm:$0xff]
    %v170 = vld [vmem:[%s5 + $0x110] sm:$0xff]
    %v171 = vld [vmem:[%s5 + $0x118] sm:$0xff]
    %v172 = vld [vmem:[%s5 + $0x120] sm:$0xff]
    %v173 = vld [vmem:[%s5 + $0x128] sm:$0xff]
    %v174 = vld [vmem:[%s5 + $0x130] sm:$0xff]
    %v175 = vld [vmem:[%s5 + $0x138] sm:$0xff]
    %v176 = vld [vmem:[%s5 + $0x140] sm:$0xff]
    %v177 = vld [vmem:[%s5 + $0x148] sm:$0xff]
    %v178 = vld [vmem:[%s5 + $0x150] sm:$0xff]
    %v179 = vld [vmem:[%s5 + $0x158] sm:$0xff]
    %v180 = vld [vmem:[%s5 + $0x160] sm:$0xff]
    %v181 = vld [vmem:[%s5 + $0x168] sm:$0xff]
    %v182 = vld [vmem:[%s5 + $0x170] sm:$0xff]
    %v183 = vld [vmem:[%s5 + $0x178] sm:$0xff]
    %v184 = vld [vmem:[%s5 + $0x180] sm:$0xff]
    %v185 = vld [vmem:[%s5 + $0x188] sm:$0xff]
    %v186 = vld [vmem:[%s5 + $0x190] sm:$0xff]
    %v187 = vld [vmem:[%s5 + $0x198] sm:$0xff]
    %v188 = vld [vmem:[%s5 + $0x1a0] sm:$0xff]
    %v189 = vld [vmem:[%s5 + $0x1a8] sm:$0xff]
    %v190 = vld [vmem:[%s5 + $0x1b0] sm:$0xff]
    %v191 = vld [vmem:[%s5 + $0x1b8] sm:$0xff]
    %v192 = vld [vmem:[%s5 + $0x1c0] sm:$0xff]
    %v193 = vld [vmem:[%s5 + $0x1c8] sm:$0xff]
    %v194 = vld [vmem:[%s5 + $0x1d0] sm:$0xff]
    %v195 = vld [vmem:[%s5 + $0x1d8] sm:$0xff]
    %v196 = vld [vmem:[%s5 + $0x1e0] sm:$0xff]
    %v197 = vld [vmem:[%s5 + $0x1e8] sm:$0xff]
    %v198 = vld [vmem:[%s5 + $0x1f0] sm:$0xff]
    %v199 = vld [vmem:[%s5 + $0x1f8] sm:$0xff]
    %v200 = vld [vmem:[%s5 + $0x200] sm:$0xff]
    %v201 = vld [vmem:[%s5 + $0x208] sm:$0xff]
    %v202 = vld [vmem:[%s5 + $0x210] sm:$0xff]
    %v203 = vld [vmem:[%s5 + $0x218] sm:$0xff]
    %v204 = vld [vmem:[%s5 + $0x220] sm:$0xff]
    %v205 = vld [vmem:[%s5 + $0x228] sm:$0xff]
    %v206 = vld [vmem:[%s5 + $0x230] sm:$0xff]
    %v207 = vld [vmem:[%s5 + $0x238] sm:$0xff]
    %v208 = vld [vmem:[%s5 + $0x240] sm:$0xff]
    %v209 = vld [vmem:[%s5 + $0x248] sm:$0xff]
    %v210 = vld [vmem:[%s5 + $0x250] sm:$0xff]
    %v211 = vld [vmem:[%s5 + $0x258] sm:$0xff]
    %v212 = vld [vmem:[%s5 + $0x260] sm:$0xff]
    %v213 = vld [vmem:[%s5 + $0x268] sm:$0xff]
    %v214 = vld [vmem:[%s5 + $0x270] sm:$0xff]
    %v215 = vld [vmem:[%s5 + $0x278] sm:$0xff]
    %v216 = vld [vmem:[%s5 + $0x280] sm:$0xff]
    %v217 = vld [vmem:[%s5 + $0x288] sm:$0xff]
    %v218 = vld [vmem:[%s5 + $0x290] sm:$0xff]
    %v219 = vld [vmem:[%s5 + $0x298] sm:$0xff]
    %v220 = vld [vmem:[%s5 + $0x2a0] sm:$0xff]
    %v221 = vld [vmem:[%s5 + $0x2a8] sm:$0xff]
    %v222 = vld [vmem:[%s5 + $0x2b0] sm:$0xff]
    %v223 = vld [vmem:[%s5 + $0x2b8] sm:$0xff]
    %v224 = vld [vmem:[%s5 + $0x2c0] sm:$0xff]
    %v225 = vld [vmem:[%s5 + $0x2c8] sm:$0xff]
    %v226 = vld [vmem:[%s5 + $0x2d0] sm:$0xff]
    %v227 = vld [vmem:[%s5 + $0x2d8] sm:$0xff]
    %v228 = vld [vmem:[%s5 + $0x2e0] sm:$0xff]
    %v229 = vld [vmem:[%s5 + $0x2e8] sm:$0xff]
    %v230 = vld [vmem:[%s5 + $0x2f0] sm:$0xff]
    %v231 = vld [vmem:[%s5 + $0x2f8] sm:$0xff]
    %v232 = vld [vmem:[%s5 + $0x300] sm:$0xff]
    %v233 = vld [vmem:[%s5 + $0x308] sm:$0xff]
    %v234 = vld [vmem:[%s5 + $0x310] sm:$0xff]
    %v235 = vld [vmem:[%s5 + $0x318] sm:$0xff]
    %v236 = vld [vmem:[%s5 + $0x320] sm:$0xff]
    %v237 = vld [vmem:[%s5 + $0x328] sm:$0xff]
    %v238 = vld [vmem:[%s5 + $0x330] sm:$0xff]
    %v239 = vld [vmem:[%s5 + $0x338] sm:$0xff]
    %v240 = vld [vmem:[%s5 + $0x340] sm:$0xff]
    %v241 = vld [vmem:[%s5 + $0x348] sm:$0xff]
    %v242 = vld [vmem:[%s5 + $0x350] sm:$0xff]
    %v243 = vld [vmem:[%s5 + $0x358] sm:$0xff]
    %v244 = vld [vmem:[%s5 + $0x360] sm:$0xff]
    %v245 = vld [vmem:[%s5 + $0x368] sm:$0xff]
    %v246 = vld [vmem:[%s5 + $0x370] sm:$0xff]
    %v247 = vld [vmem:[%s5 + $0x378] sm:$0xff]
    %v248 = vld [vmem:[%s5 + $0x380] sm:$0xff]
    %v249 = vld [vmem:[%s5 + $0x388] sm:$0xff]
    %v250 = vld [vmem:[%s5 + $0x390] sm:$0xff]
    %v251 = vld [vmem:[%s5 + $0x398] sm:$0xff]
    %v252 = vld [vmem:[%s5 + $0x3a0] sm:$0xff]
    %v253 = vld [vmem:[%s5 + $0x3a8] sm:$0xff]
    %v254 = vld [vmem:[%s5 + $0x3b0] sm:$0xff]
    %v255 = vld [vmem:[%s5 + $0x3b8] sm:$0xff]
    %v256 = vld [vmem:[%s5 + $0x3c0] sm:$0xff]
    %v257 = vld [vmem:[%s5 + $0x3c8] sm:$0xff]
    %v258 = vld [vmem:[%s5 + $0x3d0] sm:$0xff]
    %v259 = vld [vmem:[%s5 + $0x3d8] sm:$0xff]
    %v260 = vld [vmem:[%s5 + $0x3e0] sm:$0xff]
    %v261 = vld [vmem:[%s5 + $0x3e8] sm:$0xff]
    %v262 = vld [vmem:[%s5 + $0x3f0] sm:$0xff]
    %v263 = vld [vmem:[%s5 + $0x3f8] sm:$0xff]
    %v264 = vld [vmem:[%s6] sm:$0xf]
    %v266 = vlaneseq
    %v267 = vshrl.u32 %v266, 7
    %v268 = vsub.s32 0, %v267
    %v269 = vrot.slane %v264, %v268
    %v270 = vlaneseq
    %v271 = vshrl.u32 %v270, 7
    %v272 = vsub.s32 1, %v271
    %v273 = vrot.slane %v264, %v272
    %v274 = vlaneseq
    %v275 = vshrl.u32 %v274, 7
    %v276 = vsub.s32 2, %v275
    %v277 = vrot.slane %v264, %v276
    %v278 = vlaneseq
    %v279 = vshrl.u32 %v278, 7
    %v280 = vsub.s32 3, %v279
    %v281 = vrot.slane %v264, %v280
    %286 = vmatprep.subr.mxu0 %v137
    %287 = vmatpush1.msra.mxu0 %v136
    %288 = vmatprep.subr.mxu0 %v141
    %289 = vmatpush1.msra.mxu0 %v140
    %290 = vmatprep.subr.mxu0 %v145
    %291 = vmatpush1.msra.mxu0 %v144
    %292 = vmatprep.subr.mxu0 %v149
    %293 = vmatpush1.msra.mxu0 %v148
    %294 = vmatprep.subr.mxu0 %v153
    %295 = vmatpush1.msra.mxu0 %v152
    %296 = vmatprep.subr.mxu0 %v157
    %297 = vmatpush1.msra.mxu0 %v156
    %298 = vmatprep.subr.mxu0 %v161
    %299 = vmatpush1.msra.mxu0 %v160
    %300 = vmatprep.subr.mxu0 %v165
    %301 = vmatpush1.msra.mxu0 %v164
    %302 = vmatprep.subr.mxu0 %v169
    %303 = vmatpush1.msra.mxu0 %v168
    %304 = vmatprep.subr.mxu0 %v173
    %305 = vmatpush1.msra.mxu0 %v172
    %306 = vmatprep.subr.mxu0 %v177
    %307 = vmatpush1.msra.mxu0 %v176
    %308 = vmatprep.subr.mxu0 %v181
    %309 = vmatpush1.msra.mxu0 %v180
    %310 = vmatprep.subr.mxu0 %v185
    %311 = vmatpush1.msra.mxu0 %v184
    %312 = vmatprep.subr.mxu0 %v189
    %313 = vmatpush1.msra.mxu0 %v188
    %314 = vmatprep.subr.mxu0 %v193
    %315 = vmatpush1.msra.mxu0 %v192
    %316 = vmatprep.subr.mxu0 %v197
    %317 = vmatpush1.msra.mxu0 %v196
    %318 = vmatprep.subr.mxu0 %v201
    %319 = vmatpush1.msra.mxu0 %v200
    %320 = vmatprep.subr.mxu0 %v205
    %321 = vmatpush1.msra.mxu0 %v204
    %322 = vmatprep.subr.mxu0 %v209
    %323 = vmatpush1.msra.mxu0 %v208
    %324 = vmatprep.subr.mxu0 %v213
    %325 = vmatpush1.msra.mxu0 %v212
    %326 = vmatprep.subr.mxu0 %v217
    %327 = vmatpush1.msra.mxu0 %v216
    %328 = vmatprep.subr.mxu0 %v221
    %329 = vmatpush1.msra.mxu0 %v220
    %330 = vmatprep.subr.mxu0 %v225
    %331 = vmatpush1.msra.mxu0 %v224
    %332 = vmatprep.subr.mxu0 %v229
    %333 = vmatpush1.msra.mxu0 %v228
    %334 = vmatprep.subr.mxu0 %v233
    %335 = vmatpush1.msra.mxu0 %v232
    %336 = vmatprep.subr.mxu0 %v237
    %337 = vmatpush1.msra.mxu0 %v236
    %338 = vmatprep.subr.mxu0 %v241
    %339 = vmatpush1.msra.mxu0 %v240
    %340 = vmatprep.subr.mxu0 %v245
    %341 = vmatpush1.msra.mxu0 %v244
    %342 = vmatprep.subr.mxu0 %v249
    %343 = vmatpush1.msra.mxu0 %v248
    %344 = vmatprep.subr.mxu0 %v253
    %345 = vmatpush1.msra.mxu0 %v252
    %346 = vmatprep.subr.mxu0 %v257
    %347 = vmatpush1.msra.mxu0 %v256
    %348 = vmatprep.subr.mxu0 %v261
    %349 = vmatpush1.msra.mxu0 %v260
    %350 = vmatprep.mubr.f32.mxu0 %v135
    %351 = vmatmul.mubr.f32.gmra.mrb[0].mxu0 %v134
    %v352 = vpop.f32.mrb[0].mxu0
    %v353 = vadd.f32 %v269, %v352
    %v354 = vpop.f32.mrb[0].mxu0
    %v355 = vadd.f32 %v273, %v354
    %356 = vdwg.mxu0
    %357 = vmatprep.subr.mxu0 %v139
    %358 = vmatpush1.msra.mxu0 %v138
    %359 = vmatprep.subr.mxu0 %v143
    %360 = vmatpush1.msra.mxu0 %v142
    %361 = vmatprep.subr.mxu0 %v147
    %362 = vmatpush1.msra.mxu0 %v146
    %363 = vmatprep.subr.mxu0 %v151
    %364 = vmatpush1.msra.mxu0 %v150
    %365 = vmatprep.subr.mxu0 %v155
    %366 = vmatpush1.msra.mxu0 %v154
    %367 = vmatprep.subr.mxu0 %v159
    %368 = vmatpush1.msra.mxu0 %v158
    %369 = vmatprep.subr.mxu0 %v163
    %370 = vmatpush1.msra.mxu0 %v162
    %371 = vmatprep.subr.mxu0 %v167
    %372 = vmatpush1.msra.mxu0 %v166
    %373 = vmatprep.subr.mxu0 %v171
    %374 = vmatpush1.msra.mxu0 %v170
    %375 = vmatprep.subr.mxu0 %v175
    %376 = vmatpush1.msra.mxu0 %v174
    %377 = vmatprep.subr.mxu0 %v179
    %378 = vmatpush1.msra.mxu0 %v178
    %379 = vmatprep.subr.mxu0 %v183
    %380 = vmatpush1.msra.mxu0 %v182
    %381 = vmatprep.subr.mxu0 %v187
    %382 = vmatpush1.msra.mxu0 %v186
    %383 = vmatprep.subr.mxu0 %v191
    %384 = vmatpush1.msra.mxu0 %v190
    %385 = vmatprep.subr.mxu0 %v195
    %386 = vmatpush1.msra.mxu0 %v194
    %387 = vmatprep.subr.mxu0 %v199
    %388 = vmatpush1.msra.mxu0 %v198
    %389 = vmatprep.subr.mxu0 %v203
    %390 = vmatpush1.msra.mxu0 %v202
    %391 = vmatprep.subr.mxu0 %v207
    %392 = vmatpush1.msra.mxu0 %v206
    %393 = vmatprep.subr.mxu0 %v211
    %394 = vmatpush1.msra.mxu0 %v210
    %395 = vmatprep.subr.mxu0 %v215
    %396 = vmatpush1.msra.mxu0 %v214
    %397 = vmatprep.subr.mxu0 %v219
    %398 = vmatpush1.msra.mxu0 %v218
    %399 = vmatprep.subr.mxu0 %v223
    %400 = vmatpush1.msra.mxu0 %v222
    %401 = vmatprep.subr.mxu0 %v227
    %402 = vmatpush1.msra.mxu0 %v226
    %403 = vmatprep.subr.mxu0 %v231
    %404 = vmatpush1.msra.mxu0 %v230
    %405 = vmatprep.subr.mxu0 %v235
    %406 = vmatpush1.msra.mxu0 %v234
    %407 = vmatprep.subr.mxu0 %v239
    %408 = vmatpush1.msra.mxu0 %v238
    %409 = vmatprep.subr.mxu0 %v243
    %410 = vmatpush1.msra.mxu0 %v242
    %411 = vmatprep.subr.mxu0 %v247
    %412 = vmatpush1.msra.mxu0 %v246
    %413 = vmatprep.subr.mxu0 %v251
    %414 = vmatpush1.msra.mxu0 %v250
    %415 = vmatprep.subr.mxu0 %v255
    %416 = vmatpush1.msra.mxu0 %v254
    %417 = vmatprep.subr.mxu0 %v259
    %418 = vmatpush1.msra.mxu0 %v258
    %419 = vmatprep.subr.mxu0 %v263
    %420 = vmatpush1.msra.mxu0 %v262
    %421 = vmatprep.mubr.f32.mxu0 %v135
    %422 = vmatmul.mubr.f32.gmra.mrb[0].mxu0 %v134
    %v423 = vpop.f32.mrb[0].mxu0
    %v424 = vadd.f32 %v277, %v423
    %v425 = vpop.f32.mrb[0].mxu0
    %v426 = vadd.f32 %v281, %v425
    %427 = vdwg.mxu0
    %v428 = vsub.f32 0.0, %v355
    %v429 = vmul.f32 %v428, 1.442695
    %v430 = vpow.pop %v429
    %v431 = vadd.f32 %v430, 1.0
    %v432 = vrcp.pop %v431
    %v433 = vmul.f32 1.0, %v432
    %v434 = vld [vmem:[%s2] sm:$0x3f]
    %v435 = vmul.f32 %v433, %v434
    %v436 = vsub.f32 0.0, %v353
    %v437 = vmul.f32 %v436, 1.442695
    %v438 = vpow.pop %v437
    %v439 = vadd.f32 %v438, 1.0
    %v440 = vrcp.pop %v439
    %v441 = vmul.f32 1.0, %v440
    %v442 = vtanh.pop %v424
    %v443 = vmul.f32 %v441, %v442
    %v444 = vadd.f32 %v435, %v443
    %v445 = vsub.f32 0.0, %v426
    %v446 = vmul.f32 %v445, 1.442695
    %v447 = vpow.pop %v446
    %v448 = vadd.f32 %v447, 1.0
    %v449 = vrcp.pop %v448
    %v450 = vmul.f32 1.0, %v449
    %v451 = vtanh.pop %v444
    %v452 = vmul.f32 %v450, %v451
    %v453 = vld [vmem:[%s7] sm:$0xff]
    %v454 = vld [vmem:[%s7 + $0x8] sm:$0xff]
    %v455 = vld [vmem:[%s7 + $0x10] sm:$0xff]
    %v456 = vld [vmem:[%s7 + $0x18] sm:$0xff]
    %v457 = vld [vmem:[%s7 + $0x20] sm:$0xff]
    %v458 = vld [vmem:[%s7 + $0x28] sm:$0xff]
    %v459 = vld [vmem:[%s7 + $0x30] sm:$0xff]
    %v460 = vld [vmem:[%s7 + $0x38] sm:$0xff]
    %v461 = vld [vmem:[%s7 + $0x40] sm:$0xff]
    %v462 = vld [vmem:[%s7 + $0x48] sm:$0xff]
    %v463 = vld [vmem:[%s7 + $0x50] sm:$0xff]
    %v464 = vld [vmem:[%s7 + $0x58] sm:$0xff]
    %v465 = vld [vmem:[%s7 + $0x60] sm:$0xff]
    %v466 = vld [vmem:[%s7 + $0x68] sm:$0xff]
    %v467 = vld [vmem:[%s7 + $0x70] sm:$0xff]
    %v468 = vld [vmem:[%s7 + $0x78] sm:$0xff]
    %v469 = vld [vmem:[%s8] sm:$0x1]
    %v471 = vlaneseq
    %v472 = vshrl.u32 %v471, 7
    %v473 = vsub.s32 0, %v472
    %v474 = vrot.slane %v469, %v473
    %476 = vmatprep.subr.mxu0 0.0
    %477 = vmatpush1.msra.mxu0 %v453
    %478 = vmatprep.subr.mxu0 0.0
    %479 = vmatpush1.msra.mxu0 %v454
    %480 = vmatprep.subr.mxu0 0.0
    %481 = vmatpush1.msra.mxu0 %v455
    %482 = vmatprep.subr.mxu0 0.0
    %483 = vmatpush1.msra.mxu0 %v456
    %484 = vmatprep.subr.mxu0 0.0
    %485 = vmatpush1.msra.mxu0 %v457
    %486 = vmatprep.subr.mxu0 0.0
    %487 = vmatpush1.msra.mxu0 %v458
    %488 = vmatprep.subr.mxu0 0.0
    %489 = vmatpush1.msra.mxu0 %v459
    %490 = vmatprep.subr.mxu0 0.0
    %491 = vmatpush1.msra.mxu0 %v460
    %492 = vmatprep.subr.mxu0 0.0
    %493 = vmatpush1.msra.mxu0 %v461
    %494 = vmatprep.subr.mxu0 0.0
    %495 = vmatpush1.msra.mxu0 %v462
    %496 = vmatprep.subr.mxu0 0.0
    %497 = vmatpush1.msra.mxu0 %v463
    %498 = vmatprep.subr.mxu0 0.0
    %499 = vmatpush1.msra.mxu0 %v464
    %500 = vmatprep.subr.mxu0 0.0
    %501 = vmatpush1.msra.mxu0 %v465
    %502 = vmatprep.subr.mxu0 0.0
    %503 = vmatpush1.msra.mxu0 %v466
    %504 = vmatprep.subr.mxu0 0.0
    %505 = vmatpush1.msra.mxu0 %v467
    %506 = vmatprep.subr.mxu0 0.0
    %507 = vmatpush1.msra.mxu0 %v468
    %508 = vmatprep.subr.mxu0 0.0
    %509 = vmatpush1.msra.mxu0 0.0
    %510 = vmatprep.subr.mxu0 0.0
    %511 = vmatpush1.msra.mxu0 0.0
    %512 = vmatprep.subr.mxu0 0.0
    %513 = vmatpush1.msra.mxu0 0.0
    %514 = vmatprep.subr.mxu0 0.0
    %515 = vmatpush1.msra.mxu0 0.0
    %516 = vmatprep.subr.mxu0 0.0
    %517 = vmatpush1.msra.mxu0 0.0
    %518 = vmatprep.subr.mxu0 0.0
    %519 = vmatpush1.msra.mxu0 0.0
    %520 = vmatprep.subr.mxu0 0.0
    %521 = vmatpush1.msra.mxu0 0.0
    %522 = vmatprep.subr.mxu0 0.0
    %523 = vmatpush1.msra.mxu0 0.0
    %524 = vmatprep.subr.mxu0 0.0
    %525 = vmatpush1.msra.mxu0 0.0
    %526 = vmatprep.subr.mxu0 0.0
    %527 = vmatpush1.msra.mxu0 0.0
    %528 = vmatprep.subr.mxu0 0.0
    %529 = vmatpush1.msra.mxu0 0.0
    %530 = vmatprep.subr.mxu0 0.0
    %531 = vmatpush1.msra.mxu0 0.0
    %532 = vmatprep.subr.mxu0 0.0
    %533 = vmatpush1.msra.mxu0 0.0
    %534 = vmatprep.subr.mxu0 0.0
    %535 = vmatpush1.msra.mxu0 0.0
    %536 = vmatprep.subr.mxu0 0.0
    %537 = vmatpush1.msra.mxu0 0.0
    %538 = vmatprep.subr.mxu0 0.0
    %539 = vmatpush1.msra.mxu0 0.0
    %540 = vmatprep.mubr.f32.mxu0 0.0
    %541 = vmatmul.mubr.f32.gmra.mrb[0].mxu0 %v452
    %v542 = vpop.f32.mrb[0].mxu0
    %v543 = vadd.f32 %v474, %v542
    %v544 = vpop.f32.mrb[0].mxu0
    %545 = vdwg.mxu0
    %vm546 = vcmask 259072
    %547 = vst.msk [vmem:[%s9] sm:$0x3f] %vm546, %v543
    %548 = vst [vmem:[#allocation2] sm:$0x3f] %v452
    %549 = vst [vmem:[#allocation4] sm:$0x3f] %v444
    // Predicated region
    $region38: #{iodine_forward.8} parent=1 // pred_check
      _
    $region39: #{iodine_forward.8} parent=1 // pred_check_branch
      %551 = sbr.rel (0) target = $region41
    $region40: #{iodine_forward.8} parent=1 // pred_region
      _
    $region41: #{iodine_forward.8} parent=1 // pred_fallthru
      _
    // Predicated region
    $region42: #{iodine_forward.8} parent=1 // pred_check
      _
    $region43: #{iodine_forward.8} parent=1 // pred_check_branch
      %553 = sbr.rel (0) target = $region45
    $region44: #{iodine_forward.8} parent=1 // pred_region
      %s555 = ssub.s32 128, 128
      %556 = vsyncadd [#allocation3], %s555
      %s558 = sshll.u32 [#allocation2], 4
      %s559 = int_to_ptr.vmem [resolvable:$true] %s558
      %561 = dma.vmem_to_hbm [thread:$0]  %s559, 128, %s10, [#allocation3]
    $region45: #{iodine_forward.8} parent=1 // pred_fallthru
      _
    // Predicated region
    $region46: #{iodine_forward.8} parent=1 // pred_check
      _
    $region47: #{iodine_forward.8} parent=1 // pred_check_branch
      %563 = sbr.rel (0) target = $region49
    $region48: #{iodine_forward.8} parent=1 // pred_region
      %s565 = ssub.s32 128, 128
      %566 = vsyncadd [#allocation5], %s565
      %s568 = sshll.u32 [#allocation4], 4
      %s569 = int_to_ptr.vmem [resolvable:$true] %s568
      %571 = dma.vmem_to_hbm [thread:$0]  %s569, 128, %s11, [#allocation5]
    $region49: #{iodine_forward.8} parent=1 // pred_fallthru
      _
    // Predicated region
    $region50: #{iodine_forward.8} parent=1 // pred_check
      _
    $region51: #{iodine_forward.8} parent=1 // pred_check_branch
      %573 = sbr.rel (0) target = $region53
    $region52: #{iodine_forward.8} parent=1 // pred_region
      _
    $region53: #{iodine_forward.8} parent=1 // pred_fallthru
      _
    // Predicated region
    $region54: #{iodine_forward.8} parent=1 // pred_check
      _
    $region55: #{iodine_forward.8} parent=1 // pred_check_branch
      %575 = sbr.rel (0) target = $region57
    $region56: #{iodine_forward.8} parent=1 // pred_region
      %576 = dma.done [#allocation3], 128
    $region57: #{iodine_forward.8} parent=1 // pred_fallthru
      _
    // Predicated region
    $region58: #{iodine_forward.8} parent=1 // pred_check
      _
    $region59: #{iodine_forward.8} parent=1 // pred_check_branch
      %578 = sbr.rel (0) target = $region61
    $region60: #{iodine_forward.8} parent=1 // pred_region
      %579 = dma.done [#allocation5], 128
    $region61: #{iodine_forward.8} parent=1 // pred_fallthru
      _
    %580 = vsyncpa [#allocation3], 1
    %581 = vsyncpa [#allocation5], 1

// kernel: iodine_forward.6
$region0: #{iodine_forward.6}
  #allocation0 [shape = 'u32[]', space=smem, size = 0x4, offset = 0x4, fixed_abs, tag = 'smem constant byte address 0x4 - core index']
  #allocation1 [shape = 'u32[144,128]{1,0:T(1,128)}', space=vmem, size = 0x12000, scoped, tag = 'internal scratch']
  %s0 = inlined_call_operand.vmem [shape: f32[6,80], index: 0, kind: input, shape index: {}]
  %s1 = inlined_call_operand.vmem [shape: f32[6,128], index: 1, kind: input, shape index: {}, may-alias: {1,2}]
  %s2 = inlined_call_operand.vmem [shape: f32[6,128], index: 2, kind: input, shape index: {}, may-alias: {1,2}]
  %s3 = inlined_call_operand.vmem [shape: f32[80,128], index: 3, kind: input, shape index: {}]
  %s4 = inlined_call_operand.vmem [shape: f32[1,128], index: 4, kind: input, shape index: {}]
  %s5 = inlined_call_operand.vmem [shape: f32[256,512], index: 5, kind: input, shape index: {}]
  %s6 = inlined_call_operand.vmem [shape: f32[1,512], index: 6, kind: input, shape index: {}]
  %s7 = inlined_call_operand.vmem [shape: f32[128,32], index: 7, kind: input, shape index: {}]
  %s8 = inlined_call_operand.vmem [shape: f32[1,32], index: 8, kind: input, shape index: {}]
  %s9 = inlined_call_operand.vmem [shape: f32[6,32], index: 9, kind: output, shape index: {0}]
  %s10 = inlined_call_operand.vmem [shape: f32[6,128], index: 10, kind: output, shape index: {1}]
  %s11 = inlined_call_operand.vmem [shape: f32[6,128], index: 11, kind: output, shape index: {2}]
  %12 = xla_tuple %s9, %s10, %s11
  %s13 = sld [smem:[#allocation0]]
  $region62: #{iodine_forward.6} parent=0
    _
  %s15 = ssub.s32 1, %s13
  %s16 = scalar_select 0, %s15, %s13
  // Predicated region
  $region2: #{iodine_forward.6} parent=0 // pred_check
    _
  $region3: #{iodine_forward.6} parent=0 // pred_check_branch
    %18 = sbr.rel (0) target = $region5
  $region4: #{iodine_forward.6} parent=0 // pred_region
    _
  $region5: #{iodine_forward.6} parent=0 // pred_fallthru
    _
  // Predicated region
  $region6: #{iodine_forward.6} parent=0 // pred_check
    _
  $region7: #{iodine_forward.6} parent=0 // pred_check_branch
    %20 = sbr.rel (0) target = $region9
  $region8: #{iodine_forward.6} parent=0 // pred_region
    _
  $region9: #{iodine_forward.6} parent=0 // pred_fallthru
    _
  // Predicated region
  $region10: #{iodine_forward.6} parent=0 // pred_check
    _
  $region11: #{iodine_forward.6} parent=0 // pred_check_branch
    %22 = sbr.rel (0) target = $region13
  $region12: #{iodine_forward.6} parent=0 // pred_region
    _
  $region13: #{iodine_forward.6} parent=0 // pred_fallthru
    _
  // Predicated region
  $region14: #{iodine_forward.6} parent=0 // pred_check
    _
  $region15: #{iodine_forward.6} parent=0 // pred_check_branch
    %24 = sbr.rel (0) target = $region17
  $region16: #{iodine_forward.6} parent=0 // pred_region
    _
  $region17: #{iodine_forward.6} parent=0 // pred_fallthru
    _
  // Predicated region
  $region18: #{iodine_forward.6} parent=0 // pred_check
    _
  $region19: #{iodine_forward.6} parent=0 // pred_check_branch
    %26 = sbr.rel (0) target = $region21
  $region20: #{iodine_forward.6} parent=0 // pred_region
    _
  $region21: #{iodine_forward.6} parent=0 // pred_fallthru
    _
  // Predicated region
  $region22: #{iodine_forward.6} parent=0 // pred_check
    _
  $region23: #{iodine_forward.6} parent=0 // pred_check_branch
    %28 = sbr.rel (0) target = $region25
  $region24: #{iodine_forward.6} parent=0 // pred_region
    _
  $region25: #{iodine_forward.6} parent=0 // pred_fallthru
    _
  // Predicated region
  $region26: #{iodine_forward.6} parent=0 // pred_check
    _
  $region27: #{iodine_forward.6} parent=0 // pred_check_branch
    %30 = sbr.rel (0) target = $region29
  $region28: #{iodine_forward.6} parent=0 // pred_region
    _
  $region29: #{iodine_forward.6} parent=0 // pred_fallthru
    _
  // Predicated region
  $region30: #{iodine_forward.6} parent=0 // pred_check
    _
  $region31: #{iodine_forward.6} parent=0 // pred_check_branch
    %32 = sbr.rel (0) target = $region33
  $region32: #{iodine_forward.6} parent=0 // pred_region
    _
  $region33: #{iodine_forward.6} parent=0 // pred_fallthru
    _
  // Predicated region
  $region34: #{iodine_forward.6} parent=0 // pred_check
    _
  $region35: #{iodine_forward.6} parent=0 // pred_check_branch
    %34 = sbr.rel (0) target = $region37
  $region36: #{iodine_forward.6} parent=0 // pred_region
    _
  $region37: #{iodine_forward.6} parent=0 // pred_fallthru
    _
  %v35 = vld [vmem:[%s0] sm:$0x3f]
  %v36 = vld [vmem:[%s3] sm:$0xff]
  %v37 = vld [vmem:[%s3 + $0x8] sm:$0xff]
  %v38 = vld [vmem:[%s3 + $0x10] sm:$0xff]
  %v39 = vld [vmem:[%s3 + $0x18] sm:$0xff]
  %v40 = vld [vmem:[%s3 + $0x20] sm:$0xff]
  %v41 = vld [vmem:[%s3 + $0x28] sm:$0xff]
  %v42 = vld [vmem:[%s3 + $0x30] sm:$0xff]
  %v43 = vld [vmem:[%s3 + $0x38] sm:$0xff]
  %v44 = vld [vmem:[%s3 + $0x40] sm:$0xff]
  %v45 = vld [vmem:[%s3 + $0x48] sm:$0xff]
  %v46 = vld [vmem:[%s4] sm:$0x1]
  %v48 = vlaneseq
  %v49 = vshrl.u32 %v48, 7
  %v50 = vsub.s32 0, %v49
  %v51 = vrot.slane %v46, %v50
  %vm53 = vcmask 654336
  %v55 = vsel %vm53, %v35, 0
  %57 = vmatprep.subr.mxu0 0.0
  %58 = vmatpush1.msra.mxu0 %v36
  %59 = vmatprep.subr.mxu0 0.0
  %60 = vmatpush1.msra.mxu0 %v37
  %61 = vmatprep.subr.mxu0 0.0
  %62 = vmatpush1.msra.mxu0 %v38
  %63 = vmatprep.subr.mxu0 0.0
  %64 = vmatpush1.msra.mxu0 %v39
  %65 = vmatprep.subr.mxu0 0.0
  %66 = vmatpush1.msra.mxu0 %v40
  %67 = vmatprep.subr.mxu0 0.0
  %68 = vmatpush1.msra.mxu0 %v41
  %69 = vmatprep.subr.mxu0 0.0
  %70 = vmatpush1.msra.mxu0 %v42
  %71 = vmatprep.subr.mxu0 0.0
  %72 = vmatpush1.msra.mxu0 %v43
  %73 = vmatprep.subr.mxu0 0.0
  %74 = vmatpush1.msra.mxu0 %v44
  %75 = vmatprep.subr.mxu0 0.0
  %76 = vmatpush1.msra.mxu0 %v45
  %77 = vmatprep.subr.mxu0 0.0
  %78 = vmatpush1.msra.mxu0 0.0
  %79 = vmatprep.subr.mxu0 0.0
  %80 = vmatpush1.msra.mxu0 0.0
  %81 = vmatprep.subr.mxu0 0.0
  %82 = vmatpush1.msra.mxu0 0.0
  %83 = vmatprep.subr.mxu0 0.0
  %84 = vmatpush1.msra.mxu0 0.0
  %85 = vmatprep.subr.mxu0 0.0
  %86 = vmatpush1.msra.mxu0 0.0
  %87 = vmatprep.subr.mxu0 0.0
  %88 = vmatpush1.msra.mxu0 0.0
  %89 = vmatprep.subr.mxu0 0.0
  %90 = vmatpush1.msra.mxu0 0.0
  %91 = vmatprep.subr.mxu0 0.0
  %92 = vmatpush1.msra.mxu0 0.0
  %93 = vmatprep.subr.mxu0 0.0
  %94 = vmatpush1.msra.mxu0 0.0
  %95 = vmatprep.subr.mxu0 0.0
  %96 = vmatpush1.msra.mxu0 0.0
  %97 = vmatprep.subr.mxu0 0.0
  %98 = vmatpush1.msra.mxu0 0.0
  %99 = vmatprep.subr.mxu0 0.0
  %100 = vmatpush1.msra.mxu0 0.0
  %101 = vmatprep.subr.mxu0 0.0
  %102 = vmatpush1.msra.mxu0 0.0
  %103 = vmatprep.subr.mxu0 0.0
  %104 = vmatpush1.msra.mxu0 0.0
  %105 = vmatprep.subr.mxu0 0.0
  %106 = vmatpush1.msra.mxu0 0.0
  %107 = vmatprep.subr.mxu0 0.0
  %108 = vmatpush1.msra.mxu0 0.0
  %109 = vmatprep.subr.mxu0 0.0
  %110 = vmatpush1.msra.mxu0 0.0
  %111 = vmatprep.subr.mxu0 0.0
  %112 = vmatpush1.msra.mxu0 0.0
  %113 = vmatprep.subr.mxu0 0.0
  %114 = vmatpush1.msra.mxu0 0.0
  %115 = vmatprep.subr.mxu0 0.0
  %116 = vmatpush1.msra.mxu0 0.0
  %117 = vmatprep.subr.mxu0 0.0
  %118 = vmatpush1.msra.mxu0 0.0
  %119 = vmatprep.subr.mxu0 0.0
  %120 = vmatpush1.msra.mxu0 0.0
  %121 = vmatprep.mubr.f32.mxu0 0.0
  %122 = vmatmul.mubr.f32.gmra.mrb[0].mxu0 %v55
  %v123 = vpop.f32.mrb[0].mxu0
  %v124 = vadd.f32 %v51, %v123
  %v125 = vpop.f32.mrb[0].mxu0
  %126 = vdwg.mxu0
  %vm127 = vcmp.gt.f32.partialorder %v124, 0.0
  %v128 = vmin.f32 %v124, 0.0
  %v129 = vmul.f32 %v128, 1.442695
  %v130 = vpow.pop %v129
  %v131 = vsub.f32 %v130, 1.0
  %v132 = vsel %vm127, %v124, %v131
  %v133 = vld [vmem:[%s1] sm:$0x3f]
  %v134 = vld [vmem:[%s5] sm:$0xff]
  %v135 = vld [vmem:[%s5 + $0x8] sm:$0xff]
  %v136 = vld [vmem:[%s5 + $0x10] sm:$0xff]
  %v137 = vld [vmem:[%s5 + $0x18] sm:$0xff]
  %v138 = vld [vmem:[%s5 + $0x20] sm:$0xff]
  %v139 = vld [vmem:[%s5 + $0x28] sm:$0xff]
  %v140 = vld [vmem:[%s5 + $0x30] sm:$0xff]
  %v141 = vld [vmem:[%s5 + $0x38] sm:$0xff]
  %v142 = vld [vmem:[%s5 + $0x40] sm:$0xff]
  %v143 = vld [vmem:[%s5 + $0x48] sm:$0xff]
  %v144 = vld [vmem:[%s5 + $0x50] sm:$0xff]
  %v145 = vld [vmem:[%s5 + $0x58] sm:$0xff]
  %v146 = vld [vmem:[%s5 + $0x60] sm:$0xff]
  %v147 = vld [vmem:[%s5 + $0x68] sm:$0xff]
  %v148 = vld [vmem:[%s5 + $0x70] sm:$0xff]
  %v149 = vld [vmem:[%s5 + $0x78] sm:$0xff]
  %v150 = vld [vmem:[%s5 + $0x80] sm:$0xff]
  %v151 = vld [vmem:[%s5 + $0x88] sm:$0xff]
  %v152 = vld [vmem:[%s5 + $0x90] sm:$0xff]
  %v153 = vld [vmem:[%s5 + $0x98] sm:$0xff]
  %v154 = vld [vmem:[%s5 + $0xa0] sm:$0xff]
  %v155 = vld [vmem:[%s5 + $0xa8] sm:$0xff]
  %v156 = vld [vmem:[%s5 + $0xb0] sm:$0xff]
  %v157 = vld [vmem:[%s5 + $0xb8] sm:$0xff]
  %v158 = vld [vmem:[%s5 + $0xc0] sm:$0xff]
  %v159 = vld [vmem:[%s5 + $0xc8] sm:$0xff]
  %v160 = vld [vmem:[%s5 + $0xd0] sm:$0xff]
  %v161 = vld [vmem:[%s5 + $0xd8] sm:$0xff]
  %v162 = vld [vmem:[%s5 + $0xe0] sm:$0xff]
  %v163 = vld [vmem:[%s5 + $0xe8] sm:$0xff]
  %v164 = vld [vmem:[%s5 + $0xf0] sm:$0xff]
  %v165 = vld [vmem:[%s5 + $0xf8] sm:$0xff]
  %v166 = vld [vmem:[%s5 + $0x100] sm:$0xff]
  %v167 = vld [vmem:[%s5 + $0x108] sm:$0xff]
  %v168 = vld [vmem:[%s5 + $0x110] sm:$0xff]
  %v169 = vld [vmem:[%s5 + $0x118] sm:$0xff]
  %v170 = vld [vmem:[%s5 + $0x120] sm:$0xff]
  %v171 = vld [vmem:[%s5 + $0x128] sm:$0xff]
  %v172 = vld [vmem:[%s5 + $0x130] sm:$0xff]
  %v173 = vld [vmem:[%s5 + $0x138] sm:$0xff]
  %v174 = vld [vmem:[%s5 + $0x140] sm:$0xff]
  %v175 = vld [vmem:[%s5 + $0x148] sm:$0xff]
  %v176 = vld [vmem:[%s5 + $0x150] sm:$0xff]
  %v177 = vld [vmem:[%s5 + $0x158] sm:$0xff]
  %v178 = vld [vmem:[%s5 + $0x160] sm:$0xff]
  %v179 = vld [vmem:[%s5 + $0x168] sm:$0xff]
  %v180 = vld [vmem:[%s5 + $0x170] sm:$0xff]
  %v181 = vld [vmem:[%s5 + $0x178] sm:$0xff]
  %v182 = vld [vmem:[%s5 + $0x180] sm:$0xff]
  %v183 = vld [vmem:[%s5 + $0x188] sm:$0xff]
  %v184 = vld [vmem:[%s5 + $0x190] sm:$0xff]
  %v185 = vld [vmem:[%s5 + $0x198] sm:$0xff]
  %v186 = vld [vmem:[%s5 + $0x1a0] sm:$0xff]
  %v187 = vld [vmem:[%s5 + $0x1a8] sm:$0xff]
  %v188 = vld [vmem:[%s5 + $0x1b0] sm:$0xff]
  %v189 = vld [vmem:[%s5 + $0x1b8] sm:$0xff]
  %v190 = vld [vmem:[%s5 + $0x1c0] sm:$0xff]
  %v191 = vld [vmem:[%s5 + $0x1c8] sm:$0xff]
  %v192 = vld [vmem:[%s5 + $0x1d0] sm:$0xff]
  %v193 = vld [vmem:[%s5 + $0x1d8] sm:$0xff]
  %v194 = vld [vmem:[%s5 + $0x1e0] sm:$0xff]
  %v195 = vld [vmem:[%s5 + $0x1e8] sm:$0xff]
  %v196 = vld [vmem:[%s5 + $0x1f0] sm:$0xff]
  %v197 = vld [vmem:[%s5 + $0x1f8] sm:$0xff]
  %v198 = vld [vmem:[%s5 + $0x200] sm:$0xff]
  %v199 = vld [vmem:[%s5 + $0x208] sm:$0xff]
  %v200 = vld [vmem:[%s5 + $0x210] sm:$0xff]
  %v201 = vld [vmem:[%s5 + $0x218] sm:$0xff]
  %v202 = vld [vmem:[%s5 + $0x220] sm:$0xff]
  %v203 = vld [vmem:[%s5 + $0x228] sm:$0xff]
  %v204 = vld [vmem:[%s5 + $0x230] sm:$0xff]
  %v205 = vld [vmem:[%s5 + $0x238] sm:$0xff]
  %v206 = vld [vmem:[%s5 + $0x240] sm:$0xff]
  %v207 = vld [vmem:[%s5 + $0x248] sm:$0xff]
  %v208 = vld [vmem:[%s5 + $0x250] sm:$0xff]
  %v209 = vld [vmem:[%s5 + $0x258] sm:$0xff]
  %v210 = vld [vmem:[%s5 + $0x260] sm:$0xff]
  %v211 = vld [vmem:[%s5 + $0x268] sm:$0xff]
  %v212 = vld [vmem:[%s5 + $0x270] sm:$0xff]
  %v213 = vld [vmem:[%s5 + $0x278] sm:$0xff]
  %v214 = vld [vmem:[%s5 + $0x280] sm:$0xff]
  %v215 = vld [vmem:[%s5 + $0x288] sm:$0xff]
  %v216 = vld [vmem:[%s5 + $0x290] sm:$0xff]
  %v217 = vld [vmem:[%s5 + $0x298] sm:$0xff]
  %v218 = vld [vmem:[%s5 + $0x2a0] sm:$0xff]
  %v219 = vld [vmem:[%s5 + $0x2a8] sm:$0xff]
  %v220 = vld [vmem:[%s5 + $0x2b0] sm:$0xff]
  %v221 = vld [vmem:[%s5 + $0x2b8] sm:$0xff]
  %v222 = vld [vmem:[%s5 + $0x2c0] sm:$0xff]
  %v223 = vld [vmem:[%s5 + $0x2c8] sm:$0xff]
  %v224 = vld [vmem:[%s5 + $0x2d0] sm:$0xff]
  %v225 = vld [vmem:[%s5 + $0x2d8] sm:$0xff]
  %v226 = vld [vmem:[%s5 + $0x2e0] sm:$0xff]
  %v227 = vld [vmem:[%s5 + $0x2e8] sm:$0xff]
  %v228 = vld [vmem:[%s5 + $0x2f0] sm:$0xff]
  %v229 = vld [vmem:[%s5 + $0x2f8] sm:$0xff]
  %v230 = vld [vmem:[%s5 + $0x300] sm:$0xff]
  %v231 = vld [vmem:[%s5 + $0x308] sm:$0xff]
  %v232 = vld [vmem:[%s5 + $0x310] sm:$0xff]
  %v233 = vld [vmem:[%s5 + $0x318] sm:$0xff]
  %v234 = vld [vmem:[%s5 + $0x320] sm:$0xff]
  %v235 = vld [vmem:[%s5 + $0x328] sm:$0xff]
  %v236 = vld [vmem:[%s5 + $0x330] sm:$0xff]
  %v237 = vld [vmem:[%s5 + $0x338] sm:$0xff]
  %v238 = vld [vmem:[%s5 + $0x340] sm:$0xff]
  %v239 = vld [vmem:[%s5 + $0x348] sm:$0xff]
  %v240 = vld [vmem:[%s5 + $0x350] sm:$0xff]
  %v241 = vld [vmem:[%s5 + $0x358] sm:$0xff]
  %v242 = vld [vmem:[%s5 + $0x360] sm:$0xff]
  %v243 = vld [vmem:[%s5 + $0x368] sm:$0xff]
  %v244 = vld [vmem:[%s5 + $0x370] sm:$0xff]
  %v245 = vld [vmem:[%s5 + $0x378] sm:$0xff]
  %v246 = vld [vmem:[%s5 + $0x380] sm:$0xff]
  %v247 = vld [vmem:[%s5 + $0x388] sm:$0xff]
  %v248 = vld [vmem:[%s5 + $0x390] sm:$0xff]
  %v249 = vld [vmem:[%s5 + $0x398] sm:$0xff]
  %v250 = vld [vmem:[%s5 + $0x3a0] sm:$0xff]
  %v251 = vld [vmem:[%s5 + $0x3a8] sm:$0xff]
  %v252 = vld [vmem:[%s5 + $0x3b0] sm:$0xff]
  %v253 = vld [vmem:[%s5 + $0x3b8] sm:$0xff]
  %v254 = vld [vmem:[%s5 + $0x3c0] sm:$0xff]
  %v255 = vld [vmem:[%s5 + $0x3c8] sm:$0xff]
  %v256 = vld [vmem:[%s5 + $0x3d0] sm:$0xff]
  %v257 = vld [vmem:[%s5 + $0x3d8] sm:$0xff]
  %v258 = vld [vmem:[%s5 + $0x3e0] sm:$0xff]
  %v259 = vld [vmem:[%s5 + $0x3e8] sm:$0xff]
  %v260 = vld [vmem:[%s5 + $0x3f0] sm:$0xff]
  %v261 = vld [vmem:[%s5 + $0x3f8] sm:$0xff]
  %v262 = vld [vmem:[%s6] sm:$0xf]
  %v264 = vlaneseq
  %v265 = vshrl.u32 %v264, 7
  %v266 = vsub.s32 0, %v265
  %v267 = vrot.slane %v262, %v266
  %v268 = vlaneseq
  %v269 = vshrl.u32 %v268, 7
  %v270 = vsub.s32 1, %v269
  %v271 = vrot.slane %v262, %v270
  %v272 = vlaneseq
  %v273 = vshrl.u32 %v272, 7
  %v274 = vsub.s32 2, %v273
  %v275 = vrot.slane %v262, %v274
  %v276 = vlaneseq
  %v277 = vshrl.u32 %v276, 7
  %v278 = vsub.s32 3, %v277
  %v279 = vrot.slane %v262, %v278
  %284 = vmatprep.subr.mxu0 %v135
  %285 = vmatpush1.msra.mxu0 %v134
  %286 = vmatprep.subr.mxu0 %v139
  %287 = vmatpush1.msra.mxu0 %v138
  %288 = vmatprep.subr.mxu0 %v143
  %289 = vmatpush1.msra.mxu0 %v142
  %290 = vmatprep.subr.mxu0 %v147
  %291 = vmatpush1.msra.mxu0 %v146
  %292 = vmatprep.subr.mxu0 %v151
  %293 = vmatpush1.msra.mxu0 %v150
  %294 = vmatprep.subr.mxu0 %v155
  %295 = vmatpush1.msra.mxu0 %v154
  %296 = vmatprep.subr.mxu0 %v159
  %297 = vmatpush1.msra.mxu0 %v158
  %298 = vmatprep.subr.mxu0 %v163
  %299 = vmatpush1.msra.mxu0 %v162
  %300 = vmatprep.subr.mxu0 %v167
  %301 = vmatpush1.msra.mxu0 %v166
  %302 = vmatprep.subr.mxu0 %v171
  %303 = vmatpush1.msra.mxu0 %v170
  %304 = vmatprep.subr.mxu0 %v175
  %305 = vmatpush1.msra.mxu0 %v174
  %306 = vmatprep.subr.mxu0 %v179
  %307 = vmatpush1.msra.mxu0 %v178
  %308 = vmatprep.subr.mxu0 %v183
  %309 = vmatpush1.msra.mxu0 %v182
  %310 = vmatprep.subr.mxu0 %v187
  %311 = vmatpush1.msra.mxu0 %v186
  %312 = vmatprep.subr.mxu0 %v191
  %313 = vmatpush1.msra.mxu0 %v190
  %314 = vmatprep.subr.mxu0 %v195
  %315 = vmatpush1.msra.mxu0 %v194
  %316 = vmatprep.subr.mxu0 %v199
  %317 = vmatpush1.msra.mxu0 %v198
  %318 = vmatprep.subr.mxu0 %v203
  %319 = vmatpush1.msra.mxu0 %v202
  %320 = vmatprep.subr.mxu0 %v207
  %321 = vmatpush1.msra.mxu0 %v206
  %322 = vmatprep.subr.mxu0 %v211
  %323 = vmatpush1.msra.mxu0 %v210
  %324 = vmatprep.subr.mxu0 %v215
  %325 = vmatpush1.msra.mxu0 %v214
  %326 = vmatprep.subr.mxu0 %v219
  %327 = vmatpush1.msra.mxu0 %v218
  %328 = vmatprep.subr.mxu0 %v223
  %329 = vmatpush1.msra.mxu0 %v222
  %330 = vmatprep.subr.mxu0 %v227
  %331 = vmatpush1.msra.mxu0 %v226
  %332 = vmatprep.subr.mxu0 %v231
  %333 = vmatpush1.msra.mxu0 %v230
  %334 = vmatprep.subr.mxu0 %v235
  %335 = vmatpush1.msra.mxu0 %v234
  %336 = vmatprep.subr.mxu0 %v239
  %337 = vmatpush1.msra.mxu0 %v238
  %338 = vmatprep.subr.mxu0 %v243
  %339 = vmatpush1.msra.mxu0 %v242
  %340 = vmatprep.subr.mxu0 %v247
  %341 = vmatpush1.msra.mxu0 %v246
  %342 = vmatprep.subr.mxu0 %v251
  %343 = vmatpush1.msra.mxu0 %v250
  %344 = vmatprep.subr.mxu0 %v255
  %345 = vmatpush1.msra.mxu0 %v254
  %346 = vmatprep.subr.mxu0 %v259
  %347 = vmatpush1.msra.mxu0 %v258
  %348 = vmatprep.mubr.f32.mxu0 %v133
  %349 = vmatmul.mubr.f32.gmra.mrb[0].mxu0 %v132
  %v350 = vpop.f32.mrb[0].mxu0
  %v351 = vadd.f32 %v267, %v350
  %v352 = vpop.f32.mrb[0].mxu0
  %v353 = vadd.f32 %v271, %v352
  %354 = vdwg.mxu0
  %355 = vmatprep.subr.mxu0 %v137
  %356 = vmatpush1.msra.mxu0 %v136
  %357 = vmatprep.subr.mxu0 %v141
  %358 = vmatpush1.msra.mxu0 %v140
  %359 = vmatprep.subr.mxu0 %v145
  %360 = vmatpush1.msra.mxu0 %v144
  %361 = vmatprep.subr.mxu0 %v149
  %362 = vmatpush1.msra.mxu0 %v148
  %363 = vmatprep.subr.mxu0 %v153
  %364 = vmatpush1.msra.mxu0 %v152
  %365 = vmatprep.subr.mxu0 %v157
  %366 = vmatpush1.msra.mxu0 %v156
  %367 = vmatprep.subr.mxu0 %v161
  %368 = vmatpush1.msra.mxu0 %v160
  %369 = vmatprep.subr.mxu0 %v165
  %370 = vmatpush1.msra.mxu0 %v164
  %371 = vmatprep.subr.mxu0 %v169
  %372 = vmatpush1.msra.mxu0 %v168
  %373 = vmatprep.subr.mxu0 %v173
  %374 = vmatpush1.msra.mxu0 %v172
  %375 = vmatprep.subr.mxu0 %v177
  %376 = vmatpush1.msra.mxu0 %v176
  %377 = vmatprep.subr.mxu0 %v181
  %378 = vmatpush1.msra.mxu0 %v180
  %379 = vmatprep.subr.mxu0 %v185
  %380 = vmatpush1.msra.mxu0 %v184
  %381 = vmatprep.subr.mxu0 %v189
  %382 = vmatpush1.msra.mxu0 %v188
  %383 = vmatprep.subr.mxu0 %v193
  %384 = vmatpush1.msra.mxu0 %v192
  %385 = vmatprep.subr.mxu0 %v197
  %386 = vmatpush1.msra.mxu0 %v196
  %387 = vmatprep.subr.mxu0 %v201
  %388 = vmatpush1.msra.mxu0 %v200
  %389 = vmatprep.subr.mxu0 %v205
  %390 = vmatpush1.msra.mxu0 %v204
  %391 = vmatprep.subr.mxu0 %v209
  %392 = vmatpush1.msra.mxu0 %v208
  %393 = vmatprep.subr.mxu0 %v213
  %394 = vmatpush1.msra.mxu0 %v212
  %395 = vmatprep.subr.mxu0 %v217
  %396 = vmatpush1.msra.mxu0 %v216
  %397 = vmatprep.subr.mxu0 %v221
  %398 = vmatpush1.msra.mxu0 %v220
  %399 = vmatprep.subr.mxu0 %v225
  %400 = vmatpush1.msra.mxu0 %v224
  %401 = vmatprep.subr.mxu0 %v229
  %402 = vmatpush1.msra.mxu0 %v228
  %403 = vmatprep.subr.mxu0 %v233
  %404 = vmatpush1.msra.mxu0 %v232
  %405 = vmatprep.subr.mxu0 %v237
  %406 = vmatpush1.msra.mxu0 %v236
  %407 = vmatprep.subr.mxu0 %v241
  %408 = vmatpush1.msra.mxu0 %v240
  %409 = vmatprep.subr.mxu0 %v245
  %410 = vmatpush1.msra.mxu0 %v244
  %411 = vmatprep.subr.mxu0 %v249
  %412 = vmatpush1.msra.mxu0 %v248
  %413 = vmatprep.subr.mxu0 %v253
  %414 = vmatpush1.msra.mxu0 %v252
  %415 = vmatprep.subr.mxu0 %v257
  %416 = vmatpush1.msra.mxu0 %v256
  %417 = vmatprep.subr.mxu0 %v261
  %418 = vmatpush1.msra.mxu0 %v260
  %419 = vmatprep.mubr.f32.mxu0 %v133
  %420 = vmatmul.mubr.f32.gmra.mrb[0].mxu0 %v132
  %v421 = vpop.f32.mrb[0].mxu0
  %v422 = vadd.f32 %v275, %v421
  %v423 = vpop.f32.mrb[0].mxu0
  %v424 = vadd.f32 %v279, %v423
  %425 = vdwg.mxu0
  %v426 = vsub.f32 0.0, %v353
  %v427 = vmul.f32 %v426, 1.442695
  %v428 = vpow.pop %v427
  %v429 = vadd.f32 %v428, 1.0
  %v430 = vrcp.pop %v429
  %v431 = vmul.f32 1.0, %v430
  %v432 = vld [vmem:[%s2] sm:$0x3f]
  %v433 = vmul.f32 %v431, %v432
  %v434 = vsub.f32 0.0, %v351
  %v435 = vmul.f32 %v434, 1.442695
  %v436 = vpow.pop %v435
  %v437 = vadd.f32 %v436, 1.0
  %v438 = vrcp.pop %v437
  %v439 = vmul.f32 1.0, %v438
  %v440 = vtanh.pop %v422
  %v441 = vmul.f32 %v439, %v440
  %v442 = vadd.f32 %v433, %v441
  %v443 = vsub.f32 0.0, %v424
  %v444 = vmul.f32 %v443, 1.442695
  %v445 = vpow.pop %v444
  %v446 = vadd.f32 %v445, 1.0
  %v447 = vrcp.pop %v446
  %v448 = vmul.f32 1.0, %v447
  %v449 = vtanh.pop %v442
  %v450 = vmul.f32 %v448, %v449
  %v451 = vld [vmem:[%s7] sm:$0xff]
  %v452 = vld [vmem:[%s7 + $0x8] sm:$0xff]
  %v453 = vld [vmem:[%s7 + $0x10] sm:$0xff]
  %v454 = vld [vmem:[%s7 + $0x18] sm:$0xff]
  %v455 = vld [vmem:[%s7 + $0x20] sm:$0xff]
  %v456 = vld [vmem:[%s7 + $0x28] sm:$0xff]
  %v457 = vld [vmem:[%s7 + $0x30] sm:$0xff]
  %v458 = vld [vmem:[%s7 + $0x38] sm:$0xff]
  %v459 = vld [vmem:[%s7 + $0x40] sm:$0xff]
  %v460 = vld [vmem:[%s7 + $0x48] sm:$0xff]
  %v461 = vld [vmem:[%s7 + $0x50] sm:$0xff]
  %v462 = vld [vmem:[%s7 + $0x58] sm:$0xff]
  %v463 = vld [vmem:[%s7 + $0x60] sm:$0xff]
  %v464 = vld [vmem:[%s7 + $0x68] sm:$0xff]
  %v465 = vld [vmem:[%s7 + $0x70] sm:$0xff]
  %v466 = vld [vmem:[%s7 + $0x78] sm:$0xff]
  %v467 = vld [vmem:[%s8] sm:$0x1]
  %v469 = vlaneseq
  %v470 = vshrl.u32 %v469, 7
  %v471 = vsub.s32 0, %v470
  %v472 = vrot.slane %v467, %v471
  %474 = vmatprep.subr.mxu0 0.0
  %475 = vmatpush1.msra.mxu0 %v451
  %476 = vmatprep.subr.mxu0 0.0
  %477 = vmatpush1.msra.mxu0 %v452
  %478 = vmatprep.subr.mxu0 0.0
  %479 = vmatpush1.msra.mxu0 %v453
  %480 = vmatprep.subr.mxu0 0.0
  %481 = vmatpush1.msra.mxu0 %v454
  %482 = vmatprep.subr.mxu0 0.0
  %483 = vmatpush1.msra.mxu0 %v455
  %484 = vmatprep.subr.mxu0 0.0
  %485 = vmatpush1.msra.mxu0 %v456
  %486 = vmatprep.subr.mxu0 0.0
  %487 = vmatpush1.msra.mxu0 %v457
  %488 = vmatprep.subr.mxu0 0.0
  %489 = vmatpush1.msra.mxu0 %v458
  %490 = vmatprep.subr.mxu0 0.0
  %491 = vmatpush1.msra.mxu0 %v459
  %492 = vmatprep.subr.mxu0 0.0
  %493 = vmatpush1.msra.mxu0 %v460
  %494 = vmatprep.subr.mxu0 0.0
  %495 = vmatpush1.msra.mxu0 %v461
  %496 = vmatprep.subr.mxu0 0.0
  %497 = vmatpush1.msra.mxu0 %v462
  %498 = vmatprep.subr.mxu0 0.0
  %499 = vmatpush1.msra.mxu0 %v463
  %500 = vmatprep.subr.mxu0 0.0
  %501 = vmatpush1.msra.mxu0 %v464
  %502 = vmatprep.subr.mxu0 0.0
  %503 = vmatpush1.msra.mxu0 %v465
  %504 = vmatprep.subr.mxu0 0.0
  %505 = vmatpush1.msra.mxu0 %v466
  %506 = vmatprep.subr.mxu0 0.0
  %507 = vmatpush1.msra.mxu0 0.0
  %508 = vmatprep.subr.mxu0 0.0
  %509 = vmatpush1.msra.mxu0 0.0
  %510 = vmatprep.subr.mxu0 0.0
  %511 = vmatpush1.msra.mxu0 0.0
  %512 = vmatprep.subr.mxu0 0.0
  %513 = vmatpush1.msra.mxu0 0.0
  %514 = vmatprep.subr.mxu0 0.0
  %515 = vmatpush1.msra.mxu0 0.0
  %516 = vmatprep.subr.mxu0 0.0
  %517 = vmatpush1.msra.mxu0 0.0
  %518 = vmatprep.subr.mxu0 0.0
  %519 = vmatpush1.msra.mxu0 0.0
  %520 = vmatprep.subr.mxu0 0.0
  %521 = vmatpush1.msra.mxu0 0.0
  %522 = vmatprep.subr.mxu0 0.0
  %523 = vmatpush1.msra.mxu0 0.0
  %524 = vmatprep.subr.mxu0 0.0
  %525 = vmatpush1.msra.mxu0 0.0
  %526 = vmatprep.subr.mxu0 0.0
  %527 = vmatpush1.msra.mxu0 0.0
  %528 = vmatprep.subr.mxu0 0.0
  %529 = vmatpush1.msra.mxu0 0.0
  %530 = vmatprep.subr.mxu0 0.0
  %531 = vmatpush1.msra.mxu0 0.0
  %532 = vmatprep.subr.mxu0 0.0
  %533 = vmatpush1.msra.mxu0 0.0
  %534 = vmatprep.subr.mxu0 0.0
  %535 = vmatpush1.msra.mxu0 0.0
  %536 = vmatprep.subr.mxu0 0.0
  %537 = vmatpush1.msra.mxu0 0.0
  %538 = vmatprep.mubr.f32.mxu0 0.0
  %539 = vmatmul.mubr.f32.gmra.mrb[0].mxu0 %v450
  %v540 = vpop.f32.mrb[0].mxu0
  %v541 = vadd.f32 %v472, %v540
  %v542 = vpop.f32.mrb[0].mxu0
  %543 = vdwg.mxu0
  %vm544 = vcmask 259072
  %545 = vst.msk [vmem:[%s9] sm:$0x3f] %vm544, %v541
  %546 = vst [vmem:[%s10] sm:$0x3f] %v450
  %547 = vst [vmem:[%s11] sm:$0x3f] %v442
  // Predicated region
  $region38: #{iodine_forward.6} parent=0 // pred_check
    _
  $region39: #{iodine_forward.6} parent=0 // pred_check_branch
    %549 = sbr.rel (0) target = $region41
  $region40: #{iodine_forward.6} parent=0 // pred_region
    _
  $region41: #{iodine_forward.6} parent=0 // pred_fallthru
    _
  // Predicated region
  $region42: #{iodine_forward.6} parent=0 // pred_check
    _
  $region43: #{iodine_forward.6} parent=0 // pred_check_branch
    %551 = sbr.rel (0) target = $region45
  $region44: #{iodine_forward.6} parent=0 // pred_region
    _
  $region45: #{iodine_forward.6} parent=0 // pred_fallthru
    _
  // Predicated region
  $region46: #{iodine_forward.6} parent=0 // pred_check
    _
  $region47: #{iodine_forward.6} parent=0 // pred_check_branch
    %553 = sbr.rel (0) target = $region49
  $region48: #{iodine_forward.6} parent=0 // pred_region
    _
  $region49: #{iodine_forward.6} parent=0 // pred_fallthru
    _
  // Predicated region
  $region50: #{iodine_forward.6} parent=0 // pred_check
    _
  $region51: #{iodine_forward.6} parent=0 // pred_check_branch
    %555 = sbr.rel (0) target = $region53
  $region52: #{iodine_forward.6} parent=0 // pred_region
    _
  $region53: #{iodine_forward.6} parent=0 // pred_fallthru
    _
  // Predicated region
  $region54: #{iodine_forward.6} parent=0 // pred_check
    _
  $region55: #{iodine_forward.6} parent=0 // pred_check_branch
    %557 = sbr.rel (0) target = $region57
  $region56: #{iodine_forward.6} parent=0 // pred_region
    _
  $region57: #{iodine_forward.6} parent=0 // pred_fallthru
    _
  // Predicated region
  $region58: #{iodine_forward.6} parent=0 // pred_check
    _
  $region59: #{iodine_forward.6} parent=0 // pred_check_branch
    %559 = sbr.rel (0) target = $region61
  $region60: #{iodine_forward.6} parent=0 // pred_region
    _
  $region61: #{iodine_forward.6} parent=0 // pred_fallthru
    _

// kernel: iodine_forward.9
$region0: #{iodine_forward.9}
  #allocation0 [shape = 'u32[]', space=smem, size = 0x4, offset = 0x4, fixed_abs, tag = 'smem constant byte address 0x4 - core index']
  #allocation1 [shape = 'u32[144,128]{1,0:T(1,128)}', space=vmem, size = 0x12000, scoped, tag = 'internal scratch']
  %s0 = inlined_call_operand.vmem [shape: f32[2,3,16], index: 0, kind: input, shape index: {}]
  %s1 = inlined_call_operand.vmem [shape: bf16[4,16,4096], index: 1, kind: input, shape index: {}]
  %s2 = inlined_call_operand.vmem [shape: f32[4,1,4096], index: 2, kind: input, shape index: {}]
  %s3 = inlined_call_operand.vmem [shape: f32[2,3,4096], index: 3, kind: input, shape index: {}]
  %s4 = inlined_call_operand.vmem [shape: f32[2,3,3,4096], index: 4, kind: output, shape index: {0}]
  %s5 = inlined_call_operand.vmem [shape: f32[2,3,4096], index: 5, kind: output, shape index: {1}]
  %s6 = inlined_call_operand.hbm [shape: f32[4,2,3,16], index: 6, kind: output, shape index: {2}]
  %s7 = inlined_call_operand.hbm [shape: f32[4,2,3,3], index: 7, kind: output, shape index: {3}]
  %s8 = inlined_call_operand.hbm [shape: f32[4,2,3,3], index: 8, kind: output, shape index: {4}]
  %s9 = inlined_call_operand.hbm [shape: f32[4,2,3,4], index: 9, kind: output, shape index: {5}]
  %s10 = inlined_call_operand.vmem [shape: f32[4,2,1,1], index: 10, kind: output, shape index: {6}]
  %11 = xla_tuple %s4, %s5, %s6, %s7, %s8, %s9, %s10
  %s12 = sld [smem:[#allocation0]]
  $region177: #{iodine_forward.9} parent=0
    _
  %s14 = ssub.s32 1, %s12
  %s15 = scalar_select 0, %s14, %s12
  $region1: #{iodine_forward.9} parent=0
    #allocation2 [shape = 'u8[262144]{0}', space=vmem, size = 0x40000, scoped, tag = 'input window, operand 1']
    #allocation3 [shape = 'u8[32768]{0}', space=vmem, size = 0x8000, scoped, tag = 'input window, operand 2']
    #allocation4 [shape = 'u8[98304]{0}', space=vmem, size = 0x18000, scoped, tag = 'output window, operand 0']
    #allocation5 [shape = 'u8[4096]{0}', space=vmem, size = 0x1000, scoped, tag = 'output window, operand 2']
    #allocation6 [shape = 's32[2]{0}', space=sflag, size = 0x8, scoped, tag = 'scoped memory for iodine_forward.9']
    #allocation7 [shape = 'u8[4096]{0}', space=vmem, size = 0x1000, scoped, tag = 'output window, operand 3']
    #allocation8 [shape = 's32[2]{0}', space=sflag, size = 0x8, scoped, tag = 'scoped memory for iodine_forward.9']
    #allocation9 [shape = 'u8[4096]{0}', space=vmem, size = 0x1000, scoped, tag = 'output window, operand 4']
    #allocation10 [shape = 'u8[4096]{0}', space=vmem, size = 0x1000, scoped, tag = 'output window, operand 5']
    #allocation11 [shape = 's32[2]{0}', space=sflag, size = 0x8, scoped, tag = 'scoped memory for iodine_forward.9']
    %16 = vsyncpa [#allocation6], 0
    %s17 = scalar_lea.sflag [#allocation6], 1
    %18 = vsyncpa %s17, 0
    %19 = vsyncpa [#allocation8], 0
    %s20 = scalar_lea.sflag [#allocation8], 1
    %21 = vsyncpa %s20, 0
    %22 = vsyncpa [#allocation11], 0
    %s23 = scalar_lea.sflag [#allocation11], 1
    %24 = vsyncpa %s23, 0
    loop: start=0, step=1, limit=10
    $region2: #{iodine_forward.9} parent=1 // loop_pre_header
      _
    $region3: #{iodine_forward.9} parent=1 // loop_header
      %s26 = sphi 0, %s30
      %p27 = scmp.ge.s32.totalorder %s26, 10
      %s33 = sphi 0, %s45
      %s34 = sphi 0, %s41
      %s35 = sphi 0, %s33
      %s36 = sphi 0, %s34
      %s37 = sphi 0, %s35
      %s38 = sphi 0, %s36
      %s48 = sphi 0, %s50
      %s51 = sphi 0, %s48
      %s52 = sphi 0, %s51
      %s68 = sphi 0, %s52
      %s74 = sphi 0, %s76
      %s77 = sphi 0, %s74
      %s78 = sphi 0, %s77
      %s94 = sphi 0, %s78
      %s100 = sphi 0, %s102
      %s103 = sphi 0, %s100
      %s104 = sphi 0, %s103
      %s120 = sphi 0, %s104
      %s128 = sphi 0, %s130
      %s131 = sphi 0, %s128
      %s132 = sphi 0, %s131
      %s148 = sphi 0, %s132
      %s156 = sphi 0, %s158
      %s159 = sphi 0, %s156
      %s160 = sphi 0, %s159
      %s176 = sphi 0, %s160
      %s184 = sphi 0, %s186
      %s187 = sphi 0, %s184
      %s188 = sphi 0, %s187
      %s204 = sphi 0, %s188
      %s212 = sphi 0, %s214
      %s215 = sphi 0, %s212
      %s216 = sphi 0, %s215
      %s232 = sphi 0, %s216
      %s240 = sphi 0, %s242
      %s243 = sphi 0, %s240
      %s244 = sphi 0, %s243
      %s260 = sphi 0, %s244
      %s268 = sphi 0, %s270
      %s271 = sphi 0, %s268
      %s272 = sphi 0, %s271
      %s288 = sphi 0, %s272
      %s296 = sphi 0, %s298
      %s299 = sphi 0, %s296
      %s300 = sphi 0, %s299
      %s316 = sphi 0, %s300
      %s324 = sphi 0, %s326
      %s327 = sphi 0, %s324
      %s328 = sphi 0, %s327
      %s344 = sphi 0, %s328
    $region4: #{iodine_forward.9} parent=1 // loop_header_branch
      %29 = sbr.rel (%p27) target = $region8
    $region5: #{iodine_forward.9} parent=1 // loop_body
      %s31 = ssub.s32 %s26, 1
      %s32 = ssub.s32 %s26, 2
      %s39 = sadd.s32 1, %s34
      %p40 = scmp.ge.s32.totalorder %s39, 2
      %s41 = scalar_select %p40, 0, %s39
      %s42 = sadd.s32 1, %s33
      %s43 = scalar_select %p40, %s42, %s33
      %p44 = scmp.ge.s32.totalorder %s43, 4
      %s45 = scalar_select %p44, 0, %s43
      %s46 = ssub.s32 %s34, %s41
      %p47 = scmp.eq.s32.totalorder %s46, 0
      %s49 = sadd.s32 %s48, 1
      %s50 = scalar_select %p47, %s48, %s49
      %p53 = pneg %p47
      %p54 = scmp.eq.s32.totalorder %s26, 7
      %p55 = por %p53, %p54
      %p56 = scmp.ne.s32.totalorder %s48, %s51
      %p57 = scmp.eq.s32.totalorder %s26, 0
      %p58 = por %p56, %p57
      %p59 = scmp.ne.s32.totalorder %s48, %s51
      %p60 = scmp.eq.s32.totalorder %s31, 7
      %p61 = por %p59, %p60
      %p62 = scmp.ne.s32.totalorder %s51, %s52
      %p63 = scmp.eq.s32.totalorder %s31, 0
      %p64 = por %p62, %p63
      %p65 = scmp.ne.s32.totalorder %s51, %s52
      %p66 = scmp.eq.s32.totalorder %s32, 7
      %p67 = por %p65, %p66
      %p69 = scmp.ne.s32.totalorder %s52, %s68
      %p70 = scmp.eq.s32.totalorder %s32, 0
      %p71 = por %p69, %p70
      %s72 = ssub.s32 %s33, %s45
      %p73 = scmp.eq.s32.totalorder %s72, 0
      %s75 = sadd.s32 %s74, 1
      %s76 = scalar_select %p73, %s74, %s75
      %p79 = pneg %p73
      %p80 = scmp.eq.s32.totalorder %s26, 7
      %p81 = por %p79, %p80
      %p82 = scmp.ne.s32.totalorder %s74, %s77
      %p83 = scmp.eq.s32.totalorder %s26, 0
      %p84 = por %p82, %p83
      %p85 = scmp.ne.s32.totalorder %s74, %s77
      %p86 = scmp.eq.s32.totalorder %s31, 7
      %p87 = por %p85, %p86
      %p88 = scmp.ne.s32.totalorder %s77, %s78
      %p89 = scmp.eq.s32.totalorder %s31, 0
      %p90 = por %p88, %p89
      %p91 = scmp.ne.s32.totalorder %s77, %s78
      %p92 = scmp.eq.s32.totalorder %s32, 7
      %p93 = por %p91, %p92
      %p95 = scmp.ne.s32.totalorder %s78, %s94
      %p96 = scmp.eq.s32.totalorder %s32, 0
      %p97 = por %p95, %p96
      %s98 = ssub.s32 %s33, %s45
      %p99 = scmp.eq.s32.totalorder %s98, 0
      %s101 = sadd.s32 %s100, 1
      %s102 = scalar_select %p99, %s100, %s101
      %p105 = pneg %p99
      %p106 = scmp.eq.s32.totalorder %s26, 7
      %p107 = por %p105, %p106
      %p108 = scmp.ne.s32.totalorder %s100, %s103
      %p109 = scmp.eq.s32.totalorder %s26, 0
      %p110 = por %p108, %p109
      %p111 = scmp.ne.s32.totalorder %s100, %s103
      %p112 = scmp.eq.s32.totalorder %s31, 7
      %p113 = por %p111, %p112
      %p114 = scmp.ne.s32.totalorder %s103, %s104
      %p115 = scmp.eq.s32.totalorder %s31, 0
      %p116 = por %p114, %p115
      %p117 = scmp.ne.s32.totalorder %s103, %s104
      %p118 = scmp.eq.s32.totalorder %s32, 7
      %p119 = por %p117, %p118
      %p121 = scmp.ne.s32.totalorder %s104, %s120
      %p122 = scmp.eq.s32.totalorder %s32, 0
      %p123 = por %p121, %p122
      %s124 = ssub.s32 %s34, %s41
      %s125 = ssub.s32 %s33, %s45
      %s126 = sor.u32 %s124, %s125
      %p127 = scmp.eq.s32.totalorder %s126, 0
      %s129 = sadd.s32 %s128, 1
      %s130 = scalar_select %p127, %s128, %s129
      %p133 = pneg %p127
      %p134 = scmp.eq.s32.totalorder %s26, 7
      %p135 = por %p133, %p134
      %p136 = scmp.ne.s32.totalorder %s128, %s131
      %p137 = scmp.eq.s32.totalorder %s26, 0
      %p138 = por %p136, %p137
      %p139 = scmp.ne.s32.totalorder %s128, %s131
      %p140 = scmp.eq.s32.totalorder %s31, 7
      %p141 = por %p139, %p140
      %p142 = scmp.ne.s32.totalorder %s131, %s132
      %p143 = scmp.eq.s32.totalorder %s31, 0
      %p144 = por %p142, %p143
      %p145 = scmp.ne.s32.totalorder %s131, %s132
      %p146 = scmp.eq.s32.totalorder %s32, 7
      %p147 = por %p145, %p146
      %p149 = scmp.ne.s32.totalorder %s132, %s148
      %p150 = scmp.eq.s32.totalorder %s32, 0
      %p151 = por %p149, %p150
      %s152 = ssub.s32 %s34, %s41
      %s153 = ssub.s32 %s33, %s45
      %s154 = sor.u32 %s152, %s153
      %p155 = scmp.eq.s32.totalorder %s154, 0
      %s157 = sadd.s32 %s156, 1
      %s158 = scalar_select %p155, %s156, %s157
      %p161 = pneg %p155
      %p162 = scmp.eq.s32.totalorder %s26, 7
      %p163 = por %p161, %p162
      %p164 = scmp.ne.s32.totalorder %s156, %s159
      %p165 = scmp.eq.s32.totalorder %s26, 0
      %p166 = por %p164, %p165
      %p167 = scmp.ne.s32.totalorder %s156, %s159
      %p168 = scmp.eq.s32.totalorder %s31, 7
      %p169 = por %p167, %p168
      %p170 = scmp.ne.s32.totalorder %s159, %s160
      %p171 = scmp.eq.s32.totalorder %s31, 0
      %p172 = por %p170, %p171
      %p173 = scmp.ne.s32.totalorder %s159, %s160
      %p174 = scmp.eq.s32.totalorder %s32, 7
      %p175 = por %p173, %p174
      %p177 = scmp.ne.s32.totalorder %s160, %s176
      %p178 = scmp.eq.s32.totalorder %s32, 0
      %p179 = por %p177, %p178
      %s180 = ssub.s32 %s34, %s41
      %s181 = ssub.s32 %s33, %s45
      %s182 = sor.u32 %s180, %s181
      %p183 = scmp.eq.s32.totalorder %s182, 0
      %s185 = sadd.s32 %s184, 1
      %s186 = scalar_select %p183, %s184, %s185
      %p189 = pneg %p183
      %p190 = scmp.eq.s32.totalorder %s26, 7
      %p191 = por %p189, %p190
      %p192 = scmp.ne.s32.totalorder %s184, %s187
      %p193 = scmp.eq.s32.totalorder %s26, 0
      %p194 = por %p192, %p193
      %p195 = scmp.ne.s32.totalorder %s184, %s187
      %p196 = scmp.eq.s32.totalorder %s31, 7
      %p197 = por %p195, %p196
      %p198 = scmp.ne.s32.totalorder %s187, %s188
      %p199 = scmp.eq.s32.totalorder %s31, 0
      %p200 = por %p198, %p199
      %p201 = scmp.ne.s32.totalorder %s187, %s188
      %p202 = scmp.eq.s32.totalorder %s32, 7
      %p203 = por %p201, %p202
      %p205 = scmp.ne.s32.totalorder %s188, %s204
      %p206 = scmp.eq.s32.totalorder %s32, 0
      %p207 = por %p205, %p206
      %s208 = ssub.s32 %s33, %s45
      %s209 = ssub.s32 %s34, %s41
      %s210 = sor.u32 %s208, %s209
      %p211 = scmp.eq.s32.totalorder %s210, 0
      %s213 = sadd.s32 %s212, 1
      %s214 = scalar_select %p211, %s212, %s213
      %p217 = pneg %p211
      %p218 = scmp.eq.s32.totalorder %s26, 7
      %p219 = por %p217, %p218
      %p220 = scmp.ne.s32.totalorder %s212, %s215
      %p221 = scmp.eq.s32.totalorder %s26, 0
      %p222 = por %p220, %p221
      %p223 = scmp.ne.s32.totalorder %s212, %s215
      %p224 = scmp.eq.s32.totalorder %s31, 7
      %p225 = por %p223, %p224
      %p226 = scmp.ne.s32.totalorder %s215, %s216
      %p227 = scmp.eq.s32.totalorder %s31, 0
      %p228 = por %p226, %p227
      %p229 = scmp.ne.s32.totalorder %s215, %s216
      %p230 = scmp.eq.s32.totalorder %s32, 7
      %p231 = por %p229, %p230
      %p233 = scmp.ne.s32.totalorder %s216, %s232
      %p234 = scmp.eq.s32.totalorder %s32, 0
      %p235 = por %p233, %p234
      %s236 = ssub.s32 %s33, %s45
      %s237 = ssub.s32 %s34, %s41
      %s238 = sor.u32 %s236, %s237
      %p239 = scmp.eq.s32.totalorder %s238, 0
      %s241 = sadd.s32 %s240, 1
      %s242 = scalar_select %p239, %s240, %s241
      %p245 = pneg %p239
      %p246 = scmp.eq.s32.totalorder %s26, 7
      %p247 = por %p245, %p246
      %p248 = scmp.ne.s32.totalorder %s240, %s243
      %p249 = scmp.eq.s32.totalorder %s26, 0
      %p250 = por %p248, %p249
      %p251 = scmp.ne.s32.totalorder %s240, %s243
      %p252 = scmp.eq.s32.totalorder %s31, 7
      %p253 = por %p251, %p252
      %p254 = scmp.ne.s32.totalorder %s243, %s244
      %p255 = scmp.eq.s32.totalorder %s31, 0
      %p256 = por %p254, %p255
      %p257 = scmp.ne.s32.totalorder %s243, %s244
      %p258 = scmp.eq.s32.totalorder %s32, 7
      %p259 = por %p257, %p258
      %p261 = scmp.ne.s32.totalorder %s244, %s260
      %p262 = scmp.eq.s32.totalorder %s32, 0
      %p263 = por %p261, %p262
      %s264 = ssub.s32 %s33, %s45
      %s265 = ssub.s32 %s34, %s41
      %s266 = sor.u32 %s264, %s265
      %p267 = scmp.eq.s32.totalorder %s266, 0
      %s269 = sadd.s32 %s268, 1
      %s270 = scalar_select %p267, %s268, %s269
      %p273 = pneg %p267
      %p274 = scmp.eq.s32.totalorder %s26, 7
      %p275 = por %p273, %p274
      %p276 = scmp.ne.s32.totalorder %s268, %s271
      %p277 = scmp.eq.s32.totalorder %s26, 0
      %p278 = por %p276, %p277
      %p279 = scmp.ne.s32.totalorder %s268, %s271
      %p280 = scmp.eq.s32.totalorder %s31, 7
      %p281 = por %p279, %p280
      %p282 = scmp.ne.s32.totalorder %s271, %s272
      %p283 = scmp.eq.s32.totalorder %s31, 0
      %p284 = por %p282, %p283
      %p285 = scmp.ne.s32.totalorder %s271, %s272
      %p286 = scmp.eq.s32.totalorder %s32, 7
      %p287 = por %p285, %p286
      %p289 = scmp.ne.s32.totalorder %s272, %s288
      %p290 = scmp.eq.s32.totalorder %s32, 0
      %p291 = por %p289, %p290
      %s292 = ssub.s32 %s33, %s45
      %s293 = ssub.s32 %s34, %s41
      %s294 = sor.u32 %s292, %s293
      %p295 = scmp.eq.s32.totalorder %s294, 0
      %s297 = sadd.s32 %s296, 1
      %s298 = scalar_select %p295, %s296, %s297
      %p301 = pneg %p295
      %p302 = scmp.eq.s32.totalorder %s26, 7
      %p303 = por %p301, %p302
      %p304 = scmp.ne.s32.totalorder %s296, %s299
      %p305 = scmp.eq.s32.totalorder %s26, 0
      %p306 = por %p304, %p305
      %p307 = scmp.ne.s32.totalorder %s296, %s299
      %p308 = scmp.eq.s32.totalorder %s31, 7
      %p309 = por %p307, %p308
      %p310 = scmp.ne.s32.totalorder %s299, %s300
      %p311 = scmp.eq.s32.totalorder %s31, 0
      %p312 = por %p310, %p311
      %p313 = scmp.ne.s32.totalorder %s299, %s300
      %p314 = scmp.eq.s32.totalorder %s32, 7
      %p315 = por %p313, %p314
      %p317 = scmp.ne.s32.totalorder %s300, %s316
      %p318 = scmp.eq.s32.totalorder %s32, 0
      %p319 = por %p317, %p318
      %s320 = ssub.s32 %s33, %s45
      %s321 = ssub.s32 %s34, %s41
      %s322 = sor.u32 %s320, %s321
      %p323 = scmp.eq.s32.totalorder %s322, 0
      %s325 = sadd.s32 %s324, 1
      %s326 = scalar_select %p323, %s324, %s325
      %p329 = pneg %p323
      %p330 = scmp.eq.s32.totalorder %s26, 7
      %p331 = por %p329, %p330
      %p332 = scmp.ne.s32.totalorder %s324, %s327
      %p333 = scmp.eq.s32.totalorder %s26, 0
      %p334 = por %p332, %p333
      %p335 = scmp.ne.s32.totalorder %s324, %s327
      %p336 = scmp.eq.s32.totalorder %s31, 7
      %p337 = por %p335, %p336
      %p338 = scmp.ne.s32.totalorder %s327, %s328
      %p339 = scmp.eq.s32.totalorder %s31, 0
      %p340 = por %p338, %p339
      %p341 = scmp.ne.s32.totalorder %s327, %s328
      %p342 = scmp.eq.s32.totalorder %s32, 7
      %p343 = por %p341, %p342
      %p345 = scmp.ne.s32.totalorder %s328, %s344
      %p346 = scmp.eq.s32.totalorder %s32, 0
      %p347 = por %p345, %p346
      %p348 = scmp.le.s32.totalorder 1, %s26
      %p349 = scmp.lt.s32.totalorder %s26, 9
      %p350 = pnand %p348, %p349
      %p351 = pneg %p350
      // Predicated region
      $region9: #{iodine_forward.9} parent=5 // pred_check
        _
      $region10: #{iodine_forward.9} parent=5 // pred_check_branch
        %353 = sbr.rel (%p350) target = $region12
      $region11: #{iodine_forward.9} parent=5 // pred_region
        %s354 = ssub.s32 %s26, 1
      $region12: #{iodine_forward.9} parent=5 // pred_fallthru
        _
      %p355 = scmp.lt.s32.totalorder %s26, 8
      // Predicated region
      $region13: #{iodine_forward.9} parent=5 // pred_check
        %p356 = pneg %p355
      $region14: #{iodine_forward.9} parent=5 // pred_check_branch
        %358 = sbr.rel (%p356) target = $region16
      $region15: #{iodine_forward.9} parent=5 // pred_region
        // Predicated region
        $region17: #{iodine_forward.9} parent=15 // pred_check
          %p359 = pneg %p58
        $region18: #{iodine_forward.9} parent=15 // pred_check_branch
          %361 = sbr.rel (%p359) target = $region20
        $region19: #{iodine_forward.9} parent=15 // pred_region
          %p362 = scmp.lt.s32.totalorder %s34, 1
          %s363 = scalar_select %p362, %s34, 1
          %s364 = smul.addr %s363, 4
          %s365 = scalar_lea.vmem %s0, %s364
        $region20: #{iodine_forward.9} parent=15 // pred_fallthru
          _
        // Predicated region
        $region21: #{iodine_forward.9} parent=15 // pred_check
          %p366 = pneg %p84
        $region22: #{iodine_forward.9} parent=15 // pred_check_branch
          %368 = sbr.rel (%p366) target = $region24
        $region23: #{iodine_forward.9} parent=15 // pred_region
          %s369 = sand.u32 %s74, 1
          %s370 = sand.u32 %s74, 1
          %s371 = smul.addr %s370, 256
          %s372 = scalar_lea.vmem [#allocation2], %s371
          %s373 = smul.u32 8, %s33
          %s374 = smul.addr %s373, 4
          %s375 = scalar_lea.vmem %s1, %s374
          // Predicated region
          $region25: #{iodine_forward.9} parent=23 // pred_check
            _
          $region26: #{iodine_forward.9} parent=23 // pred_check_branch
            %377 = sbr.rel (0) target = $region28
          $region27: #{iodine_forward.9} parent=23 // pred_region
            // Predicated region
            $region29: #{iodine_forward.9} parent=27 // pred_check
              _
            $region30: #{iodine_forward.9} parent=27 // pred_check_branch
              %379 = sbr.rel (0) target = $region32
            $region31: #{iodine_forward.9} parent=27 // pred_region
              loop: start=0, step=1, limit=1
              $region33: #{iodine_forward.9} parent=31 // loop_pre_header
                _
              $region34: #{iodine_forward.9} parent=31 // loop_header
                %s381 = sphi 0, %s385
                %p382 = scmp.ge.s32.totalorder %s381, 1
                %s386 = sphi %s375, %s375
                %s387 = sphi %s372, %s372
              $region35: #{iodine_forward.9} parent=31 // loop_header_branch
                %384 = sbr.rel (%p382) target = $region39
              $region36: #{iodine_forward.9} parent=31 // loop_body
                %v388 = vld [vmem:[%s386] sm:$0xff]
                %389 = vst [vmem:[%s387] sm:$0xff] %v388
                %v390 = vld [vmem:[%s386 + $0x8] sm:$0xff]
                %391 = vst [vmem:[%s387 + $0x8] sm:$0xff] %v390
                %v392 = vld [vmem:[%s386 + $0x10] sm:$0xff]
                %393 = vst [vmem:[%s387 + $0x10] sm:$0xff] %v392
                %v394 = vld [vmem:[%s386 + $0x18] sm:$0xff]
                %395 = vst [vmem:[%s387 + $0x18] sm:$0xff] %v394
                %v396 = vld [vmem:[%s386 + $0x80] sm:$0xff]
                %397 = vst [vmem:[%s387 + $0x20] sm:$0xff] %v396
                %v398 = vld [vmem:[%s386 + $0x88] sm:$0xff]
                %399 = vst [vmem:[%s387 + $0x28] sm:$0xff] %v398
                %v400 = vld [vmem:[%s386 + $0x90] sm:$0xff]
                %401 = vst [vmem:[%s387 + $0x30] sm:$0xff] %v400
                %v402 = vld [vmem:[%s386 + $0x98] sm:$0xff]
                %403 = vst [vmem:[%s387 + $0x38] sm:$0xff] %v402
                %v404 = vld [vmem:[%s386 + $0x100] sm:$0xff]
                %405 = vst [vmem:[%s387 + $0x40] sm:$0xff] %v404
                %v406 = vld [vmem:[%s386 + $0x108] sm:$0xff]
                %407 = vst [vmem:[%s387 + $0x48] sm:$0xff] %v406
                %v408 = vld [vmem:[%s386 + $0x110] sm:$0xff]
                %409 = vst [vmem:[%s387 + $0x50] sm:$0xff] %v408
                %v410 = vld [vmem:[%s386 + $0x118] sm:$0xff]
                %411 = vst [vmem:[%s387 + $0x58] sm:$0xff] %v410
                %v412 = vld [vmem:[%s386 + $0x180] sm:$0xff]
                %413 = vst [vmem:[%s387 + $0x60] sm:$0xff] %v412
                %v414 = vld [vmem:[%s386 + $0x188] sm:$0xff]
                %415 = vst [vmem:[%s387 + $0x68] sm:$0xff] %v414
                %v416 = vld [vmem:[%s386 + $0x190] sm:$0xff]
                %417 = vst [vmem:[%s387 + $0x70] sm:$0xff] %v416
                %v418 = vld [vmem:[%s386 + $0x198] sm:$0xff]
                %419 = vst [vmem:[%s387 + $0x78] sm:$0xff] %v418
                %v420 = vld [vmem:[%s386 + $0x200] sm:$0xff]
                %421 = vst [vmem:[%s387 + $0x80] sm:$0xff] %v420
                %v422 = vld [vmem:[%s386 + $0x208] sm:$0xff]
                %423 = vst [vmem:[%s387 + $0x88] sm:$0xff] %v422
                %v424 = vld [vmem:[%s386 + $0x210] sm:$0xff]
                %425 = vst [vmem:[%s387 + $0x90] sm:$0xff] %v424
                %v426 = vld [vmem:[%s386 + $0x218] sm:$0xff]
                %427 = vst [vmem:[%s387 + $0x98] sm:$0xff] %v426
                %v428 = vld [vmem:[%s386 + $0x280] sm:$0xff]
                %429 = vst [vmem:[%s387 + $0xa0] sm:$0xff] %v428
                %v430 = vld [vmem:[%s386 + $0x288] sm:$0xff]
                %431 = vst [vmem:[%s387 + $0xa8] sm:$0xff] %v430
                %v432 = vld [vmem:[%s386 + $0x290] sm:$0xff]
                %433 = vst [vmem:[%s387 + $0xb0] sm:$0xff] %v432
                %v434 = vld [vmem:[%s386 + $0x298] sm:$0xff]
                %435 = vst [vmem:[%s387 + $0xb8] sm:$0xff] %v434
                %v436 = vld [vmem:[%s386 + $0x300] sm:$0xff]
                %437 = vst [vmem:[%s387 + $0xc0] sm:$0xff] %v436
                %v438 = vld [vmem:[%s386 + $0x308] sm:$0xff]
                %439 = vst [vmem:[%s387 + $0xc8] sm:$0xff] %v438
                %v440 = vld [vmem:[%s386 + $0x310] sm:$0xff]
                %441 = vst [vmem:[%s387 + $0xd0] sm:$0xff] %v440
                %v442 = vld [vmem:[%s386 + $0x318] sm:$0xff]
                %443 = vst [vmem:[%s387 + $0xd8] sm:$0xff] %v442
                %v444 = vld [vmem:[%s386 + $0x380] sm:$0xff]
                %445 = vst [vmem:[%s387 + $0xe0] sm:$0xff] %v444
                %v446 = vld [vmem:[%s386 + $0x388] sm:$0xff]
                %447 = vst [vmem:[%s387 + $0xe8] sm:$0xff] %v446
                %v448 = vld [vmem:[%s386 + $0x390] sm:$0xff]
                %449 = vst [vmem:[%s387 + $0xf0] sm:$0xff] %v448
                %v450 = vld [vmem:[%s386 + $0x398] sm:$0xff]
                %451 = vst [vmem:[%s387 + $0xf8] sm:$0xff] %v450
              $region37: #{iodine_forward.9} parent=31 // loop_footer
                %s385 = sadd.s32 1, %s381
              $region38: #{iodine_forward.9} parent=31 // loop_footer_branch
                %380 = sbr.rel target = $region34
              $region39: #{iodine_forward.9} parent=31 // loop_exit
                _
            $region32: #{iodine_forward.9} parent=27 // pred_fallthru
              _
            // Predicated region
            $region40: #{iodine_forward.9} parent=27 // pred_check
              _
            $region41: #{iodine_forward.9} parent=27 // pred_check_branch
              %453 = sbr.rel target = $region43
            $region42: #{iodine_forward.9} parent=27 // pred_region
              _
            $region43: #{iodine_forward.9} parent=27 // pred_fallthru
              _
          $region28: #{iodine_forward.9} parent=23 // pred_fallthru
            _
          %454 = vnop
        $region24: #{iodine_forward.9} parent=15 // pred_fallthru
          _
        // Predicated region
        $region44: #{iodine_forward.9} parent=15 // pred_check
          %p455 = pneg %p110
        $region45: #{iodine_forward.9} parent=15 // pred_check_branch
          %457 = sbr.rel (%p455) target = $region47
        $region46: #{iodine_forward.9} parent=15 // pred_region
          %s458 = sand.u32 %s100, 1
          %s459 = sand.u32 %s100, 1
          %s460 = smul.addr %s459, 32
          %s461 = scalar_lea.vmem [#allocation3], %s460
          %s462 = smul.u32 8, %s33
          %s463 = scalar_lea.vmem %s2, %s462
          // Predicated region
          $region48: #{iodine_forward.9} parent=46 // pred_check
            _
          $region49: #{iodine_forward.9} parent=46 // pred_check_branch
            %465 = sbr.rel (0) target = $region51
          $region50: #{iodine_forward.9} parent=46 // pred_region
            // Predicated region
            $region52: #{iodine_forward.9} parent=50 // pred_check
              _
            $region53: #{iodine_forward.9} parent=50 // pred_check_branch
              %467 = sbr.rel (0) target = $region55
            $region54: #{iodine_forward.9} parent=50 // pred_region
              // Predicated region
              $region67: #{iodine_forward.9} parent=54 // pred_check
                _
              $region68: #{iodine_forward.9} parent=54 // pred_check_branch
                %488 = sbr.rel (0) target = $region70
              $region69: #{iodine_forward.9} parent=54 // pred_region
                loop: start=0, step=1, limit=1
                $region71: #{iodine_forward.9} parent=69 // loop_pre_header
                  _
                $region72: #{iodine_forward.9} parent=69 // loop_header
                  %s490 = sphi 0, %s494
                  %p491 = scmp.ge.s32.totalorder %s490, 1
                  %s495 = sphi %s463, %s463
                  %s496 = sphi %s461, %s461
                $region73: #{iodine_forward.9} parent=69 // loop_header_branch
                  %493 = sbr.rel (%p491) target = $region77
                $region74: #{iodine_forward.9} parent=69 // loop_body
                  %v497 = vld [vmem:[%s495] sm:$0xff]
                  %498 = vst [vmem:[%s496] sm:$0xff] %v497
                  %v499 = vld [vmem:[%s495 + $0x20] sm:$0xff]
                  %500 = vst [vmem:[%s496 + $0x8] sm:$0xff] %v499
                  %v501 = vld [vmem:[%s495 + $0x40] sm:$0xff]
                  %502 = vst [vmem:[%s496 + $0x10] sm:$0xff] %v501
                  %v503 = vld [vmem:[%s495 + $0x60] sm:$0xff]
                  %504 = vst [vmem:[%s496 + $0x18] sm:$0xff] %v503
                $region75: #{iodine_forward.9} parent=69 // loop_footer
                  %s494 = sadd.s32 1, %s490
                $region76: #{iodine_forward.9} parent=69 // loop_footer_branch
                  %489 = sbr.rel target = $region72
                $region77: #{iodine_forward.9} parent=69 // loop_exit
                  _
              $region70: #{iodine_forward.9} parent=54 // pred_fallthru
                _
              // Predicated region
              $region78: #{iodine_forward.9} parent=54 // pred_check
                _
              $region79: #{iodine_forward.9} parent=54 // pred_check_branch
                %506 = sbr.rel target = $region81
              $region80: #{iodine_forward.9} parent=54 // pred_region
                _
              $region81: #{iodine_forward.9} parent=54 // pred_fallthru
                _
            $region55: #{iodine_forward.9} parent=50 // pred_fallthru
              _
            // Predicated region
            $region56: #{iodine_forward.9} parent=50 // pred_check
              _
            $region57: #{iodine_forward.9} parent=50 // pred_check_branch
              %469 = sbr.rel target = $region59
            $region58: #{iodine_forward.9} parent=50 // pred_region
              loop: start=0, step=1, limit=1
              $region60: #{iodine_forward.9} parent=58 // loop_pre_header
                _
              $region61: #{iodine_forward.9} parent=58 // loop_header
                %s472 = sphi 0, %s476
                %p473 = scmp.ge.s32.totalorder %s472, 1
                %s477 = sphi %s463, %s463
                %s478 = sphi %s461, %s461
              $region62: #{iodine_forward.9} parent=58 // loop_header_branch
                %475 = sbr.rel (%p473) target = $region66
              $region63: #{iodine_forward.9} parent=58 // loop_body
                %v479 = vld [vmem:[%s477] sm:$0xff]
                %480 = vst [vmem:[%s478] sm:$0xff] %v479
                %v481 = vld [vmem:[%s477 + $0x20] sm:$0xff]
                %482 = vst [vmem:[%s478 + $0x8] sm:$0xff] %v481
                %v483 = vld [vmem:[%s477 + $0x40] sm:$0xff]
                %484 = vst [vmem:[%s478 + $0x10] sm:$0xff] %v483
                %v485 = vld [vmem:[%s477 + $0x60] sm:$0xff]
                %486 = vst [vmem:[%s478 + $0x18] sm:$0xff] %v485
              $region64: #{iodine_forward.9} parent=58 // loop_footer
                %s476 = sadd.s32 1, %s472
              $region65: #{iodine_forward.9} parent=58 // loop_footer_branch
                %471 = sbr.rel target = $region61
              $region66: #{iodine_forward.9} parent=58 // loop_exit
                _
            $region59: #{iodine_forward.9} parent=50 // pred_fallthru
              _
          $region51: #{iodine_forward.9} parent=46 // pred_fallthru
            _
          %507 = vnop
        $region47: #{iodine_forward.9} parent=15 // pred_fallthru
          _
        // Predicated region
        $region82: #{iodine_forward.9} parent=15 // pred_check
          %p508 = pneg %p138
        $region83: #{iodine_forward.9} parent=15 // pred_check_branch
          %510 = sbr.rel (%p508) target = $region85
        $region84: #{iodine_forward.9} parent=15 // pred_region
          %s511 = smul.u32 8, %s33
          %p512 = scmp.lt.s32.totalorder %s34, 1
          %s513 = scalar_select %p512, %s34, 1
          %p514 = scmp.lt.s32.totalorder %s511, 31
          %s515 = scalar_select %p514, %s511, 31
          %s516 = smul.addr %s513, 32
          %s517 = sadd.s32 %s515, %s516
          %s518 = smul.addr %s517, 4
          %s519 = scalar_lea.vmem %s3, %s518
          %s520 = smul.u32 8, %s33
        $region85: #{iodine_forward.9} parent=15 // pred_fallthru
          _
      $region16: #{iodine_forward.9} parent=5 // pred_fallthru
        _
      %p521 = scmp.le.s32.totalorder 1, %s26
      %p522 = scmp.lt.s32.totalorder %s26, 9
      %p523 = pnand %p521, %p522
      %p524 = pneg %p523
      // Predicated region
      $region86: #{iodine_forward.9} parent=5 // pred_check
        _
      $region87: #{iodine_forward.9} parent=5 // pred_check_branch
        %526 = sbr.rel (%p523) target = $region89
      $region88: #{iodine_forward.9} parent=5 // pred_region
        %s527 = ssub.s32 %s26, 1
        %s528 = sand.u32 %s77, 1
        %s529 = sand.u32 %s77, 1
        %s530 = smul.addr %s529, 256
        %s531 = scalar_lea.vmem [#allocation2], %s530
        // Predicated region
        $region90: #{iodine_forward.9} parent=88 // pred_check
          %p532 = pneg %p90
        $region91: #{iodine_forward.9} parent=88 // pred_check_branch
          %534 = sbr.rel (%p532) target = $region93
        $region92: #{iodine_forward.9} parent=88 // pred_region
          _
        $region93: #{iodine_forward.9} parent=88 // pred_fallthru
          _
        %s535 = sand.u32 %s103, 1
        %s536 = sand.u32 %s103, 1
        %s537 = smul.addr %s536, 32
        %s538 = scalar_lea.vmem [#allocation3], %s537
        // Predicated region
        $region94: #{iodine_forward.9} parent=88 // pred_check
          %p539 = pneg %p116
        $region95: #{iodine_forward.9} parent=88 // pred_check_branch
          %541 = sbr.rel (%p539) target = $region97
        $region96: #{iodine_forward.9} parent=88 // pred_region
          _
        $region97: #{iodine_forward.9} parent=88 // pred_fallthru
          _
        %p542 = scmp.lt.s32.totalorder %s36, 1
        %s543 = scalar_select %p542, %s36, 1
        %s544 = smul.addr %s543, 4
        %s545 = scalar_lea.vmem %s0, %s544
        %p546 = pneg %p64
        %p547 = pneg %p61
        %s548 = sand.u32 %s77, 1
        %s549 = sand.u32 %s77, 1
        %s550 = smul.addr %s549, 256
        %s551 = scalar_lea.vmem [#allocation2], %s550
        %p552 = pneg %p90
        %p553 = pneg %p87
        %s554 = sand.u32 %s103, 1
        %s555 = sand.u32 %s103, 1
        %s556 = smul.addr %s555, 32
        %s557 = scalar_lea.vmem [#allocation3], %s556
        %p558 = pneg %p116
        %p559 = pneg %p113
        %s560 = smul.u32 8, %s35
        %p561 = scmp.lt.s32.totalorder %s36, 1
        %s562 = scalar_select %p561, %s36, 1
        %p563 = scmp.lt.s32.totalorder %s560, 31
        %s564 = scalar_select %p563, %s560, 31
        %s565 = smul.addr %s562, 32
        %s566 = sadd.s32 %s564, %s565
        %s567 = smul.addr %s566, 4
        %s568 = scalar_lea.vmem %s3, %s567
        %p569 = pneg %p144
        %p570 = pneg %p141
        %p571 = pneg %p172
        %p572 = pneg %p169
        %s573 = sand.u32 %s159, 1
        %s574 = sand.u32 %s159, 1
        %s575 = smul.addr %s574, 96
        %s576 = scalar_lea.vmem [#allocation4], %s575
        %p577 = pneg %p200
        %p578 = pneg %p197
        %s579 = smul.u32 8, %s35
        %p580 = scmp.lt.s32.totalorder %s36, 1
        %s581 = scalar_select %p580, %s36, 1
        %p582 = scmp.lt.s32.totalorder %s579, 31
        %s583 = scalar_select %p582, %s579, 31
        %s584 = smul.addr %s581, 32
        %s585 = sadd.s32 %s583, %s584
        %s586 = smul.addr %s585, 4
        %s587 = scalar_lea.vmem %s5, %s586
        %p588 = pneg %p228
        %p589 = pneg %p225
        %s590 = sand.u32 %s215, 1
        %s591 = scalar_lea.sflag [#allocation6], %s590
        %s592 = sand.u32 %s215, 1
        %s593 = smul.addr %s592, 4
        %s594 = scalar_lea.vmem [#allocation5], %s593
        %p595 = pneg %p256
        %p596 = pneg %p253
        %s597 = sand.u32 %s31, 1
        %s598 = scalar_lea.sflag [#allocation8], %s597
        %s599 = sand.u32 %s243, 1
        %s600 = smul.addr %s599, 4
        %s601 = scalar_lea.vmem [#allocation7], %s600
        %p602 = pneg %p284
        %p603 = pneg %p281
        %s604 = sand.u32 %s31, 1
        %s605 = scalar_lea.sflag [#allocation8], %s604
        %s606 = sand.u32 %s271, 1
        %s607 = smul.addr %s606, 4
        %s608 = scalar_lea.vmem [#allocation9], %s607
        %p609 = pneg %p312
        %p610 = pneg %p309
        %s611 = sand.u32 %s299, 1
        %s612 = scalar_lea.sflag [#allocation11], %s611
        %s613 = sand.u32 %s299, 1
        %s614 = smul.addr %s613, 4
        %s615 = scalar_lea.vmem [#allocation10], %s614
        %p616 = pneg %p340
        %p617 = pneg %p337
        %p618 = scmp.lt.s32.totalorder %s35, 3
        %s619 = scalar_select %p618, %s35, 3
        %p620 = scmp.lt.s32.totalorder %s36, 1
        %s621 = scalar_select %p620, %s36, 1
        %s622 = smul.addr %s619, 2
        %s623 = sadd.s32 %s621, %s622
        %s624 = scalar_lea.vmem %s10, %s623
        %p625 = scmp.lt.s32.totalorder %s36, 1
        %s626 = scalar_select %p625, %s36, 1
        %s627 = smul.addr %s626, 4
        %s628 = scalar_lea.vmem %s0, %s627
        %s629 = smul.u32 8, %s35
        %s630 = smul.u32 8, %s35
        %s631 = smul.u32 8, %s35
        %p632 = scmp.lt.s32.totalorder %s36, 1
        %s633 = scalar_select %p632, %s36, 1
        %p634 = scmp.lt.s32.totalorder %s631, 31
        %s635 = scalar_select %p634, %s631, 31
        %s636 = smul.addr %s633, 32
        %s637 = sadd.s32 %s635, %s636
        %s638 = smul.addr %s637, 4
        %s639 = scalar_lea.vmem %s3, %s638
        %s640 = smul.u32 8, %s35
        %s641 = smul.u32 8, %s35
        %s642 = smul.u32 8, %s35
        %p643 = scmp.lt.s32.totalorder %s36, 1
        %s644 = scalar_select %p643, %s36, 1
        %p645 = scmp.lt.s32.totalorder %s642, 31
        %s646 = scalar_select %p645, %s642, 31
        %s647 = smul.addr %s644, 32
        %s648 = sadd.s32 %s646, %s647
        %s649 = smul.addr %s648, 4
        %s650 = scalar_lea.vmem %s5, %s649
        %s651 = smul.u32 8, %s35
        %p652 = scmp.lt.s32.totalorder %s35, 3
        %s653 = scalar_select %p652, %s35, 3
        %p654 = scmp.lt.s32.totalorder %s36, 1
        %s655 = scalar_select %p654, %s36, 1
        %s656 = smul.addr %s653, 2
        %s657 = sadd.s32 %s655, %s656
        %s658 = scalar_lea.vmem %s10, %s657
        %v660 = vld [vmem:[%s628] sm:$0x7]
        %v661 = vpack.c.bf16 %v660, %v660
        %s662 = scalar_lea.vmem %s531, 192 [#allocation2]
        %v663 = vld [vmem:[%s662] sm:$0xff]
        %v664 = vld [vmem:[%s662 + $0x8] sm:$0xff]
        %v665 = vld [vmem:[%s662 + $0x10] sm:$0xff]
        %v666 = vld [vmem:[%s662 + $0x18] sm:$0xff]
        %v667 = vld [vmem:[%s662 + $0x20] sm:$0xff]
        %v668 = vld [vmem:[%s662 + $0x28] sm:$0xff]
        %v669 = vld [vmem:[%s662 + $0x30] sm:$0xff]
        %v670 = vld [vmem:[%s662 + $0x38] sm:$0xff]
        %s671 = scalar_lea.vmem %s538, 24 [#allocation3]
        %v672 = vld [vmem:[%s671] sm:$0xff]
        %v674 = vlaneseq
        %v675 = vshrl.u32 %v674, 7
        %v676 = vsub.s32 0, %v675
        %v677 = vrot.slane %v672, %v676
        %v678 = vlaneseq
        %v679 = vshrl.u32 %v678, 7
        %v680 = vsub.s32 1, %v679
        %v681 = vrot.slane %v672, %v680
        %v682 = vlaneseq
        %v683 = vshrl.u32 %v682, 7
        %v684 = vsub.s32 2, %v683
        %v685 = vrot.slane %v672, %v684
        %v686 = vlaneseq
        %v687 = vshrl.u32 %v686, 7
        %v688 = vsub.s32 3, %v687
        %v689 = vrot.slane %v672, %v688
        %v690 = vlaneseq
        %v691 = vshrl.u32 %v690, 7
        %v692 = vsub.s32 4, %v691
        %v693 = vrot.slane %v672, %v692
        %v694 = vlaneseq
        %v695 = vshrl.u32 %v694, 7
        %v696 = vsub.s32 5, %v695
        %v697 = vrot.slane %v672, %v696
        %v698 = vlaneseq
        %v699 = vshrl.u32 %v698, 7
        %v700 = vsub.s32 6, %v699
        %v701 = vrot.slane %v672, %v700
        %v702 = vlaneseq
        %v703 = vshrl.u32 %v702, 7
        %v704 = vsub.s32 7, %v703
        %v705 = vrot.slane %v672, %v704
        %v722 = vunpack.c.l.b16 %v663
        %v723 = vunpack.c.h.b16 %v663
        %v724 = vunpack.c.l.b16 %v664
        %v725 = vunpack.c.h.b16 %v664
        %v726 = vunpack.c.l.b16 %v665
        %v727 = vunpack.c.h.b16 %v665
        %v728 = vunpack.c.l.b16 %v666
        %v729 = vunpack.c.h.b16 %v666
        %v730 = vunpack.c.l.b16 %v667
        %v731 = vunpack.c.h.b16 %v667
        %v732 = vunpack.c.l.b16 %v668
        %v733 = vunpack.c.h.b16 %v668
        %v734 = vunpack.c.l.b16 %v669
        %v735 = vunpack.c.h.b16 %v669
        %v736 = vunpack.c.l.b16 %v670
        %v737 = vunpack.c.h.b16 %v670
        %v738 = vpack.c.b16 %v730, %v722
        %v739 = vpack.c.b16 %v731, %v723
        %v740 = vpack.c.b16 %v732, %v724
        %v741 = vpack.c.b16 %v733, %v725
        %v742 = vpack.c.b16 %v734, %v726
        %v743 = vpack.c.b16 %v735, %v727
        %v744 = vpack.c.b16 %v736, %v728
        %v745 = vpack.c.b16 %v737, %v729
        %vm754 = vcmask 130048
        %v756 = vsel %vm754, %v661, 0
        %758 = vmatprep.subr.bf16.mxu0 %v739
        %759 = vmatpush1.bf16.msra.mxu0 %v738
        %760 = vmatprep.subr.bf16.mxu0 0
        %761 = vmatpush1.bf16.msra.mxu0 0
        %762 = vmatprep.subr.bf16.mxu0 0
        %763 = vmatpush1.bf16.msra.mxu0 0
        %764 = vmatprep.subr.bf16.mxu0 0
        %765 = vmatpush1.bf16.msra.mxu0 0
        %766 = vmatprep.subr.bf16.mxu0 0
        %767 = vmatpush1.bf16.msra.mxu0 0
        %768 = vmatprep.subr.bf16.mxu0 0
        %769 = vmatpush1.bf16.msra.mxu0 0
        %770 = vmatprep.subr.bf16.mxu0 0
        %771 = vmatpush1.bf16.msra.mxu0 0
        %772 = vmatprep.subr.bf16.mxu0 0
        %773 = vmatpush1.bf16.msra.mxu0 0
        %774 = vmatprep.subr.bf16.mxu0 0
        %775 = vmatpush1.bf16.msra.mxu0 0
        %776 = vmatprep.subr.bf16.mxu0 0
        %777 = vmatpush1.bf16.msra.mxu0 0
        %778 = vmatprep.subr.bf16.mxu0 0
        %779 = vmatpush1.bf16.msra.mxu0 0
        %780 = vmatprep.subr.bf16.mxu0 0
        %781 = vmatpush1.bf16.msra.mxu0 0
        %782 = vmatprep.subr.bf16.mxu0 0
        %783 = vmatpush1.bf16.msra.mxu0 0
        %784 = vmatprep.subr.bf16.mxu0 0
        %785 = vmatpush1.bf16.msra.mxu0 0
        %786 = vmatprep.subr.bf16.mxu0 0
        %787 = vmatpush1.bf16.msra.mxu0 0
        %788 = vmatprep.subr.bf16.mxu0 0
        %789 = vmatpush1.bf16.msra.mxu0 0
        %790 = vmatprep.mubr.bf16.mxu0 0
        %791 = vmatmul.mubr.bf16.gmra.mrb[0].mxu0 %v756
        %v792 = vpop.f32.mrb[0].mxu0
        %v793 = vadd.f32 %v677, %v792
        %v794 = vpop.f32.mrb[0].mxu0
        %v795 = vadd.f32 %v681, %v794
        %v796 = vpop.f32.mrb[0].mxu0
        %v797 = vpop.f32.mrb[0].mxu0
        %798 = vdwg.mxu0
        %799 = vmatprep.subr.bf16.mxu0 %v741
        %800 = vmatpush1.bf16.msra.mxu0 %v740
        %801 = vmatprep.subr.bf16.mxu0 0
        %802 = vmatpush1.bf16.msra.mxu0 0
        %803 = vmatprep.subr.bf16.mxu0 0
        %804 = vmatpush1.bf16.msra.mxu0 0
        %805 = vmatprep.subr.bf16.mxu0 0
        %806 = vmatpush1.bf16.msra.mxu0 0
        %807 = vmatprep.subr.bf16.mxu0 0
        %808 = vmatpush1.bf16.msra.mxu0 0
        %809 = vmatprep.subr.bf16.mxu0 0
        %810 = vmatpush1.bf16.msra.mxu0 0
        %811 = vmatprep.subr.bf16.mxu0 0
        %812 = vmatpush1.bf16.msra.mxu0 0
        %813 = vmatprep.subr.bf16.mxu0 0
        %814 = vmatpush1.bf16.msra.mxu0 0
        %815 = vmatprep.subr.bf16.mxu0 0
        %816 = vmatpush1.bf16.msra.mxu0 0
        %817 = vmatprep.subr.bf16.mxu0 0
        %818 = vmatpush1.bf16.msra.mxu0 0
        %819 = vmatprep.subr.bf16.mxu0 0
        %820 = vmatpush1.bf16.msra.mxu0 0
        %821 = vmatprep.subr.bf16.mxu0 0
        %822 = vmatpush1.bf16.msra.mxu0 0
        %823 = vmatprep.subr.bf16.mxu0 0
        %824 = vmatpush1.bf16.msra.mxu0 0
        %825 = vmatprep.subr.bf16.mxu0 0
        %826 = vmatpush1.bf16.msra.mxu0 0
        %827 = vmatprep.subr.bf16.mxu0 0
        %828 = vmatpush1.bf16.msra.mxu0 0
        %829 = vmatprep.subr.bf16.mxu0 0
        %830 = vmatpush1.bf16.msra.mxu0 0
        %831 = vmatprep.mubr.bf16.mxu0 0
        %832 = vmatmul.mubr.bf16.gmra.mrb[0].mxu0 %v756
        %v833 = vpop.f32.mrb[0].mxu0
        %v834 = vadd.f32 %v685, %v833
        %v835 = vpop.f32.mrb[0].mxu0
        %v836 = vadd.f32 %v689, %v835
        %v837 = vpop.f32.mrb[0].mxu0
        %v838 = vpop.f32.mrb[0].mxu0
        %839 = vdwg.mxu0
        %840 = vmatprep.subr.bf16.mxu0 %v743
        %841 = vmatpush1.bf16.msra.mxu0 %v742
        %842 = vmatprep.subr.bf16.mxu0 0
        %843 = vmatpush1.bf16.msra.mxu0 0
        %844 = vmatprep.subr.bf16.mxu0 0
        %845 = vmatpush1.bf16.msra.mxu0 0
        %846 = vmatprep.subr.bf16.mxu0 0
        %847 = vmatpush1.bf16.msra.mxu0 0
        %848 = vmatprep.subr.bf16.mxu0 0
        %849 = vmatpush1.bf16.msra.mxu0 0
        %850 = vmatprep.subr.bf16.mxu0 0
        %851 = vmatpush1.bf16.msra.mxu0 0
        %852 = vmatprep.subr.bf16.mxu0 0
        %853 = vmatpush1.bf16.msra.mxu0 0
        %854 = vmatprep.subr.bf16.mxu0 0
        %855 = vmatpush1.bf16.msra.mxu0 0
        %856 = vmatprep.subr.bf16.mxu0 0
        %857 = vmatpush1.bf16.msra.mxu0 0
        %858 = vmatprep.subr.bf16.mxu0 0
        %859 = vmatpush1.bf16.msra.mxu0 0
        %860 = vmatprep.subr.bf16.mxu0 0
        %861 = vmatpush1.bf16.msra.mxu0 0
        %862 = vmatprep.subr.bf16.mxu0 0
        %863 = vmatpush1.bf16.msra.mxu0 0
        %864 = vmatprep.subr.bf16.mxu0 0
        %865 = vmatpush1.bf16.msra.mxu0 0
        %866 = vmatprep.subr.bf16.mxu0 0
        %867 = vmatpush1.bf16.msra.mxu0 0
        %868 = vmatprep.subr.bf16.mxu0 0
        %869 = vmatpush1.bf16.msra.mxu0 0
        %870 = vmatprep.subr.bf16.mxu0 0
        %871 = vmatpush1.bf16.msra.mxu0 0
        %872 = vmatprep.mubr.bf16.mxu0 0
        %873 = vmatmul.mubr.bf16.gmra.mrb[0].mxu0 %v756
        %v874 = vpop.f32.mrb[0].mxu0
        %v875 = vadd.f32 %v693, %v874
        %v876 = vpop.f32.mrb[0].mxu0
        %v877 = vadd.f32 %v697, %v876
        %v878 = vpop.f32.mrb[0].mxu0
        %v879 = vpop.f32.mrb[0].mxu0
        %880 = vdwg.mxu0
        %881 = vmatprep.subr.bf16.mxu0 %v745
        %882 = vmatpush1.bf16.msra.mxu0 %v744
        %883 = vmatprep.subr.bf16.mxu0 0
        %884 = vmatpush1.bf16.msra.mxu0 0
        %885 = vmatprep.subr.bf16.mxu0 0
        %886 = vmatpush1.bf16.msra.mxu0 0
        %887 = vmatprep.subr.bf16.mxu0 0
        %888 = vmatpush1.bf16.msra.mxu0 0
        %889 = vmatprep.subr.bf16.mxu0 0
        %890 = vmatpush1.bf16.msra.mxu0 0
        %891 = vmatprep.subr.bf16.mxu0 0
        %892 = vmatpush1.bf16.msra.mxu0 0
        %893 = vmatprep.subr.bf16.mxu0 0
        %894 = vmatpush1.bf16.msra.mxu0 0
        %895 = vmatprep.subr.bf16.mxu0 0
        %896 = vmatpush1.bf16.msra.mxu0 0
        %897 = vmatprep.subr.bf16.mxu0 0
        %898 = vmatpush1.bf16.msra.mxu0 0
        %899 = vmatprep.subr.bf16.mxu0 0
        %900 = vmatpush1.bf16.msra.mxu0 0
        %901 = vmatprep.subr.bf16.mxu0 0
        %902 = vmatpush1.bf16.msra.mxu0 0
        %903 = vmatprep.subr.bf16.mxu0 0
        %904 = vmatpush1.bf16.msra.mxu0 0
        %905 = vmatprep.subr.bf16.mxu0 0
        %906 = vmatpush1.bf16.msra.mxu0 0
        %907 = vmatprep.subr.bf16.mxu0 0
        %908 = vmatpush1.bf16.msra.mxu0 0
        %909 = vmatprep.subr.bf16.mxu0 0
        %910 = vmatpush1.bf16.msra.mxu0 0
        %911 = vmatprep.subr.bf16.mxu0 0
        %912 = vmatpush1.bf16.msra.mxu0 0
        %913 = vmatprep.mubr.bf16.mxu0 0
        %914 = vmatmul.mubr.bf16.gmra.mrb[0].mxu0 %v756
        %v915 = vpop.f32.mrb[0].mxu0
        %v916 = vadd.f32 %v701, %v915
        %v917 = vpop.f32.mrb[0].mxu0
        %v918 = vadd.f32 %v705, %v917
        %v919 = vpop.f32.mrb[0].mxu0
        %v920 = vpop.f32.mrb[0].mxu0
        %921 = vdwg.mxu0
        %vm922 = vcmask 1042432
        %v923 = vsel %vm922, %v793, -inf
        %v924 = vrot.slane %v923, 4
        %v925 = vmax.f32 %v923, %v924
        %v926 = vrot.slane %v925, 2
        %v927 = vmax.f32 %v925, %v926
        %v928 = vrot.slane %v927, 1
        %v929 = vmax.f32 %v927, %v928
        %v930 = vsel %vm922, %v795, -inf
        %v931 = vrot.slane %v930, 4
        %v932 = vmax.f32 %v930, %v931
        %v933 = vrot.slane %v932, 2
        %v934 = vmax.f32 %v932, %v933
        %v935 = vrot.slane %v934, 1
        %v936 = vmax.f32 %v934, %v935
        %v937 = vsel %vm922, %v834, -inf
        %v938 = vrot.slane %v937, 4
        %v939 = vmax.f32 %v937, %v938
        %v940 = vrot.slane %v939, 2
        %v941 = vmax.f32 %v939, %v940
        %v942 = vrot.slane %v941, 1
        %v943 = vmax.f32 %v941, %v942
        %v944 = vsel %vm922, %v836, -inf
        %v945 = vrot.slane %v944, 4
        %v946 = vmax.f32 %v944, %v945
        %v947 = vrot.slane %v946, 2
        %v948 = vmax.f32 %v946, %v947
        %v949 = vrot.slane %v948, 1
        %v950 = vmax.f32 %v948, %v949
        %v951 = vsel %vm922, %v875, -inf
        %v952 = vrot.slane %v951, 4
        %v953 = vmax.f32 %v951, %v952
        %v954 = vrot.slane %v953, 2
        %v955 = vmax.f32 %v953, %v954
        %v956 = vrot.slane %v955, 1
        %v957 = vmax.f32 %v955, %v956
        %v958 = vsel %vm922, %v877, -inf
        %v959 = vrot.slane %v958, 4
        %v960 = vmax.f32 %v958, %v959
        %v961 = vrot.slane %v960, 2
        %v962 = vmax.f32 %v960, %v961
        %v963 = vrot.slane %v962, 1
        %v964 = vmax.f32 %v962, %v963
        %v965 = vsel %vm922, %v916, -inf
        %v966 = vrot.slane %v965, 4
        %v967 = vmax.f32 %v965, %v966
        %v968 = vrot.slane %v967, 2
        %v969 = vmax.f32 %v967, %v968
        %v970 = vrot.slane %v969, 1
        %v971 = vmax.f32 %v969, %v970
        %v972 = vsel %vm922, %v918, -inf
        %v973 = vrot.slane %v972, 4
        %v974 = vmax.f32 %v972, %v973
        %v975 = vrot.slane %v974, 2
        %v976 = vmax.f32 %v974, %v975
        %v977 = vrot.slane %v976, 1
        %v978 = vmax.f32 %v976, %v977
        %v979 = vsub.f32 %v793, %v929
        %v980 = vsub.f32 %v795, %v936
        %v981 = vsub.f32 %v834, %v943
        %v982 = vsub.f32 %v836, %v950
        %v983 = vsub.f32 %v875, %v957
        %v984 = vsub.f32 %v877, %v964
        %v985 = vsub.f32 %v916, %v971
        %v986 = vsub.f32 %v918, %v978
        %v987 = vmul.f32 %v979, 1.442695
        %v988 = vpow.pop %v987
        %v989 = vmul.f32 %v980, 1.442695
        %v990 = vpow.pop %v989
        %v991 = vmul.f32 %v981, 1.442695
        %v992 = vpow.pop %v991
        %v993 = vmul.f32 %v982, 1.442695
        %v994 = vpow.pop %v993
        %v995 = vmul.f32 %v983, 1.442695
        %v996 = vpow.pop %v995
        %v997 = vmul.f32 %v984, 1.442695
        %v998 = vpow.pop %v997
        %v999 = vmul.f32 %v985, 1.442695
        %v1000 = vpow.pop %v999
        %v1001 = vmul.f32 %v986, 1.442695
        %v1002 = vpow.pop %v1001
        %v1003 = vsel %vm922, %v988, 0.0
        %v1004 = vrot.slane %v1003, 4
        %v1005 = vadd.f32 %v1003, %v1004
        %v1006 = vrot.slane %v1005, 2
        %v1007 = vadd.f32 %v1005, %v1006
        %v1008 = vrot.slane %v1007, 1
        %v1009 = vadd.f32 %v1007, %v1008
        %v1010 = vsel %vm922, %v990, 0.0
        %v1011 = vrot.slane %v1010, 4
        %v1012 = vadd.f32 %v1010, %v1011
        %v1013 = vrot.slane %v1012, 2
        %v1014 = vadd.f32 %v1012, %v1013
        %v1015 = vrot.slane %v1014, 1
        %v1016 = vadd.f32 %v1014, %v1015
        %v1017 = vsel %vm922, %v992, 0.0
        %v1018 = vrot.slane %v1017, 4
        %v1019 = vadd.f32 %v1017, %v1018
        %v1020 = vrot.slane %v1019, 2
        %v1021 = vadd.f32 %v1019, %v1020
        %v1022 = vrot.slane %v1021, 1
        %v1023 = vadd.f32 %v1021, %v1022
        %v1024 = vsel %vm922, %v994, 0.0
        %v1025 = vrot.slane %v1024, 4
        %v1026 = vadd.f32 %v1024, %v1025
        %v1027 = vrot.slane %v1026, 2
        %v1028 = vadd.f32 %v1026, %v1027
        %v1029 = vrot.slane %v1028, 1
        %v1030 = vadd.f32 %v1028, %v1029
        %v1031 = vsel %vm922, %v996, 0.0
        %v1032 = vrot.slane %v1031, 4
        %v1033 = vadd.f32 %v1031, %v1032
        %v1034 = vrot.slane %v1033, 2
        %v1035 = vadd.f32 %v1033, %v1034
        %v1036 = vrot.slane %v1035, 1
        %v1037 = vadd.f32 %v1035, %v1036
        %v1038 = vsel %vm922, %v998, 0.0
        %v1039 = vrot.slane %v1038, 4
        %v1040 = vadd.f32 %v1038, %v1039
        %v1041 = vrot.slane %v1040, 2
        %v1042 = vadd.f32 %v1040, %v1041
        %v1043 = vrot.slane %v1042, 1
        %v1044 = vadd.f32 %v1042, %v1043
        %v1045 = vsel %vm922, %v1000, 0.0
        %v1046 = vrot.slane %v1045, 4
        %v1047 = vadd.f32 %v1045, %v1046
        %v1048 = vrot.slane %v1047, 2
        %v1049 = vadd.f32 %v1047, %v1048
        %v1050 = vrot.slane %v1049, 1
        %v1051 = vadd.f32 %v1049, %v1050
        %v1052 = vsel %vm922, %v1002, 0.0
        %v1053 = vrot.slane %v1052, 4
        %v1054 = vadd.f32 %v1052, %v1053
        %v1055 = vrot.slane %v1054, 2
        %v1056 = vadd.f32 %v1054, %v1055
        %v1057 = vrot.slane %v1056, 1
        %v1058 = vadd.f32 %v1056, %v1057
        %v1059 = vrcp.pop %v1009
        %v1060 = vrcp.pop %v1016
        %v1061 = vrcp.pop %v1023
        %v1062 = vrcp.pop %v1030
        %v1063 = vrcp.pop %v1037
        %v1064 = vrcp.pop %v1044
        %v1065 = vrcp.pop %v1051
        %v1066 = vrcp.pop %v1058
        %v1067 = vmul.f32 %v988, %v1059
        %v1068 = vmul.f32 %v990, %v1060
        %v1069 = vmul.f32 %v992, %v1061
        %v1070 = vmul.f32 %v994, %v1062
        %v1071 = vmul.f32 %v996, %v1063
        %v1072 = vmul.f32 %v998, %v1064
        %v1073 = vmul.f32 %v1000, %v1065
        %v1074 = vmul.f32 %v1002, %v1066
        %v1083 = vcombine.low %v1067, %v1068
        %v1084 = vcombine.low %v1069, %v1070
        %v1085 = vcombine.low %v1071, %v1072
        %v1086 = vcombine.low %v1073, %v1074
        %1091 = vst [vmem:[%s650] sm:$0x77] %v1083
        %1092 = vst [vmem:[%s650 + $0x8] sm:$0x77] %v1084
        %1093 = vst [vmem:[%s650 + $0x10] sm:$0x77] %v1085
        %1094 = vst [vmem:[%s650 + $0x18] sm:$0x77] %v1086
        %v1095 = vld [vmem:[%s531] sm:$0xff]
        %v1096 = vld [vmem:[%s531 + $0x8] sm:$0xff]
        %v1097 = vld [vmem:[%s531 + $0x10] sm:$0xff]
        %v1098 = vld [vmem:[%s531 + $0x18] sm:$0xff]
        %v1099 = vld [vmem:[%s531 + $0x20] sm:$0xff]
        %v1100 = vld [vmem:[%s531 + $0x28] sm:$0xff]
        %v1101 = vld [vmem:[%s531 + $0x30] sm:$0xff]
        %v1102 = vld [vmem:[%s531 + $0x38] sm:$0xff]
        %v1103 = vld [vmem:[%s538] sm:$0xff]
        %v1105 = vlaneseq
        %v1106 = vshrl.u32 %v1105, 7
        %v1107 = vsub.s32 0, %v1106
        %v1108 = vrot.slane %v1103, %v1107
        %v1109 = vlaneseq
        %v1110 = vshrl.u32 %v1109, 7
        %v1111 = vsub.s32 1, %v1110
        %v1112 = vrot.slane %v1103, %v1111
        %v1113 = vlaneseq
        %v1114 = vshrl.u32 %v1113, 7
        %v1115 = vsub.s32 2, %v1114
        %v1116 = vrot.slane %v1103, %v1115
        %v1117 = vlaneseq
        %v1118 = vshrl.u32 %v1117, 7
        %v1119 = vsub.s32 3, %v1118
        %v1120 = vrot.slane %v1103, %v1119
        %v1121 = vlaneseq
        %v1122 = vshrl.u32 %v1121, 7
        %v1123 = vsub.s32 4, %v1122
        %v1124 = vrot.slane %v1103, %v1123
        %v1125 = vlaneseq
        %v1126 = vshrl.u32 %v1125, 7
        %v1127 = vsub.s32 5, %v1126
        %v1128 = vrot.slane %v1103, %v1127
        %v1129 = vlaneseq
        %v1130 = vshrl.u32 %v1129, 7
        %v1131 = vsub.s32 6, %v1130
        %v1132 = vrot.slane %v1103, %v1131
        %v1133 = vlaneseq
        %v1134 = vshrl.u32 %v1133, 7
        %v1135 = vsub.s32 7, %v1134
        %v1136 = vrot.slane %v1103, %v1135
        %v1153 = vunpack.c.l.b16 %v1095
        %v1154 = vunpack.c.h.b16 %v1095
        %v1155 = vunpack.c.l.b16 %v1096
        %v1156 = vunpack.c.h.b16 %v1096
        %v1157 = vunpack.c.l.b16 %v1097
        %v1158 = vunpack.c.h.b16 %v1097
        %v1159 = vunpack.c.l.b16 %v1098
        %v1160 = vunpack.c.h.b16 %v1098
        %v1161 = vunpack.c.l.b16 %v1099
        %v1162 = vunpack.c.h.b16 %v1099
        %v1163 = vunpack.c.l.b16 %v1100
        %v1164 = vunpack.c.h.b16 %v1100
        %v1165 = vunpack.c.l.b16 %v1101
        %v1166 = vunpack.c.h.b16 %v1101
        %v1167 = vunpack.c.l.b16 %v1102
        %v1168 = vunpack.c.h.b16 %v1102
        %v1169 = vpack.c.b16 %v1161, %v1153
        %v1170 = vpack.c.b16 %v1162, %v1154
        %v1171 = vpack.c.b16 %v1163, %v1155
        %v1172 = vpack.c.b16 %v1164, %v1156
        %v1173 = vpack.c.b16 %v1165, %v1157
        %v1174 = vpack.c.b16 %v1166, %v1158
        %v1175 = vpack.c.b16 %v1167, %v1159
        %v1176 = vpack.c.b16 %v1168, %v1160
        %1185 = vmatprep.subr.bf16.mxu0 %v1170
        %1186 = vmatpush1.bf16.msra.mxu0 %v1169
        %1187 = vmatprep.subr.bf16.mxu0 0
        %1188 = vmatpush1.bf16.msra.mxu0 0
        %1189 = vmatprep.subr.bf16.mxu0 0
        %1190 = vmatpush1.bf16.msra.mxu0 0
        %1191 = vmatprep.subr.bf16.mxu0 0
        %1192 = vmatpush1.bf16.msra.mxu0 0
        %1193 = vmatprep.subr.bf16.mxu0 0
        %1194 = vmatpush1.bf16.msra.mxu0 0
        %1195 = vmatprep.subr.bf16.mxu0 0
        %1196 = vmatpush1.bf16.msra.mxu0 0
        %1197 = vmatprep.subr.bf16.mxu0 0
        %1198 = vmatpush1.bf16.msra.mxu0 0
        %1199 = vmatprep.subr.bf16.mxu0 0
        %1200 = vmatpush1.bf16.msra.mxu0 0
        %1201 = vmatprep.subr.bf16.mxu0 0
        %1202 = vmatpush1.bf16.msra.mxu0 0
        %1203 = vmatprep.subr.bf16.mxu0 0
        %1204 = vmatpush1.bf16.msra.mxu0 0
        %1205 = vmatprep.subr.bf16.mxu0 0
        %1206 = vmatpush1.bf16.msra.mxu0 0
        %1207 = vmatprep.subr.bf16.mxu0 0
        %1208 = vmatpush1.bf16.msra.mxu0 0
        %1209 = vmatprep.subr.bf16.mxu0 0
        %1210 = vmatpush1.bf16.msra.mxu0 0
        %1211 = vmatprep.subr.bf16.mxu0 0
        %1212 = vmatpush1.bf16.msra.mxu0 0
        %1213 = vmatprep.subr.bf16.mxu0 0
        %1214 = vmatpush1.bf16.msra.mxu0 0
        %1215 = vmatprep.subr.bf16.mxu0 0
        %1216 = vmatpush1.bf16.msra.mxu0 0
        %1217 = vmatprep.mubr.bf16.mxu0 0
        %1218 = vmatmul.mubr.bf16.gmra.mrb[0].mxu0 %v756
        %v1219 = vpop.f32.mrb[0].mxu0
        %v1220 = vadd.f32 %v1108, %v1219
        %v1221 = vpop.f32.mrb[0].mxu0
        %v1222 = vadd.f32 %v1112, %v1221
        %v1223 = vpop.f32.mrb[0].mxu0
        %v1224 = vpop.f32.mrb[0].mxu0
        %1225 = vdwg.mxu0
        %1226 = vmatprep.subr.bf16.mxu0 %v1172
        %1227 = vmatpush1.bf16.msra.mxu0 %v1171
        %1228 = vmatprep.subr.bf16.mxu0 0
        %1229 = vmatpush1.bf16.msra.mxu0 0
        %1230 = vmatprep.subr.bf16.mxu0 0
        %1231 = vmatpush1.bf16.msra.mxu0 0
        %1232 = vmatprep.subr.bf16.mxu0 0
        %1233 = vmatpush1.bf16.msra.mxu0 0
        %1234 = vmatprep.subr.bf16.mxu0 0
        %1235 = vmatpush1.bf16.msra.mxu0 0
        %1236 = vmatprep.subr.bf16.mxu0 0
        %1237 = vmatpush1.bf16.msra.mxu0 0
        %1238 = vmatprep.subr.bf16.mxu0 0
        %1239 = vmatpush1.bf16.msra.mxu0 0
        %1240 = vmatprep.subr.bf16.mxu0 0
        %1241 = vmatpush1.bf16.msra.mxu0 0
        %1242 = vmatprep.subr.bf16.mxu0 0
        %1243 = vmatpush1.bf16.msra.mxu0 0
        %1244 = vmatprep.subr.bf16.mxu0 0
        %1245 = vmatpush1.bf16.msra.mxu0 0
        %1246 = vmatprep.subr.bf16.mxu0 0
        %1247 = vmatpush1.bf16.msra.mxu0 0
        %1248 = vmatprep.subr.bf16.mxu0 0
        %1249 = vmatpush1.bf16.msra.mxu0 0
        %1250 = vmatprep.subr.bf16.mxu0 0
        %1251 = vmatpush1.bf16.msra.mxu0 0
        %1252 = vmatprep.subr.bf16.mxu0 0
        %1253 = vmatpush1.bf16.msra.mxu0 0
        %1254 = vmatprep.subr.bf16.mxu0 0
        %1255 = vmatpush1.bf16.msra.mxu0 0
        %1256 = vmatprep.subr.bf16.mxu0 0
        %1257 = vmatpush1.bf16.msra.mxu0 0
        %1258 = vmatprep.mubr.bf16.mxu0 0
        %1259 = vmatmul.mubr.bf16.gmra.mrb[0].mxu0 %v756
        %v1260 = vpop.f32.mrb[0].mxu0
        %v1261 = vadd.f32 %v1116, %v1260
        %v1262 = vpop.f32.mrb[0].mxu0
        %v1263 = vadd.f32 %v1120, %v1262
        %v1264 = vpop.f32.mrb[0].mxu0
        %v1265 = vpop.f32.mrb[0].mxu0
        %1266 = vdwg.mxu0
        %1267 = vmatprep.subr.bf16.mxu0 %v1174
        %1268 = vmatpush1.bf16.msra.mxu0 %v1173
        %1269 = vmatprep.subr.bf16.mxu0 0
        %1270 = vmatpush1.bf16.msra.mxu0 0
        %1271 = vmatprep.subr.bf16.mxu0 0
        %1272 = vmatpush1.bf16.msra.mxu0 0
        %1273 = vmatprep.subr.bf16.mxu0 0
        %1274 = vmatpush1.bf16.msra.mxu0 0
        %1275 = vmatprep.subr.bf16.mxu0 0
        %1276 = vmatpush1.bf16.msra.mxu0 0
        %1277 = vmatprep.subr.bf16.mxu0 0
        %1278 = vmatpush1.bf16.msra.mxu0 0
        %1279 = vmatprep.subr.bf16.mxu0 0
        %1280 = vmatpush1.bf16.msra.mxu0 0
        %1281 = vmatprep.subr.bf16.mxu0 0
        %1282 = vmatpush1.bf16.msra.mxu0 0
        %1283 = vmatprep.subr.bf16.mxu0 0
        %1284 = vmatpush1.bf16.msra.mxu0 0
        %1285 = vmatprep.subr.bf16.mxu0 0
        %1286 = vmatpush1.bf16.msra.mxu0 0
        %1287 = vmatprep.subr.bf16.mxu0 0
        %1288 = vmatpush1.bf16.msra.mxu0 0
        %1289 = vmatprep.subr.bf16.mxu0 0
        %1290 = vmatpush1.bf16.msra.mxu0 0
        %1291 = vmatprep.subr.bf16.mxu0 0
        %1292 = vmatpush1.bf16.msra.mxu0 0
        %1293 = vmatprep.subr.bf16.mxu0 0
        %1294 = vmatpush1.bf16.msra.mxu0 0
        %1295 = vmatprep.subr.bf16.mxu0 0
        %1296 = vmatpush1.bf16.msra.mxu0 0
        %1297 = vmatprep.subr.bf16.mxu0 0
        %1298 = vmatpush1.bf16.msra.mxu0 0
        %1299 = vmatprep.mubr.bf16.mxu0 0
        %1300 = vmatmul.mubr.bf16.gmra.mrb[0].mxu0 %v756
        %v1301 = vpop.f32.mrb[0].mxu0
        %v1302 = vadd.f32 %v1124, %v1301
        %v1303 = vpop.f32.mrb[0].mxu0
        %v1304 = vadd.f32 %v1128, %v1303
        %v1305 = vpop.f32.mrb[0].mxu0
        %v1306 = vpop.f32.mrb[0].mxu0
        %1307 = vdwg.mxu0
        %1308 = vmatprep.subr.bf16.mxu0 %v1176
        %1309 = vmatpush1.bf16.msra.mxu0 %v1175
        %1310 = vmatprep.subr.bf16.mxu0 0
        %1311 = vmatpush1.bf16.msra.mxu0 0
        %1312 = vmatprep.subr.bf16.mxu0 0
        %1313 = vmatpush1.bf16.msra.mxu0 0
        %1314 = vmatprep.subr.bf16.mxu0 0
        %1315 = vmatpush1.bf16.msra.mxu0 0
        %1316 = vmatprep.subr.bf16.mxu0 0
        %1317 = vmatpush1.bf16.msra.mxu0 0
        %1318 = vmatprep.subr.bf16.mxu0 0
        %1319 = vmatpush1.bf16.msra.mxu0 0
        %1320 = vmatprep.subr.bf16.mxu0 0
        %1321 = vmatpush1.bf16.msra.mxu0 0
        %1322 = vmatprep.subr.bf16.mxu0 0
        %1323 = vmatpush1.bf16.msra.mxu0 0
        %1324 = vmatprep.subr.bf16.mxu0 0
        %1325 = vmatpush1.bf16.msra.mxu0 0
        %1326 = vmatprep.subr.bf16.mxu0 0
        %1327 = vmatpush1.bf16.msra.mxu0 0
        %1328 = vmatprep.subr.bf16.mxu0 0
        %1329 = vmatpush1.bf16.msra.mxu0 0
        %1330 = vmatprep.subr.bf16.mxu0 0
        %1331 = vmatpush1.bf16.msra.mxu0 0
        %1332 = vmatprep.subr.bf16.mxu0 0
        %1333 = vmatpush1.bf16.msra.mxu0 0
        %1334 = vmatprep.subr.bf16.mxu0 0
        %1335 = vmatpush1.bf16.msra.mxu0 0
        %1336 = vmatprep.subr.bf16.mxu0 0
        %1337 = vmatpush1.bf16.msra.mxu0 0
        %1338 = vmatprep.subr.bf16.mxu0 0
        %1339 = vmatpush1.bf16.msra.mxu0 0
        %1340 = vmatprep.mubr.bf16.mxu0 0
        %1341 = vmatmul.mubr.bf16.gmra.mrb[0].mxu0 %v756
        %v1342 = vpop.f32.mrb[0].mxu0
        %v1343 = vadd.f32 %v1132, %v1342
        %v1344 = vpop.f32.mrb[0].mxu0
        %v1345 = vadd.f32 %v1136, %v1344
        %v1346 = vpop.f32.mrb[0].mxu0
        %v1347 = vpop.f32.mrb[0].mxu0
        %1348 = vdwg.mxu0
        %v1357 = vcombine.low %v1220, %v1222
        %v1358 = vcombine.low %v1261, %v1263
        %v1359 = vcombine.low %v1302, %v1304
        %v1360 = vcombine.low %v1343, %v1345
        %1365 = vst [vmem:[%s576] sm:$0x77] %v1357
        %1366 = vst [vmem:[%s576 + $0x8] sm:$0x77] %v1358
        %1367 = vst [vmem:[%s576 + $0x10] sm:$0x77] %v1359
        %1368 = vst [vmem:[%s576 + $0x18] sm:$0x77] %v1360
        %v1369 = vsel %vm922, %v1220, 0.0
        %v1370 = vsel %vm922, %v1222, 0.0
        %v1371 = vadd.f32 %v1369, %v1370
        %v1372 = vsel %vm922, %v1261, 0.0
        %v1373 = vadd.f32 %v1371, %v1372
        %v1374 = vsel %vm922, %v1263, 0.0
        %v1375 = vadd.f32 %v1373, %v1374
        %v1376 = vsel %vm922, %v1302, 0.0
        %v1377 = vadd.f32 %v1375, %v1376
        %v1378 = vsel %vm922, %v1304, 0.0
        %v1379 = vadd.f32 %v1377, %v1378
        %v1380 = vsel %vm922, %v1343, 0.0
        %v1381 = vadd.f32 %v1379, %v1380
        %v1382 = vsel %vm922, %v1345, 0.0
        %v1383 = vadd.f32 %v1381, %v1382
        %1384 = vadd.xlane.f32.xlu0 %v1383
        %v1385 = vpop.xlane.xlu0 %1384
        %vm1386 = vcmask 2048
        %1387 = vst.msk [vmem:[%s601] sm:$0x7] %vm1386, %v1385
        %v1388 = vld [vmem:[%s639] ss:$4 sm:$0xff]
        %v1390 = vlaneseq
        %v1391 = vshrl.u32 %v1390, 7
        %v1392 = vsub.s32 0, %v1391
        %v1393 = vrot.slane %v1388, %v1392
        %v1394 = vlaneseq
        %v1395 = vshrl.u32 %v1394, 7
        %v1396 = vsub.s32 1, %v1395
        %v1397 = vrot.slane %v1388, %v1396
        %v1398 = vlaneseq
        %v1399 = vshrl.u32 %v1398, 7
        %v1400 = vsub.s32 2, %v1399
        %v1401 = vrot.slane %v1388, %v1400
        %v1402 = vlaneseq
        %v1403 = vshrl.u32 %v1402, 7
        %v1404 = vsub.s32 3, %v1403
        %v1405 = vrot.slane %v1388, %v1404
        %v1406 = vlaneseq
        %v1407 = vshrl.u32 %v1406, 7
        %v1408 = vsub.s32 4, %v1407
        %v1409 = vrot.slane %v1388, %v1408
        %v1410 = vlaneseq
        %v1411 = vshrl.u32 %v1410, 7
        %v1412 = vsub.s32 5, %v1411
        %v1413 = vrot.slane %v1388, %v1412
        %v1414 = vlaneseq
        %v1415 = vshrl.u32 %v1414, 7
        %v1416 = vsub.s32 6, %v1415
        %v1417 = vrot.slane %v1388, %v1416
        %v1418 = vlaneseq
        %v1419 = vshrl.u32 %v1418, 7
        %v1420 = vsub.s32 7, %v1419
        %v1421 = vrot.slane %v1388, %v1420
        %v1430 = vsub.f32 %v1220, %v1393
        %v1431 = vsub.f32 %v1222, %v1397
        %v1432 = vsub.f32 %v1261, %v1401
        %v1433 = vsub.f32 %v1263, %v1405
        %v1434 = vsub.f32 %v1302, %v1409
        %v1435 = vsub.f32 %v1304, %v1413
        %v1436 = vsub.f32 %v1343, %v1417
        %v1437 = vsub.f32 %v1345, %v1421
        %v1438 = vmul.f32 %v1430, %v1430
        %v1439 = vmul.f32 %v1431, %v1431
        %v1440 = vmul.f32 %v1432, %v1432
        %v1441 = vmul.f32 %v1433, %v1433
        %v1442 = vmul.f32 %v1434, %v1434
        %v1443 = vmul.f32 %v1435, %v1435
        %v1444 = vmul.f32 %v1436, %v1436
        %v1445 = vmul.f32 %v1437, %v1437
        %v1446 = vsub.f32 0.0, %v1438
        %v1447 = vsub.f32 0.0, %v1439
        %v1448 = vsub.f32 0.0, %v1440
        %v1449 = vsub.f32 0.0, %v1441
        %v1450 = vsub.f32 0.0, %v1442
        %v1451 = vsub.f32 0.0, %v1443
        %v1452 = vsub.f32 0.0, %v1444
        %v1453 = vsub.f32 0.0, %v1445
        %v1454 = vmul.f32 %v1446, 1.6666666
        %v1455 = vmul.f32 %v1447, 1.6666666
        %v1456 = vmul.f32 %v1448, 1.6666666
        %v1457 = vmul.f32 %v1449, 1.6666666
        %v1458 = vmul.f32 %v1450, 1.6666666
        %v1459 = vmul.f32 %v1451, 1.6666666
        %v1460 = vmul.f32 %v1452, 1.6666666
        %v1461 = vmul.f32 %v1453, 1.6666666
        %v1462 = vmul.f32 %v1454, 1.442695
        %v1463 = vpow.pop %v1462
        %v1464 = vmul.f32 %v1455, 1.442695
        %v1465 = vpow.pop %v1464
        %v1466 = vmul.f32 %v1456, 1.442695
        %v1467 = vpow.pop %v1466
        %v1468 = vmul.f32 %v1457, 1.442695
        %v1469 = vpow.pop %v1468
        %v1470 = vmul.f32 %v1458, 1.442695
        %v1471 = vpow.pop %v1470
        %v1472 = vmul.f32 %v1459, 1.442695
        %v1473 = vpow.pop %v1472
        %v1474 = vmul.f32 %v1460, 1.442695
        %v1475 = vpow.pop %v1474
        %v1476 = vmul.f32 %v1461, 1.442695
        %v1477 = vpow.pop %v1476
        %v1478 = vmul.f32 %v1067, %v1463
        %v1479 = vmul.f32 %v1068, %v1465
        %v1480 = vmul.f32 %v1069, %v1467
        %v1481 = vmul.f32 %v1070, %v1469
        %v1482 = vmul.f32 %v1071, %v1471
        %v1483 = vmul.f32 %v1072, %v1473
        %v1484 = vmul.f32 %v1073, %v1475
        %v1485 = vmul.f32 %v1074, %v1477
        %v1486 = vsel %vm922, %v1478, 0.0
        %v1487 = vrot.slane %v1486, 4
        %v1488 = vadd.f32 %v1486, %v1487
        %v1489 = vrot.slane %v1488, 2
        %v1490 = vadd.f32 %v1488, %v1489
        %v1491 = vrot.slane %v1490, 1
        %v1492 = vadd.f32 %v1490, %v1491
        %v1493 = vsel %vm922, %v1479, 0.0
        %v1494 = vrot.slane %v1493, 4
        %v1495 = vadd.f32 %v1493, %v1494
        %v1496 = vrot.slane %v1495, 2
        %v1497 = vadd.f32 %v1495, %v1496
        %v1498 = vrot.slane %v1497, 1
        %v1499 = vadd.f32 %v1497, %v1498
        %v1500 = vsel %vm922, %v1480, 0.0
        %v1501 = vrot.slane %v1500, 4
        %v1502 = vadd.f32 %v1500, %v1501
        %v1503 = vrot.slane %v1502, 2
        %v1504 = vadd.f32 %v1502, %v1503
        %v1505 = vrot.slane %v1504, 1
        %v1506 = vadd.f32 %v1504, %v1505
        %v1507 = vsel %vm922, %v1481, 0.0
        %v1508 = vrot.slane %v1507, 4
        %v1509 = vadd.f32 %v1507, %v1508
        %v1510 = vrot.slane %v1509, 2
        %v1511 = vadd.f32 %v1509, %v1510
        %v1512 = vrot.slane %v1511, 1
        %v1513 = vadd.f32 %v1511, %v1512
        %v1514 = vsel %vm922, %v1482, 0.0
        %v1515 = vrot.slane %v1514, 4
        %v1516 = vadd.f32 %v1514, %v1515
        %v1517 = vrot.slane %v1516, 2
        %v1518 = vadd.f32 %v1516, %v1517
        %v1519 = vrot.slane %v1518, 1
        %v1520 = vadd.f32 %v1518, %v1519
        %v1521 = vsel %vm922, %v1483, 0.0
        %v1522 = vrot.slane %v1521, 4
        %v1523 = vadd.f32 %v1521, %v1522
        %v1524 = vrot.slane %v1523, 2
        %v1525 = vadd.f32 %v1523, %v1524
        %v1526 = vrot.slane %v1525, 1
        %v1527 = vadd.f32 %v1525, %v1526
        %v1528 = vsel %vm922, %v1484, 0.0
        %v1529 = vrot.slane %v1528, 4
        %v1530 = vadd.f32 %v1528, %v1529
        %v1531 = vrot.slane %v1530, 2
        %v1532 = vadd.f32 %v1530, %v1531
        %v1533 = vrot.slane %v1532, 1
        %v1534 = vadd.f32 %v1532, %v1533
        %v1535 = vsel %vm922, %v1485, 0.0
        %v1536 = vrot.slane %v1535, 4
        %v1537 = vadd.f32 %v1535, %v1536
        %v1538 = vrot.slane %v1537, 2
        %v1539 = vadd.f32 %v1537, %v1538
        %v1540 = vrot.slane %v1539, 1
        %v1541 = vadd.f32 %v1539, %v1540
        %v1542 = vmax.f32 %v1492, 1e-30
        %v1543 = vmax.f32 %v1499, 1e-30
        %v1544 = vmax.f32 %v1506, 1e-30
        %v1545 = vmax.f32 %v1513, 1e-30
        %v1546 = vmax.f32 %v1520, 1e-30
        %v1547 = vmax.f32 %v1527, 1e-30
        %v1548 = vmax.f32 %v1534, 1e-30
        %v1549 = vmax.f32 %v1541, 1e-30
        %v1550 = vrcp.pop %v1542
        %v1551 = vrcp.pop %v1543
        %v1552 = vrcp.pop %v1544
        %v1553 = vrcp.pop %v1545
        %v1554 = vrcp.pop %v1546
        %v1555 = vrcp.pop %v1547
        %v1556 = vrcp.pop %v1548
        %v1557 = vrcp.pop %v1549
        %v1558 = vmul.f32 %v1463, %v1550
        %v1559 = vmul.f32 %v1465, %v1551
        %v1560 = vmul.f32 %v1467, %v1552
        %v1561 = vmul.f32 %v1469, %v1553
        %v1562 = vmul.f32 %v1471, %v1554
        %v1563 = vmul.f32 %v1473, %v1555
        %v1564 = vmul.f32 %v1475, %v1556
        %v1565 = vmul.f32 %v1477, %v1557
        %v1566 = vmul.f32 %v1067, 1.6666666
        %v1567 = vmul.f32 %v1068, 1.6666666
        %v1568 = vmul.f32 %v1069, 1.6666666
        %v1569 = vmul.f32 %v1070, 1.6666666
        %v1570 = vmul.f32 %v1071, 1.6666666
        %v1571 = vmul.f32 %v1072, 1.6666666
        %v1572 = vmul.f32 %v1073, 1.6666666
        %v1573 = vmul.f32 %v1074, 1.6666666
        %v1574 = vmul.f32 %v1566, %v1558
        %v1575 = vmul.f32 %v1567, %v1559
        %v1576 = vmul.f32 %v1568, %v1560
        %v1577 = vmul.f32 %v1569, %v1561
        %v1578 = vmul.f32 %v1570, %v1562
        %v1579 = vmul.f32 %v1571, %v1563
        %v1580 = vmul.f32 %v1572, %v1564
        %v1581 = vmul.f32 %v1573, %v1565
        %v1582 = vmul.f32 %v1574, %v1430
        %v1583 = vmul.f32 %v1575, %v1431
        %v1584 = vmul.f32 %v1576, %v1432
        %v1585 = vmul.f32 %v1577, %v1433
        %v1586 = vmul.f32 %v1578, %v1434
        %v1587 = vmul.f32 %v1579, %v1435
        %v1588 = vmul.f32 %v1580, %v1436
        %v1589 = vmul.f32 %v1581, %v1437
        %v1590 = vsel %vm922, %v1582, 0.0
        %v1591 = vsel %vm922, %v1583, 0.0
        %v1592 = vadd.f32 %v1590, %v1591
        %v1593 = vsel %vm922, %v1584, 0.0
        %v1594 = vadd.f32 %v1592, %v1593
        %v1595 = vsel %vm922, %v1585, 0.0
        %v1596 = vadd.f32 %v1594, %v1595
        %v1597 = vsel %vm922, %v1586, 0.0
        %v1598 = vadd.f32 %v1596, %v1597
        %v1599 = vsel %vm922, %v1587, 0.0
        %v1600 = vadd.f32 %v1598, %v1599
        %v1601 = vsel %vm922, %v1588, 0.0
        %v1602 = vadd.f32 %v1600, %v1601
        %v1603 = vsel %vm922, %v1589, 0.0
        %v1604 = vadd.f32 %v1602, %v1603
        %1605 = vadd.xlane.f32.xlu0 %v1604
        %v1606 = vpop.xlane.xlu0 %1605
        %1607 = vst.msk [vmem:[%s608] sm:$0x7] %vm1386, %v1606
        %v1608 = vmul.f32 %v1582, %v1582
        %v1609 = vmul.f32 %v1583, %v1583
        %v1610 = vmul.f32 %v1584, %v1584
        %v1611 = vmul.f32 %v1585, %v1585
        %v1612 = vmul.f32 %v1586, %v1586
        %v1613 = vmul.f32 %v1587, %v1587
        %v1614 = vmul.f32 %v1588, %v1588
        %v1615 = vmul.f32 %v1589, %v1589
        %v1616 = vsel %vm922, %v1608, 0.0
        %v1617 = vsel %vm922, %v1609, 0.0
        %v1618 = vadd.f32 %v1616, %v1617
        %v1619 = vsel %vm922, %v1610, 0.0
        %v1620 = vadd.f32 %v1618, %v1619
        %v1621 = vsel %vm922, %v1611, 0.0
        %v1622 = vadd.f32 %v1620, %v1621
        %v1623 = vsel %vm922, %v1612, 0.0
        %v1624 = vadd.f32 %v1622, %v1623
        %v1625 = vsel %vm922, %v1613, 0.0
        %v1626 = vadd.f32 %v1624, %v1625
        %v1627 = vsel %vm922, %v1614, 0.0
        %v1628 = vadd.f32 %v1626, %v1627
        %v1629 = vsel %vm922, %v1615, 0.0
        %v1630 = vadd.f32 %v1628, %v1629
        %1631 = vadd.xlane.f32.xlu0 %v1630
        %v1632 = vpop.xlane.xlu0 %1631
        %v1633 = vadd.f32 %v1632, 0.0
        %v1634 = vpack.c.bf16 %v1582, %v1582
        %v1635 = vpack.c.bf16 %v1583, %v1583
        %v1636 = vpack.c.bf16 %v1584, %v1584
        %v1637 = vpack.c.bf16 %v1585, %v1585
        %v1638 = vpack.c.bf16 %v1586, %v1586
        %v1639 = vpack.c.bf16 %v1587, %v1587
        %v1640 = vpack.c.bf16 %v1588, %v1588
        %v1641 = vpack.c.bf16 %v1589, %v1589
        %s1642 = scalar_lea.vmem %s531, 64 [#allocation2]
        %v1643 = vld [vmem:[%s1642] sm:$0xff]
        %v1644 = vld [vmem:[%s1642 + $0x8] sm:$0xff]
        %v1645 = vld [vmem:[%s1642 + $0x10] sm:$0xff]
        %v1646 = vld [vmem:[%s1642 + $0x18] sm:$0xff]
        %v1647 = vld [vmem:[%s1642 + $0x20] sm:$0xff]
        %v1648 = vld [vmem:[%s1642 + $0x28] sm:$0xff]
        %v1649 = vld [vmem:[%s1642 + $0x30] sm:$0xff]
        %v1650 = vld [vmem:[%s1642 + $0x38] sm:$0xff]
        %s1651 = scalar_lea.vmem %s538, 8 [#allocation3]
        %v1652 = vld [vmem:[%s1651] sm:$0xff]
        %v1654 = vlaneseq
        %v1655 = vshrl.u32 %v1654, 7
        %v1656 = vsub.s32 0, %v1655
        %v1657 = vrot.slane %v1652, %v1656
        %v1658 = vlaneseq
        %v1659 = vshrl.u32 %v1658, 7
        %v1660 = vsub.s32 1, %v1659
        %v1661 = vrot.slane %v1652, %v1660
        %v1662 = vlaneseq
        %v1663 = vshrl.u32 %v1662, 7
        %v1664 = vsub.s32 2, %v1663
        %v1665 = vrot.slane %v1652, %v1664
        %v1666 = vlaneseq
        %v1667 = vshrl.u32 %v1666, 7
        %v1668 = vsub.s32 3, %v1667
        %v1669 = vrot.slane %v1652, %v1668
        %v1670 = vlaneseq
        %v1671 = vshrl.u32 %v1670, 7
        %v1672 = vsub.s32 4, %v1671
        %v1673 = vrot.slane %v1652, %v1672
        %v1674 = vlaneseq
        %v1675 = vshrl.u32 %v1674, 7
        %v1676 = vsub.s32 5, %v1675
        %v1677 = vrot.slane %v1652, %v1676
        %v1678 = vlaneseq
        %v1679 = vshrl.u32 %v1678, 7
        %v1680 = vsub.s32 6, %v1679
        %v1681 = vrot.slane %v1652, %v1680
        %v1682 = vlaneseq
        %v1683 = vshrl.u32 %v1682, 7
        %v1684 = vsub.s32 7, %v1683
        %v1685 = vrot.slane %v1652, %v1684
        %v1702 = vunpack.c.l.b16 %v1643
        %v1703 = vunpack.c.h.b16 %v1643
        %v1704 = vunpack.c.l.b16 %v1644
        %v1705 = vunpack.c.h.b16 %v1644
        %v1706 = vunpack.c.l.b16 %v1645
        %v1707 = vunpack.c.h.b16 %v1645
        %v1708 = vunpack.c.l.b16 %v1646
        %v1709 = vunpack.c.h.b16 %v1646
        %v1710 = vunpack.c.l.b16 %v1647
        %v1711 = vunpack.c.h.b16 %v1647
        %v1712 = vunpack.c.l.b16 %v1648
        %v1713 = vunpack.c.h.b16 %v1648
        %v1714 = vunpack.c.l.b16 %v1649
        %v1715 = vunpack.c.h.b16 %v1649
        %v1716 = vunpack.c.l.b16 %v1650
        %v1717 = vunpack.c.h.b16 %v1650
        %v1718 = vpack.c.b16 %v1710, %v1702
        %v1719 = vpack.c.b16 %v1711, %v1703
        %v1720 = vpack.c.b16 %v1712, %v1704
        %v1721 = vpack.c.b16 %v1713, %v1705
        %v1722 = vpack.c.b16 %v1714, %v1706
        %v1723 = vpack.c.b16 %v1715, %v1707
        %v1724 = vpack.c.b16 %v1716, %v1708
        %v1725 = vpack.c.b16 %v1717, %v1709
        %1734 = vmatprep.subr.bf16.mxu0 %v1719
        %1735 = vmatpush1.bf16.msra.mxu0 %v1718
        %1736 = vmatprep.subr.bf16.mxu0 0
        %1737 = vmatpush1.bf16.msra.mxu0 0
        %1738 = vmatprep.subr.bf16.mxu0 0
        %1739 = vmatpush1.bf16.msra.mxu0 0
        %1740 = vmatprep.subr.bf16.mxu0 0
        %1741 = vmatpush1.bf16.msra.mxu0 0
        %1742 = vmatprep.subr.bf16.mxu0 0
        %1743 = vmatpush1.bf16.msra.mxu0 0
        %1744 = vmatprep.subr.bf16.mxu0 0
        %1745 = vmatpush1.bf16.msra.mxu0 0
        %1746 = vmatprep.subr.bf16.mxu0 0
        %1747 = vmatpush1.bf16.msra.mxu0 0
        %1748 = vmatprep.subr.bf16.mxu0 0
        %1749 = vmatpush1.bf16.msra.mxu0 0
        %1750 = vmatprep.subr.bf16.mxu0 0
        %1751 = vmatpush1.bf16.msra.mxu0 0
        %1752 = vmatprep.subr.bf16.mxu0 0
        %1753 = vmatpush1.bf16.msra.mxu0 0
        %1754 = vmatprep.subr.bf16.mxu0 0
        %1755 = vmatpush1.bf16.msra.mxu0 0
        %1756 = vmatprep.subr.bf16.mxu0 0
        %1757 = vmatpush1.bf16.msra.mxu0 0
        %1758 = vmatprep.subr.bf16.mxu0 0
        %1759 = vmatpush1.bf16.msra.mxu0 0
        %1760 = vmatprep.subr.bf16.mxu0 0
        %1761 = vmatpush1.bf16.msra.mxu0 0
        %1762 = vmatprep.subr.bf16.mxu0 0
        %1763 = vmatpush1.bf16.msra.mxu0 0
        %1764 = vmatprep.subr.bf16.mxu0 0
        %1765 = vmatpush1.bf16.msra.mxu0 0
        %1766 = vmatprep.mubr.bf16.mxu0 0
        %1767 = vmatmul.mubr.bf16.gmra.mrb[0].mxu0 %v756
        %v1768 = vpop.f32.mrb[0].mxu0
        %v1769 = vadd.f32 %v1657, %v1768
        %v1770 = vpop.f32.mrb[0].mxu0
        %v1771 = vadd.f32 %v1661, %v1770
        %v1772 = vpop.f32.mrb[0].mxu0
        %v1773 = vpop.f32.mrb[0].mxu0
        %1774 = vdwg.mxu0
        %1775 = vmatprep.subr.bf16.mxu0 %v1721
        %1776 = vmatpush1.bf16.msra.mxu0 %v1720
        %1777 = vmatprep.subr.bf16.mxu0 0
        %1778 = vmatpush1.bf16.msra.mxu0 0
        %1779 = vmatprep.subr.bf16.mxu0 0
        %1780 = vmatpush1.bf16.msra.mxu0 0
        %1781 = vmatprep.subr.bf16.mxu0 0
        %1782 = vmatpush1.bf16.msra.mxu0 0
        %1783 = vmatprep.subr.bf16.mxu0 0
        %1784 = vmatpush1.bf16.msra.mxu0 0
        %1785 = vmatprep.subr.bf16.mxu0 0
        %1786 = vmatpush1.bf16.msra.mxu0 0
        %1787 = vmatprep.subr.bf16.mxu0 0
        %1788 = vmatpush1.bf16.msra.mxu0 0
        %1789 = vmatprep.subr.bf16.mxu0 0
        %1790 = vmatpush1.bf16.msra.mxu0 0
        %1791 = vmatprep.subr.bf16.mxu0 0
        %1792 = vmatpush1.bf16.msra.mxu0 0
        %1793 = vmatprep.subr.bf16.mxu0 0
        %1794 = vmatpush1.bf16.msra.mxu0 0
        %1795 = vmatprep.subr.bf16.mxu0 0
        %1796 = vmatpush1.bf16.msra.mxu0 0
        %1797 = vmatprep.subr.bf16.mxu0 0
        %1798 = vmatpush1.bf16.msra.mxu0 0
        %1799 = vmatprep.subr.bf16.mxu0 0
        %1800 = vmatpush1.bf16.msra.mxu0 0
        %1801 = vmatprep.subr.bf16.mxu0 0
        %1802 = vmatpush1.bf16.msra.mxu0 0
        %1803 = vmatprep.subr.bf16.mxu0 0
        %1804 = vmatpush1.bf16.msra.mxu0 0
        %1805 = vmatprep.subr.bf16.mxu0 0
        %1806 = vmatpush1.bf16.msra.mxu0 0
        %1807 = vmatprep.mubr.bf16.mxu0 0
        %1808 = vmatmul.mubr.bf16.gmra.mrb[0].mxu0 %v756
        %v1809 = vpop.f32.mrb[0].mxu0
        %v1810 = vadd.f32 %v1665, %v1809
        %v1811 = vpop.f32.mrb[0].mxu0
        %v1812 = vadd.f32 %v1669, %v1811
        %v1813 = vpop.f32.mrb[0].mxu0
        %v1814 = vpop.f32.mrb[0].mxu0
        %1815 = vdwg.mxu0
        %1816 = vmatprep.subr.bf16.mxu0 %v1723
        %1817 = vmatpush1.bf16.msra.mxu0 %v1722
        %1818 = vmatprep.subr.bf16.mxu0 0
        %1819 = vmatpush1.bf16.msra.mxu0 0
        %1820 = vmatprep.subr.bf16.mxu0 0
        %1821 = vmatpush1.bf16.msra.mxu0 0
        %1822 = vmatprep.subr.bf16.mxu0 0
        %1823 = vmatpush1.bf16.msra.mxu0 0
        %1824 = vmatprep.subr.bf16.mxu0 0
        %1825 = vmatpush1.bf16.msra.mxu0 0
        %1826 = vmatprep.subr.bf16.mxu0 0
        %1827 = vmatpush1.bf16.msra.mxu0 0
        %1828 = vmatprep.subr.bf16.mxu0 0
        %1829 = vmatpush1.bf16.msra.mxu0 0
        %1830 = vmatprep.subr.bf16.mxu0 0
        %1831 = vmatpush1.bf16.msra.mxu0 0
        %1832 = vmatprep.subr.bf16.mxu0 0
        %1833 = vmatpush1.bf16.msra.mxu0 0
        %1834 = vmatprep.subr.bf16.mxu0 0
        %1835 = vmatpush1.bf16.msra.mxu0 0
        %1836 = vmatprep.subr.bf16.mxu0 0
        %1837 = vmatpush1.bf16.msra.mxu0 0
        %1838 = vmatprep.subr.bf16.mxu0 0
        %1839 = vmatpush1.bf16.msra.mxu0 0
        %1840 = vmatprep.subr.bf16.mxu0 0
        %1841 = vmatpush1.bf16.msra.mxu0 0
        %1842 = vmatprep.subr.bf16.mxu0 0
        %1843 = vmatpush1.bf16.msra.mxu0 0
        %1844 = vmatprep.subr.bf16.mxu0 0
        %1845 = vmatpush1.bf16.msra.mxu0 0
        %1846 = vmatprep.subr.bf16.mxu0 0
        %1847 = vmatpush1.bf16.msra.mxu0 0
        %1848 = vmatprep.mubr.bf16.mxu0 0
        %1849 = vmatmul.mubr.bf16.gmra.mrb[0].mxu0 %v756
        %v1850 = vpop.f32.mrb[0].mxu0
        %v1851 = vadd.f32 %v1673, %v1850
        %v1852 = vpop.f32.mrb[0].mxu0
        %v1853 = vadd.f32 %v1677, %v1852
        %v1854 = vpop.f32.mrb[0].mxu0
        %v1855 = vpop.f32.mrb[0].mxu0
        %1856 = vdwg.mxu0
        %1857 = vmatprep.subr.bf16.mxu0 %v1725
        %1858 = vmatpush1.bf16.msra.mxu0 %v1724
        %1859 = vmatprep.subr.bf16.mxu0 0
        %1860 = vmatpush1.bf16.msra.mxu0 0
        %1861 = vmatprep.subr.bf16.mxu0 0
        %1862 = vmatpush1.bf16.msra.mxu0 0
        %1863 = vmatprep.subr.bf16.mxu0 0
        %1864 = vmatpush1.bf16.msra.mxu0 0
        %1865 = vmatprep.subr.bf16.mxu0 0
        %1866 = vmatpush1.bf16.msra.mxu0 0
        %1867 = vmatprep.subr.bf16.mxu0 0
        %1868 = vmatpush1.bf16.msra.mxu0 0
        %1869 = vmatprep.subr.bf16.mxu0 0
        %1870 = vmatpush1.bf16.msra.mxu0 0
        %1871 = vmatprep.subr.bf16.mxu0 0
        %1872 = vmatpush1.bf16.msra.mxu0 0
        %1873 = vmatprep.subr.bf16.mxu0 0
        %1874 = vmatpush1.bf16.msra.mxu0 0
        %1875 = vmatprep.subr.bf16.mxu0 0
        %1876 = vmatpush1.bf16.msra.mxu0 0
        %1877 = vmatprep.subr.bf16.mxu0 0
        %1878 = vmatpush1.bf16.msra.mxu0 0
        %1879 = vmatprep.subr.bf16.mxu0 0
        %1880 = vmatpush1.bf16.msra.mxu0 0
        %1881 = vmatprep.subr.bf16.mxu0 0
        %1882 = vmatpush1.bf16.msra.mxu0 0
        %1883 = vmatprep.subr.bf16.mxu0 0
        %1884 = vmatpush1.bf16.msra.mxu0 0
        %1885 = vmatprep.subr.bf16.mxu0 0
        %1886 = vmatpush1.bf16.msra.mxu0 0
        %1887 = vmatprep.subr.bf16.mxu0 0
        %1888 = vmatpush1.bf16.msra.mxu0 0
        %1889 = vmatprep.mubr.bf16.mxu0 0
        %1890 = vmatmul.mubr.bf16.gmra.mrb[0].mxu0 %v756
        %v1891 = vpop.f32.mrb[0].mxu0
        %v1892 = vadd.f32 %v1681, %v1891
        %v1893 = vpop.f32.mrb[0].mxu0
        %v1894 = vadd.f32 %v1685, %v1893
        %v1895 = vpop.f32.mrb[0].mxu0
        %v1896 = vpop.f32.mrb[0].mxu0
        %1897 = vdwg.mxu0
        %v1906 = vcombine.low %v1769, %v1771
        %v1907 = vcombine.low %v1810, %v1812
        %v1908 = vcombine.low %v1851, %v1853
        %v1909 = vcombine.low %v1892, %v1894
        %s1914 = scalar_lea.vmem %s576, 32 [#allocation4]
        %1915 = vst [vmem:[%s1914] sm:$0x77] %v1906
        %1916 = vst [vmem:[%s1914 + $0x8] sm:$0x77] %v1907
        %1917 = vst [vmem:[%s1914 + $0x10] sm:$0x77] %v1908
        %1918 = vst [vmem:[%s1914 + $0x18] sm:$0x77] %v1909
        %v1919 = vsel %vm922, %v1769, 0.0
        %v1920 = vsel %vm922, %v1771, 0.0
        %v1921 = vadd.f32 %v1919, %v1920
        %v1922 = vsel %vm922, %v1810, 0.0
        %v1923 = vadd.f32 %v1921, %v1922
        %v1924 = vsel %vm922, %v1812, 0.0
        %v1925 = vadd.f32 %v1923, %v1924
        %v1926 = vsel %vm922, %v1851, 0.0
        %v1927 = vadd.f32 %v1925, %v1926
        %v1928 = vsel %vm922, %v1853, 0.0
        %v1929 = vadd.f32 %v1927, %v1928
        %v1930 = vsel %vm922, %v1892, 0.0
        %v1931 = vadd.f32 %v1929, %v1930
        %v1932 = vsel %vm922, %v1894, 0.0
        %v1933 = vadd.f32 %v1931, %v1932
        %1934 = vadd.xlane.f32.xlu0 %v1933
        %v1935 = vpop.xlane.xlu0 %1934
        %vm1936 = vcmask 10248
        %1937 = vst.msk [vmem:[%s601] sm:$0x7] %vm1936, %v1935
        %s1938 = scalar_lea.vmem %s639, 1
        %v1939 = vld [vmem:[%s1938] ss:$4 sm:$0xff]
        %v1941 = vlaneseq
        %v1942 = vshrl.u32 %v1941, 7
        %v1943 = vsub.s32 0, %v1942
        %v1944 = vrot.slane %v1939, %v1943
        %v1945 = vlaneseq
        %v1946 = vshrl.u32 %v1945, 7
        %v1947 = vsub.s32 1, %v1946
        %v1948 = vrot.slane %v1939, %v1947
        %v1949 = vlaneseq
        %v1950 = vshrl.u32 %v1949, 7
        %v1951 = vsub.s32 2, %v1950
        %v1952 = vrot.slane %v1939, %v1951
        %v1953 = vlaneseq
        %v1954 = vshrl.u32 %v1953, 7
        %v1955 = vsub.s32 3, %v1954
        %v1956 = vrot.slane %v1939, %v1955
        %v1957 = vlaneseq
        %v1958 = vshrl.u32 %v1957, 7
        %v1959 = vsub.s32 4, %v1958
        %v1960 = vrot.slane %v1939, %v1959
        %v1961 = vlaneseq
        %v1962 = vshrl.u32 %v1961, 7
        %v1963 = vsub.s32 5, %v1962
        %v1964 = vrot.slane %v1939, %v1963
        %v1965 = vlaneseq
        %v1966 = vshrl.u32 %v1965, 7
        %v1967 = vsub.s32 6, %v1966
        %v1968 = vrot.slane %v1939, %v1967
        %v1969 = vlaneseq
        %v1970 = vshrl.u32 %v1969, 7
        %v1971 = vsub.s32 7, %v1970
        %v1972 = vrot.slane %v1939, %v1971
        %v1981 = vsub.f32 %v1769, %v1944
        %v1982 = vsub.f32 %v1771, %v1948
        %v1983 = vsub.f32 %v1810, %v1952
        %v1984 = vsub.f32 %v1812, %v1956
        %v1985 = vsub.f32 %v1851, %v1960
        %v1986 = vsub.f32 %v1853, %v1964
        %v1987 = vsub.f32 %v1892, %v1968
        %v1988 = vsub.f32 %v1894, %v1972
        %v1989 = vmul.f32 %v1981, %v1981
        %v1990 = vmul.f32 %v1982, %v1982
        %v1991 = vmul.f32 %v1983, %v1983
        %v1992 = vmul.f32 %v1984, %v1984
        %v1993 = vmul.f32 %v1985, %v1985
        %v1994 = vmul.f32 %v1986, %v1986
        %v1995 = vmul.f32 %v1987, %v1987
        %v1996 = vmul.f32 %v1988, %v1988
        %v1997 = vsub.f32 0.0, %v1989
        %v1998 = vsub.f32 0.0, %v1990
        %v1999 = vsub.f32 0.0, %v1991
        %v2000 = vsub.f32 0.0, %v1992
        %v2001 = vsub.f32 0.0, %v1993
        %v2002 = vsub.f32 0.0, %v1994
        %v2003 = vsub.f32 0.0, %v1995
        %v2004 = vsub.f32 0.0, %v1996
        %v2005 = vmul.f32 %v1997, 1.6666666
        %v2006 = vmul.f32 %v1998, 1.6666666
        %v2007 = vmul.f32 %v1999, 1.6666666
        %v2008 = vmul.f32 %v2000, 1.6666666
        %v2009 = vmul.f32 %v2001, 1.6666666
        %v2010 = vmul.f32 %v2002, 1.6666666
        %v2011 = vmul.f32 %v2003, 1.6666666
        %v2012 = vmul.f32 %v2004, 1.6666666
        %v2013 = vmul.f32 %v2005, 1.442695
        %v2014 = vpow.pop %v2013
        %v2015 = vmul.f32 %v2006, 1.442695
        %v2016 = vpow.pop %v2015
        %v2017 = vmul.f32 %v2007, 1.442695
        %v2018 = vpow.pop %v2017
        %v2019 = vmul.f32 %v2008, 1.442695
        %v2020 = vpow.pop %v2019
        %v2021 = vmul.f32 %v2009, 1.442695
        %v2022 = vpow.pop %v2021
        %v2023 = vmul.f32 %v2010, 1.442695
        %v2024 = vpow.pop %v2023
        %v2025 = vmul.f32 %v2011, 1.442695
        %v2026 = vpow.pop %v2025
        %v2027 = vmul.f32 %v2012, 1.442695
        %v2028 = vpow.pop %v2027
        %v2029 = vmul.f32 %v1463, %v2014
        %v2030 = vmul.f32 %v1465, %v2016
        %v2031 = vmul.f32 %v1467, %v2018
        %v2032 = vmul.f32 %v1469, %v2020
        %v2033 = vmul.f32 %v1471, %v2022
        %v2034 = vmul.f32 %v1473, %v2024
        %v2035 = vmul.f32 %v1475, %v2026
        %v2036 = vmul.f32 %v1477, %v2028
        %v2037 = vmul.f32 %v1067, %v2014
        %v2038 = vmul.f32 %v1068, %v2016
        %v2039 = vmul.f32 %v1069, %v2018
        %v2040 = vmul.f32 %v1070, %v2020
        %v2041 = vmul.f32 %v1071, %v2022
        %v2042 = vmul.f32 %v1072, %v2024
        %v2043 = vmul.f32 %v1073, %v2026
        %v2044 = vmul.f32 %v1074, %v2028
        %v2045 = vsel %vm922, %v2037, 0.0
        %v2046 = vrot.slane %v2045, 4
        %v2047 = vadd.f32 %v2045, %v2046
        %v2048 = vrot.slane %v2047, 2
        %v2049 = vadd.f32 %v2047, %v2048
        %v2050 = vrot.slane %v2049, 1
        %v2051 = vadd.f32 %v2049, %v2050
        %v2052 = vsel %vm922, %v2038, 0.0
        %v2053 = vrot.slane %v2052, 4
        %v2054 = vadd.f32 %v2052, %v2053
        %v2055 = vrot.slane %v2054, 2
        %v2056 = vadd.f32 %v2054, %v2055
        %v2057 = vrot.slane %v2056, 1
        %v2058 = vadd.f32 %v2056, %v2057
        %v2059 = vsel %vm922, %v2039, 0.0
        %v2060 = vrot.slane %v2059, 4
        %v2061 = vadd.f32 %v2059, %v2060
        %v2062 = vrot.slane %v2061, 2
        %v2063 = vadd.f32 %v2061, %v2062
        %v2064 = vrot.slane %v2063, 1
        %v2065 = vadd.f32 %v2063, %v2064
        %v2066 = vsel %vm922, %v2040, 0.0
        %v2067 = vrot.slane %v2066, 4
        %v2068 = vadd.f32 %v2066, %v2067
        %v2069 = vrot.slane %v2068, 2
        %v2070 = vadd.f32 %v2068, %v2069
        %v2071 = vrot.slane %v2070, 1
        %v2072 = vadd.f32 %v2070, %v2071
        %v2073 = vsel %vm922, %v2041, 0.0
        %v2074 = vrot.slane %v2073, 4
        %v2075 = vadd.f32 %v2073, %v2074
        %v2076 = vrot.slane %v2075, 2
        %v2077 = vadd.f32 %v2075, %v2076
        %v2078 = vrot.slane %v2077, 1
        %v2079 = vadd.f32 %v2077, %v2078
        %v2080 = vsel %vm922, %v2042, 0.0
        %v2081 = vrot.slane %v2080, 4
        %v2082 = vadd.f32 %v2080, %v2081
        %v2083 = vrot.slane %v2082, 2
        %v2084 = vadd.f32 %v2082, %v2083
        %v2085 = vrot.slane %v2084, 1
        %v2086 = vadd.f32 %v2084, %v2085
        %v2087 = vsel %vm922, %v2043, 0.0
        %v2088 = vrot.slane %v2087, 4
        %v2089 = vadd.f32 %v2087, %v2088
        %v2090 = vrot.slane %v2089, 2
        %v2091 = vadd.f32 %v2089, %v2090
        %v2092 = vrot.slane %v2091, 1
        %v2093 = vadd.f32 %v2091, %v2092
        %v2094 = vsel %vm922, %v2044, 0.0
        %v2095 = vrot.slane %v2094, 4
        %v2096 = vadd.f32 %v2094, %v2095
        %v2097 = vrot.slane %v2096, 2
        %v2098 = vadd.f32 %v2096, %v2097
        %v2099 = vrot.slane %v2098, 1
        %v2100 = vadd.f32 %v2098, %v2099
        %v2101 = vmax.f32 %v2051, 1e-30
        %v2102 = vmax.f32 %v2058, 1e-30
        %v2103 = vmax.f32 %v2065, 1e-30
        %v2104 = vmax.f32 %v2072, 1e-30
        %v2105 = vmax.f32 %v2079, 1e-30
        %v2106 = vmax.f32 %v2086, 1e-30
        %v2107 = vmax.f32 %v2093, 1e-30
        %v2108 = vmax.f32 %v2100, 1e-30
        %v2109 = vmul.f32 %v1542, %v2101
        %v2110 = vmul.f32 %v1543, %v2102
        %v2111 = vmul.f32 %v1544, %v2103
        %v2112 = vmul.f32 %v1545, %v2104
        %v2113 = vmul.f32 %v1546, %v2105
        %v2114 = vmul.f32 %v1547, %v2106
        %v2115 = vmul.f32 %v1548, %v2107
        %v2116 = vmul.f32 %v1549, %v2108
        %v2117 = vrcp.pop %v2101
        %v2118 = vrcp.pop %v2102
        %v2119 = vrcp.pop %v2103
        %v2120 = vrcp.pop %v2104
        %v2121 = vrcp.pop %v2105
        %v2122 = vrcp.pop %v2106
        %v2123 = vrcp.pop %v2107
        %v2124 = vrcp.pop %v2108
        %v2125 = vmul.f32 %v2014, %v2117
        %v2126 = vmul.f32 %v2016, %v2118
        %v2127 = vmul.f32 %v2018, %v2119
        %v2128 = vmul.f32 %v2020, %v2120
        %v2129 = vmul.f32 %v2022, %v2121
        %v2130 = vmul.f32 %v2024, %v2122
        %v2131 = vmul.f32 %v2026, %v2123
        %v2132 = vmul.f32 %v2028, %v2124
        %v2133 = vadd.f32 %v1558, %v2125
        %v2134 = vadd.f32 %v1559, %v2126
        %v2135 = vadd.f32 %v1560, %v2127
        %v2136 = vadd.f32 %v1561, %v2128
        %v2137 = vadd.f32 %v1562, %v2129
        %v2138 = vadd.f32 %v1563, %v2130
        %v2139 = vadd.f32 %v1564, %v2131
        %v2140 = vadd.f32 %v1565, %v2132
        %v2141 = vmul.f32 %v1566, %v2125
        %v2142 = vmul.f32 %v1567, %v2126
        %v2143 = vmul.f32 %v1568, %v2127
        %v2144 = vmul.f32 %v1569, %v2128
        %v2145 = vmul.f32 %v1570, %v2129
        %v2146 = vmul.f32 %v1571, %v2130
        %v2147 = vmul.f32 %v1572, %v2131
        %v2148 = vmul.f32 %v1573, %v2132
        %v2149 = vmul.f32 %v2141, %v1981
        %v2150 = vmul.f32 %v2142, %v1982
        %v2151 = vmul.f32 %v2143, %v1983
        %v2152 = vmul.f32 %v2144, %v1984
        %v2153 = vmul.f32 %v2145, %v1985
        %v2154 = vmul.f32 %v2146, %v1986
        %v2155 = vmul.f32 %v2147, %v1987
        %v2156 = vmul.f32 %v2148, %v1988
        %v2157 = vsel %vm922, %v2149, 0.0
        %v2158 = vsel %vm922, %v2150, 0.0
        %v2159 = vadd.f32 %v2157, %v2158
        %v2160 = vsel %vm922, %v2151, 0.0
        %v2161 = vadd.f32 %v2159, %v2160
        %v2162 = vsel %vm922, %v2152, 0.0
        %v2163 = vadd.f32 %v2161, %v2162
        %v2164 = vsel %vm922, %v2153, 0.0
        %v2165 = vadd.f32 %v2163, %v2164
        %v2166 = vsel %vm922, %v2154, 0.0
        %v2167 = vadd.f32 %v2165, %v2166
        %v2168 = vsel %vm922, %v2155, 0.0
        %v2169 = vadd.f32 %v2167, %v2168
        %v2170 = vsel %vm922, %v2156, 0.0
        %v2171 = vadd.f32 %v2169, %v2170
        %2172 = vadd.xlane.f32.xlu0 %v2171
        %v2173 = vpop.xlane.xlu0 %2172
        %2174 = vst.msk [vmem:[%s608] sm:$0x7] %vm1936, %v2173
        %v2175 = vmul.f32 %v2149, %v2149
        %v2176 = vmul.f32 %v2150, %v2150
        %v2177 = vmul.f32 %v2151, %v2151
        %v2178 = vmul.f32 %v2152, %v2152
        %v2179 = vmul.f32 %v2153, %v2153
        %v2180 = vmul.f32 %v2154, %v2154
        %v2181 = vmul.f32 %v2155, %v2155
        %v2182 = vmul.f32 %v2156, %v2156
        %v2183 = vsel %vm922, %v2175, 0.0
        %v2184 = vsel %vm922, %v2176, 0.0
        %v2185 = vadd.f32 %v2183, %v2184
        %v2186 = vsel %vm922, %v2177, 0.0
        %v2187 = vadd.f32 %v2185, %v2186
        %v2188 = vsel %vm922, %v2178, 0.0
        %v2189 = vadd.f32 %v2187, %v2188
        %v2190 = vsel %vm922, %v2179, 0.0
        %v2191 = vadd.f32 %v2189, %v2190
        %v2192 = vsel %vm922, %v2180, 0.0
        %v2193 = vadd.f32 %v2191, %v2192
        %v2194 = vsel %vm922, %v2181, 0.0
        %v2195 = vadd.f32 %v2193, %v2194
        %v2196 = vsel %vm922, %v2182, 0.0
        %v2197 = vadd.f32 %v2195, %v2196
        %2198 = vadd.xlane.f32.xlu0 %v2197
        %v2199 = vpop.xlane.xlu0 %2198
        %v2200 = vadd.f32 %v1633, %v2199
        %v2201 = vpack.c.bf16 %v2149, %v2149
        %v2202 = vpack.c.bf16 %v2150, %v2150
        %v2203 = vpack.c.bf16 %v2151, %v2151
        %v2204 = vpack.c.bf16 %v2152, %v2152
        %v2205 = vpack.c.bf16 %v2153, %v2153
        %v2206 = vpack.c.bf16 %v2154, %v2154
        %v2207 = vpack.c.bf16 %v2155, %v2155
        %v2208 = vpack.c.bf16 %v2156, %v2156
        %2209 = vmatprep.subr.bf16.mxu0 %v1719
        %2210 = vmatpush1.bf16.xpose.msra.mxu0 %v1718
        %2211 = vmatprep.subr.bf16.mxu0 0
        %2212 = vmatpush1.bf16.xpose.msra.mxu0 0
        %2213 = vmatprep.subr.bf16.mxu0 0
        %2214 = vmatpush1.bf16.xpose.msra.mxu0 0
        %2215 = vmatprep.subr.bf16.mxu0 0
        %2216 = vmatpush1.bf16.xpose.msra.mxu0 0
        %2217 = vmatprep.subr.bf16.mxu0 0
        %2218 = vmatpush1.bf16.xpose.msra.mxu0 0
        %2219 = vmatprep.subr.bf16.mxu0 0
        %2220 = vmatpush1.bf16.xpose.msra.mxu0 0
        %2221 = vmatprep.subr.bf16.mxu0 0
        %2222 = vmatpush1.bf16.xpose.msra.mxu0 0
        %2223 = vmatprep.subr.bf16.mxu0 0
        %2224 = vmatpush1.bf16.xpose.msra.mxu0 0
        %2225 = vmatprep.subr.bf16.mxu0 0
        %2226 = vmatpush1.bf16.xpose.msra.mxu0 0
        %2227 = vmatprep.subr.bf16.mxu0 0
        %2228 = vmatpush1.bf16.xpose.msra.mxu0 0
        %2229 = vmatprep.subr.bf16.mxu0 0
        %2230 = vmatpush1.bf16.xpose.msra.mxu0 0
        %2231 = vmatprep.subr.bf16.mxu0 0
        %2232 = vmatpush1.bf16.xpose.msra.mxu0 0
        %2233 = vmatprep.subr.bf16.mxu0 0
        %2234 = vmatpush1.bf16.xpose.msra.mxu0 0
        %2235 = vmatprep.subr.bf16.mxu0 0
        %2236 = vmatpush1.bf16.xpose.msra.mxu0 0
        %2237 = vmatprep.subr.bf16.mxu0 0
        %2238 = vmatpush1.bf16.xpose.msra.mxu0 0
        %2239 = vmatprep.subr.bf16.mxu0 0
        %2240 = vmatpush1.bf16.xpose.msra.mxu0 0
        %2241 = vmatprep.mubr.bf16.mxu0 %v2202
        %2242 = vmatmul.mubr.bf16.gmra.mrb[0].mxu0 %v2201
        %v2243 = vpop.f32.mrb[0].mxu0
        %v2244 = vadd.f32 0.0, %v2243
        %v2245 = vpop.f32.mrb[0].mxu0
        %v2246 = vpop.f32.mrb[0].mxu0
        %v2247 = vpop.f32.mrb[0].mxu0
        %2248 = vdwg.mxu0
        %2249 = vmatprep.subr.bf16.mxu0 %v1721
        %2250 = vmatpush1.bf16.xpose.msra.mxu0 %v1720
        %2251 = vmatprep.subr.bf16.mxu0 0
        %2252 = vmatpush1.bf16.xpose.msra.mxu0 0
        %2253 = vmatprep.subr.bf16.mxu0 0
        %2254 = vmatpush1.bf16.xpose.msra.mxu0 0
        %2255 = vmatprep.subr.bf16.mxu0 0
        %2256 = vmatpush1.bf16.xpose.msra.mxu0 0
        %2257 = vmatprep.subr.bf16.mxu0 0
        %2258 = vmatpush1.bf16.xpose.msra.mxu0 0
        %2259 = vmatprep.subr.bf16.mxu0 0
        %2260 = vmatpush1.bf16.xpose.msra.mxu0 0
        %2261 = vmatprep.subr.bf16.mxu0 0
        %2262 = vmatpush1.bf16.xpose.msra.mxu0 0
        %2263 = vmatprep.subr.bf16.mxu0 0
        %2264 = vmatpush1.bf16.xpose.msra.mxu0 0
        %2265 = vmatprep.subr.bf16.mxu0 0
        %2266 = vmatpush1.bf16.xpose.msra.mxu0 0
        %2267 = vmatprep.subr.bf16.mxu0 0
        %2268 = vmatpush1.bf16.xpose.msra.mxu0 0
        %2269 = vmatprep.subr.bf16.mxu0 0
        %2270 = vmatpush1.bf16.xpose.msra.mxu0 0
        %2271 = vmatprep.subr.bf16.mxu0 0
        %2272 = vmatpush1.bf16.xpose.msra.mxu0 0
        %2273 = vmatprep.subr.bf16.mxu0 0
        %2274 = vmatpush1.bf16.xpose.msra.mxu0 0
        %2275 = vmatprep.subr.bf16.mxu0 0
        %2276 = vmatpush1.bf16.xpose.msra.mxu0 0
        %2277 = vmatprep.subr.bf16.mxu0 0
        %2278 = vmatpush1.bf16.xpose.msra.mxu0 0
        %2279 = vmatprep.subr.bf16.mxu0 0
        %2280 = vmatpush1.bf16.xpose.msra.mxu0 0
        %2281 = vmatprep.mubr.bf16.mxu0 %v2204
        %2282 = vmatmul.mubr.bf16.gmra.mrb[0].mxu0 %v2203
        %v2283 = vpop.f32.mrb[0].mxu0
        %v2284 = vadd.f32 %v2244, %v2283
        %v2285 = vpop.f32.mrb[0].mxu0
        %v2286 = vpop.f32.mrb[0].mxu0
        %v2287 = vpop.f32.mrb[0].mxu0
        %2288 = vdwg.mxu0
        %2289 = vmatprep.subr.bf16.mxu0 %v1723
        %2290 = vmatpush1.bf16.xpose.msra.mxu0 %v1722
        %2291 = vmatprep.subr.bf16.mxu0 0
        %2292 = vmatpush1.bf16.xpose.msra.mxu0 0
        %2293 = vmatprep.subr.bf16.mxu0 0
        %2294 = vmatpush1.bf16.xpose.msra.mxu0 0
        %2295 = vmatprep.subr.bf16.mxu0 0
        %2296 = vmatpush1.bf16.xpose.msra.mxu0 0
        %2297 = vmatprep.subr.bf16.mxu0 0
        %2298 = vmatpush1.bf16.xpose.msra.mxu0 0
        %2299 = vmatprep.subr.bf16.mxu0 0
        %2300 = vmatpush1.bf16.xpose.msra.mxu0 0
        %2301 = vmatprep.subr.bf16.mxu0 0
        %2302 = vmatpush1.bf16.xpose.msra.mxu0 0
        %2303 = vmatprep.subr.bf16.mxu0 0
        %2304 = vmatpush1.bf16.xpose.msra.mxu0 0
        %2305 = vmatprep.subr.bf16.mxu0 0
        %2306 = vmatpush1.bf16.xpose.msra.mxu0 0
        %2307 = vmatprep.subr.bf16.mxu0 0
        %2308 = vmatpush1.bf16.xpose.msra.mxu0 0
        %2309 = vmatprep.subr.bf16.mxu0 0
        %2310 = vmatpush1.bf16.xpose.msra.mxu0 0
        %2311 = vmatprep.subr.bf16.mxu0 0
        %2312 = vmatpush1.bf16.xpose.msra.mxu0 0
        %2313 = vmatprep.subr.bf16.mxu0 0
        %2314 = vmatpush1.bf16.xpose.msra.mxu0 0
        %2315 = vmatprep.subr.bf16.mxu0 0
        %2316 = vmatpush1.bf16.xpose.msra.mxu0 0
        %2317 = vmatprep.subr.bf16.mxu0 0
        %2318 = vmatpush1.bf16.xpose.msra.mxu0 0
        %2319 = vmatprep.subr.bf16.mxu0 0
        %2320 = vmatpush1.bf16.xpose.msra.mxu0 0
        %2321 = vmatprep.mubr.bf16.mxu0 %v2206
        %2322 = vmatmul.mubr.bf16.gmra.mrb[0].mxu0 %v2205
        %v2323 = vpop.f32.mrb[0].mxu0
        %v2324 = vadd.f32 %v2284, %v2323
        %v2325 = vpop.f32.mrb[0].mxu0
        %v2326 = vpop.f32.mrb[0].mxu0
        %v2327 = vpop.f32.mrb[0].mxu0
        %2328 = vdwg.mxu0
        %2329 = vmatprep.subr.bf16.mxu0 %v1725
        %2330 = vmatpush1.bf16.xpose.msra.mxu0 %v1724
        %2331 = vmatprep.subr.bf16.mxu0 0
        %2332 = vmatpush1.bf16.xpose.msra.mxu0 0
        %2333 = vmatprep.subr.bf16.mxu0 0
        %2334 = vmatpush1.bf16.xpose.msra.mxu0 0
        %2335 = vmatprep.subr.bf16.mxu0 0
        %2336 = vmatpush1.bf16.xpose.msra.mxu0 0
        %2337 = vmatprep.subr.bf16.mxu0 0
        %2338 = vmatpush1.bf16.xpose.msra.mxu0 0
        %2339 = vmatprep.subr.bf16.mxu0 0
        %2340 = vmatpush1.bf16.xpose.msra.mxu0 0
        %2341 = vmatprep.subr.bf16.mxu0 0
        %2342 = vmatpush1.bf16.xpose.msra.mxu0 0
        %2343 = vmatprep.subr.bf16.mxu0 0
        %2344 = vmatpush1.bf16.xpose.msra.mxu0 0
        %2345 = vmatprep.subr.bf16.mxu0 0
        %2346 = vmatpush1.bf16.xpose.msra.mxu0 0
        %2347 = vmatprep.subr.bf16.mxu0 0
        %2348 = vmatpush1.bf16.xpose.msra.mxu0 0
        %2349 = vmatprep.subr.bf16.mxu0 0
        %2350 = vmatpush1.bf16.xpose.msra.mxu0 0
        %2351 = vmatprep.subr.bf16.mxu0 0
        %2352 = vmatpush1.bf16.xpose.msra.mxu0 0
        %2353 = vmatprep.subr.bf16.mxu0 0
        %2354 = vmatpush1.bf16.xpose.msra.mxu0 0
        %2355 = vmatprep.subr.bf16.mxu0 0
        %2356 = vmatpush1.bf16.xpose.msra.mxu0 0
        %2357 = vmatprep.subr.bf16.mxu0 0
        %2358 = vmatpush1.bf16.xpose.msra.mxu0 0
        %2359 = vmatprep.subr.bf16.mxu0 0
        %2360 = vmatpush1.bf16.xpose.msra.mxu0 0
        %2361 = vmatprep.mubr.bf16.mxu0 %v2208
        %2362 = vmatmul.mubr.bf16.gmra.mrb[0].mxu0 %v2207
        %v2363 = vpop.f32.mrb[0].mxu0
        %v2364 = vadd.f32 %v2324, %v2363
        %v2365 = vpop.f32.mrb[0].mxu0
        %v2366 = vpop.f32.mrb[0].mxu0
        %v2367 = vpop.f32.mrb[0].mxu0
        %2368 = vdwg.mxu0
        %2369 = vmatprep.subr.bf16.mxu0 %v1170
        %2370 = vmatpush1.bf16.xpose.msra.mxu0 %v1169
        %2371 = vmatprep.subr.bf16.mxu0 0
        %2372 = vmatpush1.bf16.xpose.msra.mxu0 0
        %2373 = vmatprep.subr.bf16.mxu0 0
        %2374 = vmatpush1.bf16.xpose.msra.mxu0 0
        %2375 = vmatprep.subr.bf16.mxu0 0
        %2376 = vmatpush1.bf16.xpose.msra.mxu0 0
        %2377 = vmatprep.subr.bf16.mxu0 0
        %2378 = vmatpush1.bf16.xpose.msra.mxu0 0
        %2379 = vmatprep.subr.bf16.mxu0 0
        %2380 = vmatpush1.bf16.xpose.msra.mxu0 0
        %2381 = vmatprep.subr.bf16.mxu0 0
        %2382 = vmatpush1.bf16.xpose.msra.mxu0 0
        %2383 = vmatprep.subr.bf16.mxu0 0
        %2384 = vmatpush1.bf16.xpose.msra.mxu0 0
        %2385 = vmatprep.subr.bf16.mxu0 0
        %2386 = vmatpush1.bf16.xpose.msra.mxu0 0
        %2387 = vmatprep.subr.bf16.mxu0 0
        %2388 = vmatpush1.bf16.xpose.msra.mxu0 0
        %2389 = vmatprep.subr.bf16.mxu0 0
        %2390 = vmatpush1.bf16.xpose.msra.mxu0 0
        %2391 = vmatprep.subr.bf16.mxu0 0
        %2392 = vmatpush1.bf16.xpose.msra.mxu0 0
        %2393 = vmatprep.subr.bf16.mxu0 0
        %2394 = vmatpush1.bf16.xpose.msra.mxu0 0
        %2395 = vmatprep.subr.bf16.mxu0 0
        %2396 = vmatpush1.bf16.xpose.msra.mxu0 0
        %2397 = vmatprep.subr.bf16.mxu0 0
        %2398 = vmatpush1.bf16.xpose.msra.mxu0 0
        %2399 = vmatprep.subr.bf16.mxu0 0
        %2400 = vmatpush1.bf16.xpose.msra.mxu0 0
        %2401 = vmatprep.mubr.bf16.mxu0 %v1635
        %2402 = vmatmul.mubr.bf16.gmra.mrb[0].mxu0 %v1634
        %v2403 = vpop.f32.mrb[0].mxu0
        %v2404 = vadd.f32 %v2364, %v2403
        %v2405 = vpop.f32.mrb[0].mxu0
        %v2406 = vpop.f32.mrb[0].mxu0
        %v2407 = vpop.f32.mrb[0].mxu0
        %2408 = vdwg.mxu0
        %2409 = vmatprep.subr.bf16.mxu0 %v1172
        %2410 = vmatpush1.bf16.xpose.msra.mxu0 %v1171
        %2411 = vmatprep.subr.bf16.mxu0 0
        %2412 = vmatpush1.bf16.xpose.msra.mxu0 0
        %2413 = vmatprep.subr.bf16.mxu0 0
        %2414 = vmatpush1.bf16.xpose.msra.mxu0 0
        %2415 = vmatprep.subr.bf16.mxu0 0
        %2416 = vmatpush1.bf16.xpose.msra.mxu0 0
        %2417 = vmatprep.subr.bf16.mxu0 0
        %2418 = vmatpush1.bf16.xpose.msra.mxu0 0
        %2419 = vmatprep.subr.bf16.mxu0 0
        %2420 = vmatpush1.bf16.xpose.msra.mxu0 0
        %2421 = vmatprep.subr.bf16.mxu0 0
        %2422 = vmatpush1.bf16.xpose.msra.mxu0 0
        %2423 = vmatprep.subr.bf16.mxu0 0
        %2424 = vmatpush1.bf16.xpose.msra.mxu0 0
        %2425 = vmatprep.subr.bf16.mxu0 0
        %2426 = vmatpush1.bf16.xpose.msra.mxu0 0
        %2427 = vmatprep.subr.bf16.mxu0 0
        %2428 = vmatpush1.bf16.xpose.msra.mxu0 0
        %2429 = vmatprep.subr.bf16.mxu0 0
        %2430 = vmatpush1.bf16.xpose.msra.mxu0 0
        %2431 = vmatprep.subr.bf16.mxu0 0
        %2432 = vmatpush1.bf16.xpose.msra.mxu0 0
        %2433 = vmatprep.subr.bf16.mxu0 0
        %2434 = vmatpush1.bf16.xpose.msra.mxu0 0
        %2435 = vmatprep.subr.bf16.mxu0 0
        %2436 = vmatpush1.bf16.xpose.msra.mxu0 0
        %2437 = vmatprep.subr.bf16.mxu0 0
        %2438 = vmatpush1.bf16.xpose.msra.mxu0 0
        %2439 = vmatprep.subr.bf16.mxu0 0
        %2440 = vmatpush1.bf16.xpose.msra.mxu0 0
        %2441 = vmatprep.mubr.bf16.mxu0 %v1637
        %2442 = vmatmul.mubr.bf16.gmra.mrb[0].mxu0 %v1636
        %v2443 = vpop.f32.mrb[0].mxu0
        %v2444 = vadd.f32 %v2404, %v2443
        %v2445 = vpop.f32.mrb[0].mxu0
        %v2446 = vpop.f32.mrb[0].mxu0
        %v2447 = vpop.f32.mrb[0].mxu0
        %2448 = vdwg.mxu0
        %2449 = vmatprep.subr.bf16.mxu0 %v1174
        %2450 = vmatpush1.bf16.xpose.msra.mxu0 %v1173
        %2451 = vmatprep.subr.bf16.mxu0 0
        %2452 = vmatpush1.bf16.xpose.msra.mxu0 0
        %2453 = vmatprep.subr.bf16.mxu0 0
        %2454 = vmatpush1.bf16.xpose.msra.mxu0 0
        %2455 = vmatprep.subr.bf16.mxu0 0
        %2456 = vmatpush1.bf16.xpose.msra.mxu0 0
        %2457 = vmatprep.subr.bf16.mxu0 0
        %2458 = vmatpush1.bf16.xpose.msra.mxu0 0
        %2459 = vmatprep.subr.bf16.mxu0 0
        %2460 = vmatpush1.bf16.xpose.msra.mxu0 0
        %2461 = vmatprep.subr.bf16.mxu0 0
        %2462 = vmatpush1.bf16.xpose.msra.mxu0 0
        %2463 = vmatprep.subr.bf16.mxu0 0
        %2464 = vmatpush1.bf16.xpose.msra.mxu0 0
        %2465 = vmatprep.subr.bf16.mxu0 0
        %2466 = vmatpush1.bf16.xpose.msra.mxu0 0
        %2467 = vmatprep.subr.bf16.mxu0 0
        %2468 = vmatpush1.bf16.xpose.msra.mxu0 0
        %2469 = vmatprep.subr.bf16.mxu0 0
        %2470 = vmatpush1.bf16.xpose.msra.mxu0 0
        %2471 = vmatprep.subr.bf16.mxu0 0
        %2472 = vmatpush1.bf16.xpose.msra.mxu0 0
        %2473 = vmatprep.subr.bf16.mxu0 0
        %2474 = vmatpush1.bf16.xpose.msra.mxu0 0
        %2475 = vmatprep.subr.bf16.mxu0 0
        %2476 = vmatpush1.bf16.xpose.msra.mxu0 0
        %2477 = vmatprep.subr.bf16.mxu0 0
        %2478 = vmatpush1.bf16.xpose.msra.mxu0 0
        %2479 = vmatprep.subr.bf16.mxu0 0
        %2480 = vmatpush1.bf16.xpose.msra.mxu0 0
        %2481 = vmatprep.mubr.bf16.mxu0 %v1639
        %2482 = vmatmul.mubr.bf16.gmra.mrb[0].mxu0 %v1638
        %v2483 = vpop.f32.mrb[0].mxu0
        %v2484 = vadd.f32 %v2444, %v2483
        %v2485 = vpop.f32.mrb[0].mxu0
        %v2486 = vpop.f32.mrb[0].mxu0
        %v2487 = vpop.f32.mrb[0].mxu0
        %2488 = vdwg.mxu0
        %2489 = vmatprep.subr.bf16.mxu0 %v1176
        %2490 = vmatpush1.bf16.xpose.msra.mxu0 %v1175
        %2491 = vmatprep.subr.bf16.mxu0 0
        %2492 = vmatpush1.bf16.xpose.msra.mxu0 0
        %2493 = vmatprep.subr.bf16.mxu0 0
        %2494 = vmatpush1.bf16.xpose.msra.mxu0 0
        %2495 = vmatprep.subr.bf16.mxu0 0
        %2496 = vmatpush1.bf16.xpose.msra.mxu0 0
        %2497 = vmatprep.subr.bf16.mxu0 0
        %2498 = vmatpush1.bf16.xpose.msra.mxu0 0
        %2499 = vmatprep.subr.bf16.mxu0 0
        %2500 = vmatpush1.bf16.xpose.msra.mxu0 0
        %2501 = vmatprep.subr.bf16.mxu0 0
        %2502 = vmatpush1.bf16.xpose.msra.mxu0 0
        %2503 = vmatprep.subr.bf16.mxu0 0
        %2504 = vmatpush1.bf16.xpose.msra.mxu0 0
        %2505 = vmatprep.subr.bf16.mxu0 0
        %2506 = vmatpush1.bf16.xpose.msra.mxu0 0
        %2507 = vmatprep.subr.bf16.mxu0 0
        %2508 = vmatpush1.bf16.xpose.msra.mxu0 0
        %2509 = vmatprep.subr.bf16.mxu0 0
        %2510 = vmatpush1.bf16.xpose.msra.mxu0 0
        %2511 = vmatprep.subr.bf16.mxu0 0
        %2512 = vmatpush1.bf16.xpose.msra.mxu0 0
        %2513 = vmatprep.subr.bf16.mxu0 0
        %2514 = vmatpush1.bf16.xpose.msra.mxu0 0
        %2515 = vmatprep.subr.bf16.mxu0 0
        %2516 = vmatpush1.bf16.xpose.msra.mxu0 0
        %2517 = vmatprep.subr.bf16.mxu0 0
        %2518 = vmatpush1.bf16.xpose.msra.mxu0 0
        %2519 = vmatprep.subr.bf16.mxu0 0
        %2520 = vmatpush1.bf16.xpose.msra.mxu0 0
        %2521 = vmatprep.mubr.bf16.mxu0 %v1641
        %2522 = vmatmul.mubr.bf16.gmra.mrb[0].mxu0 %v1640
        %v2523 = vpop.f32.mrb[0].mxu0
        %v2524 = vadd.f32 %v2484, %v2523
        %v2525 = vpop.f32.mrb[0].mxu0
        %v2526 = vpop.f32.mrb[0].mxu0
        %v2527 = vpop.f32.mrb[0].mxu0
        %2528 = vdwg.mxu0
        %s2529 = scalar_lea.vmem %s531, 128 [#allocation2]
        %v2530 = vld [vmem:[%s2529] sm:$0xff]
        %v2531 = vld [vmem:[%s2529 + $0x8] sm:$0xff]
        %v2532 = vld [vmem:[%s2529 + $0x10] sm:$0xff]
        %v2533 = vld [vmem:[%s2529 + $0x18] sm:$0xff]
        %v2534 = vld [vmem:[%s2529 + $0x20] sm:$0xff]
        %v2535 = vld [vmem:[%s2529 + $0x28] sm:$0xff]
        %v2536 = vld [vmem:[%s2529 + $0x30] sm:$0xff]
        %v2537 = vld [vmem:[%s2529 + $0x38] sm:$0xff]
        %s2538 = scalar_lea.vmem %s538, 16 [#allocation3]
        %v2539 = vld [vmem:[%s2538] sm:$0xff]
        %v2541 = vlaneseq
        %v2542 = vshrl.u32 %v2541, 7
        %v2543 = vsub.s32 0, %v2542
        %v2544 = vrot.slane %v2539, %v2543
        %v2545 = vlaneseq
        %v2546 = vshrl.u32 %v2545, 7
        %v2547 = vsub.s32 1, %v2546
        %v2548 = vrot.slane %v2539, %v2547
        %v2549 = vlaneseq
        %v2550 = vshrl.u32 %v2549, 7
        %v2551 = vsub.s32 2, %v2550
        %v2552 = vrot.slane %v2539, %v2551
        %v2553 = vlaneseq
        %v2554 = vshrl.u32 %v2553, 7
        %v2555 = vsub.s32 3, %v2554
        %v2556 = vrot.slane %v2539, %v2555
        %v2557 = vlaneseq
        %v2558 = vshrl.u32 %v2557, 7
        %v2559 = vsub.s32 4, %v2558
        %v2560 = vrot.slane %v2539, %v2559
        %v2561 = vlaneseq
        %v2562 = vshrl.u32 %v2561, 7
        %v2563 = vsub.s32 5, %v2562
        %v2564 = vrot.slane %v2539, %v2563
        %v2565 = vlaneseq
        %v2566 = vshrl.u32 %v2565, 7
        %v2567 = vsub.s32 6, %v2566
        %v2568 = vrot.slane %v2539, %v2567
        %v2569 = vlaneseq
        %v2570 = vshrl.u32 %v2569, 7
        %v2571 = vsub.s32 7, %v2570
        %v2572 = vrot.slane %v2539, %v2571
        %v2589 = vunpack.c.l.b16 %v2530
        %v2590 = vunpack.c.h.b16 %v2530
        %v2591 = vunpack.c.l.b16 %v2531
        %v2592 = vunpack.c.h.b16 %v2531
        %v2593 = vunpack.c.l.b16 %v2532
        %v2594 = vunpack.c.h.b16 %v2532
        %v2595 = vunpack.c.l.b16 %v2533
        %v2596 = vunpack.c.h.b16 %v2533
        %v2597 = vunpack.c.l.b16 %v2534
        %v2598 = vunpack.c.h.b16 %v2534
        %v2599 = vunpack.c.l.b16 %v2535
        %v2600 = vunpack.c.h.b16 %v2535
        %v2601 = vunpack.c.l.b16 %v2536
        %v2602 = vunpack.c.h.b16 %v2536
        %v2603 = vunpack.c.l.b16 %v2537
        %v2604 = vunpack.c.h.b16 %v2537
        %v2605 = vpack.c.b16 %v2597, %v2589
        %v2606 = vpack.c.b16 %v2598, %v2590
        %v2607 = vpack.c.b16 %v2599, %v2591
        %v2608 = vpack.c.b16 %v2600, %v2592
        %v2609 = vpack.c.b16 %v2601, %v2593
        %v2610 = vpack.c.b16 %v2602, %v2594
        %v2611 = vpack.c.b16 %v2603, %v2595
        %v2612 = vpack.c.b16 %v2604, %v2596
        %2621 = vmatprep.subr.bf16.mxu0 %v2606
        %2622 = vmatpush1.bf16.msra.mxu0 %v2605
        %2623 = vmatprep.subr.bf16.mxu0 0
        %2624 = vmatpush1.bf16.msra.mxu0 0
        %2625 = vmatprep.subr.bf16.mxu0 0
        %2626 = vmatpush1.bf16.msra.mxu0 0
        %2627 = vmatprep.subr.bf16.mxu0 0
        %2628 = vmatpush1.bf16.msra.mxu0 0
        %2629 = vmatprep.subr.bf16.mxu0 0
        %2630 = vmatpush1.bf16.msra.mxu0 0
        %2631 = vmatprep.subr.bf16.mxu0 0
        %2632 = vmatpush1.bf16.msra.mxu0 0
        %2633 = vmatprep.subr.bf16.mxu0 0
        %2634 = vmatpush1.bf16.msra.mxu0 0
        %2635 = vmatprep.subr.bf16.mxu0 0
        %2636 = vmatpush1.bf16.msra.mxu0 0
        %2637 = vmatprep.subr.bf16.mxu0 0
        %2638 = vmatpush1.bf16.msra.mxu0 0
        %2639 = vmatprep.subr.bf16.mxu0 0
        %2640 = vmatpush1.bf16.msra.mxu0 0
        %2641 = vmatprep.subr.bf16.mxu0 0
        %2642 = vmatpush1.bf16.msra.mxu0 0
        %2643 = vmatprep.subr.bf16.mxu0 0
        %2644 = vmatpush1.bf16.msra.mxu0 0
        %2645 = vmatprep.subr.bf16.mxu0 0
        %2646 = vmatpush1.bf16.msra.mxu0 0
        %2647 = vmatprep.subr.bf16.mxu0 0
        %2648 = vmatpush1.bf16.msra.mxu0 0
        %2649 = vmatprep.subr.bf16.mxu0 0
        %2650 = vmatpush1.bf16.msra.mxu0 0
        %2651 = vmatprep.subr.bf16.mxu0 0
        %2652 = vmatpush1.bf16.msra.mxu0 0
        %2653 = vmatprep.mubr.bf16.mxu0 0
        %2654 = vmatmul.mubr.bf16.gmra.mrb[0].mxu0 %v756
        %v2655 = vpop.f32.mrb[0].mxu0
        %v2656 = vadd.f32 %v2544, %v2655
        %v2657 = vpop.f32.mrb[0].mxu0
        %v2658 = vadd.f32 %v2548, %v2657
        %v2659 = vpop.f32.mrb[0].mxu0
        %v2660 = vpop.f32.mrb[0].mxu0
        %2661 = vdwg.mxu0
        %2662 = vmatprep.subr.bf16.mxu0 %v2608
        %2663 = vmatpush1.bf16.msra.mxu0 %v2607
        %2664 = vmatprep.subr.bf16.mxu0 0
        %2665 = vmatpush1.bf16.msra.mxu0 0
        %2666 = vmatprep.subr.bf16.mxu0 0
        %2667 = vmatpush1.bf16.msra.mxu0 0
        %2668 = vmatprep.subr.bf16.mxu0 0
        %2669 = vmatpush1.bf16.msra.mxu0 0
        %2670 = vmatprep.subr.bf16.mxu0 0
        %2671 = vmatpush1.bf16.msra.mxu0 0
        %2672 = vmatprep.subr.bf16.mxu0 0
        %2673 = vmatpush1.bf16.msra.mxu0 0
        %2674 = vmatprep.subr.bf16.mxu0 0
        %2675 = vmatpush1.bf16.msra.mxu0 0
        %2676 = vmatprep.subr.bf16.mxu0 0
        %2677 = vmatpush1.bf16.msra.mxu0 0
        %2678 = vmatprep.subr.bf16.mxu0 0
        %2679 = vmatpush1.bf16.msra.mxu0 0
        %2680 = vmatprep.subr.bf16.mxu0 0
        %2681 = vmatpush1.bf16.msra.mxu0 0
        %2682 = vmatprep.subr.bf16.mxu0 0
        %2683 = vmatpush1.bf16.msra.mxu0 0
        %2684 = vmatprep.subr.bf16.mxu0 0
        %2685 = vmatpush1.bf16.msra.mxu0 0
        %2686 = vmatprep.subr.bf16.mxu0 0
        %2687 = vmatpush1.bf16.msra.mxu0 0
        %2688 = vmatprep.subr.bf16.mxu0 0
        %2689 = vmatpush1.bf16.msra.mxu0 0
        %2690 = vmatprep.subr.bf16.mxu0 0
        %2691 = vmatpush1.bf16.msra.mxu0 0
        %2692 = vmatprep.subr.bf16.mxu0 0
        %2693 = vmatpush1.bf16.msra.mxu0 0
        %2694 = vmatprep.mubr.bf16.mxu0 0
        %2695 = vmatmul.mubr.bf16.gmra.mrb[0].mxu0 %v756
        %v2696 = vpop.f32.mrb[0].mxu0
        %v2697 = vadd.f32 %v2552, %v2696
        %v2698 = vpop.f32.mrb[0].mxu0
        %v2699 = vadd.f32 %v2556, %v2698
        %v2700 = vpop.f32.mrb[0].mxu0
        %v2701 = vpop.f32.mrb[0].mxu0
        %2702 = vdwg.mxu0
        %2703 = vmatprep.subr.bf16.mxu0 %v2610
        %2704 = vmatpush1.bf16.msra.mxu0 %v2609
        %2705 = vmatprep.subr.bf16.mxu0 0
        %2706 = vmatpush1.bf16.msra.mxu0 0
        %2707 = vmatprep.subr.bf16.mxu0 0
        %2708 = vmatpush1.bf16.msra.mxu0 0
        %2709 = vmatprep.subr.bf16.mxu0 0
        %2710 = vmatpush1.bf16.msra.mxu0 0
        %2711 = vmatprep.subr.bf16.mxu0 0
        %2712 = vmatpush1.bf16.msra.mxu0 0
        %2713 = vmatprep.subr.bf16.mxu0 0
        %2714 = vmatpush1.bf16.msra.mxu0 0
        %2715 = vmatprep.subr.bf16.mxu0 0
        %2716 = vmatpush1.bf16.msra.mxu0 0
        %2717 = vmatprep.subr.bf16.mxu0 0
        %2718 = vmatpush1.bf16.msra.mxu0 0
        %2719 = vmatprep.subr.bf16.mxu0 0
        %2720 = vmatpush1.bf16.msra.mxu0 0
        %2721 = vmatprep.subr.bf16.mxu0 0
        %2722 = vmatpush1.bf16.msra.mxu0 0
        %2723 = vmatprep.subr.bf16.mxu0 0
        %2724 = vmatpush1.bf16.msra.mxu0 0
        %2725 = vmatprep.subr.bf16.mxu0 0
        %2726 = vmatpush1.bf16.msra.mxu0 0
        %2727 = vmatprep.subr.bf16.mxu0 0
        %2728 = vmatpush1.bf16.msra.mxu0 0
        %2729 = vmatprep.subr.bf16.mxu0 0
        %2730 = vmatpush1.bf16.msra.mxu0 0
        %2731 = vmatprep.subr.bf16.mxu0 0
        %2732 = vmatpush1.bf16.msra.mxu0 0
        %2733 = vmatprep.subr.bf16.mxu0 0
        %2734 = vmatpush1.bf16.msra.mxu0 0
        %2735 = vmatprep.mubr.bf16.mxu0 0
        %2736 = vmatmul.mubr.bf16.gmra.mrb[0].mxu0 %v756
        %v2737 = vpop.f32.mrb[0].mxu0
        %v2738 = vadd.f32 %v2560, %v2737
        %v2739 = vpop.f32.mrb[0].mxu0
        %v2740 = vadd.f32 %v2564, %v2739
        %v2741 = vpop.f32.mrb[0].mxu0
        %v2742 = vpop.f32.mrb[0].mxu0
        %2743 = vdwg.mxu0
        %2744 = vmatprep.subr.bf16.mxu0 %v2612
        %2745 = vmatpush1.bf16.msra.mxu0 %v2611
        %2746 = vmatprep.subr.bf16.mxu0 0
        %2747 = vmatpush1.bf16.msra.mxu0 0
        %2748 = vmatprep.subr.bf16.mxu0 0
        %2749 = vmatpush1.bf16.msra.mxu0 0
        %2750 = vmatprep.subr.bf16.mxu0 0
        %2751 = vmatpush1.bf16.msra.mxu0 0
        %2752 = vmatprep.subr.bf16.mxu0 0
        %2753 = vmatpush1.bf16.msra.mxu0 0
        %2754 = vmatprep.subr.bf16.mxu0 0
        %2755 = vmatpush1.bf16.msra.mxu0 0
        %2756 = vmatprep.subr.bf16.mxu0 0
        %2757 = vmatpush1.bf16.msra.mxu0 0
        %2758 = vmatprep.subr.bf16.mxu0 0
        %2759 = vmatpush1.bf16.msra.mxu0 0
        %2760 = vmatprep.subr.bf16.mxu0 0
        %2761 = vmatpush1.bf16.msra.mxu0 0
        %2762 = vmatprep.subr.bf16.mxu0 0
        %2763 = vmatpush1.bf16.msra.mxu0 0
        %2764 = vmatprep.subr.bf16.mxu0 0
        %2765 = vmatpush1.bf16.msra.mxu0 0
        %2766 = vmatprep.subr.bf16.mxu0 0
        %2767 = vmatpush1.bf16.msra.mxu0 0
        %2768 = vmatprep.subr.bf16.mxu0 0
        %2769 = vmatpush1.bf16.msra.mxu0 0
        %2770 = vmatprep.subr.bf16.mxu0 0
        %2771 = vmatpush1.bf16.msra.mxu0 0
        %2772 = vmatprep.subr.bf16.mxu0 0
        %2773 = vmatpush1.bf16.msra.mxu0 0
        %2774 = vmatprep.subr.bf16.mxu0 0
        %2775 = vmatpush1.bf16.msra.mxu0 0
        %2776 = vmatprep.mubr.bf16.mxu0 0
        %2777 = vmatmul.mubr.bf16.gmra.mrb[0].mxu0 %v756
        %v2778 = vpop.f32.mrb[0].mxu0
        %v2779 = vadd.f32 %v2568, %v2778
        %v2780 = vpop.f32.mrb[0].mxu0
        %v2781 = vadd.f32 %v2572, %v2780
        %v2782 = vpop.f32.mrb[0].mxu0
        %v2783 = vpop.f32.mrb[0].mxu0
        %2784 = vdwg.mxu0
        %v2793 = vcombine.low %v2656, %v2658
        %v2794 = vcombine.low %v2697, %v2699
        %v2795 = vcombine.low %v2738, %v2740
        %v2796 = vcombine.low %v2779, %v2781
        %s2801 = scalar_lea.vmem %s576, 64 [#allocation4]
        %2802 = vst [vmem:[%s2801] sm:$0x77] %v2793
        %2803 = vst [vmem:[%s2801 + $0x8] sm:$0x77] %v2794
        %2804 = vst [vmem:[%s2801 + $0x10] sm:$0x77] %v2795
        %2805 = vst [vmem:[%s2801 + $0x18] sm:$0x77] %v2796
        %v2806 = vsel %vm922, %v2656, 0.0
        %v2807 = vsel %vm922, %v2658, 0.0
        %v2808 = vadd.f32 %v2806, %v2807
        %v2809 = vsel %vm922, %v2697, 0.0
        %v2810 = vadd.f32 %v2808, %v2809
        %v2811 = vsel %vm922, %v2699, 0.0
        %v2812 = vadd.f32 %v2810, %v2811
        %v2813 = vsel %vm922, %v2738, 0.0
        %v2814 = vadd.f32 %v2812, %v2813
        %v2815 = vsel %vm922, %v2740, 0.0
        %v2816 = vadd.f32 %v2814, %v2815
        %v2817 = vsel %vm922, %v2779, 0.0
        %v2818 = vadd.f32 %v2816, %v2817
        %v2819 = vsel %vm922, %v2781, 0.0
        %v2820 = vadd.f32 %v2818, %v2819
        %2821 = vadd.xlane.f32.xlu0 %v2820
        %v2822 = vpop.xlane.xlu0 %2821
        %vm2823 = vcmask 18448
        %2824 = vst.msk [vmem:[%s601] sm:$0x7] %vm2823, %v2822
        %s2825 = scalar_lea.vmem %s639, 2
        %v2826 = vld [vmem:[%s2825] ss:$4 sm:$0xff]
        %v2828 = vlaneseq
        %v2829 = vshrl.u32 %v2828, 7
        %v2830 = vsub.s32 0, %v2829
        %v2831 = vrot.slane %v2826, %v2830
        %v2832 = vlaneseq
        %v2833 = vshrl.u32 %v2832, 7
        %v2834 = vsub.s32 1, %v2833
        %v2835 = vrot.slane %v2826, %v2834
        %v2836 = vlaneseq
        %v2837 = vshrl.u32 %v2836, 7
        %v2838 = vsub.s32 2, %v2837
        %v2839 = vrot.slane %v2826, %v2838
        %v2840 = vlaneseq
        %v2841 = vshrl.u32 %v2840, 7
        %v2842 = vsub.s32 3, %v2841
        %v2843 = vrot.slane %v2826, %v2842
        %v2844 = vlaneseq
        %v2845 = vshrl.u32 %v2844, 7
        %v2846 = vsub.s32 4, %v2845
        %v2847 = vrot.slane %v2826, %v2846
        %v2848 = vlaneseq
        %v2849 = vshrl.u32 %v2848, 7
        %v2850 = vsub.s32 5, %v2849
        %v2851 = vrot.slane %v2826, %v2850
        %v2852 = vlaneseq
        %v2853 = vshrl.u32 %v2852, 7
        %v2854 = vsub.s32 6, %v2853
        %v2855 = vrot.slane %v2826, %v2854
        %v2856 = vlaneseq
        %v2857 = vshrl.u32 %v2856, 7
        %v2858 = vsub.s32 7, %v2857
        %v2859 = vrot.slane %v2826, %v2858
        %v2868 = vsub.f32 %v2656, %v2831
        %v2869 = vsub.f32 %v2658, %v2835
        %v2870 = vsub.f32 %v2697, %v2839
        %v2871 = vsub.f32 %v2699, %v2843
        %v2872 = vsub.f32 %v2738, %v2847
        %v2873 = vsub.f32 %v2740, %v2851
        %v2874 = vsub.f32 %v2779, %v2855
        %v2875 = vsub.f32 %v2781, %v2859
        %v2876 = vmul.f32 %v2868, %v2868
        %v2877 = vmul.f32 %v2869, %v2869
        %v2878 = vmul.f32 %v2870, %v2870
        %v2879 = vmul.f32 %v2871, %v2871
        %v2880 = vmul.f32 %v2872, %v2872
        %v2881 = vmul.f32 %v2873, %v2873
        %v2882 = vmul.f32 %v2874, %v2874
        %v2883 = vmul.f32 %v2875, %v2875
        %v2884 = vsub.f32 0.0, %v2876
        %v2885 = vsub.f32 0.0, %v2877
        %v2886 = vsub.f32 0.0, %v2878
        %v2887 = vsub.f32 0.0, %v2879
        %v2888 = vsub.f32 0.0, %v2880
        %v2889 = vsub.f32 0.0, %v2881
        %v2890 = vsub.f32 0.0, %v2882
        %v2891 = vsub.f32 0.0, %v2883
        %v2892 = vmul.f32 %v2884, 1.6666666
        %v2893 = vmul.f32 %v2885, 1.6666666
        %v2894 = vmul.f32 %v2886, 1.6666666
        %v2895 = vmul.f32 %v2887, 1.6666666
        %v2896 = vmul.f32 %v2888, 1.6666666
        %v2897 = vmul.f32 %v2889, 1.6666666
        %v2898 = vmul.f32 %v2890, 1.6666666
        %v2899 = vmul.f32 %v2891, 1.6666666
        %v2900 = vmul.f32 %v2892, 1.442695
        %v2901 = vpow.pop %v2900
        %v2902 = vmul.f32 %v2893, 1.442695
        %v2903 = vpow.pop %v2902
        %v2904 = vmul.f32 %v2894, 1.442695
        %v2905 = vpow.pop %v2904
        %v2906 = vmul.f32 %v2895, 1.442695
        %v2907 = vpow.pop %v2906
        %v2908 = vmul.f32 %v2896, 1.442695
        %v2909 = vpow.pop %v2908
        %v2910 = vmul.f32 %v2897, 1.442695
        %v2911 = vpow.pop %v2910
        %v2912 = vmul.f32 %v2898, 1.442695
        %v2913 = vpow.pop %v2912
        %v2914 = vmul.f32 %v2899, 1.442695
        %v2915 = vpow.pop %v2914
        %v2916 = vmul.f32 %v2029, %v2901
        %v2917 = vmul.f32 %v2030, %v2903
        %v2918 = vmul.f32 %v2031, %v2905
        %v2919 = vmul.f32 %v2032, %v2907
        %v2920 = vmul.f32 %v2033, %v2909
        %v2921 = vmul.f32 %v2034, %v2911
        %v2922 = vmul.f32 %v2035, %v2913
        %v2923 = vmul.f32 %v2036, %v2915
        %v2924 = vmul.f32 %v1067, %v2901
        %v2925 = vmul.f32 %v1068, %v2903
        %v2926 = vmul.f32 %v1069, %v2905
        %v2927 = vmul.f32 %v1070, %v2907
        %v2928 = vmul.f32 %v1071, %v2909
        %v2929 = vmul.f32 %v1072, %v2911
        %v2930 = vmul.f32 %v1073, %v2913
        %v2931 = vmul.f32 %v1074, %v2915
        %v2932 = vsel %vm922, %v2924, 0.0
        %v2933 = vrot.slane %v2932, 4
        %v2934 = vadd.f32 %v2932, %v2933
        %v2935 = vrot.slane %v2934, 2
        %v2936 = vadd.f32 %v2934, %v2935
        %v2937 = vrot.slane %v2936, 1
        %v2938 = vadd.f32 %v2936, %v2937
        %v2939 = vsel %vm922, %v2925, 0.0
        %v2940 = vrot.slane %v2939, 4
        %v2941 = vadd.f32 %v2939, %v2940
        %v2942 = vrot.slane %v2941, 2
        %v2943 = vadd.f32 %v2941, %v2942
        %v2944 = vrot.slane %v2943, 1
        %v2945 = vadd.f32 %v2943, %v2944
        %v2946 = vsel %vm922, %v2926, 0.0
        %v2947 = vrot.slane %v2946, 4
        %v2948 = vadd.f32 %v2946, %v2947
        %v2949 = vrot.slane %v2948, 2
        %v2950 = vadd.f32 %v2948, %v2949
        %v2951 = vrot.slane %v2950, 1
        %v2952 = vadd.f32 %v2950, %v2951
        %v2953 = vsel %vm922, %v2927, 0.0
        %v2954 = vrot.slane %v2953, 4
        %v2955 = vadd.f32 %v2953, %v2954
        %v2956 = vrot.slane %v2955, 2
        %v2957 = vadd.f32 %v2955, %v2956
        %v2958 = vrot.slane %v2957, 1
        %v2959 = vadd.f32 %v2957, %v2958
        %v2960 = vsel %vm922, %v2928, 0.0
        %v2961 = vrot.slane %v2960, 4
        %v2962 = vadd.f32 %v2960, %v2961
        %v2963 = vrot.slane %v2962, 2
        %v2964 = vadd.f32 %v2962, %v2963
        %v2965 = vrot.slane %v2964, 1
        %v2966 = vadd.f32 %v2964, %v2965
        %v2967 = vsel %vm922, %v2929, 0.0
        %v2968 = vrot.slane %v2967, 4
        %v2969 = vadd.f32 %v2967, %v2968
        %v2970 = vrot.slane %v2969, 2
        %v2971 = vadd.f32 %v2969, %v2970
        %v2972 = vrot.slane %v2971, 1
        %v2973 = vadd.f32 %v2971, %v2972
        %v2974 = vsel %vm922, %v2930, 0.0
        %v2975 = vrot.slane %v2974, 4
        %v2976 = vadd.f32 %v2974, %v2975
        %v2977 = vrot.slane %v2976, 2
        %v2978 = vadd.f32 %v2976, %v2977
        %v2979 = vrot.slane %v2978, 1
        %v2980 = vadd.f32 %v2978, %v2979
        %v2981 = vsel %vm922, %v2931, 0.0
        %v2982 = vrot.slane %v2981, 4
        %v2983 = vadd.f32 %v2981, %v2982
        %v2984 = vrot.slane %v2983, 2
        %v2985 = vadd.f32 %v2983, %v2984
        %v2986 = vrot.slane %v2985, 1
        %v2987 = vadd.f32 %v2985, %v2986
        %v2988 = vmax.f32 %v2938, 1e-30
        %v2989 = vmax.f32 %v2945, 1e-30
        %v2990 = vmax.f32 %v2952, 1e-30
        %v2991 = vmax.f32 %v2959, 1e-30
        %v2992 = vmax.f32 %v2966, 1e-30
        %v2993 = vmax.f32 %v2973, 1e-30
        %v2994 = vmax.f32 %v2980, 1e-30
        %v2995 = vmax.f32 %v2987, 1e-30
        %v2996 = vmul.f32 %v2109, %v2988
        %v2997 = vmul.f32 %v2110, %v2989
        %v2998 = vmul.f32 %v2111, %v2990
        %v2999 = vmul.f32 %v2112, %v2991
        %v3000 = vmul.f32 %v2113, %v2992
        %v3001 = vmul.f32 %v2114, %v2993
        %v3002 = vmul.f32 %v2115, %v2994
        %v3003 = vmul.f32 %v2116, %v2995
        %v3004 = vrcp.pop %v2988
        %v3005 = vrcp.pop %v2989
        %v3006 = vrcp.pop %v2990
        %v3007 = vrcp.pop %v2991
        %v3008 = vrcp.pop %v2992
        %v3009 = vrcp.pop %v2993
        %v3010 = vrcp.pop %v2994
        %v3011 = vrcp.pop %v2995
        %v3012 = vmul.f32 %v2901, %v3004
        %v3013 = vmul.f32 %v2903, %v3005
        %v3014 = vmul.f32 %v2905, %v3006
        %v3015 = vmul.f32 %v2907, %v3007
        %v3016 = vmul.f32 %v2909, %v3008
        %v3017 = vmul.f32 %v2911, %v3009
        %v3018 = vmul.f32 %v2913, %v3010
        %v3019 = vmul.f32 %v2915, %v3011
        %v3020 = vadd.f32 %v2133, %v3012
        %v3021 = vadd.f32 %v2134, %v3013
        %v3022 = vadd.f32 %v2135, %v3014
        %v3023 = vadd.f32 %v2136, %v3015
        %v3024 = vadd.f32 %v2137, %v3016
        %v3025 = vadd.f32 %v2138, %v3017
        %v3026 = vadd.f32 %v2139, %v3018
        %v3027 = vadd.f32 %v2140, %v3019
        %v3028 = vmul.f32 %v1566, %v3012
        %v3029 = vmul.f32 %v1567, %v3013
        %v3030 = vmul.f32 %v1568, %v3014
        %v3031 = vmul.f32 %v1569, %v3015
        %v3032 = vmul.f32 %v1570, %v3016
        %v3033 = vmul.f32 %v1571, %v3017
        %v3034 = vmul.f32 %v1572, %v3018
        %v3035 = vmul.f32 %v1573, %v3019
        %v3036 = vmul.f32 %v3028, %v2868
        %v3037 = vmul.f32 %v3029, %v2869
        %v3038 = vmul.f32 %v3030, %v2870
        %v3039 = vmul.f32 %v3031, %v2871
        %v3040 = vmul.f32 %v3032, %v2872
        %v3041 = vmul.f32 %v3033, %v2873
        %v3042 = vmul.f32 %v3034, %v2874
        %v3043 = vmul.f32 %v3035, %v2875
        %v3044 = vsel %vm922, %v3036, 0.0
        %v3045 = vsel %vm922, %v3037, 0.0
        %v3046 = vadd.f32 %v3044, %v3045
        %v3047 = vsel %vm922, %v3038, 0.0
        %v3048 = vadd.f32 %v3046, %v3047
        %v3049 = vsel %vm922, %v3039, 0.0
        %v3050 = vadd.f32 %v3048, %v3049
        %v3051 = vsel %vm922, %v3040, 0.0
        %v3052 = vadd.f32 %v3050, %v3051
        %v3053 = vsel %vm922, %v3041, 0.0
        %v3054 = vadd.f32 %v3052, %v3053
        %v3055 = vsel %vm922, %v3042, 0.0
        %v3056 = vadd.f32 %v3054, %v3055
        %v3057 = vsel %vm922, %v3043, 0.0
        %v3058 = vadd.f32 %v3056, %v3057
        %3059 = vadd.xlane.f32.xlu0 %v3058
        %v3060 = vpop.xlane.xlu0 %3059
        %3061 = vst.msk [vmem:[%s608] sm:$0x7] %vm2823, %v3060
        %v3062 = vmul.f32 %v3036, %v3036
        %v3063 = vmul.f32 %v3037, %v3037
        %v3064 = vmul.f32 %v3038, %v3038
        %v3065 = vmul.f32 %v3039, %v3039
        %v3066 = vmul.f32 %v3040, %v3040
        %v3067 = vmul.f32 %v3041, %v3041
        %v3068 = vmul.f32 %v3042, %v3042
        %v3069 = vmul.f32 %v3043, %v3043
        %v3070 = vsel %vm922, %v3062, 0.0
        %v3071 = vsel %vm922, %v3063, 0.0
        %v3072 = vadd.f32 %v3070, %v3071
        %v3073 = vsel %vm922, %v3064, 0.0
        %v3074 = vadd.f32 %v3072, %v3073
        %v3075 = vsel %vm922, %v3065, 0.0
        %v3076 = vadd.f32 %v3074, %v3075
        %v3077 = vsel %vm922, %v3066, 0.0
        %v3078 = vadd.f32 %v3076, %v3077
        %v3079 = vsel %vm922, %v3067, 0.0
        %v3080 = vadd.f32 %v3078, %v3079
        %v3081 = vsel %vm922, %v3068, 0.0
        %v3082 = vadd.f32 %v3080, %v3081
        %v3083 = vsel %vm922, %v3069, 0.0
        %v3084 = vadd.f32 %v3082, %v3083
        %3085 = vadd.xlane.f32.xlu0 %v3084
        %v3086 = vpop.xlane.xlu0 %3085
        %v3087 = vadd.f32 %v2200, %v3086
        %v3088 = vpack.c.bf16 %v3036, %v3036
        %v3089 = vpack.c.bf16 %v3037, %v3037
        %v3090 = vpack.c.bf16 %v3038, %v3038
        %v3091 = vpack.c.bf16 %v3039, %v3039
        %v3092 = vpack.c.bf16 %v3040, %v3040
        %v3093 = vpack.c.bf16 %v3041, %v3041
        %v3094 = vpack.c.bf16 %v3042, %v3042
        %v3095 = vpack.c.bf16 %v3043, %v3043
        %3096 = vmatprep.subr.bf16.mxu0 %v2606
        %3097 = vmatpush1.bf16.xpose.msra.mxu0 %v2605
        %3098 = vmatprep.subr.bf16.mxu0 0
        %3099 = vmatpush1.bf16.xpose.msra.mxu0 0
        %3100 = vmatprep.subr.bf16.mxu0 0
        %3101 = vmatpush1.bf16.xpose.msra.mxu0 0
        %3102 = vmatprep.subr.bf16.mxu0 0
        %3103 = vmatpush1.bf16.xpose.msra.mxu0 0
        %3104 = vmatprep.subr.bf16.mxu0 0
        %3105 = vmatpush1.bf16.xpose.msra.mxu0 0
        %3106 = vmatprep.subr.bf16.mxu0 0
        %3107 = vmatpush1.bf16.xpose.msra.mxu0 0
        %3108 = vmatprep.subr.bf16.mxu0 0
        %3109 = vmatpush1.bf16.xpose.msra.mxu0 0
        %3110 = vmatprep.subr.bf16.mxu0 0
        %3111 = vmatpush1.bf16.xpose.msra.mxu0 0
        %3112 = vmatprep.subr.bf16.mxu0 0
        %3113 = vmatpush1.bf16.xpose.msra.mxu0 0
        %3114 = vmatprep.subr.bf16.mxu0 0
        %3115 = vmatpush1.bf16.xpose.msra.mxu0 0
        %3116 = vmatprep.subr.bf16.mxu0 0
        %3117 = vmatpush1.bf16.xpose.msra.mxu0 0
        %3118 = vmatprep.subr.bf16.mxu0 0
        %3119 = vmatpush1.bf16.xpose.msra.mxu0 0
        %3120 = vmatprep.subr.bf16.mxu0 0
        %3121 = vmatpush1.bf16.xpose.msra.mxu0 0
        %3122 = vmatprep.subr.bf16.mxu0 0
        %3123 = vmatpush1.bf16.xpose.msra.mxu0 0
        %3124 = vmatprep.subr.bf16.mxu0 0
        %3125 = vmatpush1.bf16.xpose.msra.mxu0 0
        %3126 = vmatprep.subr.bf16.mxu0 0
        %3127 = vmatpush1.bf16.xpose.msra.mxu0 0
        %3128 = vmatprep.mubr.bf16.mxu0 %v3089
        %3129 = vmatmul.mubr.bf16.gmra.mrb[0].mxu0 %v3088
        %v3130 = vpop.f32.mrb[0].mxu0
        %v3131 = vadd.f32 0.0, %v3130
        %v3132 = vpop.f32.mrb[0].mxu0
        %v3133 = vpop.f32.mrb[0].mxu0
        %v3134 = vpop.f32.mrb[0].mxu0
        %3135 = vdwg.mxu0
        %3136 = vmatprep.subr.bf16.mxu0 %v2608
        %3137 = vmatpush1.bf16.xpose.msra.mxu0 %v2607
        %3138 = vmatprep.subr.bf16.mxu0 0
        %3139 = vmatpush1.bf16.xpose.msra.mxu0 0
        %3140 = vmatprep.subr.bf16.mxu0 0
        %3141 = vmatpush1.bf16.xpose.msra.mxu0 0
        %3142 = vmatprep.subr.bf16.mxu0 0
        %3143 = vmatpush1.bf16.xpose.msra.mxu0 0
        %3144 = vmatprep.subr.bf16.mxu0 0
        %3145 = vmatpush1.bf16.xpose.msra.mxu0 0
        %3146 = vmatprep.subr.bf16.mxu0 0
        %3147 = vmatpush1.bf16.xpose.msra.mxu0 0
        %3148 = vmatprep.subr.bf16.mxu0 0
        %3149 = vmatpush1.bf16.xpose.msra.mxu0 0
        %3150 = vmatprep.subr.bf16.mxu0 0
        %3151 = vmatpush1.bf16.xpose.msra.mxu0 0
        %3152 = vmatprep.subr.bf16.mxu0 0
        %3153 = vmatpush1.bf16.xpose.msra.mxu0 0
        %3154 = vmatprep.subr.bf16.mxu0 0
        %3155 = vmatpush1.bf16.xpose.msra.mxu0 0
        %3156 = vmatprep.subr.bf16.mxu0 0
        %3157 = vmatpush1.bf16.xpose.msra.mxu0 0
        %3158 = vmatprep.subr.bf16.mxu0 0
        %3159 = vmatpush1.bf16.xpose.msra.mxu0 0
        %3160 = vmatprep.subr.bf16.mxu0 0
        %3161 = vmatpush1.bf16.xpose.msra.mxu0 0
        %3162 = vmatprep.subr.bf16.mxu0 0
        %3163 = vmatpush1.bf16.xpose.msra.mxu0 0
        %3164 = vmatprep.subr.bf16.mxu0 0
        %3165 = vmatpush1.bf16.xpose.msra.mxu0 0
        %3166 = vmatprep.subr.bf16.mxu0 0
        %3167 = vmatpush1.bf16.xpose.msra.mxu0 0
        %3168 = vmatprep.mubr.bf16.mxu0 %v3091
        %3169 = vmatmul.mubr.bf16.gmra.mrb[0].mxu0 %v3090
        %v3170 = vpop.f32.mrb[0].mxu0
        %v3171 = vadd.f32 %v3131, %v3170
        %v3172 = vpop.f32.mrb[0].mxu0
        %v3173 = vpop.f32.mrb[0].mxu0
        %v3174 = vpop.f32.mrb[0].mxu0
        %3175 = vdwg.mxu0
        %3176 = vmatprep.subr.bf16.mxu0 %v2610
        %3177 = vmatpush1.bf16.xpose.msra.mxu0 %v2609
        %3178 = vmatprep.subr.bf16.mxu0 0
        %3179 = vmatpush1.bf16.xpose.msra.mxu0 0
        %3180 = vmatprep.subr.bf16.mxu0 0
        %3181 = vmatpush1.bf16.xpose.msra.mxu0 0
        %3182 = vmatprep.subr.bf16.mxu0 0
        %3183 = vmatpush1.bf16.xpose.msra.mxu0 0
        %3184 = vmatprep.subr.bf16.mxu0 0
        %3185 = vmatpush1.bf16.xpose.msra.mxu0 0
        %3186 = vmatprep.subr.bf16.mxu0 0
        %3187 = vmatpush1.bf16.xpose.msra.mxu0 0
        %3188 = vmatprep.subr.bf16.mxu0 0
        %3189 = vmatpush1.bf16.xpose.msra.mxu0 0
        %3190 = vmatprep.subr.bf16.mxu0 0
        %3191 = vmatpush1.bf16.xpose.msra.mxu0 0
        %3192 = vmatprep.subr.bf16.mxu0 0
        %3193 = vmatpush1.bf16.xpose.msra.mxu0 0
        %3194 = vmatprep.subr.bf16.mxu0 0
        %3195 = vmatpush1.bf16.xpose.msra.mxu0 0
        %3196 = vmatprep.subr.bf16.mxu0 0
        %3197 = vmatpush1.bf16.xpose.msra.mxu0 0
        %3198 = vmatprep.subr.bf16.mxu0 0
        %3199 = vmatpush1.bf16.xpose.msra.mxu0 0
        %3200 = vmatprep.subr.bf16.mxu0 0
        %3201 = vmatpush1.bf16.xpose.msra.mxu0 0
        %3202 = vmatprep.subr.bf16.mxu0 0
        %3203 = vmatpush1.bf16.xpose.msra.mxu0 0
        %3204 = vmatprep.subr.bf16.mxu0 0
        %3205 = vmatpush1.bf16.xpose.msra.mxu0 0
        %3206 = vmatprep.subr.bf16.mxu0 0
        %3207 = vmatpush1.bf16.xpose.msra.mxu0 0
        %3208 = vmatprep.mubr.bf16.mxu0 %v3093
        %3209 = vmatmul.mubr.bf16.gmra.mrb[0].mxu0 %v3092
        %v3210 = vpop.f32.mrb[0].mxu0
        %v3211 = vadd.f32 %v3171, %v3210
        %v3212 = vpop.f32.mrb[0].mxu0
        %v3213 = vpop.f32.mrb[0].mxu0
        %v3214 = vpop.f32.mrb[0].mxu0
        %3215 = vdwg.mxu0
        %3216 = vmatprep.subr.bf16.mxu0 %v2612
        %3217 = vmatpush1.bf16.xpose.msra.mxu0 %v2611
        %3218 = vmatprep.subr.bf16.mxu0 0
        %3219 = vmatpush1.bf16.xpose.msra.mxu0 0
        %3220 = vmatprep.subr.bf16.mxu0 0
        %3221 = vmatpush1.bf16.xpose.msra.mxu0 0
        %3222 = vmatprep.subr.bf16.mxu0 0
        %3223 = vmatpush1.bf16.xpose.msra.mxu0 0
        %3224 = vmatprep.subr.bf16.mxu0 0
        %3225 = vmatpush1.bf16.xpose.msra.mxu0 0
        %3226 = vmatprep.subr.bf16.mxu0 0
        %3227 = vmatpush1.bf16.xpose.msra.mxu0 0
        %3228 = vmatprep.subr.bf16.mxu0 0
        %3229 = vmatpush1.bf16.xpose.msra.mxu0 0
        %3230 = vmatprep.subr.bf16.mxu0 0
        %3231 = vmatpush1.bf16.xpose.msra.mxu0 0
        %3232 = vmatprep.subr.bf16.mxu0 0
        %3233 = vmatpush1.bf16.xpose.msra.mxu0 0
        %3234 = vmatprep.subr.bf16.mxu0 0
        %3235 = vmatpush1.bf16.xpose.msra.mxu0 0
        %3236 = vmatprep.subr.bf16.mxu0 0
        %3237 = vmatpush1.bf16.xpose.msra.mxu0 0
        %3238 = vmatprep.subr.bf16.mxu0 0
        %3239 = vmatpush1.bf16.xpose.msra.mxu0 0
        %3240 = vmatprep.subr.bf16.mxu0 0
        %3241 = vmatpush1.bf16.xpose.msra.mxu0 0
        %3242 = vmatprep.subr.bf16.mxu0 0
        %3243 = vmatpush1.bf16.xpose.msra.mxu0 0
        %3244 = vmatprep.subr.bf16.mxu0 0
        %3245 = vmatpush1.bf16.xpose.msra.mxu0 0
        %3246 = vmatprep.subr.bf16.mxu0 0
        %3247 = vmatpush1.bf16.xpose.msra.mxu0 0
        %3248 = vmatprep.mubr.bf16.mxu0 %v3095
        %3249 = vmatmul.mubr.bf16.gmra.mrb[0].mxu0 %v3094
        %v3250 = vpop.f32.mrb[0].mxu0
        %v3251 = vadd.f32 %v3211, %v3250
        %v3252 = vpop.f32.mrb[0].mxu0
        %v3253 = vpop.f32.mrb[0].mxu0
        %v3254 = vpop.f32.mrb[0].mxu0
        %3255 = vdwg.mxu0
        %v3256 = vadd.f32 %v2524, %v3251
        %v3257 = vmul.f32 %v3020, -0.5
        %v3258 = vmul.f32 %v3021, -0.5
        %v3259 = vmul.f32 %v3022, -0.5
        %v3260 = vmul.f32 %v3023, -0.5
        %v3261 = vmul.f32 %v3024, -0.5
        %v3262 = vmul.f32 %v3025, -0.5
        %v3263 = vmul.f32 %v3026, -0.5
        %v3264 = vmul.f32 %v3027, -0.5
        %v3265 = vmul.f32 %v1067, %v3257
        %v3266 = vmul.f32 %v1068, %v3258
        %v3267 = vmul.f32 %v1069, %v3259
        %v3268 = vmul.f32 %v1070, %v3260
        %v3269 = vmul.f32 %v1071, %v3261
        %v3270 = vmul.f32 %v1072, %v3262
        %v3271 = vmul.f32 %v1073, %v3263
        %v3272 = vmul.f32 %v1074, %v3264
        %v3273 = vsel %vm922, %v3265, 0.0
        %v3274 = vrot.slane %v3273, 4
        %v3275 = vadd.f32 %v3273, %v3274
        %v3276 = vrot.slane %v3275, 2
        %v3277 = vadd.f32 %v3275, %v3276
        %v3278 = vrot.slane %v3277, 1
        %v3279 = vadd.f32 %v3277, %v3278
        %v3280 = vsel %vm922, %v3266, 0.0
        %v3281 = vrot.slane %v3280, 4
        %v3282 = vadd.f32 %v3280, %v3281
        %v3283 = vrot.slane %v3282, 2
        %v3284 = vadd.f32 %v3282, %v3283
        %v3285 = vrot.slane %v3284, 1
        %v3286 = vadd.f32 %v3284, %v3285
        %v3287 = vsel %vm922, %v3267, 0.0
        %v3288 = vrot.slane %v3287, 4
        %v3289 = vadd.f32 %v3287, %v3288
        %v3290 = vrot.slane %v3289, 2
        %v3291 = vadd.f32 %v3289, %v3290
        %v3292 = vrot.slane %v3291, 1
        %v3293 = vadd.f32 %v3291, %v3292
        %v3294 = vsel %vm922, %v3268, 0.0
        %v3295 = vrot.slane %v3294, 4
        %v3296 = vadd.f32 %v3294, %v3295
        %v3297 = vrot.slane %v3296, 2
        %v3298 = vadd.f32 %v3296, %v3297
        %v3299 = vrot.slane %v3298, 1
        %v3300 = vadd.f32 %v3298, %v3299
        %v3301 = vsel %vm922, %v3269, 0.0
        %v3302 = vrot.slane %v3301, 4
        %v3303 = vadd.f32 %v3301, %v3302
        %v3304 = vrot.slane %v3303, 2
        %v3305 = vadd.f32 %v3303, %v3304
        %v3306 = vrot.slane %v3305, 1
        %v3307 = vadd.f32 %v3305, %v3306
        %v3308 = vsel %vm922, %v3270, 0.0
        %v3309 = vrot.slane %v3308, 4
        %v3310 = vadd.f32 %v3308, %v3309
        %v3311 = vrot.slane %v3310, 2
        %v3312 = vadd.f32 %v3310, %v3311
        %v3313 = vrot.slane %v3312, 1
        %v3314 = vadd.f32 %v3312, %v3313
        %v3315 = vsel %vm922, %v3271, 0.0
        %v3316 = vrot.slane %v3315, 4
        %v3317 = vadd.f32 %v3315, %v3316
        %v3318 = vrot.slane %v3317, 2
        %v3319 = vadd.f32 %v3317, %v3318
        %v3320 = vrot.slane %v3319, 1
        %v3321 = vadd.f32 %v3319, %v3320
        %v3322 = vsel %vm922, %v3272, 0.0
        %v3323 = vrot.slane %v3322, 4
        %v3324 = vadd.f32 %v3322, %v3323
        %v3325 = vrot.slane %v3324, 2
        %v3326 = vadd.f32 %v3324, %v3325
        %v3327 = vrot.slane %v3326, 1
        %v3328 = vadd.f32 %v3326, %v3327
        %v3329 = vsub.f32 %v3257, %v3279
        %v3330 = vsub.f32 %v3258, %v3286
        %v3331 = vsub.f32 %v3259, %v3293
        %v3332 = vsub.f32 %v3260, %v3300
        %v3333 = vsub.f32 %v3261, %v3307
        %v3334 = vsub.f32 %v3262, %v3314
        %v3335 = vsub.f32 %v3263, %v3321
        %v3336 = vsub.f32 %v3264, %v3328
        %v3337 = vmul.f32 %v1067, %v3329
        %v3338 = vmul.f32 %v1068, %v3330
        %v3339 = vmul.f32 %v1069, %v3331
        %v3340 = vmul.f32 %v1070, %v3332
        %v3341 = vmul.f32 %v1071, %v3333
        %v3342 = vmul.f32 %v1072, %v3334
        %v3343 = vmul.f32 %v1073, %v3335
        %v3344 = vmul.f32 %v1074, %v3336
        %v3345 = vpack.c.bf16 %v3337, %v3337
        %v3346 = vpack.c.bf16 %v3338, %v3338
        %v3347 = vpack.c.bf16 %v3339, %v3339
        %v3348 = vpack.c.bf16 %v3340, %v3340
        %v3349 = vpack.c.bf16 %v3341, %v3341
        %v3350 = vpack.c.bf16 %v3342, %v3342
        %v3351 = vpack.c.bf16 %v3343, %v3343
        %v3352 = vpack.c.bf16 %v3344, %v3344
        %3353 = vmatprep.subr.bf16.mxu0 %v739
        %3354 = vmatpush1.bf16.xpose.msra.mxu0 %v738
        %3355 = vmatprep.subr.bf16.mxu0 0
        %3356 = vmatpush1.bf16.xpose.msra.mxu0 0
        %3357 = vmatprep.subr.bf16.mxu0 0
        %3358 = vmatpush1.bf16.xpose.msra.mxu0 0
        %3359 = vmatprep.subr.bf16.mxu0 0
        %3360 = vmatpush1.bf16.xpose.msra.mxu0 0
        %3361 = vmatprep.subr.bf16.mxu0 0
        %3362 = vmatpush1.bf16.xpose.msra.mxu0 0
        %3363 = vmatprep.subr.bf16.mxu0 0
        %3364 = vmatpush1.bf16.xpose.msra.mxu0 0
        %3365 = vmatprep.subr.bf16.mxu0 0
        %3366 = vmatpush1.bf16.xpose.msra.mxu0 0
        %3367 = vmatprep.subr.bf16.mxu0 0
        %3368 = vmatpush1.bf16.xpose.msra.mxu0 0
        %3369 = vmatprep.subr.bf16.mxu0 0
        %3370 = vmatpush1.bf16.xpose.msra.mxu0 0
        %3371 = vmatprep.subr.bf16.mxu0 0
        %3372 = vmatpush1.bf16.xpose.msra.mxu0 0
        %3373 = vmatprep.subr.bf16.mxu0 0
        %3374 = vmatpush1.bf16.xpose.msra.mxu0 0
        %3375 = vmatprep.subr.bf16.mxu0 0
        %3376 = vmatpush1.bf16.xpose.msra.mxu0 0
        %3377 = vmatprep.subr.bf16.mxu0 0
        %3378 = vmatpush1.bf16.xpose.msra.mxu0 0
        %3379 = vmatprep.subr.bf16.mxu0 0
        %3380 = vmatpush1.bf16.xpose.msra.mxu0 0
        %3381 = vmatprep.subr.bf16.mxu0 0
        %3382 = vmatpush1.bf16.xpose.msra.mxu0 0
        %3383 = vmatprep.subr.bf16.mxu0 0
        %3384 = vmatpush1.bf16.xpose.msra.mxu0 0
        %3385 = vmatprep.mubr.bf16.mxu0 %v3346
        %3386 = vmatmul.mubr.bf16.gmra.mrb[0].mxu0 %v3345
        %v3387 = vpop.f32.mrb[0].mxu0
        %v3388 = vadd.f32 0.0, %v3387
        %v3389 = vpop.f32.mrb[0].mxu0
        %v3390 = vpop.f32.mrb[0].mxu0
        %v3391 = vpop.f32.mrb[0].mxu0
        %3392 = vdwg.mxu0
        %3393 = vmatprep.subr.bf16.mxu0 %v741
        %3394 = vmatpush1.bf16.xpose.msra.mxu0 %v740
        %3395 = vmatprep.subr.bf16.mxu0 0
        %3396 = vmatpush1.bf16.xpose.msra.mxu0 0
        %3397 = vmatprep.subr.bf16.mxu0 0
        %3398 = vmatpush1.bf16.xpose.msra.mxu0 0
        %3399 = vmatprep.subr.bf16.mxu0 0
        %3400 = vmatpush1.bf16.xpose.msra.mxu0 0
        %3401 = vmatprep.subr.bf16.mxu0 0
        %3402 = vmatpush1.bf16.xpose.msra.mxu0 0
        %3403 = vmatprep.subr.bf16.mxu0 0
        %3404 = vmatpush1.bf16.xpose.msra.mxu0 0
        %3405 = vmatprep.subr.bf16.mxu0 0
        %3406 = vmatpush1.bf16.xpose.msra.mxu0 0
        %3407 = vmatprep.subr.bf16.mxu0 0
        %3408 = vmatpush1.bf16.xpose.msra.mxu0 0
        %3409 = vmatprep.subr.bf16.mxu0 0
        %3410 = vmatpush1.bf16.xpose.msra.mxu0 0
        %3411 = vmatprep.subr.bf16.mxu0 0
        %3412 = vmatpush1.bf16.xpose.msra.mxu0 0
        %3413 = vmatprep.subr.bf16.mxu0 0
        %3414 = vmatpush1.bf16.xpose.msra.mxu0 0
        %3415 = vmatprep.subr.bf16.mxu0 0
        %3416 = vmatpush1.bf16.xpose.msra.mxu0 0
        %3417 = vmatprep.subr.bf16.mxu0 0
        %3418 = vmatpush1.bf16.xpose.msra.mxu0 0
        %3419 = vmatprep.subr.bf16.mxu0 0
        %3420 = vmatpush1.bf16.xpose.msra.mxu0 0
        %3421 = vmatprep.subr.bf16.mxu0 0
        %3422 = vmatpush1.bf16.xpose.msra.mxu0 0
        %3423 = vmatprep.subr.bf16.mxu0 0
        %3424 = vmatpush1.bf16.xpose.msra.mxu0 0
        %3425 = vmatprep.mubr.bf16.mxu0 %v3348
        %3426 = vmatmul.mubr.bf16.gmra.mrb[0].mxu0 %v3347
        %v3427 = vpop.f32.mrb[0].mxu0
        %v3428 = vadd.f32 %v3388, %v3427
        %v3429 = vpop.f32.mrb[0].mxu0
        %v3430 = vpop.f32.mrb[0].mxu0
        %v3431 = vpop.f32.mrb[0].mxu0
        %3432 = vdwg.mxu0
        %3433 = vmatprep.subr.bf16.mxu0 %v743
        %3434 = vmatpush1.bf16.xpose.msra.mxu0 %v742
        %3435 = vmatprep.subr.bf16.mxu0 0
        %3436 = vmatpush1.bf16.xpose.msra.mxu0 0
        %3437 = vmatprep.subr.bf16.mxu0 0
        %3438 = vmatpush1.bf16.xpose.msra.mxu0 0
        %3439 = vmatprep.subr.bf16.mxu0 0
        %3440 = vmatpush1.bf16.xpose.msra.mxu0 0
        %3441 = vmatprep.subr.bf16.mxu0 0
        %3442 = vmatpush1.bf16.xpose.msra.mxu0 0
        %3443 = vmatprep.subr.bf16.mxu0 0
        %3444 = vmatpush1.bf16.xpose.msra.mxu0 0
        %3445 = vmatprep.subr.bf16.mxu0 0
        %3446 = vmatpush1.bf16.xpose.msra.mxu0 0
        %3447 = vmatprep.subr.bf16.mxu0 0
        %3448 = vmatpush1.bf16.xpose.msra.mxu0 0
        %3449 = vmatprep.subr.bf16.mxu0 0
        %3450 = vmatpush1.bf16.xpose.msra.mxu0 0
        %3451 = vmatprep.subr.bf16.mxu0 0
        %3452 = vmatpush1.bf16.xpose.msra.mxu0 0
        %3453 = vmatprep.subr.bf16.mxu0 0
        %3454 = vmatpush1.bf16.xpose.msra.mxu0 0
        %3455 = vmatprep.subr.bf16.mxu0 0
        %3456 = vmatpush1.bf16.xpose.msra.mxu0 0
        %3457 = vmatprep.subr.bf16.mxu0 0
        %3458 = vmatpush1.bf16.xpose.msra.mxu0 0
        %3459 = vmatprep.subr.bf16.mxu0 0
        %3460 = vmatpush1.bf16.xpose.msra.mxu0 0
        %3461 = vmatprep.subr.bf16.mxu0 0
        %3462 = vmatpush1.bf16.xpose.msra.mxu0 0
        %3463 = vmatprep.subr.bf16.mxu0 0
        %3464 = vmatpush1.bf16.xpose.msra.mxu0 0
        %3465 = vmatprep.mubr.bf16.mxu0 %v3350
        %3466 = vmatmul.mubr.bf16.gmra.mrb[0].mxu0 %v3349
        %v3467 = vpop.f32.mrb[0].mxu0
        %v3468 = vadd.f32 %v3428, %v3467
        %v3469 = vpop.f32.mrb[0].mxu0
        %v3470 = vpop.f32.mrb[0].mxu0
        %v3471 = vpop.f32.mrb[0].mxu0
        %3472 = vdwg.mxu0
        %3473 = vmatprep.subr.bf16.mxu0 %v745
        %3474 = vmatpush1.bf16.xpose.msra.mxu0 %v744
        %3475 = vmatprep.subr.bf16.mxu0 0
        %3476 = vmatpush1.bf16.xpose.msra.mxu0 0
        %3477 = vmatprep.subr.bf16.mxu0 0
        %3478 = vmatpush1.bf16.xpose.msra.mxu0 0
        %3479 = vmatprep.subr.bf16.mxu0 0
        %3480 = vmatpush1.bf16.xpose.msra.mxu0 0
        %3481 = vmatprep.subr.bf16.mxu0 0
        %3482 = vmatpush1.bf16.xpose.msra.mxu0 0
        %3483 = vmatprep.subr.bf16.mxu0 0
        %3484 = vmatpush1.bf16.xpose.msra.mxu0 0
        %3485 = vmatprep.subr.bf16.mxu0 0
        %3486 = vmatpush1.bf16.xpose.msra.mxu0 0
        %3487 = vmatprep.subr.bf16.mxu0 0
        %3488 = vmatpush1.bf16.xpose.msra.mxu0 0
        %3489 = vmatprep.subr.bf16.mxu0 0
        %3490 = vmatpush1.bf16.xpose.msra.mxu0 0
        %3491 = vmatprep.subr.bf16.mxu0 0
        %3492 = vmatpush1.bf16.xpose.msra.mxu0 0
        %3493 = vmatprep.subr.bf16.mxu0 0
        %3494 = vmatpush1.bf16.xpose.msra.mxu0 0
        %3495 = vmatprep.subr.bf16.mxu0 0
        %3496 = vmatpush1.bf16.xpose.msra.mxu0 0
        %3497 = vmatprep.subr.bf16.mxu0 0
        %3498 = vmatpush1.bf16.xpose.msra.mxu0 0
        %3499 = vmatprep.subr.bf16.mxu0 0
        %3500 = vmatpush1.bf16.xpose.msra.mxu0 0
        %3501 = vmatprep.subr.bf16.mxu0 0
        %3502 = vmatpush1.bf16.xpose.msra.mxu0 0
        %3503 = vmatprep.subr.bf16.mxu0 0
        %3504 = vmatpush1.bf16.xpose.msra.mxu0 0
        %3505 = vmatprep.mubr.bf16.mxu0 %v3352
        %3506 = vmatmul.mubr.bf16.gmra.mrb[0].mxu0 %v3351
        %v3507 = vpop.f32.mrb[0].mxu0
        %v3508 = vadd.f32 %v3468, %v3507
        %v3509 = vpop.f32.mrb[0].mxu0
        %v3510 = vpop.f32.mrb[0].mxu0
        %v3511 = vpop.f32.mrb[0].mxu0
        %3512 = vdwg.mxu0
        %v3513 = vadd.f32 %v3256, %v3508
        %vm3514 = vcmask 124928
        %3515 = vst.msk [vmem:[%s594] sm:$0x7] %vm3514, %v3513
        %v3516 = vmax.f32 %v2996, 1e-37
        %v3517 = vmax.f32 %v2997, 1e-37
        %v3518 = vmax.f32 %v2998, 1e-37
        %v3519 = vmax.f32 %v2999, 1e-37
        %v3520 = vmax.f32 %v3000, 1e-37
        %v3521 = vmax.f32 %v3001, 1e-37
        %v3522 = vmax.f32 %v3002, 1e-37
        %v3523 = vmax.f32 %v3003, 1e-37
        %v3524 = vlog2.pop %v3516
        %v3525 = vmul.f32 %v3524, 0.6931472
        %v3526 = vlog2.pop %v3517
        %v3527 = vmul.f32 %v3526, 0.6931472
        %v3528 = vlog2.pop %v3518
        %v3529 = vmul.f32 %v3528, 0.6931472
        %v3530 = vlog2.pop %v3519
        %v3531 = vmul.f32 %v3530, 0.6931472
        %v3532 = vlog2.pop %v3520
        %v3533 = vmul.f32 %v3532, 0.6931472
        %v3534 = vlog2.pop %v3521
        %v3535 = vmul.f32 %v3534, 0.6931472
        %v3536 = vlog2.pop %v3522
        %v3537 = vmul.f32 %v3536, 0.6931472
        %v3538 = vlog2.pop %v3523
        %v3539 = vmul.f32 %v3538, 0.6931472
        %v3540 = vadd.f32 %v3525, %v3527
        %v3541 = vadd.f32 %v3540, %v3529
        %v3542 = vadd.f32 %v3541, %v3531
        %v3543 = vadd.f32 %v3542, %v3533
        %v3544 = vadd.f32 %v3543, %v3535
        %v3545 = vadd.f32 %v3544, %v3537
        %v3546 = vadd.f32 %v3545, %v3539
        %3547 = vadd.xlane.f32.xlu0 %v3546
        %v3548 = vpop.xlane.xlu0 %3547
        %vm3549 = vcmask 0
        %3550 = vst.msk [vmem:[%s658] sm:$0x1] %vm3549, %v3548
        %v3551 = vsel %vm922, %v2916, -inf
        %v3552 = vrot.slane %v3551, 4
        %v3553 = vmax.f32 %v3551, %v3552
        %v3554 = vrot.slane %v3553, 2
        %v3555 = vmax.f32 %v3553, %v3554
        %v3556 = vrot.slane %v3555, 1
        %v3557 = vmax.f32 %v3555, %v3556
        %v3558 = vsel %vm922, %v2917, -inf
        %v3559 = vrot.slane %v3558, 4
        %v3560 = vmax.f32 %v3558, %v3559
        %v3561 = vrot.slane %v3560, 2
        %v3562 = vmax.f32 %v3560, %v3561
        %v3563 = vrot.slane %v3562, 1
        %v3564 = vmax.f32 %v3562, %v3563
        %v3565 = vsel %vm922, %v2918, -inf
        %v3566 = vrot.slane %v3565, 4
        %v3567 = vmax.f32 %v3565, %v3566
        %v3568 = vrot.slane %v3567, 2
        %v3569 = vmax.f32 %v3567, %v3568
        %v3570 = vrot.slane %v3569, 1
        %v3571 = vmax.f32 %v3569, %v3570
        %v3572 = vsel %vm922, %v2919, -inf
        %v3573 = vrot.slane %v3572, 4
        %v3574 = vmax.f32 %v3572, %v3573
        %v3575 = vrot.slane %v3574, 2
        %v3576 = vmax.f32 %v3574, %v3575
        %v3577 = vrot.slane %v3576, 1
        %v3578 = vmax.f32 %v3576, %v3577
        %v3579 = vsel %vm922, %v2920, -inf
        %v3580 = vrot.slane %v3579, 4
        %v3581 = vmax.f32 %v3579, %v3580
        %v3582 = vrot.slane %v3581, 2
        %v3583 = vmax.f32 %v3581, %v3582
        %v3584 = vrot.slane %v3583, 1
        %v3585 = vmax.f32 %v3583, %v3584
        %v3586 = vsel %vm922, %v2921, -inf
        %v3587 = vrot.slane %v3586, 4
        %v3588 = vmax.f32 %v3586, %v3587
        %v3589 = vrot.slane %v3588, 2
        %v3590 = vmax.f32 %v3588, %v3589
        %v3591 = vrot.slane %v3590, 1
        %v3592 = vmax.f32 %v3590, %v3591
        %v3593 = vsel %vm922, %v2922, -inf
        %v3594 = vrot.slane %v3593, 4
        %v3595 = vmax.f32 %v3593, %v3594
        %v3596 = vrot.slane %v3595, 2
        %v3597 = vmax.f32 %v3595, %v3596
        %v3598 = vrot.slane %v3597, 1
        %v3599 = vmax.f32 %v3597, %v3598
        %v3600 = vsel %vm922, %v2923, -inf
        %v3601 = vrot.slane %v3600, 4
        %v3602 = vmax.f32 %v3600, %v3601
        %v3603 = vrot.slane %v3602, 2
        %v3604 = vmax.f32 %v3602, %v3603
        %v3605 = vrot.slane %v3604, 1
        %v3606 = vmax.f32 %v3604, %v3605
        %v3607 = vsub.f32 %v2916, %v3557
        %v3608 = vsub.f32 %v2917, %v3564
        %v3609 = vsub.f32 %v2918, %v3571
        %v3610 = vsub.f32 %v2919, %v3578
        %v3611 = vsub.f32 %v2920, %v3585
        %v3612 = vsub.f32 %v2921, %v3592
        %v3613 = vsub.f32 %v2922, %v3599
        %v3614 = vsub.f32 %v2923, %v3606
        %v3615 = vmul.f32 %v3607, 1.442695
        %v3616 = vpow.pop %v3615
        %v3617 = vmul.f32 %v3608, 1.442695
        %v3618 = vpow.pop %v3617
        %v3619 = vmul.f32 %v3609, 1.442695
        %v3620 = vpow.pop %v3619
        %v3621 = vmul.f32 %v3610, 1.442695
        %v3622 = vpow.pop %v3621
        %v3623 = vmul.f32 %v3611, 1.442695
        %v3624 = vpow.pop %v3623
        %v3625 = vmul.f32 %v3612, 1.442695
        %v3626 = vpow.pop %v3625
        %v3627 = vmul.f32 %v3613, 1.442695
        %v3628 = vpow.pop %v3627
        %v3629 = vmul.f32 %v3614, 1.442695
        %v3630 = vpow.pop %v3629
        %v3631 = vsel %vm922, %v3616, 0.0
        %v3632 = vrot.slane %v3631, 4
        %v3633 = vadd.f32 %v3631, %v3632
        %v3634 = vrot.slane %v3633, 2
        %v3635 = vadd.f32 %v3633, %v3634
        %v3636 = vrot.slane %v3635, 1
        %v3637 = vadd.f32 %v3635, %v3636
        %v3638 = vsel %vm922, %v3618, 0.0
        %v3639 = vrot.slane %v3638, 4
        %v3640 = vadd.f32 %v3638, %v3639
        %v3641 = vrot.slane %v3640, 2
        %v3642 = vadd.f32 %v3640, %v3641
        %v3643 = vrot.slane %v3642, 1
        %v3644 = vadd.f32 %v3642, %v3643
        %v3645 = vsel %vm922, %v3620, 0.0
        %v3646 = vrot.slane %v3645, 4
        %v3647 = vadd.f32 %v3645, %v3646
        %v3648 = vrot.slane %v3647, 2
        %v3649 = vadd.f32 %v3647, %v3648
        %v3650 = vrot.slane %v3649, 1
        %v3651 = vadd.f32 %v3649, %v3650
        %v3652 = vsel %vm922, %v3622, 0.0
        %v3653 = vrot.slane %v3652, 4
        %v3654 = vadd.f32 %v3652, %v3653
        %v3655 = vrot.slane %v3654, 2
        %v3656 = vadd.f32 %v3654, %v3655
        %v3657 = vrot.slane %v3656, 1
        %v3658 = vadd.f32 %v3656, %v3657
        %v3659 = vsel %vm922, %v3624, 0.0
        %v3660 = vrot.slane %v3659, 4
        %v3661 = vadd.f32 %v3659, %v3660
        %v3662 = vrot.slane %v3661, 2
        %v3663 = vadd.f32 %v3661, %v3662
        %v3664 = vrot.slane %v3663, 1
        %v3665 = vadd.f32 %v3663, %v3664
        %v3666 = vsel %vm922, %v3626, 0.0
        %v3667 = vrot.slane %v3666, 4
        %v3668 = vadd.f32 %v3666, %v3667
        %v3669 = vrot.slane %v3668, 2
        %v3670 = vadd.f32 %v3668, %v3669
        %v3671 = vrot.slane %v3670, 1
        %v3672 = vadd.f32 %v3670, %v3671
        %v3673 = vsel %vm922, %v3628, 0.0
        %v3674 = vrot.slane %v3673, 4
        %v3675 = vadd.f32 %v3673, %v3674
        %v3676 = vrot.slane %v3675, 2
        %v3677 = vadd.f32 %v3675, %v3676
        %v3678 = vrot.slane %v3677, 1
        %v3679 = vadd.f32 %v3677, %v3678
        %v3680 = vsel %vm922, %v3630, 0.0
        %v3681 = vrot.slane %v3680, 4
        %v3682 = vadd.f32 %v3680, %v3681
        %v3683 = vrot.slane %v3682, 2
        %v3684 = vadd.f32 %v3682, %v3683
        %v3685 = vrot.slane %v3684, 1
        %v3686 = vadd.f32 %v3684, %v3685
        %v3687 = vrcp.pop %v3637
        %v3688 = vrcp.pop %v3644
        %v3689 = vrcp.pop %v3651
        %v3690 = vrcp.pop %v3658
        %v3691 = vrcp.pop %v3665
        %v3692 = vrcp.pop %v3672
        %v3693 = vrcp.pop %v3679
        %v3694 = vrcp.pop %v3686
        %v3695 = vmul.f32 %v3616, %v3687
        %v3696 = vmul.f32 %v3618, %v3688
        %v3697 = vmul.f32 %v3620, %v3689
        %v3698 = vmul.f32 %v3622, %v3690
        %v3699 = vmul.f32 %v3624, %v3691
        %v3700 = vmul.f32 %v3626, %v3692
        %v3701 = vmul.f32 %v3628, %v3693
        %v3702 = vmul.f32 %v3630, %v3694
        %v3703 = vsel %vm922, %v1067, 0.0
        %v3704 = vsel %vm922, %v1068, 0.0
        %v3705 = vadd.f32 %v3703, %v3704
        %v3706 = vsel %vm922, %v1069, 0.0
        %v3707 = vadd.f32 %v3705, %v3706
        %v3708 = vsel %vm922, %v1070, 0.0
        %v3709 = vadd.f32 %v3707, %v3708
        %v3710 = vsel %vm922, %v1071, 0.0
        %v3711 = vadd.f32 %v3709, %v3710
        %v3712 = vsel %vm922, %v1072, 0.0
        %v3713 = vadd.f32 %v3711, %v3712
        %v3714 = vsel %vm922, %v1073, 0.0
        %v3715 = vadd.f32 %v3713, %v3714
        %v3716 = vsel %vm922, %v1074, 0.0
        %v3717 = vadd.f32 %v3715, %v3716
        %3718 = vadd.xlane.f32.xlu0 %v3717
        %v3719 = vpop.xlane.xlu0 %3718
        %3720 = vst.msk [vmem:[%s615] sm:$0x7] %vm1386, %v3719
        %v3721 = vsel %vm922, %v793, 0.0
        %v3722 = vsel %vm922, %v795, 0.0
        %v3723 = vadd.f32 %v3721, %v3722
        %v3724 = vsel %vm922, %v834, 0.0
        %v3725 = vadd.f32 %v3723, %v3724
        %v3726 = vsel %vm922, %v836, 0.0
        %v3727 = vadd.f32 %v3725, %v3726
        %v3728 = vsel %vm922, %v875, 0.0
        %v3729 = vadd.f32 %v3727, %v3728
        %v3730 = vsel %vm922, %v877, 0.0
        %v3731 = vadd.f32 %v3729, %v3730
        %v3732 = vsel %vm922, %v916, 0.0
        %v3733 = vadd.f32 %v3731, %v3732
        %v3734 = vsel %vm922, %v918, 0.0
        %v3735 = vadd.f32 %v3733, %v3734
        %3736 = vadd.xlane.f32.xlu0 %v3735
        %v3737 = vpop.xlane.xlu0 %3736
        %3738 = vst.msk [vmem:[%s615] sm:$0x7] %vm1936, %v3737
        %v3739 = vsel %vm922, %v3695, 0.0
        %v3740 = vsel %vm922, %v3696, 0.0
        %v3741 = vadd.f32 %v3739, %v3740
        %v3742 = vsel %vm922, %v3697, 0.0
        %v3743 = vadd.f32 %v3741, %v3742
        %v3744 = vsel %vm922, %v3698, 0.0
        %v3745 = vadd.f32 %v3743, %v3744
        %v3746 = vsel %vm922, %v3699, 0.0
        %v3747 = vadd.f32 %v3745, %v3746
        %v3748 = vsel %vm922, %v3700, 0.0
        %v3749 = vadd.f32 %v3747, %v3748
        %v3750 = vsel %vm922, %v3701, 0.0
        %v3751 = vadd.f32 %v3749, %v3750
        %v3752 = vsel %vm922, %v3702, 0.0
        %v3753 = vadd.f32 %v3751, %v3752
        %3754 = vadd.xlane.f32.xlu0 %v3753
        %v3755 = vpop.xlane.xlu0 %3754
        %3756 = vst.msk [vmem:[%s615] sm:$0x7] %vm2823, %v3755
        %vm3757 = vcmask 26648
        %3758 = vst.msk [vmem:[%s615] sm:$0x7] %vm3757, %v3087
        %s3759 = sand.u32 %s159, 1
        %s3760 = sand.u32 %s159, 1
        %s3761 = smul.addr %s3760, 96
        %s3762 = scalar_lea.vmem [#allocation4], %s3761
        %s3763 = smul.u32 8, %s35
        %p3764 = scmp.lt.s32.totalorder %s36, 1
        %s3765 = scalar_select %p3764, %s36, 1
        %p3766 = scmp.lt.s32.totalorder %s3763, 31
        %s3767 = scalar_select %p3766, %s3763, 31
        %s3768 = smul.addr %s3765, 32
        %s3769 = sadd.s32 %s3767, %s3768
        %s3770 = smul.addr %s3769, 4
        %s3771 = scalar_lea.vmem %s5, %s3770
        %s3772 = sand.u32 %s215, 1
        %s3773 = scalar_lea.sflag [#allocation6], %s3772
        %s3774 = sand.u32 %s215, 1
        %s3775 = smul.addr %s3774, 4
        %s3776 = scalar_lea.vmem [#allocation5], %s3775
        %s3777 = sand.u32 %s31, 1
        %s3778 = scalar_lea.sflag [#allocation8], %s3777
        %s3779 = sand.u32 %s243, 1
        %s3780 = smul.addr %s3779, 4
        %s3781 = scalar_lea.vmem [#allocation7], %s3780
        %s3782 = sand.u32 %s31, 1
        %s3783 = scalar_lea.sflag [#allocation8], %s3782
        %s3784 = sand.u32 %s271, 1
        %s3785 = smul.addr %s3784, 4
        %s3786 = scalar_lea.vmem [#allocation9], %s3785
        %s3787 = sand.u32 %s299, 1
        %s3788 = scalar_lea.sflag [#allocation11], %s3787
        %s3789 = sand.u32 %s299, 1
        %s3790 = smul.addr %s3789, 4
        %s3791 = scalar_lea.vmem [#allocation10], %s3790
        %p3792 = scmp.lt.s32.totalorder %s35, 3
        %s3793 = scalar_select %p3792, %s35, 3
        %p3794 = scmp.lt.s32.totalorder %s36, 1
        %s3795 = scalar_select %p3794, %s36, 1
        %s3796 = smul.addr %s3793, 2
        %s3797 = sadd.s32 %s3795, %s3796
        %s3798 = scalar_lea.vmem %s10, %s3797
        // Predicated region
        $region98: #{iodine_forward.9} parent=88 // pred_check
          %p3799 = pneg %p169
        $region99: #{iodine_forward.9} parent=88 // pred_check_branch
          %3801 = sbr.rel (%p3799) target = $region101
        $region100: #{iodine_forward.9} parent=88 // pred_region
          %s3802 = smul.u32 8, %s35
          %s3803 = smul.addr %s36, 96
          %s3804 = sadd.s32 %s3802, %s3803
          %s3805 = smul.addr %s3804, 4
          %s3806 = scalar_lea.vmem %s4, %s3805
          // Predicated region
          $region102: #{iodine_forward.9} parent=100 // pred_check
            _
          $region103: #{iodine_forward.9} parent=100 // pred_check_branch
            %3808 = sbr.rel (0) target = $region105
          $region104: #{iodine_forward.9} parent=100 // pred_region
            // Predicated region
            $region106: #{iodine_forward.9} parent=104 // pred_check
              _
            $region107: #{iodine_forward.9} parent=104 // pred_check_branch
              %3810 = sbr.rel (0) target = $region109
            $region108: #{iodine_forward.9} parent=104 // pred_region
              loop: start=0, step=1, limit=1
              $region110: #{iodine_forward.9} parent=108 // loop_pre_header
                _
              $region111: #{iodine_forward.9} parent=108 // loop_header
                %s3812 = sphi 0, %s3816
                %p3813 = scmp.ge.s32.totalorder %s3812, 1
                %s3817 = sphi %s3762, %s3762
                %s3818 = sphi %s3806, %s3806
              $region112: #{iodine_forward.9} parent=108 // loop_header_branch
                %3815 = sbr.rel (%p3813) target = $region116
              $region113: #{iodine_forward.9} parent=108 // loop_body
                %v3819 = vld [vmem:[%s3817] sm:$0xff]
                %3820 = vst [vmem:[%s3818] sm:$0xff] %v3819
                %v3821 = vld [vmem:[%s3817 + $0x8] sm:$0xff]
                %3822 = vst [vmem:[%s3818 + $0x8] sm:$0xff] %v3821
                %v3823 = vld [vmem:[%s3817 + $0x10] sm:$0xff]
                %3824 = vst [vmem:[%s3818 + $0x10] sm:$0xff] %v3823
                %v3825 = vld [vmem:[%s3817 + $0x18] sm:$0xff]
                %3826 = vst [vmem:[%s3818 + $0x18] sm:$0xff] %v3825
                %v3827 = vld [vmem:[%s3817 + $0x20] sm:$0xff]
                %3828 = vst [vmem:[%s3818 + $0x80] sm:$0xff] %v3827
                %v3829 = vld [vmem:[%s3817 + $0x28] sm:$0xff]
                %3830 = vst [vmem:[%s3818 + $0x88] sm:$0xff] %v3829
                %v3831 = vld [vmem:[%s3817 + $0x30] sm:$0xff]
                %3832 = vst [vmem:[%s3818 + $0x90] sm:$0xff] %v3831
                %v3833 = vld [vmem:[%s3817 + $0x38] sm:$0xff]
                %3834 = vst [vmem:[%s3818 + $0x98] sm:$0xff] %v3833
                %v3835 = vld [vmem:[%s3817 + $0x40] sm:$0xff]
                %3836 = vst [vmem:[%s3818 + $0x100] sm:$0xff] %v3835
                %v3837 = vld [vmem:[%s3817 + $0x48] sm:$0xff]
                %3838 = vst [vmem:[%s3818 + $0x108] sm:$0xff] %v3837
                %v3839 = vld [vmem:[%s3817 + $0x50] sm:$0xff]
                %3840 = vst [vmem:[%s3818 + $0x110] sm:$0xff] %v3839
                %v3841 = vld [vmem:[%s3817 + $0x58] sm:$0xff]
                %3842 = vst [vmem:[%s3818 + $0x118] sm:$0xff] %v3841
              $region114: #{iodine_forward.9} parent=108 // loop_footer
                %s3816 = sadd.s32 1, %s3812
              $region115: #{iodine_forward.9} parent=108 // loop_footer_branch
                %3811 = sbr.rel target = $region111
              $region116: #{iodine_forward.9} parent=108 // loop_exit
                _
            $region109: #{iodine_forward.9} parent=104 // pred_fallthru
              _
            // Predicated region
            $region117: #{iodine_forward.9} parent=104 // pred_check
              _
            $region118: #{iodine_forward.9} parent=104 // pred_check_branch
              %3844 = sbr.rel target = $region120
            $region119: #{iodine_forward.9} parent=104 // pred_region
              _
            $region120: #{iodine_forward.9} parent=104 // pred_fallthru
              _
          $region105: #{iodine_forward.9} parent=100 // pred_fallthru
            _
          %3845 = vnop
        $region101: #{iodine_forward.9} parent=88 // pred_fallthru
          _
        // Predicated region
        $region121: #{iodine_forward.9} parent=88 // pred_check
          %p3846 = pneg %p197
        $region122: #{iodine_forward.9} parent=88 // pred_check_branch
          %3848 = sbr.rel (%p3846) target = $region124
        $region123: #{iodine_forward.9} parent=88 // pred_region
          %s3849 = smul.u32 8, %s35
        $region124: #{iodine_forward.9} parent=88 // pred_fallthru
          _
        // Predicated region
        $region125: #{iodine_forward.9} parent=88 // pred_check
          %p3850 = pneg %p225
        $region126: #{iodine_forward.9} parent=88 // pred_check_branch
          %3852 = sbr.rel (%p3850) target = $region128
        $region127: #{iodine_forward.9} parent=88 // pred_region
          %s3854 = ssub.s32 64, 64
          %3855 = vsyncadd %s3773, %s3854
          %s3856 = smul.addr %s35, 2
          %s3857 = sadd.s32 %s36, %s3856
          %s3858 = smul.addr %s3857, 64
          %s3859 = scalar_lea.hbm %s6, %s3858
          %s3861 = sshll.u32 %s3776, 4
          %s3862 = int_to_ptr.vmem [resolvable:$true] %s3861
          %3864 = dma.vmem_to_hbm [thread:$0]  %s3862, 64, %s3859, %s3773
        $region128: #{iodine_forward.9} parent=88 // pred_fallthru
          _
        // Predicated region
        $region129: #{iodine_forward.9} parent=88 // pred_check
          %p3865 = pneg %p253
        $region130: #{iodine_forward.9} parent=88 // pred_check_branch
          %3867 = sbr.rel (%p3865) target = $region132
        $region131: #{iodine_forward.9} parent=88 // pred_region
          %s3869 = ssub.s32 64, 64
          %3870 = vsyncadd %s3778, %s3869
          %s3871 = smul.addr %s35, 2
          %s3872 = sadd.s32 %s36, %s3871
          %s3873 = smul.addr %s3872, 64
          %s3874 = scalar_lea.hbm %s7, %s3873
          %s3876 = sshll.u32 %s3781, 4
          %s3877 = int_to_ptr.vmem [resolvable:$true] %s3876
          %3879 = dma.vmem_to_hbm [thread:$0]  %s3877, 64, %s3874, %s3778
        $region132: #{iodine_forward.9} parent=88 // pred_fallthru
          _
        // Predicated region
        $region133: #{iodine_forward.9} parent=88 // pred_check
          %p3880 = pneg %p281
        $region134: #{iodine_forward.9} parent=88 // pred_check_branch
          %3882 = sbr.rel (%p3880) target = $region136
        $region135: #{iodine_forward.9} parent=88 // pred_region
          %s3884 = ssub.s32 64, 64
          %3885 = vsyncadd %s3783, %s3884
          %s3886 = smul.addr %s35, 2
          %s3887 = sadd.s32 %s36, %s3886
          %s3888 = smul.addr %s3887, 64
          %s3889 = scalar_lea.hbm %s8, %s3888
          %s3891 = sshll.u32 %s3786, 4
          %s3892 = int_to_ptr.vmem [resolvable:$true] %s3891
          %3894 = dma.vmem_to_hbm [thread:$0]  %s3892, 64, %s3889, %s3783
        $region136: #{iodine_forward.9} parent=88 // pred_fallthru
          _
        // Predicated region
        $region137: #{iodine_forward.9} parent=88 // pred_check
          %p3895 = pneg %p309
        $region138: #{iodine_forward.9} parent=88 // pred_check_branch
          %3897 = sbr.rel (%p3895) target = $region140
        $region139: #{iodine_forward.9} parent=88 // pred_region
          %s3899 = ssub.s32 64, 64
          %3900 = vsyncadd %s3788, %s3899
          %s3901 = smul.addr %s35, 2
          %s3902 = sadd.s32 %s36, %s3901
          %s3903 = smul.addr %s3902, 64
          %s3904 = scalar_lea.hbm %s9, %s3903
          %s3906 = sshll.u32 %s3791, 4
          %s3907 = int_to_ptr.vmem [resolvable:$true] %s3906
          %3909 = dma.vmem_to_hbm [thread:$0]  %s3907, 64, %s3904, %s3788
        $region140: #{iodine_forward.9} parent=88 // pred_fallthru
          _
        // Predicated region
        $region141: #{iodine_forward.9} parent=88 // pred_check
          %p3910 = pneg %p337
        $region142: #{iodine_forward.9} parent=88 // pred_check_branch
          %3912 = sbr.rel (%p3910) target = $region144
        $region143: #{iodine_forward.9} parent=88 // pred_region
          _
        $region144: #{iodine_forward.9} parent=88 // pred_fallthru
          _
      $region89: #{iodine_forward.9} parent=5 // pred_fallthru
        _
      %p3913 = scmp.le.s32.totalorder 2, %s26
      // Predicated region
      $region145: #{iodine_forward.9} parent=5 // pred_check
        %p3914 = pneg %p3913
      $region146: #{iodine_forward.9} parent=5 // pred_check_branch
        %3916 = sbr.rel (%p3914) target = $region148
      $region147: #{iodine_forward.9} parent=5 // pred_region
        %s3917 = ssub.s32 %s26, 2
        // Predicated region
        $region149: #{iodine_forward.9} parent=147 // pred_check
          %p3918 = pneg %p175
        $region150: #{iodine_forward.9} parent=147 // pred_check_branch
          %3920 = sbr.rel (%p3918) target = $region152
        $region151: #{iodine_forward.9} parent=147 // pred_region
          %s3921 = sand.u32 %s160, 1
          %s3922 = sand.u32 %s160, 1
          %s3923 = smul.addr %s3922, 96
          %s3924 = scalar_lea.vmem [#allocation4], %s3923
        $region152: #{iodine_forward.9} parent=147 // pred_fallthru
          _
        // Predicated region
        $region153: #{iodine_forward.9} parent=147 // pred_check
          %p3925 = pneg %p203
        $region154: #{iodine_forward.9} parent=147 // pred_check_branch
          %3927 = sbr.rel (%p3925) target = $region156
        $region155: #{iodine_forward.9} parent=147 // pred_region
          %s3928 = smul.u32 8, %s37
          %p3929 = scmp.lt.s32.totalorder %s38, 1
          %s3930 = scalar_select %p3929, %s38, 1
          %p3931 = scmp.lt.s32.totalorder %s3928, 31
          %s3932 = scalar_select %p3931, %s3928, 31
          %s3933 = smul.addr %s3930, 32
          %s3934 = sadd.s32 %s3932, %s3933
          %s3935 = smul.addr %s3934, 4
          %s3936 = scalar_lea.vmem %s5, %s3935
        $region156: #{iodine_forward.9} parent=147 // pred_fallthru
          _
        // Predicated region
        $region157: #{iodine_forward.9} parent=147 // pred_check
          %p3937 = pneg %p231
        $region158: #{iodine_forward.9} parent=147 // pred_check_branch
          %3939 = sbr.rel (%p3937) target = $region160
        $region159: #{iodine_forward.9} parent=147 // pred_region
          %s3940 = sand.u32 %s216, 1
          %s3941 = scalar_lea.sflag [#allocation6], %s3940
          %s3942 = sand.u32 %s216, 1
          %s3943 = smul.addr %s3942, 4
          %s3944 = scalar_lea.vmem [#allocation5], %s3943
          %3945 = dma.done %s3941, 64
        $region160: #{iodine_forward.9} parent=147 // pred_fallthru
          _
        // Predicated region
        $region161: #{iodine_forward.9} parent=147 // pred_check
          %p3946 = pneg %p259
        $region162: #{iodine_forward.9} parent=147 // pred_check_branch
          %3948 = sbr.rel (%p3946) target = $region164
        $region163: #{iodine_forward.9} parent=147 // pred_region
          %s3949 = sand.u32 %s32, 1
          %s3950 = scalar_lea.sflag [#allocation8], %s3949
          %s3951 = sand.u32 %s244, 1
          %s3952 = smul.addr %s3951, 4
          %s3953 = scalar_lea.vmem [#allocation7], %s3952
          %3954 = dma.done %s3950, 64
        $region164: #{iodine_forward.9} parent=147 // pred_fallthru
          _
        // Predicated region
        $region165: #{iodine_forward.9} parent=147 // pred_check
          %p3955 = pneg %p287
        $region166: #{iodine_forward.9} parent=147 // pred_check_branch
          %3957 = sbr.rel (%p3955) target = $region168
        $region167: #{iodine_forward.9} parent=147 // pred_region
          %s3958 = sand.u32 %s32, 1
          %s3959 = scalar_lea.sflag [#allocation8], %s3958
          %s3960 = sand.u32 %s272, 1
          %s3961 = smul.addr %s3960, 4
          %s3962 = scalar_lea.vmem [#allocation9], %s3961
          %3963 = dma.done %s3959, 64
        $region168: #{iodine_forward.9} parent=147 // pred_fallthru
          _
        // Predicated region
        $region169: #{iodine_forward.9} parent=147 // pred_check
          %p3964 = pneg %p315
        $region170: #{iodine_forward.9} parent=147 // pred_check_branch
          %3966 = sbr.rel (%p3964) target = $region172
        $region171: #{iodine_forward.9} parent=147 // pred_region
          %s3967 = sand.u32 %s300, 1
          %s3968 = scalar_lea.sflag [#allocation11], %s3967
          %s3969 = sand.u32 %s300, 1
          %s3970 = smul.addr %s3969, 4
          %s3971 = scalar_lea.vmem [#allocation10], %s3970
          %3972 = dma.done %s3968, 64
        $region172: #{iodine_forward.9} parent=147 // pred_fallthru
          _
        // Predicated region
        $region173: #{iodine_forward.9} parent=147 // pred_check
          %p3973 = pneg %p343
        $region174: #{iodine_forward.9} parent=147 // pred_check_branch
          %3975 = sbr.rel (%p3973) target = $region176
        $region175: #{iodine_forward.9} parent=147 // pred_region
          %p3976 = scmp.lt.s32.totalorder %s37, 3
          %s3977 = scalar_select %p3976, %s37, 3
          %p3978 = scmp.lt.s32.totalorder %s38, 1
          %s3979 = scalar_select %p3978, %s38, 1
          %s3980 = smul.addr %s3977, 2
          %s3981 = sadd.s32 %s3979, %s3980
          %s3982 = scalar_lea.vmem %s10, %s3981
        $region176: #{iodine_forward.9} parent=147 // pred_fallthru
          _
      $region148: #{iodine_forward.9} parent=5 // pred_fallthru
        _
    $region6: #{iodine_forward.9} parent=1 // loop_footer
      %s30 = sadd.s32 1, %s26
    $region7: #{iodine_forward.9} parent=1 // loop_footer_branch
      %25 = sbr.rel target = $region3
    $region8: #{iodine_forward.9} parent=1 // loop_exit
      _
    %3983 = vsyncpa [#allocation6], 1
    %s3984 = scalar_lea.sflag [#allocation6], 1
    %3985 = vsyncpa %s3984, 1
    %3986 = vsyncpa [#allocation8], 1
    %s3987 = scalar_lea.sflag [#allocation8], 1
    %3988 = vsyncpa %s3987, 1
    %3989 = vsyncpa [#allocation11], 1
    %s3990 = scalar_lea.sflag [#allocation11], 1
    %3991 = vsyncpa %s3990, 1

</llo_original>
